<compile_context>
chip_gen: v7x
topology: tpu7x:2x2x1
jax: 0.10.0
libtpu: 0.0.40
codegen_flags: <defaults>
</compile_context>

<pallas_src>
import numpy as np
import jax
import jax.numpy as jnp
from jax.experimental import pallas as pl
from jax.experimental.pallas import tpu as pltpu

# ---- static model config (small, deterministic) -----------------------------
N_LAYERS = 2      # encoder.n_layers == decoder.n_layers
HIDDEN = 32       # encoder.hidden_dim == decoder.hidden_dim
INPUT_DIM = 8     # encoder input feature dim
OUTPUT_DIM = 8    # decoder.output_dim (decoder input dim == output dim)
SRC_LEN = 8
TRG_LEN = 6
BATCH = 2
TEACHER_FORCING_RATIO = 0.5


def _lstm_cell(gates, c, H):
    """PyTorch gate order (i, f, g, o); one sigmoid over the full 4H lanes."""
    sig = jax.nn.sigmoid(gates)               # covers i, f, o in one EUP pass
    i = sig[:, 0 * H:1 * H]
    f = sig[:, 1 * H:2 * H]
    o = sig[:, 3 * H:4 * H]
    g = jnp.tanh(gates[:, 2 * H:3 * H])
    c_new = f * c + i * g
    h_new = o * jnp.tanh(c_new)
    return h_new, c_new


# ---- fused encoder + attention-decoder kernel --------------------------------
def seq2seq_kernel(tf_ref, src_ref, trg_ref,
                   e_w0, e_b0, e_w1, e_b1,
                   d_w0, d_b0, d_w1, d_b1,
                   d_wo, d_bo,
                   out_ref, attn_ref, enc_sc):
    H = HIDDEN
    S, Bp, _ = src_ref.shape
    T, _, OUT = trg_ref.shape

    zero_bh = jnp.zeros((Bp, H), jnp.float32)
    h0, c0, h1, c1 = zero_bh, zero_bh, zero_bh, zero_bh

    # ---------------- encoder: 2-layer LSTM, fully unrolled over SRC_LEN -----
    ew0, eb0, ew1, eb1 = e_w0[...], e_b0[...], e_w1[...], e_b1[...]
    for t in range(S):
        x_t = src_ref[t]                                          # (Bp, IN)
        g0 = jnp.dot(jnp.concatenate([x_t, h0], axis=1), ew0,
                     preferred_element_type=jnp.float32) + eb0
        h0, c0 = _lstm_cell(g0, c0, H)
        g1 = jnp.dot(jnp.concatenate([h0, h1], axis=1), ew1,
                     preferred_element_type=jnp.float32) + eb1
        h1, c1 = _lstm_cell(g1, c1, H)
        enc_sc[:, t, :] = h1                  # top-layer hidden, (B, S, H) layout

    # reference semantics: outputs[0] and attention_ws[:, 0, :] stay zero
    out_ref[0] = jnp.zeros((Bp, OUT), jnp.float32)
    attn_ref[0] = jnp.zeros((Bp, S), jnp.float32)

    # ---------------- decoder: attention + 2-layer LSTM, fully unrolled ------
    enc = enc_sc[...]                                             # (Bp, S, H)
    dw0, db0 = d_w0[...], d_b0[...]
    dw1, db1 = d_w1[...], d_b1[...]
    dwo, dbo = d_wo[...], d_bo[...]

    inp = trg_ref[0]                                              # (Bp, OUT)
    for t in range(1, T):
        # dot-product attention; softmax + weights lane-dense over S
        scores = jnp.sum(enc * h1[:, None, :], axis=2)            # (Bp, S)
        m = jnp.max(scores, axis=1, keepdims=True)
        e = jnp.exp(scores - m)
        a = e / jnp.sum(e, axis=1, keepdims=True)                 # (Bp, S)
        ctx = jnp.sum(a[:, :, None] * enc, axis=1)                # (Bp, H)
        attn_ref[t] = a

        # LSTM layer 0 on packed [y ; context ; h_prev]  -> one MXU matmul
        g0 = jnp.dot(jnp.concatenate([inp, ctx, h0], axis=1), dw0,
                     preferred_element_type=jnp.float32) + db0
        h0, c0 = _lstm_cell(g0, c0, H)

        # LSTM layer 1 on packed [h_below ; h_prev]
        g1 = jnp.dot(jnp.concatenate([h0, h1], axis=1), dw1,
                     preferred_element_type=jnp.float32) + db1
        h1, c1 = _lstm_cell(g1, c1, H)

        # output projection on packed [h_top ; context]
        out = jnp.dot(jnp.concatenate([h1, ctx], axis=1), dwo,
                      preferred_element_type=jnp.float32) + dbo    # (Bp, OUT)
        out_ref[t] = out

        # teacher forcing: scalar mask from SMEM picks the next decoder input
        tf_t = tf_ref[t]
        inp = tf_t * trg_ref[t] + (1.0 - tf_t) * out


def _fused_seq2seq(tf_mask, src_p, trg_p, p):
    S, Bp, _ = src_p.shape
    T, _, OUT = trg_p.shape
    vmem = pl.BlockSpec(memory_space=pltpu.MemorySpace.VMEM)
    smem = pl.BlockSpec(memory_space=pltpu.MemorySpace.SMEM)
    return pl.pallas_call(
        seq2seq_kernel,
        out_shape=(jax.ShapeDtypeStruct((T, Bp, OUT), jnp.float32),
                   jax.ShapeDtypeStruct((T, Bp, S), jnp.float32)),
        in_specs=[smem] + [vmem] * 12,
        out_specs=(vmem, vmem),
        scratch_shapes=[pltpu.VMEM((Bp, S, HIDDEN), jnp.float32)],
    )(tf_mask, src_p, trg_p,
      p["e_w0"], p["e_b0"], p["e_w1"], p["e_b1"],
      p["d_w0"], p["d_b0"], p["d_w1"], p["d_b1"],
      p["d_wo"], p["d_bo"])


@jax.jit
def _seq2seq_jit(source, target, tf_mask, params):
    B, S, _ = source.shape
    T = target.shape[1]
    Bp = ((B + 7) // 8) * 8                       # pad batch to 8 sublanes
    src = jnp.transpose(source, (1, 0, 2))        # (S, B, IN)
    trg = jnp.transpose(target, (1, 0, 2))        # (T, B, OUT)
    src = jnp.pad(src, ((0, 0), (0, Bp - B), (0, 0)))
    trg = jnp.pad(trg, ((0, 0), (0, Bp - B), (0, 0)))
    out_p, attn_p = _fused_seq2seq(tf_mask, src, trg, params)
    outputs = out_p[:, :B, :]                            # (T, B, OUT)
    attention_ws = jnp.transpose(attn_p, (1, 0, 2))[:B]  # (B, T, S)
    return outputs, attention_ws


def seq2seq_forward(source, target, params,
                    teacher_forcing_ratio=TEACHER_FORCING_RATIO, tf_seed=0):
    # TODO(synk): teacher-forcing coin flips use host-side numpy RNG (matching
    # `from numpy import random` in the reference); they are passed to the
    # kernel as runtime data (SMEM mask), not baked into the compiled graph.
    T = target.shape[1]
    rng = np.random.RandomState(tf_seed)
    tf_mask = np.zeros((T,), np.float32)
    for t in range(1, T):
        tf_mask[t] = 1.0 if rng.random_sample() < teacher_forcing_ratio else 0.0
    return _seq2seq_jit(source, target, jnp.asarray(tf_mask), params)


# ---- deterministic parameter init (packed layouts) ---------------------------
def init_params(key):
    H, IN, OUT = HIDDEN, INPUT_DIM, OUTPUT_DIM
    ks = jax.random.split(key, 10)

    def u(k, shape):
        return jax.random.uniform(k, shape, jnp.float32, -0.1, 0.1)

    return {
        # encoder LSTM; rows packed as layer0=[x ; h_prev], layer1=[h_below ; h_prev]
        "e_w0": u(ks[0], (IN + H, 4 * H)),
        "e_b0": u(ks[1], (1, 4 * H)),          # combined b_ih + b_hh
        "e_w1": u(ks[2], (2 * H, 4 * H)),
        "e_b1": u(ks[3], (1, 4 * H)),
        # decoder LSTM; rows packed as layer0=[y ; context ; h_prev], layer1=[h_below ; h_prev]
        "d_w0": u(ks[4], (OUT + 2 * H, 4 * H)),
        "d_b0": u(ks[5], (1, 4 * H)),
        "d_w1": u(ks[6], (2 * H, 4 * H)),
        "d_b1": u(ks[7], (1, 4 * H)),
        # output projection; rows packed as [h_top ; context]
        "d_wo": u(ks[8], (2 * H, OUT)),
        "d_bo": u(ks[9], (1, OUT)),
    }


if __name__ == "__main__":
    key = jax.random.PRNGKey(0)
    kp, ksrc, ktrg = jax.random.split(key, 3)
    params = init_params(kp)
    source = jax.random.normal(ksrc, (BATCH, SRC_LEN, INPUT_DIM), jnp.float32)
    target = jax.random.normal(ktrg, (BATCH, TRG_LEN, OUTPUT_DIM), jnp.float32)

    outputs, attention_ws = seq2seq_forward(source, target, params)
    jax.block_until_ready((outputs, attention_ws))

    assert outputs.shape == (TRG_LEN, BATCH, OUTPUT_DIM)
    assert attention_ws.shape == (BATCH, TRG_LEN, SRC_LEN)
    assert bool(jnp.all(jnp.isfinite(outputs)))
    # rows t>=1 of the attention matrix are softmax distributions over SRC_LEN
    row_sums = jnp.sum(attention_ws[:, 1:, :], axis=-1)
    assert bool(jnp.all(jnp.abs(row_sums - 1.0) < 1e-3))
    print("KERNEL_OK")
</pallas_src>

<mosaic_0001>
module attributes {stable_mosaic.version = 11 : i64} {
  func.func @seq2seq_kernel(%arg0: memref<6xf32, #tpu.memory_space<smem>>, %arg1: memref<8x8x8xf32, #tpu.memory_space<vmem>>, %arg2: memref<6x8x8xf32, #tpu.memory_space<vmem>>, %arg3: memref<40x128xf32, #tpu.memory_space<vmem>>, %arg4: memref<1x128xf32, #tpu.memory_space<vmem>>, %arg5: memref<64x128xf32, #tpu.memory_space<vmem>>, %arg6: memref<1x128xf32, #tpu.memory_space<vmem>>, %arg7: memref<72x128xf32, #tpu.memory_space<vmem>>, %arg8: memref<1x128xf32, #tpu.memory_space<vmem>>, %arg9: memref<64x128xf32, #tpu.memory_space<vmem>>, %arg10: memref<1x128xf32, #tpu.memory_space<vmem>>, %arg11: memref<64x8xf32, #tpu.memory_space<vmem>>, %arg12: memref<1x8xf32, #tpu.memory_space<vmem>>, %arg13: memref<6x8x8xf32, #tpu.memory_space<vmem>>, %arg14: memref<6x8x8xf32, #tpu.memory_space<vmem>>, %arg15: memref<8x8x32xf32, #tpu.memory_space<vmem>>) attributes {dimension_semantics = [], scalar_prefetch = 0 : i64, scratch_operands = 1 : i64, tpu.core_type = #tpu.core_type<tc>} {
    %cst = arith.constant 0.000000e+00 : f32
    %0 = vector.broadcast %cst : f32 to vector<8x32xf32>
    %c0 = arith.constant 0 : index
    %c0_0 = arith.constant 0 : index
    %1 = vector.load %arg3[%c0, %c0_0] : memref<40x128xf32, #tpu.memory_space<vmem>>, vector<40x128xf32>
    %c0_1 = arith.constant 0 : index
    %c0_2 = arith.constant 0 : index
    %2 = vector.load %arg4[%c0_1, %c0_2] : memref<1x128xf32, #tpu.memory_space<vmem>>, vector<1x128xf32>
    %c0_3 = arith.constant 0 : index
    %c0_4 = arith.constant 0 : index
    %3 = vector.load %arg5[%c0_3, %c0_4] : memref<64x128xf32, #tpu.memory_space<vmem>>, vector<64x128xf32>
    %c0_5 = arith.constant 0 : index
    %c0_6 = arith.constant 0 : index
    %4 = vector.load %arg6[%c0_5, %c0_6] : memref<1x128xf32, #tpu.memory_space<vmem>>, vector<1x128xf32>
    %c0_7 = arith.constant 0 : index
    %c0_8 = arith.constant 0 : index
    %c0_9 = arith.constant 0 : index
    %5 = vector.load %arg1[%c0_7, %c0_8, %c0_9] : memref<8x8x8xf32, #tpu.memory_space<vmem>>, vector<1x8x8xf32>
    %6 = vector.shape_cast %5 : vector<1x8x8xf32> to vector<8x8xf32>
    %7 = tpu.concatenate %6, %0 in 1 : vector<8x8xf32>, vector<8x32xf32> -> vector<8x40xf32>
    %cst_10 = arith.constant dense<0.000000e+00> : vector<8x128xf32>
    %8 = tpu.matmul %7, %1, %cst_10 {dimension_numbers = #tpu.dot_dimension_numbers<[1], [0], [0], [1], [0, 0, 1, 1], [], []>} : vector<8x40xf32>, vector<40x128xf32>, vector<8x128xf32> -> vector<8x128xf32>
    %9 = vector.broadcast %2 : vector<1x128xf32> to vector<8x128xf32>
    %10 = arith.addf %8, %9 : vector<8x128xf32>
    %11 = arith.negf %10 : vector<8x128xf32>
    %12 = math.exp %11 : vector<8x128xf32>
    %cst_11 = arith.constant 1.000000e+00 : f32
    %13 = vector.broadcast %cst_11 : f32 to vector<8x128xf32>
    %14 = arith.addf %13, %12 : vector<8x128xf32>
    %15 = arith.divf %13, %14 : vector<8x128xf32>
    %16 = vector.extract_strided_slice %15 {offsets = [0, 0], sizes = [8, 32], strides = [1, 1]} : vector<8x128xf32> to vector<8x32xf32>
    %17 = vector.extract_strided_slice %15 {offsets = [0, 32], sizes = [8, 32], strides = [1, 1]} : vector<8x128xf32> to vector<8x32xf32>
    %18 = vector.extract_strided_slice %15 {offsets = [0, 96], sizes = [8, 32], strides = [1, 1]} : vector<8x128xf32> to vector<8x32xf32>
    %19 = vector.extract_strided_slice %10 {offsets = [0, 64], sizes = [8, 32], strides = [1, 1]} : vector<8x128xf32> to vector<8x32xf32>
    %20 = math.tanh %19 : vector<8x32xf32>
    %21 = arith.mulf %17, %0 : vector<8x32xf32>
    %22 = arith.mulf %16, %20 : vector<8x32xf32>
    %23 = arith.addf %21, %22 : vector<8x32xf32>
    %24 = math.tanh %23 : vector<8x32xf32>
    %25 = arith.mulf %18, %24 : vector<8x32xf32>
    %26 = tpu.concatenate %25, %0 in 1 : vector<8x32xf32>, vector<8x32xf32> -> vector<8x64xf32>
    %cst_12 = arith.constant dense<0.000000e+00> : vector<8x128xf32>
    %27 = tpu.matmul %26, %3, %cst_12 {dimension_numbers = #tpu.dot_dimension_numbers<[1], [0], [0], [1], [0, 0, 1, 1], [], []>} : vector<8x64xf32>, vector<64x128xf32>, vector<8x128xf32> -> vector<8x128xf32>
    %28 = vector.broadcast %4 : vector<1x128xf32> to vector<8x128xf32>
    %29 = arith.addf %27, %28 : vector<8x128xf32>
    %30 = arith.negf %29 : vector<8x128xf32>
    %31 = math.exp %30 : vector<8x128xf32>
    %cst_13 = arith.constant 1.000000e+00 : f32
    %32 = vector.broadcast %cst_13 : f32 to vector<8x128xf32>
    %33 = arith.addf %32, %31 : vector<8x128xf32>
    %34 = arith.divf %32, %33 : vector<8x128xf32>
    %35 = vector.extract_strided_slice %34 {offsets = [0, 0], sizes = [8, 32], strides = [1, 1]} : vector<8x128xf32> to vector<8x32xf32>
    %36 = vector.extract_strided_slice %34 {offsets = [0, 32], sizes = [8, 32], strides = [1, 1]} : vector<8x128xf32> to vector<8x32xf32>
    %37 = vector.extract_strided_slice %34 {offsets = [0, 96], sizes = [8, 32], strides = [1, 1]} : vector<8x128xf32> to vector<8x32xf32>
    %38 = vector.extract_strided_slice %29 {offsets = [0, 64], sizes = [8, 32], strides = [1, 1]} : vector<8x128xf32> to vector<8x32xf32>
    %39 = math.tanh %38 : vector<8x32xf32>
    %40 = arith.mulf %36, %0 : vector<8x32xf32>
    %41 = arith.mulf %35, %39 : vector<8x32xf32>
    %42 = arith.addf %40, %41 : vector<8x32xf32>
    %43 = math.tanh %42 : vector<8x32xf32>
    %44 = arith.mulf %37, %43 : vector<8x32xf32>
    %c0_14 = arith.constant 0 : index
    %c0_15 = arith.constant 0 : index
    %c0_16 = arith.constant 0 : index
    %45 = vector.load %arg15[%c0_14, %c0_15, %c0_16] : memref<8x8x32xf32, #tpu.memory_space<vmem>>, vector<8x1x32xf32>
    %46 = vector.shape_cast %45 : vector<8x1x32xf32> to vector<8x32xf32>
    %47 = vector.shape_cast %44 : vector<8x32xf32> to vector<8x1x32xf32>
    tpu.vector_store %arg15[%c0_14, %c0_15, %c0_16], %47 {strides = array<i32>} : memref<8x8x32xf32, #tpu.memory_space<vmem>>, vector<8x1x32xf32>,
    %c1 = arith.constant 1 : index
    %c0_17 = arith.constant 0 : index
    %c0_18 = arith.constant 0 : index
    %48 = vector.load %arg1[%c1, %c0_17, %c0_18] : memref<8x8x8xf32, #tpu.memory_space<vmem>>, vector<1x8x8xf32>
    %49 = vector.shape_cast %48 : vector<1x8x8xf32> to vector<8x8xf32>
    %50 = tpu.concatenate %49, %25 in 1 : vector<8x8xf32>, vector<8x32xf32> -> vector<8x40xf32>
    %cst_19 = arith.constant dense<0.000000e+00> : vector<8x128xf32>
    %51 = tpu.matmul %50, %1, %cst_19 {dimension_numbers = #tpu.dot_dimension_numbers<[1], [0], [0], [1], [0, 0, 1, 1], [], []>} : vector<8x40xf32>, vector<40x128xf32>, vector<8x128xf32> -> vector<8x128xf32>
    %52 = vector.broadcast %2 : vector<1x128xf32> to vector<8x128xf32>
    %53 = arith.addf %51, %52 : vector<8x128xf32>
    %54 = arith.negf %53 : vector<8x128xf32>
    %55 = math.exp %54 : vector<8x128xf32>
    %cst_20 = arith.constant 1.000000e+00 : f32
    %56 = vector.broadcast %cst_20 : f32 to vector<8x128xf32>
    %57 = arith.addf %56, %55 : vector<8x128xf32>
    %58 = arith.divf %56, %57 : vector<8x128xf32>
    %59 = vector.extract_strided_slice %58 {offsets = [0, 0], sizes = [8, 32], strides = [1, 1]} : vector<8x128xf32> to vector<8x32xf32>
    %60 = vector.extract_strided_slice %58 {offsets = [0, 32], sizes = [8, 32], strides = [1, 1]} : vector<8x128xf32> to vector<8x32xf32>
    %61 = vector.extract_strided_slice %58 {offsets = [0, 96], sizes = [8, 32], strides = [1, 1]} : vector<8x128xf32> to vector<8x32xf32>
    %62 = vector.extract_strided_slice %53 {offsets = [0, 64], sizes = [8, 32], strides = [1, 1]} : vector<8x128xf32> to vector<8x32xf32>
    %63 = math.tanh %62 : vector<8x32xf32>
    %64 = arith.mulf %60, %23 : vector<8x32xf32>
    %65 = arith.mulf %59, %63 : vector<8x32xf32>
    %66 = arith.addf %64, %65 : vector<8x32xf32>
    %67 = math.tanh %66 : vector<8x32xf32>
    %68 = arith.mulf %61, %67 : vector<8x32xf32>
    %69 = tpu.concatenate %68, %44 in 1 : vector<8x32xf32>, vector<8x32xf32> -> vector<8x64xf32>
    %cst_21 = arith.constant dense<0.000000e+00> : vector<8x128xf32>
    %70 = tpu.matmul %69, %3, %cst_21 {dimension_numbers = #tpu.dot_dimension_numbers<[1], [0], [0], [1], [0, 0, 1, 1], [], []>} : vector<8x64xf32>, vector<64x128xf32>, vector<8x128xf32> -> vector<8x128xf32>
    %71 = vector.broadcast %4 : vector<1x128xf32> to vector<8x128xf32>
    %72 = arith.addf %70, %71 : vector<8x128xf32>
    %73 = arith.negf %72 : vector<8x128xf32>
    %74 = math.exp %73 : vector<8x128xf32>
    %cst_22 = arith.constant 1.000000e+00 : f32
    %75 = vector.broadcast %cst_22 : f32 to vector<8x128xf32>
    %76 = arith.addf %75, %74 : vector<8x128xf32>
    %77 = arith.divf %75, %76 : vector<8x128xf32>
    %78 = vector.extract_strided_slice %77 {offsets = [0, 0], sizes = [8, 32], strides = [1, 1]} : vector<8x128xf32> to vector<8x32xf32>
    %79 = vector.extract_strided_slice %77 {offsets = [0, 32], sizes = [8, 32], strides = [1, 1]} : vector<8x128xf32> to vector<8x32xf32>
    %80 = vector.extract_strided_slice %77 {offsets = [0, 96], sizes = [8, 32], strides = [1, 1]} : vector<8x128xf32> to vector<8x32xf32>
    %81 = vector.extract_strided_slice %72 {offsets = [0, 64], sizes = [8, 32], strides = [1, 1]} : vector<8x128xf32> to vector<8x32xf32>
    %82 = math.tanh %81 : vector<8x32xf32>
    %83 = arith.mulf %79, %42 : vector<8x32xf32>
    %84 = arith.mulf %78, %82 : vector<8x32xf32>
    %85 = arith.addf %83, %84 : vector<8x32xf32>
    %86 = math.tanh %85 : vector<8x32xf32>
    %87 = arith.mulf %80, %86 : vector<8x32xf32>
    %c0_23 = arith.constant 0 : index
    %c1_24 = arith.constant 1 : index
    %c0_25 = arith.constant 0 : index
    %88 = vector.load %arg15[%c0_23, %c1_24, %c0_25] : memref<8x8x32xf32, #tpu.memory_space<vmem>>, vector<8x1x32xf32>
    %89 = vector.shape_cast %88 : vector<8x1x32xf32> to vector<8x32xf32>
    %90 = vector.shape_cast %87 : vector<8x32xf32> to vector<8x1x32xf32>
    tpu.vector_store %arg15[%c0_23, %c1_24, %c0_25], %90 {strides = array<i32>} : memref<8x8x32xf32, #tpu.memory_space<vmem>>, vector<8x1x32xf32>,
    %c2 = arith.constant 2 : index
    %c0_26 = arith.constant 0 : index
    %c0_27 = arith.constant 0 : index
    %91 = vector.load %arg1[%c2, %c0_26, %c0_27] : memref<8x8x8xf32, #tpu.memory_space<vmem>>, vector<1x8x8xf32>
    %92 = vector.shape_cast %91 : vector<1x8x8xf32> to vector<8x8xf32>
    %93 = tpu.concatenate %92, %68 in 1 : vector<8x8xf32>, vector<8x32xf32> -> vector<8x40xf32>
    %cst_28 = arith.constant dense<0.000000e+00> : vector<8x128xf32>
    %94 = tpu.matmul %93, %1, %cst_28 {dimension_numbers = #tpu.dot_dimension_numbers<[1], [0], [0], [1], [0, 0, 1, 1], [], []>} : vector<8x40xf32>, vector<40x128xf32>, vector<8x128xf32> -> vector<8x128xf32>
    %95 = vector.broadcast %2 : vector<1x128xf32> to vector<8x128xf32>
    %96 = arith.addf %94, %95 : vector<8x128xf32>
    %97 = arith.negf %96 : vector<8x128xf32>
    %98 = math.exp %97 : vector<8x128xf32>
    %cst_29 = arith.constant 1.000000e+00 : f32
    %99 = vector.broadcast %cst_29 : f32 to vector<8x128xf32>
    %100 = arith.addf %99, %98 : vector<8x128xf32>
    %101 = arith.divf %99, %100 : vector<8x128xf32>
    %102 = vector.extract_strided_slice %101 {offsets = [0, 0], sizes = [8, 32], strides = [1, 1]} : vector<8x128xf32> to vector<8x32xf32>
    %103 = vector.extract_strided_slice %101 {offsets = [0, 32], sizes = [8, 32], strides = [1, 1]} : vector<8x128xf32> to vector<8x32xf32>
    %104 = vector.extract_strided_slice %101 {offsets = [0, 96], sizes = [8, 32], strides = [1, 1]} : vector<8x128xf32> to vector<8x32xf32>
    %105 = vector.extract_strided_slice %96 {offsets = [0, 64], sizes = [8, 32], strides = [1, 1]} : vector<8x128xf32> to vector<8x32xf32>
    %106 = math.tanh %105 : vector<8x32xf32>
    %107 = arith.mulf %103, %66 : vector<8x32xf32>
    %108 = arith.mulf %102, %106 : vector<8x32xf32>
    %109 = arith.addf %107, %108 : vector<8x32xf32>
    %110 = math.tanh %109 : vector<8x32xf32>
    %111 = arith.mulf %104, %110 : vector<8x32xf32>
    %112 = tpu.concatenate %111, %87 in 1 : vector<8x32xf32>, vector<8x32xf32> -> vector<8x64xf32>
    %cst_30 = arith.constant dense<0.000000e+00> : vector<8x128xf32>
    %113 = tpu.matmul %112, %3, %cst_30 {dimension_numbers = #tpu.dot_dimension_numbers<[1], [0], [0], [1], [0, 0, 1, 1], [], []>} : vector<8x64xf32>, vector<64x128xf32>, vector<8x128xf32> -> vector<8x128xf32>
    %114 = vector.broadcast %4 : vector<1x128xf32> to vector<8x128xf32>
    %115 = arith.addf %113, %114 : vector<8x128xf32>
    %116 = arith.negf %115 : vector<8x128xf32>
    %117 = math.exp %116 : vector<8x128xf32>
    %cst_31 = arith.constant 1.000000e+00 : f32
    %118 = vector.broadcast %cst_31 : f32 to vector<8x128xf32>
    %119 = arith.addf %118, %117 : vector<8x128xf32>
    %120 = arith.divf %118, %119 : vector<8x128xf32>
    %121 = vector.extract_strided_slice %120 {offsets = [0, 0], sizes = [8, 32], strides = [1, 1]} : vector<8x128xf32> to vector<8x32xf32>
    %122 = vector.extract_strided_slice %120 {offsets = [0, 32], sizes = [8, 32], strides = [1, 1]} : vector<8x128xf32> to vector<8x32xf32>
    %123 = vector.extract_strided_slice %120 {offsets = [0, 96], sizes = [8, 32], strides = [1, 1]} : vector<8x128xf32> to vector<8x32xf32>
    %124 = vector.extract_strided_slice %115 {offsets = [0, 64], sizes = [8, 32], strides = [1, 1]} : vector<8x128xf32> to vector<8x32xf32>
    %125 = math.tanh %124 : vector<8x32xf32>
    %126 = arith.mulf %122, %85 : vector<8x32xf32>
    %127 = arith.mulf %121, %125 : vector<8x32xf32>
    %128 = arith.addf %126, %127 : vector<8x32xf32>
    %129 = math.tanh %128 : vector<8x32xf32>
    %130 = arith.mulf %123, %129 : vector<8x32xf32>
    %c0_32 = arith.constant 0 : index
    %c2_33 = arith.constant 2 : index
    %c0_34 = arith.constant 0 : index
    %131 = vector.load %arg15[%c0_32, %c2_33, %c0_34] : memref<8x8x32xf32, #tpu.memory_space<vmem>>, vector<8x1x32xf32>
    %132 = vector.shape_cast %131 : vector<8x1x32xf32> to vector<8x32xf32>
    %133 = vector.shape_cast %130 : vector<8x32xf32> to vector<8x1x32xf32>
    tpu.vector_store %arg15[%c0_32, %c2_33, %c0_34], %133 {strides = array<i32>} : memref<8x8x32xf32, #tpu.memory_space<vmem>>, vector<8x1x32xf32>,
    %c3 = arith.constant 3 : index
    %c0_35 = arith.constant 0 : index
    %c0_36 = arith.constant 0 : index
    %134 = vector.load %arg1[%c3, %c0_35, %c0_36] : memref<8x8x8xf32, #tpu.memory_space<vmem>>, vector<1x8x8xf32>
    %135 = vector.shape_cast %134 : vector<1x8x8xf32> to vector<8x8xf32>
    %136 = tpu.concatenate %135, %111 in 1 : vector<8x8xf32>, vector<8x32xf32> -> vector<8x40xf32>
    %cst_37 = arith.constant dense<0.000000e+00> : vector<8x128xf32>
    %137 = tpu.matmul %136, %1, %cst_37 {dimension_numbers = #tpu.dot_dimension_numbers<[1], [0], [0], [1], [0, 0, 1, 1], [], []>} : vector<8x40xf32>, vector<40x128xf32>, vector<8x128xf32> -> vector<8x128xf32>
    %138 = vector.broadcast %2 : vector<1x128xf32> to vector<8x128xf32>
    %139 = arith.addf %137, %138 : vector<8x128xf32>
    %140 = arith.negf %139 : vector<8x128xf32>
    %141 = math.exp %140 : vector<8x128xf32>
    %cst_38 = arith.constant 1.000000e+00 : f32
    %142 = vector.broadcast %cst_38 : f32 to vector<8x128xf32>
    %143 = arith.addf %142, %141 : vector<8x128xf32>
    %144 = arith.divf %142, %143 : vector<8x128xf32>
    %145 = vector.extract_strided_slice %144 {offsets = [0, 0], sizes = [8, 32], strides = [1, 1]} : vector<8x128xf32> to vector<8x32xf32>
    %146 = vector.extract_strided_slice %144 {offsets = [0, 32], sizes = [8, 32], strides = [1, 1]} : vector<8x128xf32> to vector<8x32xf32>
    %147 = vector.extract_strided_slice %144 {offsets = [0, 96], sizes = [8, 32], strides = [1, 1]} : vector<8x128xf32> to vector<8x32xf32>
    %148 = vector.extract_strided_slice %139 {offsets = [0, 64], sizes = [8, 32], strides = [1, 1]} : vector<8x128xf32> to vector<8x32xf32>
    %149 = math.tanh %148 : vector<8x32xf32>
    %150 = arith.mulf %146, %109 : vector<8x32xf32>
    %151 = arith.mulf %145, %149 : vector<8x32xf32>
    %152 = arith.addf %150, %151 : vector<8x32xf32>
    %153 = math.tanh %152 : vector<8x32xf32>
    %154 = arith.mulf %147, %153 : vector<8x32xf32>
    %155 = tpu.concatenate %154, %130 in 1 : vector<8x32xf32>, vector<8x32xf32> -> vector<8x64xf32>
    %cst_39 = arith.constant dense<0.000000e+00> : vector<8x128xf32>
    %156 = tpu.matmul %155, %3, %cst_39 {dimension_numbers = #tpu.dot_dimension_numbers<[1], [0], [0], [1], [0, 0, 1, 1], [], []>} : vector<8x64xf32>, vector<64x128xf32>, vector<8x128xf32> -> vector<8x128xf32>
    %157 = vector.broadcast %4 : vector<1x128xf32> to vector<8x128xf32>
    %158 = arith.addf %156, %157 : vector<8x128xf32>
    %159 = arith.negf %158 : vector<8x128xf32>
    %160 = math.exp %159 : vector<8x128xf32>
    %cst_40 = arith.constant 1.000000e+00 : f32
    %161 = vector.broadcast %cst_40 : f32 to vector<8x128xf32>
    %162 = arith.addf %161, %160 : vector<8x128xf32>
    %163 = arith.divf %161, %162 : vector<8x128xf32>
    %164 = vector.extract_strided_slice %163 {offsets = [0, 0], sizes = [8, 32], strides = [1, 1]} : vector<8x128xf32> to vector<8x32xf32>
    %165 = vector.extract_strided_slice %163 {offsets = [0, 32], sizes = [8, 32], strides = [1, 1]} : vector<8x128xf32> to vector<8x32xf32>
    %166 = vector.extract_strided_slice %163 {offsets = [0, 96], sizes = [8, 32], strides = [1, 1]} : vector<8x128xf32> to vector<8x32xf32>
    %167 = vector.extract_strided_slice %158 {offsets = [0, 64], sizes = [8, 32], strides = [1, 1]} : vector<8x128xf32> to vector<8x32xf32>
    %168 = math.tanh %167 : vector<8x32xf32>
    %169 = arith.mulf %165, %128 : vector<8x32xf32>
    %170 = arith.mulf %164, %168 : vector<8x32xf32>
    %171 = arith.addf %169, %170 : vector<8x32xf32>
    %172 = math.tanh %171 : vector<8x32xf32>
    %173 = arith.mulf %166, %172 : vector<8x32xf32>
    %c0_41 = arith.constant 0 : index
    %c3_42 = arith.constant 3 : index
    %c0_43 = arith.constant 0 : index
    %174 = vector.load %arg15[%c0_41, %c3_42, %c0_43] : memref<8x8x32xf32, #tpu.memory_space<vmem>>, vector<8x1x32xf32>
    %175 = vector.shape_cast %174 : vector<8x1x32xf32> to vector<8x32xf32>
    %176 = vector.shape_cast %173 : vector<8x32xf32> to vector<8x1x32xf32>
    tpu.vector_store %arg15[%c0_41, %c3_42, %c0_43], %176 {strides = array<i32>} : memref<8x8x32xf32, #tpu.memory_space<vmem>>, vector<8x1x32xf32>,
    %c4 = arith.constant 4 : index
    %c0_44 = arith.constant 0 : index
    %c0_45 = arith.constant 0 : index
    %177 = vector.load %arg1[%c4, %c0_44, %c0_45] : memref<8x8x8xf32, #tpu.memory_space<vmem>>, vector<1x8x8xf32>
    %178 = vector.shape_cast %177 : vector<1x8x8xf32> to vector<8x8xf32>
    %179 = tpu.concatenate %178, %154 in 1 : vector<8x8xf32>, vector<8x32xf32> -> vector<8x40xf32>
    %cst_46 = arith.constant dense<0.000000e+00> : vector<8x128xf32>
    %180 = tpu.matmul %179, %1, %cst_46 {dimension_numbers = #tpu.dot_dimension_numbers<[1], [0], [0], [1], [0, 0, 1, 1], [], []>} : vector<8x40xf32>, vector<40x128xf32>, vector<8x128xf32> -> vector<8x128xf32>
    %181 = vector.broadcast %2 : vector<1x128xf32> to vector<8x128xf32>
    %182 = arith.addf %180, %181 : vector<8x128xf32>
    %183 = arith.negf %182 : vector<8x128xf32>
    %184 = math.exp %183 : vector<8x128xf32>
    %cst_47 = arith.constant 1.000000e+00 : f32
    %185 = vector.broadcast %cst_47 : f32 to vector<8x128xf32>
    %186 = arith.addf %185, %184 : vector<8x128xf32>
    %187 = arith.divf %185, %186 : vector<8x128xf32>
    %188 = vector.extract_strided_slice %187 {offsets = [0, 0], sizes = [8, 32], strides = [1, 1]} : vector<8x128xf32> to vector<8x32xf32>
    %189 = vector.extract_strided_slice %187 {offsets = [0, 32], sizes = [8, 32], strides = [1, 1]} : vector<8x128xf32> to vector<8x32xf32>
    %190 = vector.extract_strided_slice %187 {offsets = [0, 96], sizes = [8, 32], strides = [1, 1]} : vector<8x128xf32> to vector<8x32xf32>
    %191 = vector.extract_strided_slice %182 {offsets = [0, 64], sizes = [8, 32], strides = [1, 1]} : vector<8x128xf32> to vector<8x32xf32>
    %192 = math.tanh %191 : vector<8x32xf32>
    %193 = arith.mulf %189, %152 : vector<8x32xf32>
    %194 = arith.mulf %188, %192 : vector<8x32xf32>
    %195 = arith.addf %193, %194 : vector<8x32xf32>
    %196 = math.tanh %195 : vector<8x32xf32>
    %197 = arith.mulf %190, %196 : vector<8x32xf32>
    %198 = tpu.concatenate %197, %173 in 1 : vector<8x32xf32>, vector<8x32xf32> -> vector<8x64xf32>
    %cst_48 = arith.constant dense<0.000000e+00> : vector<8x128xf32>
    %199 = tpu.matmul %198, %3, %cst_48 {dimension_numbers = #tpu.dot_dimension_numbers<[1], [0], [0], [1], [0, 0, 1, 1], [], []>} : vector<8x64xf32>, vector<64x128xf32>, vector<8x128xf32> -> vector<8x128xf32>
    %200 = vector.broadcast %4 : vector<1x128xf32> to vector<8x128xf32>
    %201 = arith.addf %199, %200 : vector<8x128xf32>
    %202 = arith.negf %201 : vector<8x128xf32>
    %203 = math.exp %202 : vector<8x128xf32>
    %cst_49 = arith.constant 1.000000e+00 : f32
    %204 = vector.broadcast %cst_49 : f32 to vector<8x128xf32>
    %205 = arith.addf %204, %203 : vector<8x128xf32>
    %206 = arith.divf %204, %205 : vector<8x128xf32>
    %207 = vector.extract_strided_slice %206 {offsets = [0, 0], sizes = [8, 32], strides = [1, 1]} : vector<8x128xf32> to vector<8x32xf32>
    %208 = vector.extract_strided_slice %206 {offsets = [0, 32], sizes = [8, 32], strides = [1, 1]} : vector<8x128xf32> to vector<8x32xf32>
    %209 = vector.extract_strided_slice %206 {offsets = [0, 96], sizes = [8, 32], strides = [1, 1]} : vector<8x128xf32> to vector<8x32xf32>
    %210 = vector.extract_strided_slice %201 {offsets = [0, 64], sizes = [8, 32], strides = [1, 1]} : vector<8x128xf32> to vector<8x32xf32>
    %211 = math.tanh %210 : vector<8x32xf32>
    %212 = arith.mulf %208, %171 : vector<8x32xf32>
    %213 = arith.mulf %207, %211 : vector<8x32xf32>
    %214 = arith.addf %212, %213 : vector<8x32xf32>
    %215 = math.tanh %214 : vector<8x32xf32>
    %216 = arith.mulf %209, %215 : vector<8x32xf32>
    %c0_50 = arith.constant 0 : index
    %c4_51 = arith.constant 4 : index
    %c0_52 = arith.constant 0 : index
    %217 = vector.load %arg15[%c0_50, %c4_51, %c0_52] : memref<8x8x32xf32, #tpu.memory_space<vmem>>, vector<8x1x32xf32>
    %218 = vector.shape_cast %217 : vector<8x1x32xf32> to vector<8x32xf32>
    %219 = vector.shape_cast %216 : vector<8x32xf32> to vector<8x1x32xf32>
    tpu.vector_store %arg15[%c0_50, %c4_51, %c0_52], %219 {strides = array<i32>} : memref<8x8x32xf32, #tpu.memory_space<vmem>>, vector<8x1x32xf32>,
    %c5 = arith.constant 5 : index
    %c0_53 = arith.constant 0 : index
    %c0_54 = arith.constant 0 : index
    %220 = vector.load %arg1[%c5, %c0_53, %c0_54] : memref<8x8x8xf32, #tpu.memory_space<vmem>>, vector<1x8x8xf32>
    %221 = vector.shape_cast %220 : vector<1x8x8xf32> to vector<8x8xf32>
    %222 = tpu.concatenate %221, %197 in 1 : vector<8x8xf32>, vector<8x32xf32> -> vector<8x40xf32>
    %cst_55 = arith.constant dense<0.000000e+00> : vector<8x128xf32>
    %223 = tpu.matmul %222, %1, %cst_55 {dimension_numbers = #tpu.dot_dimension_numbers<[1], [0], [0], [1], [0, 0, 1, 1], [], []>} : vector<8x40xf32>, vector<40x128xf32>, vector<8x128xf32> -> vector<8x128xf32>
    %224 = vector.broadcast %2 : vector<1x128xf32> to vector<8x128xf32>
    %225 = arith.addf %223, %224 : vector<8x128xf32>
    %226 = arith.negf %225 : vector<8x128xf32>
    %227 = math.exp %226 : vector<8x128xf32>
    %cst_56 = arith.constant 1.000000e+00 : f32
    %228 = vector.broadcast %cst_56 : f32 to vector<8x128xf32>
    %229 = arith.addf %228, %227 : vector<8x128xf32>
    %230 = arith.divf %228, %229 : vector<8x128xf32>
    %231 = vector.extract_strided_slice %230 {offsets = [0, 0], sizes = [8, 32], strides = [1, 1]} : vector<8x128xf32> to vector<8x32xf32>
    %232 = vector.extract_strided_slice %230 {offsets = [0, 32], sizes = [8, 32], strides = [1, 1]} : vector<8x128xf32> to vector<8x32xf32>
    %233 = vector.extract_strided_slice %230 {offsets = [0, 96], sizes = [8, 32], strides = [1, 1]} : vector<8x128xf32> to vector<8x32xf32>
    %234 = vector.extract_strided_slice %225 {offsets = [0, 64], sizes = [8, 32], strides = [1, 1]} : vector<8x128xf32> to vector<8x32xf32>
    %235 = math.tanh %234 : vector<8x32xf32>
    %236 = arith.mulf %232, %195 : vector<8x32xf32>
    %237 = arith.mulf %231, %235 : vector<8x32xf32>
    %238 = arith.addf %236, %237 : vector<8x32xf32>
    %239 = math.tanh %238 : vector<8x32xf32>
    %240 = arith.mulf %233, %239 : vector<8x32xf32>
    %241 = tpu.concatenate %240, %216 in 1 : vector<8x32xf32>, vector<8x32xf32> -> vector<8x64xf32>
    %cst_57 = arith.constant dense<0.000000e+00> : vector<8x128xf32>
    %242 = tpu.matmul %241, %3, %cst_57 {dimension_numbers = #tpu.dot_dimension_numbers<[1], [0], [0], [1], [0, 0, 1, 1], [], []>} : vector<8x64xf32>, vector<64x128xf32>, vector<8x128xf32> -> vector<8x128xf32>
    %243 = vector.broadcast %4 : vector<1x128xf32> to vector<8x128xf32>
    %244 = arith.addf %242, %243 : vector<8x128xf32>
    %245 = arith.negf %244 : vector<8x128xf32>
    %246 = math.exp %245 : vector<8x128xf32>
    %cst_58 = arith.constant 1.000000e+00 : f32
    %247 = vector.broadcast %cst_58 : f32 to vector<8x128xf32>
    %248 = arith.addf %247, %246 : vector<8x128xf32>
    %249 = arith.divf %247, %248 : vector<8x128xf32>
    %250 = vector.extract_strided_slice %249 {offsets = [0, 0], sizes = [8, 32], strides = [1, 1]} : vector<8x128xf32> to vector<8x32xf32>
    %251 = vector.extract_strided_slice %249 {offsets = [0, 32], sizes = [8, 32], strides = [1, 1]} : vector<8x128xf32> to vector<8x32xf32>
    %252 = vector.extract_strided_slice %249 {offsets = [0, 96], sizes = [8, 32], strides = [1, 1]} : vector<8x128xf32> to vector<8x32xf32>
    %253 = vector.extract_strided_slice %244 {offsets = [0, 64], sizes = [8, 32], strides = [1, 1]} : vector<8x128xf32> to vector<8x32xf32>
    %254 = math.tanh %253 : vector<8x32xf32>
    %255 = arith.mulf %251, %214 : vector<8x32xf32>
    %256 = arith.mulf %250, %254 : vector<8x32xf32>
    %257 = arith.addf %255, %256 : vector<8x32xf32>
    %258 = math.tanh %257 : vector<8x32xf32>
    %259 = arith.mulf %252, %258 : vector<8x32xf32>
    %c0_59 = arith.constant 0 : index
    %c5_60 = arith.constant 5 : index
    %c0_61 = arith.constant 0 : index
    %260 = vector.load %arg15[%c0_59, %c5_60, %c0_61] : memref<8x8x32xf32, #tpu.memory_space<vmem>>, vector<8x1x32xf32>
    %261 = vector.shape_cast %260 : vector<8x1x32xf32> to vector<8x32xf32>
    %262 = vector.shape_cast %259 : vector<8x32xf32> to vector<8x1x32xf32>
    tpu.vector_store %arg15[%c0_59, %c5_60, %c0_61], %262 {strides = array<i32>} : memref<8x8x32xf32, #tpu.memory_space<vmem>>, vector<8x1x32xf32>,
    %c6 = arith.constant 6 : index
    %c0_62 = arith.constant 0 : index
    %c0_63 = arith.constant 0 : index
    %263 = vector.load %arg1[%c6, %c0_62, %c0_63] : memref<8x8x8xf32, #tpu.memory_space<vmem>>, vector<1x8x8xf32>
    %264 = vector.shape_cast %263 : vector<1x8x8xf32> to vector<8x8xf32>
    %265 = tpu.concatenate %264, %240 in 1 : vector<8x8xf32>, vector<8x32xf32> -> vector<8x40xf32>
    %cst_64 = arith.constant dense<0.000000e+00> : vector<8x128xf32>
    %266 = tpu.matmul %265, %1, %cst_64 {dimension_numbers = #tpu.dot_dimension_numbers<[1], [0], [0], [1], [0, 0, 1, 1], [], []>} : vector<8x40xf32>, vector<40x128xf32>, vector<8x128xf32> -> vector<8x128xf32>
    %267 = vector.broadcast %2 : vector<1x128xf32> to vector<8x128xf32>
    %268 = arith.addf %266, %267 : vector<8x128xf32>
    %269 = arith.negf %268 : vector<8x128xf32>
    %270 = math.exp %269 : vector<8x128xf32>
    %cst_65 = arith.constant 1.000000e+00 : f32
    %271 = vector.broadcast %cst_65 : f32 to vector<8x128xf32>
    %272 = arith.addf %271, %270 : vector<8x128xf32>
    %273 = arith.divf %271, %272 : vector<8x128xf32>
    %274 = vector.extract_strided_slice %273 {offsets = [0, 0], sizes = [8, 32], strides = [1, 1]} : vector<8x128xf32> to vector<8x32xf32>
    %275 = vector.extract_strided_slice %273 {offsets = [0, 32], sizes = [8, 32], strides = [1, 1]} : vector<8x128xf32> to vector<8x32xf32>
    %276 = vector.extract_strided_slice %273 {offsets = [0, 96], sizes = [8, 32], strides = [1, 1]} : vector<8x128xf32> to vector<8x32xf32>
    %277 = vector.extract_strided_slice %268 {offsets = [0, 64], sizes = [8, 32], strides = [1, 1]} : vector<8x128xf32> to vector<8x32xf32>
    %278 = math.tanh %277 : vector<8x32xf32>
    %279 = arith.mulf %275, %238 : vector<8x32xf32>
    %280 = arith.mulf %274, %278 : vector<8x32xf32>
    %281 = arith.addf %279, %280 : vector<8x32xf32>
    %282 = math.tanh %281 : vector<8x32xf32>
    %283 = arith.mulf %276, %282 : vector<8x32xf32>
    %284 = tpu.concatenate %283, %259 in 1 : vector<8x32xf32>, vector<8x32xf32> -> vector<8x64xf32>
    %cst_66 = arith.constant dense<0.000000e+00> : vector<8x128xf32>
    %285 = tpu.matmul %284, %3, %cst_66 {dimension_numbers = #tpu.dot_dimension_numbers<[1], [0], [0], [1], [0, 0, 1, 1], [], []>} : vector<8x64xf32>, vector<64x128xf32>, vector<8x128xf32> -> vector<8x128xf32>
    %286 = vector.broadcast %4 : vector<1x128xf32> to vector<8x128xf32>
    %287 = arith.addf %285, %286 : vector<8x128xf32>
    %288 = arith.negf %287 : vector<8x128xf32>
    %289 = math.exp %288 : vector<8x128xf32>
    %cst_67 = arith.constant 1.000000e+00 : f32
    %290 = vector.broadcast %cst_67 : f32 to vector<8x128xf32>
    %291 = arith.addf %290, %289 : vector<8x128xf32>
    %292 = arith.divf %290, %291 : vector<8x128xf32>
    %293 = vector.extract_strided_slice %292 {offsets = [0, 0], sizes = [8, 32], strides = [1, 1]} : vector<8x128xf32> to vector<8x32xf32>
    %294 = vector.extract_strided_slice %292 {offsets = [0, 32], sizes = [8, 32], strides = [1, 1]} : vector<8x128xf32> to vector<8x32xf32>
    %295 = vector.extract_strided_slice %292 {offsets = [0, 96], sizes = [8, 32], strides = [1, 1]} : vector<8x128xf32> to vector<8x32xf32>
    %296 = vector.extract_strided_slice %287 {offsets = [0, 64], sizes = [8, 32], strides = [1, 1]} : vector<8x128xf32> to vector<8x32xf32>
    %297 = math.tanh %296 : vector<8x32xf32>
    %298 = arith.mulf %294, %257 : vector<8x32xf32>
    %299 = arith.mulf %293, %297 : vector<8x32xf32>
    %300 = arith.addf %298, %299 : vector<8x32xf32>
    %301 = math.tanh %300 : vector<8x32xf32>
    %302 = arith.mulf %295, %301 : vector<8x32xf32>
    %c0_68 = arith.constant 0 : index
    %c6_69 = arith.constant 6 : index
    %c0_70 = arith.constant 0 : index
    %303 = vector.load %arg15[%c0_68, %c6_69, %c0_70] : memref<8x8x32xf32, #tpu.memory_space<vmem>>, vector<8x1x32xf32>
    %304 = vector.shape_cast %303 : vector<8x1x32xf32> to vector<8x32xf32>
    %305 = vector.shape_cast %302 : vector<8x32xf32> to vector<8x1x32xf32>
    tpu.vector_store %arg15[%c0_68, %c6_69, %c0_70], %305 {strides = array<i32>} : memref<8x8x32xf32, #tpu.memory_space<vmem>>, vector<8x1x32xf32>,
    %c7 = arith.constant 7 : index
    %c0_71 = arith.constant 0 : index
    %c0_72 = arith.constant 0 : index
    %306 = vector.load %arg1[%c7, %c0_71, %c0_72] : memref<8x8x8xf32, #tpu.memory_space<vmem>>, vector<1x8x8xf32>
    %307 = vector.shape_cast %306 : vector<1x8x8xf32> to vector<8x8xf32>
    %308 = tpu.concatenate %307, %283 in 1 : vector<8x8xf32>, vector<8x32xf32> -> vector<8x40xf32>
    %cst_73 = arith.constant dense<0.000000e+00> : vector<8x128xf32>
    %309 = tpu.matmul %308, %1, %cst_73 {dimension_numbers = #tpu.dot_dimension_numbers<[1], [0], [0], [1], [0, 0, 1, 1], [], []>} : vector<8x40xf32>, vector<40x128xf32>, vector<8x128xf32> -> vector<8x128xf32>
    %310 = vector.broadcast %2 : vector<1x128xf32> to vector<8x128xf32>
    %311 = arith.addf %309, %310 : vector<8x128xf32>
    %312 = arith.negf %311 : vector<8x128xf32>
    %313 = math.exp %312 : vector<8x128xf32>
    %cst_74 = arith.constant 1.000000e+00 : f32
    %314 = vector.broadcast %cst_74 : f32 to vector<8x128xf32>
    %315 = arith.addf %314, %313 : vector<8x128xf32>
    %316 = arith.divf %314, %315 : vector<8x128xf32>
    %317 = vector.extract_strided_slice %316 {offsets = [0, 0], sizes = [8, 32], strides = [1, 1]} : vector<8x128xf32> to vector<8x32xf32>
    %318 = vector.extract_strided_slice %316 {offsets = [0, 32], sizes = [8, 32], strides = [1, 1]} : vector<8x128xf32> to vector<8x32xf32>
    %319 = vector.extract_strided_slice %316 {offsets = [0, 96], sizes = [8, 32], strides = [1, 1]} : vector<8x128xf32> to vector<8x32xf32>
    %320 = vector.extract_strided_slice %311 {offsets = [0, 64], sizes = [8, 32], strides = [1, 1]} : vector<8x128xf32> to vector<8x32xf32>
    %321 = math.tanh %320 : vector<8x32xf32>
    %322 = arith.mulf %318, %281 : vector<8x32xf32>
    %323 = arith.mulf %317, %321 : vector<8x32xf32>
    %324 = arith.addf %322, %323 : vector<8x32xf32>
    %325 = math.tanh %324 : vector<8x32xf32>
    %326 = arith.mulf %319, %325 : vector<8x32xf32>
    %327 = tpu.concatenate %326, %302 in 1 : vector<8x32xf32>, vector<8x32xf32> -> vector<8x64xf32>
    %cst_75 = arith.constant dense<0.000000e+00> : vector<8x128xf32>
    %328 = tpu.matmul %327, %3, %cst_75 {dimension_numbers = #tpu.dot_dimension_numbers<[1], [0], [0], [1], [0, 0, 1, 1], [], []>} : vector<8x64xf32>, vector<64x128xf32>, vector<8x128xf32> -> vector<8x128xf32>
    %329 = vector.broadcast %4 : vector<1x128xf32> to vector<8x128xf32>
    %330 = arith.addf %328, %329 : vector<8x128xf32>
    %331 = arith.negf %330 : vector<8x128xf32>
    %332 = math.exp %331 : vector<8x128xf32>
    %cst_76 = arith.constant 1.000000e+00 : f32
    %333 = vector.broadcast %cst_76 : f32 to vector<8x128xf32>
    %334 = arith.addf %333, %332 : vector<8x128xf32>
    %335 = arith.divf %333, %334 : vector<8x128xf32>
    %336 = vector.extract_strided_slice %335 {offsets = [0, 0], sizes = [8, 32], strides = [1, 1]} : vector<8x128xf32> to vector<8x32xf32>
    %337 = vector.extract_strided_slice %335 {offsets = [0, 32], sizes = [8, 32], strides = [1, 1]} : vector<8x128xf32> to vector<8x32xf32>
    %338 = vector.extract_strided_slice %335 {offsets = [0, 96], sizes = [8, 32], strides = [1, 1]} : vector<8x128xf32> to vector<8x32xf32>
    %339 = vector.extract_strided_slice %330 {offsets = [0, 64], sizes = [8, 32], strides = [1, 1]} : vector<8x128xf32> to vector<8x32xf32>
    %340 = math.tanh %339 : vector<8x32xf32>
    %341 = arith.mulf %337, %300 : vector<8x32xf32>
    %342 = arith.mulf %336, %340 : vector<8x32xf32>
    %343 = arith.addf %341, %342 : vector<8x32xf32>
    %344 = math.tanh %343 : vector<8x32xf32>
    %345 = arith.mulf %338, %344 : vector<8x32xf32>
    %c0_77 = arith.constant 0 : index
    %c7_78 = arith.constant 7 : index
    %c0_79 = arith.constant 0 : index
    %346 = vector.load %arg15[%c0_77, %c7_78, %c0_79] : memref<8x8x32xf32, #tpu.memory_space<vmem>>, vector<8x1x32xf32>
    %347 = vector.shape_cast %346 : vector<8x1x32xf32> to vector<8x32xf32>
    %348 = vector.shape_cast %345 : vector<8x32xf32> to vector<8x1x32xf32>
    tpu.vector_store %arg15[%c0_77, %c7_78, %c0_79], %348 {strides = array<i32>} : memref<8x8x32xf32, #tpu.memory_space<vmem>>, vector<8x1x32xf32>,
    %cst_80 = arith.constant 0.000000e+00 : f32
    %349 = vector.broadcast %cst_80 : f32 to vector<8x8xf32>
    %c0_81 = arith.constant 0 : index
    %c0_82 = arith.constant 0 : index
    %c0_83 = arith.constant 0 : index
    %350 = vector.load %arg13[%c0_81, %c0_82, %c0_83] : memref<6x8x8xf32, #tpu.memory_space<vmem>>, vector<1x8x8xf32>
    %351 = vector.shape_cast %350 : vector<1x8x8xf32> to vector<8x8xf32>
    %352 = vector.shape_cast %349 : vector<8x8xf32> to vector<1x8x8xf32>
    tpu.vector_store %arg13[%c0_81, %c0_82, %c0_83], %352 {strides = array<i32>} : memref<6x8x8xf32, #tpu.memory_space<vmem>>, vector<1x8x8xf32>,
    %cst_84 = arith.constant 0.000000e+00 : f32
    %353 = vector.broadcast %cst_84 : f32 to vector<8x8xf32>
    %c0_85 = arith.constant 0 : index
    %c0_86 = arith.constant 0 : index
    %c0_87 = arith.constant 0 : index
    %354 = vector.load %arg14[%c0_85, %c0_86, %c0_87] : memref<6x8x8xf32, #tpu.memory_space<vmem>>, vector<1x8x8xf32>
    %355 = vector.shape_cast %354 : vector<1x8x8xf32> to vector<8x8xf32>
    %356 = vector.shape_cast %353 : vector<8x8xf32> to vector<1x8x8xf32>
    tpu.vector_store %arg14[%c0_85, %c0_86, %c0_87], %356 {strides = array<i32>} : memref<6x8x8xf32, #tpu.memory_space<vmem>>, vector<1x8x8xf32>,
    %c0_88 = arith.constant 0 : index
    %c0_89 = arith.constant 0 : index
    %c0_90 = arith.constant 0 : index
    %357 = vector.load %arg15[%c0_88, %c0_89, %c0_90] : memref<8x8x32xf32, #tpu.memory_space<vmem>>, vector<8x8x32xf32>
    %c0_91 = arith.constant 0 : index
    %c0_92 = arith.constant 0 : index
    %358 = vector.load %arg7[%c0_91, %c0_92] : memref<72x128xf32, #tpu.memory_space<vmem>>, vector<72x128xf32>
    %c0_93 = arith.constant 0 : index
    %c0_94 = arith.constant 0 : index
    %359 = vector.load %arg8[%c0_93, %c0_94] : memref<1x128xf32, #tpu.memory_space<vmem>>, vector<1x128xf32>
    %c0_95 = arith.constant 0 : index
    %c0_96 = arith.constant 0 : index
    %360 = vector.load %arg9[%c0_95, %c0_96] : memref<64x128xf32, #tpu.memory_space<vmem>>, vector<64x128xf32>
    %c0_97 = arith.constant 0 : index
    %c0_98 = arith.constant 0 : index
    %361 = vector.load %arg10[%c0_97, %c0_98] : memref<1x128xf32, #tpu.memory_space<vmem>>, vector<1x128xf32>
    %c0_99 = arith.constant 0 : index
    %c0_100 = arith.constant 0 : index
    %362 = vector.load %arg11[%c0_99, %c0_100] : memref<64x8xf32, #tpu.memory_space<vmem>>, vector<64x8xf32>
    %c0_101 = arith.constant 0 : index
    %c0_102 = arith.constant 0 : index
    %363 = vector.load %arg12[%c0_101, %c0_102] : memref<1x8xf32, #tpu.memory_space<vmem>>, vector<1x8xf32>
    %c0_103 = arith.constant 0 : index
    %c0_104 = arith.constant 0 : index
    %c0_105 = arith.constant 0 : index
    %364 = vector.load %arg2[%c0_103, %c0_104, %c0_105] : memref<6x8x8xf32, #tpu.memory_space<vmem>>, vector<1x8x8xf32>
    %365 = vector.shape_cast %364 : vector<1x8x8xf32> to vector<8x8xf32>
    %366 = vector.shape_cast %345 : vector<8x32xf32> to vector<8x1x32xf32>
    %367 = vector.broadcast %366 : vector<8x1x32xf32> to vector<8x8x32xf32>
    %368 = arith.mulf %357, %367 : vector<8x8x32xf32>
    %cst_106 = arith.constant dense<0.000000e+00> : vector<8x8xf32>
    %369 = vector.multi_reduction <add>, %368, %cst_106 [2] : vector<8x8x32xf32> to vector<8x8xf32>
    %cst_107 = arith.constant dense<0xFF800000> : vector<8xf32>
    %370 = vector.multi_reduction <maximumf>, %369, %cst_107 [1] : vector<8x8xf32> to vector<8xf32>
    %371 = vector.shape_cast %370 : vector<8xf32> to vector<8x1xf32>
    %372 = vector.broadcast %371 : vector<8x1xf32> to vector<8x8xf32>
    %373 = arith.subf %369, %372 : vector<8x8xf32>
    %374 = math.exp %373 : vector<8x8xf32>
    %cst_108 = arith.constant dense<0.000000e+00> : vector<8xf32>
    %375 = vector.multi_reduction <add>, %374, %cst_108 [1] : vector<8x8xf32> to vector<8xf32>
    %376 = vector.shape_cast %375 : vector<8xf32> to vector<8x1xf32>
    %377 = vector.broadcast %376 : vector<8x1xf32> to vector<8x8xf32>
    %378 = arith.divf %374, %377 : vector<8x8xf32>
    %379 = vector.shape_cast %378 : vector<8x8xf32> to vector<8x8x1xf32>
    %380 = vector.broadcast %379 : vector<8x8x1xf32> to vector<8x8x32xf32>
    %381 = arith.mulf %380, %357 : vector<8x8x32xf32>
    %cst_109 = arith.constant dense<0.000000e+00> : vector<8x32xf32>
    %382 = vector.multi_reduction <add>, %381, %cst_109 [1] : vector<8x8x32xf32> to vector<8x32xf32>
    %c1_110 = arith.constant 1 : index
    %c0_111 = arith.constant 0 : index
    %c0_112 = arith.constant 0 : index
    %383 = vector.load %arg14[%c1_110, %c0_111, %c0_112] : memref<6x8x8xf32, #tpu.memory_space<vmem>>, vector<1x8x8xf32>
    %384 = vector.shape_cast %383 : vector<1x8x8xf32> to vector<8x8xf32>
    %385 = vector.shape_cast %378 : vector<8x8xf32> to vector<1x8x8xf32>
    tpu.vector_store %arg14[%c1_110, %c0_111, %c0_112], %385 {strides = array<i32>} : memref<6x8x8xf32, #tpu.memory_space<vmem>>, vector<1x8x8xf32>,
    %386 = tpu.concatenate %365, %382, %326 in 1 : vector<8x8xf32>, vector<8x32xf32>, vector<8x32xf32> -> vector<8x72xf32>
    %cst_113 = arith.constant dense<0.000000e+00> : vector<8x128xf32>
    %387 = tpu.matmul %386, %358, %cst_113 {dimension_numbers = #tpu.dot_dimension_numbers<[1], [0], [0], [1], [0, 0, 1, 1], [], []>} : vector<8x72xf32>, vector<72x128xf32>, vector<8x128xf32> -> vector<8x128xf32>
    %388 = vector.broadcast %359 : vector<1x128xf32> to vector<8x128xf32>
    %389 = arith.addf %387, %388 : vector<8x128xf32>
    %390 = arith.negf %389 : vector<8x128xf32>
    %391 = math.exp %390 : vector<8x128xf32>
    %cst_114 = arith.constant 1.000000e+00 : f32
    %392 = vector.broadcast %cst_114 : f32 to vector<8x128xf32>
    %393 = arith.addf %392, %391 : vector<8x128xf32>
    %394 = arith.divf %392, %393 : vector<8x128xf32>
    %395 = vector.extract_strided_slice %394 {offsets = [0, 0], sizes = [8, 32], strides = [1, 1]} : vector<8x128xf32> to vector<8x32xf32>
    %396 = vector.extract_strided_slice %394 {offsets = [0, 32], sizes = [8, 32], strides = [1, 1]} : vector<8x128xf32> to vector<8x32xf32>
    %397 = vector.extract_strided_slice %394 {offsets = [0, 96], sizes = [8, 32], strides = [1, 1]} : vector<8x128xf32> to vector<8x32xf32>
    %398 = vector.extract_strided_slice %389 {offsets = [0, 64], sizes = [8, 32], strides = [1, 1]} : vector<8x128xf32> to vector<8x32xf32>
    %399 = math.tanh %398 : vector<8x32xf32>
    %400 = arith.mulf %396, %324 : vector<8x32xf32>
    %401 = arith.mulf %395, %399 : vector<8x32xf32>
    %402 = arith.addf %400, %401 : vector<8x32xf32>
    %403 = math.tanh %402 : vector<8x32xf32>
    %404 = arith.mulf %397, %403 : vector<8x32xf32>
    %405 = tpu.concatenate %404, %345 in 1 : vector<8x32xf32>, vector<8x32xf32> -> vector<8x64xf32>
    %cst_115 = arith.constant dense<0.000000e+00> : vector<8x128xf32>
    %406 = tpu.matmul %405, %360, %cst_115 {dimension_numbers = #tpu.dot_dimension_numbers<[1], [0], [0], [1], [0, 0, 1, 1], [], []>} : vector<8x64xf32>, vector<64x128xf32>, vector<8x128xf32> -> vector<8x128xf32>
    %407 = vector.broadcast %361 : vector<1x128xf32> to vector<8x128xf32>
    %408 = arith.addf %406, %407 : vector<8x128xf32>
    %409 = arith.negf %408 : vector<8x128xf32>
    %410 = math.exp %409 : vector<8x128xf32>
    %cst_116 = arith.constant 1.000000e+00 : f32
    %411 = vector.broadcast %cst_116 : f32 to vector<8x128xf32>
    %412 = arith.addf %411, %410 : vector<8x128xf32>
    %413 = arith.divf %411, %412 : vector<8x128xf32>
    %414 = vector.extract_strided_slice %413 {offsets = [0, 0], sizes = [8, 32], strides = [1, 1]} : vector<8x128xf32> to vector<8x32xf32>
    %415 = vector.extract_strided_slice %413 {offsets = [0, 32], sizes = [8, 32], strides = [1, 1]} : vector<8x128xf32> to vector<8x32xf32>
    %416 = vector.extract_strided_slice %413 {offsets = [0, 96], sizes = [8, 32], strides = [1, 1]} : vector<8x128xf32> to vector<8x32xf32>
    %417 = vector.extract_strided_slice %408 {offsets = [0, 64], sizes = [8, 32], strides = [1, 1]} : vector<8x128xf32> to vector<8x32xf32>
    %418 = math.tanh %417 : vector<8x32xf32>
    %419 = arith.mulf %415, %343 : vector<8x32xf32>
    %420 = arith.mulf %414, %418 : vector<8x32xf32>
    %421 = arith.addf %419, %420 : vector<8x32xf32>
    %422 = math.tanh %421 : vector<8x32xf32>
    %423 = arith.mulf %416, %422 : vector<8x32xf32>
    %424 = tpu.concatenate %423, %382 in 1 : vector<8x32xf32>, vector<8x32xf32> -> vector<8x64xf32>
    %cst_117 = arith.constant dense<0.000000e+00> : vector<8x8xf32>
    %425 = tpu.matmul %424, %362, %cst_117 {dimension_numbers = #tpu.dot_dimension_numbers<[1], [0], [0], [1], [0, 0, 1, 1], [], []>} : vector<8x64xf32>, vector<64x8xf32>, vector<8x8xf32> -> vector<8x8xf32>
    %426 = vector.broadcast %363 : vector<1x8xf32> to vector<8x8xf32>
    %427 = arith.addf %425, %426 : vector<8x8xf32>
    %c1_118 = arith.constant 1 : index
    %c0_119 = arith.constant 0 : index
    %c0_120 = arith.constant 0 : index
    %428 = vector.load %arg13[%c1_118, %c0_119, %c0_120] : memref<6x8x8xf32, #tpu.memory_space<vmem>>, vector<1x8x8xf32>
    %429 = vector.shape_cast %428 : vector<1x8x8xf32> to vector<8x8xf32>
    %430 = vector.shape_cast %427 : vector<8x8xf32> to vector<1x8x8xf32>
    tpu.vector_store %arg13[%c1_118, %c0_119, %c0_120], %430 {strides = array<i32>} : memref<6x8x8xf32, #tpu.memory_space<vmem>>, vector<1x8x8xf32>,
    %c1_121 = arith.constant 1 : index
    %431 = memref.load %arg0[%c1_121] : memref<6xf32, #tpu.memory_space<smem>>
    %c1_122 = arith.constant 1 : index
    %c0_123 = arith.constant 0 : index
    %c0_124 = arith.constant 0 : index
    %432 = vector.load %arg2[%c1_122, %c0_123, %c0_124] : memref<6x8x8xf32, #tpu.memory_space<vmem>>, vector<1x8x8xf32>
    %433 = vector.shape_cast %432 : vector<1x8x8xf32> to vector<8x8xf32>
    %434 = vector.broadcast %431 : f32 to vector<8x8xf32>
    %435 = arith.mulf %434, %433 : vector<8x8xf32>
    %cst_125 = arith.constant 1.000000e+00 : f32
    %436 = arith.subf %cst_125, %431 : f32
    %437 = vector.broadcast %436 : f32 to vector<8x8xf32>
    %438 = arith.mulf %437, %427 : vector<8x8xf32>
    %439 = arith.addf %435, %438 : vector<8x8xf32>
    %440 = vector.shape_cast %423 : vector<8x32xf32> to vector<8x1x32xf32>
    %441 = vector.broadcast %440 : vector<8x1x32xf32> to vector<8x8x32xf32>
    %442 = arith.mulf %357, %441 : vector<8x8x32xf32>
    %cst_126 = arith.constant dense<0.000000e+00> : vector<8x8xf32>
    %443 = vector.multi_reduction <add>, %442, %cst_126 [2] : vector<8x8x32xf32> to vector<8x8xf32>
    %cst_127 = arith.constant dense<0xFF800000> : vector<8xf32>
    %444 = vector.multi_reduction <maximumf>, %443, %cst_127 [1] : vector<8x8xf32> to vector<8xf32>
    %445 = vector.shape_cast %444 : vector<8xf32> to vector<8x1xf32>
    %446 = vector.broadcast %445 : vector<8x1xf32> to vector<8x8xf32>
    %447 = arith.subf %443, %446 : vector<8x8xf32>
    %448 = math.exp %447 : vector<8x8xf32>
    %cst_128 = arith.constant dense<0.000000e+00> : vector<8xf32>
    %449 = vector.multi_reduction <add>, %448, %cst_128 [1] : vector<8x8xf32> to vector<8xf32>
    %450 = vector.shape_cast %449 : vector<8xf32> to vector<8x1xf32>
    %451 = vector.broadcast %450 : vector<8x1xf32> to vector<8x8xf32>
    %452 = arith.divf %448, %451 : vector<8x8xf32>
    %453 = vector.shape_cast %452 : vector<8x8xf32> to vector<8x8x1xf32>
    %454 = vector.broadcast %453 : vector<8x8x1xf32> to vector<8x8x32xf32>
    %455 = arith.mulf %454, %357 : vector<8x8x32xf32>
    %cst_129 = arith.constant dense<0.000000e+00> : vector<8x32xf32>
    %456 = vector.multi_reduction <add>, %455, %cst_129 [1] : vector<8x8x32xf32> to vector<8x32xf32>
    %c2_130 = arith.constant 2 : index
    %c0_131 = arith.constant 0 : index
    %c0_132 = arith.constant 0 : index
    %457 = vector.load %arg14[%c2_130, %c0_131, %c0_132] : memref<6x8x8xf32, #tpu.memory_space<vmem>>, vector<1x8x8xf32>
    %458 = vector.shape_cast %457 : vector<1x8x8xf32> to vector<8x8xf32>
    %459 = vector.shape_cast %452 : vector<8x8xf32> to vector<1x8x8xf32>
    tpu.vector_store %arg14[%c2_130, %c0_131, %c0_132], %459 {strides = array<i32>} : memref<6x8x8xf32, #tpu.memory_space<vmem>>, vector<1x8x8xf32>,
    %460 = tpu.concatenate %439, %456, %404 in 1 : vector<8x8xf32>, vector<8x32xf32>, vector<8x32xf32> -> vector<8x72xf32>
    %cst_133 = arith.constant dense<0.000000e+00> : vector<8x128xf32>
    %461 = tpu.matmul %460, %358, %cst_133 {dimension_numbers = #tpu.dot_dimension_numbers<[1], [0], [0], [1], [0, 0, 1, 1], [], []>} : vector<8x72xf32>, vector<72x128xf32>, vector<8x128xf32> -> vector<8x128xf32>
    %462 = vector.broadcast %359 : vector<1x128xf32> to vector<8x128xf32>
    %463 = arith.addf %461, %462 : vector<8x128xf32>
    %464 = arith.negf %463 : vector<8x128xf32>
    %465 = math.exp %464 : vector<8x128xf32>
    %cst_134 = arith.constant 1.000000e+00 : f32
    %466 = vector.broadcast %cst_134 : f32 to vector<8x128xf32>
    %467 = arith.addf %466, %465 : vector<8x128xf32>
    %468 = arith.divf %466, %467 : vector<8x128xf32>
    %469 = vector.extract_strided_slice %468 {offsets = [0, 0], sizes = [8, 32], strides = [1, 1]} : vector<8x128xf32> to vector<8x32xf32>
    %470 = vector.extract_strided_slice %468 {offsets = [0, 32], sizes = [8, 32], strides = [1, 1]} : vector<8x128xf32> to vector<8x32xf32>
    %471 = vector.extract_strided_slice %468 {offsets = [0, 96], sizes = [8, 32], strides = [1, 1]} : vector<8x128xf32> to vector<8x32xf32>
    %472 = vector.extract_strided_slice %463 {offsets = [0, 64], sizes = [8, 32], strides = [1, 1]} : vector<8x128xf32> to vector<8x32xf32>
    %473 = math.tanh %472 : vector<8x32xf32>
    %474 = arith.mulf %470, %402 : vector<8x32xf32>
    %475 = arith.mulf %469, %473 : vector<8x32xf32>
    %476 = arith.addf %474, %475 : vector<8x32xf32>
    %477 = math.tanh %476 : vector<8x32xf32>
    %478 = arith.mulf %471, %477 : vector<8x32xf32>
    %479 = tpu.concatenate %478, %423 in 1 : vector<8x32xf32>, vector<8x32xf32> -> vector<8x64xf32>
    %cst_135 = arith.constant dense<0.000000e+00> : vector<8x128xf32>
    %480 = tpu.matmul %479, %360, %cst_135 {dimension_numbers = #tpu.dot_dimension_numbers<[1], [0], [0], [1], [0, 0, 1, 1], [], []>} : vector<8x64xf32>, vector<64x128xf32>, vector<8x128xf32> -> vector<8x128xf32>
    %481 = vector.broadcast %361 : vector<1x128xf32> to vector<8x128xf32>
    %482 = arith.addf %480, %481 : vector<8x128xf32>
    %483 = arith.negf %482 : vector<8x128xf32>
    %484 = math.exp %483 : vector<8x128xf32>
    %cst_136 = arith.constant 1.000000e+00 : f32
    %485 = vector.broadcast %cst_136 : f32 to vector<8x128xf32>
    %486 = arith.addf %485, %484 : vector<8x128xf32>
    %487 = arith.divf %485, %486 : vector<8x128xf32>
    %488 = vector.extract_strided_slice %487 {offsets = [0, 0], sizes = [8, 32], strides = [1, 1]} : vector<8x128xf32> to vector<8x32xf32>
    %489 = vector.extract_strided_slice %487 {offsets = [0, 32], sizes = [8, 32], strides = [1, 1]} : vector<8x128xf32> to vector<8x32xf32>
    %490 = vector.extract_strided_slice %487 {offsets = [0, 96], sizes = [8, 32], strides = [1, 1]} : vector<8x128xf32> to vector<8x32xf32>
    %491 = vector.extract_strided_slice %482 {offsets = [0, 64], sizes = [8, 32], strides = [1, 1]} : vector<8x128xf32> to vector<8x32xf32>
    %492 = math.tanh %491 : vector<8x32xf32>
    %493 = arith.mulf %489, %421 : vector<8x32xf32>
    %494 = arith.mulf %488, %492 : vector<8x32xf32>
    %495 = arith.addf %493, %494 : vector<8x32xf32>
    %496 = math.tanh %495 : vector<8x32xf32>
    %497 = arith.mulf %490, %496 : vector<8x32xf32>
    %498 = tpu.concatenate %497, %456 in 1 : vector<8x32xf32>, vector<8x32xf32> -> vector<8x64xf32>
    %cst_137 = arith.constant dense<0.000000e+00> : vector<8x8xf32>
    %499 = tpu.matmul %498, %362, %cst_137 {dimension_numbers = #tpu.dot_dimension_numbers<[1], [0], [0], [1], [0, 0, 1, 1], [], []>} : vector<8x64xf32>, vector<64x8xf32>, vector<8x8xf32> -> vector<8x8xf32>
    %500 = vector.broadcast %363 : vector<1x8xf32> to vector<8x8xf32>
    %501 = arith.addf %499, %500 : vector<8x8xf32>
    %c2_138 = arith.constant 2 : index
    %c0_139 = arith.constant 0 : index
    %c0_140 = arith.constant 0 : index
    %502 = vector.load %arg13[%c2_138, %c0_139, %c0_140] : memref<6x8x8xf32, #tpu.memory_space<vmem>>, vector<1x8x8xf32>
    %503 = vector.shape_cast %502 : vector<1x8x8xf32> to vector<8x8xf32>
    %504 = vector.shape_cast %501 : vector<8x8xf32> to vector<1x8x8xf32>
    tpu.vector_store %arg13[%c2_138, %c0_139, %c0_140], %504 {strides = array<i32>} : memref<6x8x8xf32, #tpu.memory_space<vmem>>, vector<1x8x8xf32>,
    %c2_141 = arith.constant 2 : index
    %505 = memref.load %arg0[%c2_141] : memref<6xf32, #tpu.memory_space<smem>>
    %c2_142 = arith.constant 2 : index
    %c0_143 = arith.constant 0 : index
    %c0_144 = arith.constant 0 : index
    %506 = vector.load %arg2[%c2_142, %c0_143, %c0_144] : memref<6x8x8xf32, #tpu.memory_space<vmem>>, vector<1x8x8xf32>
    %507 = vector.shape_cast %506 : vector<1x8x8xf32> to vector<8x8xf32>
    %508 = vector.broadcast %505 : f32 to vector<8x8xf32>
    %509 = arith.mulf %508, %507 : vector<8x8xf32>
    %cst_145 = arith.constant 1.000000e+00 : f32
    %510 = arith.subf %cst_145, %505 : f32
    %511 = vector.broadcast %510 : f32 to vector<8x8xf32>
    %512 = arith.mulf %511, %501 : vector<8x8xf32>
    %513 = arith.addf %509, %512 : vector<8x8xf32>
    %514 = vector.shape_cast %497 : vector<8x32xf32> to vector<8x1x32xf32>
    %515 = vector.broadcast %514 : vector<8x1x32xf32> to vector<8x8x32xf32>
    %516 = arith.mulf %357, %515 : vector<8x8x32xf32>
    %cst_146 = arith.constant dense<0.000000e+00> : vector<8x8xf32>
    %517 = vector.multi_reduction <add>, %516, %cst_146 [2] : vector<8x8x32xf32> to vector<8x8xf32>
    %cst_147 = arith.constant dense<0xFF800000> : vector<8xf32>
    %518 = vector.multi_reduction <maximumf>, %517, %cst_147 [1] : vector<8x8xf32> to vector<8xf32>
    %519 = vector.shape_cast %518 : vector<8xf32> to vector<8x1xf32>
    %520 = vector.broadcast %519 : vector<8x1xf32> to vector<8x8xf32>
    %521 = arith.subf %517, %520 : vector<8x8xf32>
    %522 = math.exp %521 : vector<8x8xf32>
    %cst_148 = arith.constant dense<0.000000e+00> : vector<8xf32>
    %523 = vector.multi_reduction <add>, %522, %cst_148 [1] : vector<8x8xf32> to vector<8xf32>
    %524 = vector.shape_cast %523 : vector<8xf32> to vector<8x1xf32>
    %525 = vector.broadcast %524 : vector<8x1xf32> to vector<8x8xf32>
    %526 = arith.divf %522, %525 : vector<8x8xf32>
    %527 = vector.shape_cast %526 : vector<8x8xf32> to vector<8x8x1xf32>
    %528 = vector.broadcast %527 : vector<8x8x1xf32> to vector<8x8x32xf32>
    %529 = arith.mulf %528, %357 : vector<8x8x32xf32>
    %cst_149 = arith.constant dense<0.000000e+00> : vector<8x32xf32>
    %530 = vector.multi_reduction <add>, %529, %cst_149 [1] : vector<8x8x32xf32> to vector<8x32xf32>
    %c3_150 = arith.constant 3 : index
    %c0_151 = arith.constant 0 : index
    %c0_152 = arith.constant 0 : index
    %531 = vector.load %arg14[%c3_150, %c0_151, %c0_152] : memref<6x8x8xf32, #tpu.memory_space<vmem>>, vector<1x8x8xf32>
    %532 = vector.shape_cast %531 : vector<1x8x8xf32> to vector<8x8xf32>
    %533 = vector.shape_cast %526 : vector<8x8xf32> to vector<1x8x8xf32>
    tpu.vector_store %arg14[%c3_150, %c0_151, %c0_152], %533 {strides = array<i32>} : memref<6x8x8xf32, #tpu.memory_space<vmem>>, vector<1x8x8xf32>,
    %534 = tpu.concatenate %513, %530, %478 in 1 : vector<8x8xf32>, vector<8x32xf32>, vector<8x32xf32> -> vector<8x72xf32>
    %cst_153 = arith.constant dense<0.000000e+00> : vector<8x128xf32>
    %535 = tpu.matmul %534, %358, %cst_153 {dimension_numbers = #tpu.dot_dimension_numbers<[1], [0], [0], [1], [0, 0, 1, 1], [], []>} : vector<8x72xf32>, vector<72x128xf32>, vector<8x128xf32> -> vector<8x128xf32>
    %536 = vector.broadcast %359 : vector<1x128xf32> to vector<8x128xf32>
    %537 = arith.addf %535, %536 : vector<8x128xf32>
    %538 = arith.negf %537 : vector<8x128xf32>
    %539 = math.exp %538 : vector<8x128xf32>
    %cst_154 = arith.constant 1.000000e+00 : f32
    %540 = vector.broadcast %cst_154 : f32 to vector<8x128xf32>
    %541 = arith.addf %540, %539 : vector<8x128xf32>
    %542 = arith.divf %540, %541 : vector<8x128xf32>
    %543 = vector.extract_strided_slice %542 {offsets = [0, 0], sizes = [8, 32], strides = [1, 1]} : vector<8x128xf32> to vector<8x32xf32>
    %544 = vector.extract_strided_slice %542 {offsets = [0, 32], sizes = [8, 32], strides = [1, 1]} : vector<8x128xf32> to vector<8x32xf32>
    %545 = vector.extract_strided_slice %542 {offsets = [0, 96], sizes = [8, 32], strides = [1, 1]} : vector<8x128xf32> to vector<8x32xf32>
    %546 = vector.extract_strided_slice %537 {offsets = [0, 64], sizes = [8, 32], strides = [1, 1]} : vector<8x128xf32> to vector<8x32xf32>
    %547 = math.tanh %546 : vector<8x32xf32>
    %548 = arith.mulf %544, %476 : vector<8x32xf32>
    %549 = arith.mulf %543, %547 : vector<8x32xf32>
    %550 = arith.addf %548, %549 : vector<8x32xf32>
    %551 = math.tanh %550 : vector<8x32xf32>
    %552 = arith.mulf %545, %551 : vector<8x32xf32>
    %553 = tpu.concatenate %552, %497 in 1 : vector<8x32xf32>, vector<8x32xf32> -> vector<8x64xf32>
    %cst_155 = arith.constant dense<0.000000e+00> : vector<8x128xf32>
    %554 = tpu.matmul %553, %360, %cst_155 {dimension_numbers = #tpu.dot_dimension_numbers<[1], [0], [0], [1], [0, 0, 1, 1], [], []>} : vector<8x64xf32>, vector<64x128xf32>, vector<8x128xf32> -> vector<8x128xf32>
    %555 = vector.broadcast %361 : vector<1x128xf32> to vector<8x128xf32>
    %556 = arith.addf %554, %555 : vector<8x128xf32>
    %557 = arith.negf %556 : vector<8x128xf32>
    %558 = math.exp %557 : vector<8x128xf32>
    %cst_156 = arith.constant 1.000000e+00 : f32
    %559 = vector.broadcast %cst_156 : f32 to vector<8x128xf32>
    %560 = arith.addf %559, %558 : vector<8x128xf32>
    %561 = arith.divf %559, %560 : vector<8x128xf32>
    %562 = vector.extract_strided_slice %561 {offsets = [0, 0], sizes = [8, 32], strides = [1, 1]} : vector<8x128xf32> to vector<8x32xf32>
    %563 = vector.extract_strided_slice %561 {offsets = [0, 32], sizes = [8, 32], strides = [1, 1]} : vector<8x128xf32> to vector<8x32xf32>
    %564 = vector.extract_strided_slice %561 {offsets = [0, 96], sizes = [8, 32], strides = [1, 1]} : vector<8x128xf32> to vector<8x32xf32>
    %565 = vector.extract_strided_slice %556 {offsets = [0, 64], sizes = [8, 32], strides = [1, 1]} : vector<8x128xf32> to vector<8x32xf32>
    %566 = math.tanh %565 : vector<8x32xf32>
    %567 = arith.mulf %563, %495 : vector<8x32xf32>
    %568 = arith.mulf %562, %566 : vector<8x32xf32>
    %569 = arith.addf %567, %568 : vector<8x32xf32>
    %570 = math.tanh %569 : vector<8x32xf32>
    %571 = arith.mulf %564, %570 : vector<8x32xf32>
    %572 = tpu.concatenate %571, %530 in 1 : vector<8x32xf32>, vector<8x32xf32> -> vector<8x64xf32>
    %cst_157 = arith.constant dense<0.000000e+00> : vector<8x8xf32>
    %573 = tpu.matmul %572, %362, %cst_157 {dimension_numbers = #tpu.dot_dimension_numbers<[1], [0], [0], [1], [0, 0, 1, 1], [], []>} : vector<8x64xf32>, vector<64x8xf32>, vector<8x8xf32> -> vector<8x8xf32>
    %574 = vector.broadcast %363 : vector<1x8xf32> to vector<8x8xf32>
    %575 = arith.addf %573, %574 : vector<8x8xf32>
    %c3_158 = arith.constant 3 : index
    %c0_159 = arith.constant 0 : index
    %c0_160 = arith.constant 0 : index
    %576 = vector.load %arg13[%c3_158, %c0_159, %c0_160] : memref<6x8x8xf32, #tpu.memory_space<vmem>>, vector<1x8x8xf32>
    %577 = vector.shape_cast %576 : vector<1x8x8xf32> to vector<8x8xf32>
    %578 = vector.shape_cast %575 : vector<8x8xf32> to vector<1x8x8xf32>
    tpu.vector_store %arg13[%c3_158, %c0_159, %c0_160], %578 {strides = array<i32>} : memref<6x8x8xf32, #tpu.memory_space<vmem>>, vector<1x8x8xf32>,
    %c3_161 = arith.constant 3 : index
    %579 = memref.load %arg0[%c3_161] : memref<6xf32, #tpu.memory_space<smem>>
    %c3_162 = arith.constant 3 : index
    %c0_163 = arith.constant 0 : index
    %c0_164 = arith.constant 0 : index
    %580 = vector.load %arg2[%c3_162, %c0_163, %c0_164] : memref<6x8x8xf32, #tpu.memory_space<vmem>>, vector<1x8x8xf32>
    %581 = vector.shape_cast %580 : vector<1x8x8xf32> to vector<8x8xf32>
    %582 = vector.broadcast %579 : f32 to vector<8x8xf32>
    %583 = arith.mulf %582, %581 : vector<8x8xf32>
    %cst_165 = arith.constant 1.000000e+00 : f32
    %584 = arith.subf %cst_165, %579 : f32
    %585 = vector.broadcast %584 : f32 to vector<8x8xf32>
    %586 = arith.mulf %585, %575 : vector<8x8xf32>
    %587 = arith.addf %583, %586 : vector<8x8xf32>
    %588 = vector.shape_cast %571 : vector<8x32xf32> to vector<8x1x32xf32>
    %589 = vector.broadcast %588 : vector<8x1x32xf32> to vector<8x8x32xf32>
    %590 = arith.mulf %357, %589 : vector<8x8x32xf32>
    %cst_166 = arith.constant dense<0.000000e+00> : vector<8x8xf32>
    %591 = vector.multi_reduction <add>, %590, %cst_166 [2] : vector<8x8x32xf32> to vector<8x8xf32>
    %cst_167 = arith.constant dense<0xFF800000> : vector<8xf32>
    %592 = vector.multi_reduction <maximumf>, %591, %cst_167 [1] : vector<8x8xf32> to vector<8xf32>
    %593 = vector.shape_cast %592 : vector<8xf32> to vector<8x1xf32>
    %594 = vector.broadcast %593 : vector<8x1xf32> to vector<8x8xf32>
    %595 = arith.subf %591, %594 : vector<8x8xf32>
    %596 = math.exp %595 : vector<8x8xf32>
    %cst_168 = arith.constant dense<0.000000e+00> : vector<8xf32>
    %597 = vector.multi_reduction <add>, %596, %cst_168 [1] : vector<8x8xf32> to vector<8xf32>
    %598 = vector.shape_cast %597 : vector<8xf32> to vector<8x1xf32>
    %599 = vector.broadcast %598 : vector<8x1xf32> to vector<8x8xf32>
    %600 = arith.divf %596, %599 : vector<8x8xf32>
    %601 = vector.shape_cast %600 : vector<8x8xf32> to vector<8x8x1xf32>
    %602 = vector.broadcast %601 : vector<8x8x1xf32> to vector<8x8x32xf32>
    %603 = arith.mulf %602, %357 : vector<8x8x32xf32>
    %cst_169 = arith.constant dense<0.000000e+00> : vector<8x32xf32>
    %604 = vector.multi_reduction <add>, %603, %cst_169 [1] : vector<8x8x32xf32> to vector<8x32xf32>
    %c4_170 = arith.constant 4 : index
    %c0_171 = arith.constant 0 : index
    %c0_172 = arith.constant 0 : index
    %605 = vector.load %arg14[%c4_170, %c0_171, %c0_172] : memref<6x8x8xf32, #tpu.memory_space<vmem>>, vector<1x8x8xf32>
    %606 = vector.shape_cast %605 : vector<1x8x8xf32> to vector<8x8xf32>
    %607 = vector.shape_cast %600 : vector<8x8xf32> to vector<1x8x8xf32>
    tpu.vector_store %arg14[%c4_170, %c0_171, %c0_172], %607 {strides = array<i32>} : memref<6x8x8xf32, #tpu.memory_space<vmem>>, vector<1x8x8xf32>,
    %608 = tpu.concatenate %587, %604, %552 in 1 : vector<8x8xf32>, vector<8x32xf32>, vector<8x32xf32> -> vector<8x72xf32>
    %cst_173 = arith.constant dense<0.000000e+00> : vector<8x128xf32>
    %609 = tpu.matmul %608, %358, %cst_173 {dimension_numbers = #tpu.dot_dimension_numbers<[1], [0], [0], [1], [0, 0, 1, 1], [], []>} : vector<8x72xf32>, vector<72x128xf32>, vector<8x128xf32> -> vector<8x128xf32>
    %610 = vector.broadcast %359 : vector<1x128xf32> to vector<8x128xf32>
    %611 = arith.addf %609, %610 : vector<8x128xf32>
    %612 = arith.negf %611 : vector<8x128xf32>
    %613 = math.exp %612 : vector<8x128xf32>
    %cst_174 = arith.constant 1.000000e+00 : f32
    %614 = vector.broadcast %cst_174 : f32 to vector<8x128xf32>
    %615 = arith.addf %614, %613 : vector<8x128xf32>
    %616 = arith.divf %614, %615 : vector<8x128xf32>
    %617 = vector.extract_strided_slice %616 {offsets = [0, 0], sizes = [8, 32], strides = [1, 1]} : vector<8x128xf32> to vector<8x32xf32>
    %618 = vector.extract_strided_slice %616 {offsets = [0, 32], sizes = [8, 32], strides = [1, 1]} : vector<8x128xf32> to vector<8x32xf32>
    %619 = vector.extract_strided_slice %616 {offsets = [0, 96], sizes = [8, 32], strides = [1, 1]} : vector<8x128xf32> to vector<8x32xf32>
    %620 = vector.extract_strided_slice %611 {offsets = [0, 64], sizes = [8, 32], strides = [1, 1]} : vector<8x128xf32> to vector<8x32xf32>
    %621 = math.tanh %620 : vector<8x32xf32>
    %622 = arith.mulf %618, %550 : vector<8x32xf32>
    %623 = arith.mulf %617, %621 : vector<8x32xf32>
    %624 = arith.addf %622, %623 : vector<8x32xf32>
    %625 = math.tanh %624 : vector<8x32xf32>
    %626 = arith.mulf %619, %625 : vector<8x32xf32>
    %627 = tpu.concatenate %626, %571 in 1 : vector<8x32xf32>, vector<8x32xf32> -> vector<8x64xf32>
    %cst_175 = arith.constant dense<0.000000e+00> : vector<8x128xf32>
    %628 = tpu.matmul %627, %360, %cst_175 {dimension_numbers = #tpu.dot_dimension_numbers<[1], [0], [0], [1], [0, 0, 1, 1], [], []>} : vector<8x64xf32>, vector<64x128xf32>, vector<8x128xf32> -> vector<8x128xf32>
    %629 = vector.broadcast %361 : vector<1x128xf32> to vector<8x128xf32>
    %630 = arith.addf %628, %629 : vector<8x128xf32>
    %631 = arith.negf %630 : vector<8x128xf32>
    %632 = math.exp %631 : vector<8x128xf32>
    %cst_176 = arith.constant 1.000000e+00 : f32
    %633 = vector.broadcast %cst_176 : f32 to vector<8x128xf32>
    %634 = arith.addf %633, %632 : vector<8x128xf32>
    %635 = arith.divf %633, %634 : vector<8x128xf32>
    %636 = vector.extract_strided_slice %635 {offsets = [0, 0], sizes = [8, 32], strides = [1, 1]} : vector<8x128xf32> to vector<8x32xf32>
    %637 = vector.extract_strided_slice %635 {offsets = [0, 32], sizes = [8, 32], strides = [1, 1]} : vector<8x128xf32> to vector<8x32xf32>
    %638 = vector.extract_strided_slice %635 {offsets = [0, 96], sizes = [8, 32], strides = [1, 1]} : vector<8x128xf32> to vector<8x32xf32>
    %639 = vector.extract_strided_slice %630 {offsets = [0, 64], sizes = [8, 32], strides = [1, 1]} : vector<8x128xf32> to vector<8x32xf32>
    %640 = math.tanh %639 : vector<8x32xf32>
    %641 = arith.mulf %637, %569 : vector<8x32xf32>
    %642 = arith.mulf %636, %640 : vector<8x32xf32>
    %643 = arith.addf %641, %642 : vector<8x32xf32>
    %644 = math.tanh %643 : vector<8x32xf32>
    %645 = arith.mulf %638, %644 : vector<8x32xf32>
    %646 = tpu.concatenate %645, %604 in 1 : vector<8x32xf32>, vector<8x32xf32> -> vector<8x64xf32>
    %cst_177 = arith.constant dense<0.000000e+00> : vector<8x8xf32>
    %647 = tpu.matmul %646, %362, %cst_177 {dimension_numbers = #tpu.dot_dimension_numbers<[1], [0], [0], [1], [0, 0, 1, 1], [], []>} : vector<8x64xf32>, vector<64x8xf32>, vector<8x8xf32> -> vector<8x8xf32>
    %648 = vector.broadcast %363 : vector<1x8xf32> to vector<8x8xf32>
    %649 = arith.addf %647, %648 : vector<8x8xf32>
    %c4_178 = arith.constant 4 : index
    %c0_179 = arith.constant 0 : index
    %c0_180 = arith.constant 0 : index
    %650 = vector.load %arg13[%c4_178, %c0_179, %c0_180] : memref<6x8x8xf32, #tpu.memory_space<vmem>>, vector<1x8x8xf32>
    %651 = vector.shape_cast %650 : vector<1x8x8xf32> to vector<8x8xf32>
    %652 = vector.shape_cast %649 : vector<8x8xf32> to vector<1x8x8xf32>
    tpu.vector_store %arg13[%c4_178, %c0_179, %c0_180], %652 {strides = array<i32>} : memref<6x8x8xf32, #tpu.memory_space<vmem>>, vector<1x8x8xf32>,
    %c4_181 = arith.constant 4 : index
    %653 = memref.load %arg0[%c4_181] : memref<6xf32, #tpu.memory_space<smem>>
    %c4_182 = arith.constant 4 : index
    %c0_183 = arith.constant 0 : index
    %c0_184 = arith.constant 0 : index
    %654 = vector.load %arg2[%c4_182, %c0_183, %c0_184] : memref<6x8x8xf32, #tpu.memory_space<vmem>>, vector<1x8x8xf32>
    %655 = vector.shape_cast %654 : vector<1x8x8xf32> to vector<8x8xf32>
    %656 = vector.broadcast %653 : f32 to vector<8x8xf32>
    %657 = arith.mulf %656, %655 : vector<8x8xf32>
    %cst_185 = arith.constant 1.000000e+00 : f32
    %658 = arith.subf %cst_185, %653 : f32
    %659 = vector.broadcast %658 : f32 to vector<8x8xf32>
    %660 = arith.mulf %659, %649 : vector<8x8xf32>
    %661 = arith.addf %657, %660 : vector<8x8xf32>
    %662 = vector.shape_cast %645 : vector<8x32xf32> to vector<8x1x32xf32>
    %663 = vector.broadcast %662 : vector<8x1x32xf32> to vector<8x8x32xf32>
    %664 = arith.mulf %357, %663 : vector<8x8x32xf32>
    %cst_186 = arith.constant dense<0.000000e+00> : vector<8x8xf32>
    %665 = vector.multi_reduction <add>, %664, %cst_186 [2] : vector<8x8x32xf32> to vector<8x8xf32>
    %cst_187 = arith.constant dense<0xFF800000> : vector<8xf32>
    %666 = vector.multi_reduction <maximumf>, %665, %cst_187 [1] : vector<8x8xf32> to vector<8xf32>
    %667 = vector.shape_cast %666 : vector<8xf32> to vector<8x1xf32>
    %668 = vector.broadcast %667 : vector<8x1xf32> to vector<8x8xf32>
    %669 = arith.subf %665, %668 : vector<8x8xf32>
    %670 = math.exp %669 : vector<8x8xf32>
    %cst_188 = arith.constant dense<0.000000e+00> : vector<8xf32>
    %671 = vector.multi_reduction <add>, %670, %cst_188 [1] : vector<8x8xf32> to vector<8xf32>
    %672 = vector.shape_cast %671 : vector<8xf32> to vector<8x1xf32>
    %673 = vector.broadcast %672 : vector<8x1xf32> to vector<8x8xf32>
    %674 = arith.divf %670, %673 : vector<8x8xf32>
    %675 = vector.shape_cast %674 : vector<8x8xf32> to vector<8x8x1xf32>
    %676 = vector.broadcast %675 : vector<8x8x1xf32> to vector<8x8x32xf32>
    %677 = arith.mulf %676, %357 : vector<8x8x32xf32>
    %cst_189 = arith.constant dense<0.000000e+00> : vector<8x32xf32>
    %678 = vector.multi_reduction <add>, %677, %cst_189 [1] : vector<8x8x32xf32> to vector<8x32xf32>
    %c5_190 = arith.constant 5 : index
    %c0_191 = arith.constant 0 : index
    %c0_192 = arith.constant 0 : index
    %679 = vector.load %arg14[%c5_190, %c0_191, %c0_192] : memref<6x8x8xf32, #tpu.memory_space<vmem>>, vector<1x8x8xf32>
    %680 = vector.shape_cast %679 : vector<1x8x8xf32> to vector<8x8xf32>
    %681 = vector.shape_cast %674 : vector<8x8xf32> to vector<1x8x8xf32>
    tpu.vector_store %arg14[%c5_190, %c0_191, %c0_192], %681 {strides = array<i32>} : memref<6x8x8xf32, #tpu.memory_space<vmem>>, vector<1x8x8xf32>,
    %682 = tpu.concatenate %661, %678, %626 in 1 : vector<8x8xf32>, vector<8x32xf32>, vector<8x32xf32> -> vector<8x72xf32>
    %cst_193 = arith.constant dense<0.000000e+00> : vector<8x128xf32>
    %683 = tpu.matmul %682, %358, %cst_193 {dimension_numbers = #tpu.dot_dimension_numbers<[1], [0], [0], [1], [0, 0, 1, 1], [], []>} : vector<8x72xf32>, vector<72x128xf32>, vector<8x128xf32> -> vector<8x128xf32>
    %684 = vector.broadcast %359 : vector<1x128xf32> to vector<8x128xf32>
    %685 = arith.addf %683, %684 : vector<8x128xf32>
    %686 = arith.negf %685 : vector<8x128xf32>
    %687 = math.exp %686 : vector<8x128xf32>
    %cst_194 = arith.constant 1.000000e+00 : f32
    %688 = vector.broadcast %cst_194 : f32 to vector<8x128xf32>
    %689 = arith.addf %688, %687 : vector<8x128xf32>
    %690 = arith.divf %688, %689 : vector<8x128xf32>
    %691 = vector.extract_strided_slice %690 {offsets = [0, 0], sizes = [8, 32], strides = [1, 1]} : vector<8x128xf32> to vector<8x32xf32>
    %692 = vector.extract_strided_slice %690 {offsets = [0, 32], sizes = [8, 32], strides = [1, 1]} : vector<8x128xf32> to vector<8x32xf32>
    %693 = vector.extract_strided_slice %690 {offsets = [0, 96], sizes = [8, 32], strides = [1, 1]} : vector<8x128xf32> to vector<8x32xf32>
    %694 = vector.extract_strided_slice %685 {offsets = [0, 64], sizes = [8, 32], strides = [1, 1]} : vector<8x128xf32> to vector<8x32xf32>
    %695 = math.tanh %694 : vector<8x32xf32>
    %696 = arith.mulf %692, %624 : vector<8x32xf32>
    %697 = arith.mulf %691, %695 : vector<8x32xf32>
    %698 = arith.addf %696, %697 : vector<8x32xf32>
    %699 = math.tanh %698 : vector<8x32xf32>
    %700 = arith.mulf %693, %699 : vector<8x32xf32>
    %701 = tpu.concatenate %700, %645 in 1 : vector<8x32xf32>, vector<8x32xf32> -> vector<8x64xf32>
    %cst_195 = arith.constant dense<0.000000e+00> : vector<8x128xf32>
    %702 = tpu.matmul %701, %360, %cst_195 {dimension_numbers = #tpu.dot_dimension_numbers<[1], [0], [0], [1], [0, 0, 1, 1], [], []>} : vector<8x64xf32>, vector<64x128xf32>, vector<8x128xf32> -> vector<8x128xf32>
    %703 = vector.broadcast %361 : vector<1x128xf32> to vector<8x128xf32>
    %704 = arith.addf %702, %703 : vector<8x128xf32>
    %705 = arith.negf %704 : vector<8x128xf32>
    %706 = math.exp %705 : vector<8x128xf32>
    %cst_196 = arith.constant 1.000000e+00 : f32
    %707 = vector.broadcast %cst_196 : f32 to vector<8x128xf32>
    %708 = arith.addf %707, %706 : vector<8x128xf32>
    %709 = arith.divf %707, %708 : vector<8x128xf32>
    %710 = vector.extract_strided_slice %709 {offsets = [0, 0], sizes = [8, 32], strides = [1, 1]} : vector<8x128xf32> to vector<8x32xf32>
    %711 = vector.extract_strided_slice %709 {offsets = [0, 32], sizes = [8, 32], strides = [1, 1]} : vector<8x128xf32> to vector<8x32xf32>
    %712 = vector.extract_strided_slice %709 {offsets = [0, 96], sizes = [8, 32], strides = [1, 1]} : vector<8x128xf32> to vector<8x32xf32>
    %713 = vector.extract_strided_slice %704 {offsets = [0, 64], sizes = [8, 32], strides = [1, 1]} : vector<8x128xf32> to vector<8x32xf32>
    %714 = math.tanh %713 : vector<8x32xf32>
    %715 = arith.mulf %711, %643 : vector<8x32xf32>
    %716 = arith.mulf %710, %714 : vector<8x32xf32>
    %717 = arith.addf %715, %716 : vector<8x32xf32>
    %718 = math.tanh %717 : vector<8x32xf32>
    %719 = arith.mulf %712, %718 : vector<8x32xf32>
    %720 = tpu.concatenate %719, %678 in 1 : vector<8x32xf32>, vector<8x32xf32> -> vector<8x64xf32>
    %cst_197 = arith.constant dense<0.000000e+00> : vector<8x8xf32>
    %721 = tpu.matmul %720, %362, %cst_197 {dimension_numbers = #tpu.dot_dimension_numbers<[1], [0], [0], [1], [0, 0, 1, 1], [], []>} : vector<8x64xf32>, vector<64x8xf32>, vector<8x8xf32> -> vector<8x8xf32>
    %722 = vector.broadcast %363 : vector<1x8xf32> to vector<8x8xf32>
    %723 = arith.addf %721, %722 : vector<8x8xf32>
    %c5_198 = arith.constant 5 : index
    %c0_199 = arith.constant 0 : index
    %c0_200 = arith.constant 0 : index
    %724 = vector.load %arg13[%c5_198, %c0_199, %c0_200] : memref<6x8x8xf32, #tpu.memory_space<vmem>>, vector<1x8x8xf32>
    %725 = vector.shape_cast %724 : vector<1x8x8xf32> to vector<8x8xf32>
    %726 = vector.shape_cast %723 : vector<8x8xf32> to vector<1x8x8xf32>
    tpu.vector_store %arg13[%c5_198, %c0_199, %c0_200], %726 {strides = array<i32>} : memref<6x8x8xf32, #tpu.memory_space<vmem>>, vector<1x8x8xf32>,
    return
  }
}

</mosaic_0001>

<llo_original>
// kernel: _seq2seq_jit.1
$region0: #{_seq2seq_jit.1}
  #allocation0 [shape = 'u32[]', space=smem, size = 0x4, offset = 0x4, fixed_abs, tag = 'smem constant byte address 0x4 - core index']
  #allocation1 [shape = 'u32[144,128]{1,0:T(1,128)}', space=vmem, size = 0x12000, scoped, tag = 'internal scratch']
  #allocation2 [shape = 'f32[8,8,32]{2,1,0:T(8,128)}', space=vmem, size = 0x8000, scoped, tag = 'scratch operand']
  %s0 = inlined_call_operand.vmem [shape: f32[6], index: 0, kind: input, shape index: {}]
  %s1 = inlined_call_operand.vmem [shape: f32[8,8,8], index: 1, kind: input, shape index: {}]
  %s2 = inlined_call_operand.vmem [shape: f32[6,8,8], index: 2, kind: input, shape index: {}]
  %s3 = inlined_call_operand.vmem [shape: f32[40,128], index: 3, kind: input, shape index: {}]
  %s4 = inlined_call_operand.vmem [shape: f32[1,128], index: 4, kind: input, shape index: {}]
  %s5 = inlined_call_operand.vmem [shape: f32[64,128], index: 5, kind: input, shape index: {}]
  %s6 = inlined_call_operand.vmem [shape: f32[1,128], index: 6, kind: input, shape index: {}]
  %s7 = inlined_call_operand.vmem [shape: f32[72,128], index: 7, kind: input, shape index: {}]
  %s8 = inlined_call_operand.hbm [shape: f32[1,128], index: 8, kind: input, shape index: {}]
  %s9 = inlined_call_operand.vmem [shape: f32[64,128], index: 9, kind: input, shape index: {}]
  %s10 = inlined_call_operand.vmem [shape: f32[1,128], index: 10, kind: input, shape index: {}]
  %s11 = inlined_call_operand.vmem [shape: f32[64,8], index: 11, kind: input, shape index: {}]
  %s12 = inlined_call_operand.vmem [shape: f32[1,8], index: 12, kind: input, shape index: {}]
  %s13 = inlined_call_operand.vmem [shape: f32[6,8,8], index: 13, kind: output, shape index: {0}]
  %s14 = inlined_call_operand.vmem [shape: f32[6,8,8], index: 14, kind: output, shape index: {1}]
  %15 = xla_tuple %s13, %s14
  %s16 = sld [smem:[#allocation0]]
  $region78: #{_seq2seq_jit.1} parent=0
    _
  %s18 = ssub.s32 1, %s16
  %s19 = scalar_select 0, %s18, %s16
  $region1: #{_seq2seq_jit.1} parent=0
    #allocation3 [shape = 'u8[512]{0}', space=smem, size = 0x200, scoped, tag = 'input window, operand 0, single buffered']
    #allocation4 [shape = 's32[1]{0}', space=sflag, size = 0x4, scoped, tag = 'scoped memory for _seq2seq_jit.1']
    #allocation5 [shape = 's32[1]{0}', space=sflag, size = 0x4, scoped, tag = 'scoped memory for _seq2seq_jit.1']
    #allocation6 [shape = 'u8[512]{0}', space=vmem, size = 0x400, scoped, tag = 'input window, operand 8, single buffered']
    %20 = vsyncpa [#allocation5], 0
    %21 = vsyncpa [#allocation4], 0
    // Predicated region
    $region2: #{_seq2seq_jit.1} parent=1 // pred_check
      _
    $region3: #{_seq2seq_jit.1} parent=1 // pred_check_branch
      %23 = sbr.rel (0) target = $region5
    $region4: #{_seq2seq_jit.1} parent=1 // pred_region
      %s25 = ssub.s32 16, 16
      %26 = vsyncadd [#allocation5], %s25
      %s28 = sshll.u32 %s0, 4
      %s29 = int_to_ptr.vmem [resolvable:$true] %s28
      %31 = dma.vmem_to_smem %s29, 16, [#allocation3], [#allocation5]
    $region5: #{_seq2seq_jit.1} parent=1 // pred_fallthru
      _
    // Predicated region
    $region6: #{_seq2seq_jit.1} parent=1 // pred_check
      _
    $region7: #{_seq2seq_jit.1} parent=1 // pred_check_branch
      %33 = sbr.rel (0) target = $region9
    $region8: #{_seq2seq_jit.1} parent=1 // pred_region
      _
    $region9: #{_seq2seq_jit.1} parent=1 // pred_fallthru
      _
    // Predicated region
    $region10: #{_seq2seq_jit.1} parent=1 // pred_check
      _
    $region11: #{_seq2seq_jit.1} parent=1 // pred_check_branch
      %35 = sbr.rel (0) target = $region13
    $region12: #{_seq2seq_jit.1} parent=1 // pred_region
      _
    $region13: #{_seq2seq_jit.1} parent=1 // pred_fallthru
      _
    // Predicated region
    $region14: #{_seq2seq_jit.1} parent=1 // pred_check
      _
    $region15: #{_seq2seq_jit.1} parent=1 // pred_check_branch
      %37 = sbr.rel (0) target = $region17
    $region16: #{_seq2seq_jit.1} parent=1 // pred_region
      _
    $region17: #{_seq2seq_jit.1} parent=1 // pred_fallthru
      _
    // Predicated region
    $region18: #{_seq2seq_jit.1} parent=1 // pred_check
      _
    $region19: #{_seq2seq_jit.1} parent=1 // pred_check_branch
      %39 = sbr.rel (0) target = $region21
    $region20: #{_seq2seq_jit.1} parent=1 // pred_region
      _
    $region21: #{_seq2seq_jit.1} parent=1 // pred_fallthru
      _
    // Predicated region
    $region22: #{_seq2seq_jit.1} parent=1 // pred_check
      _
    $region23: #{_seq2seq_jit.1} parent=1 // pred_check_branch
      %41 = sbr.rel (0) target = $region25
    $region24: #{_seq2seq_jit.1} parent=1 // pred_region
      _
    $region25: #{_seq2seq_jit.1} parent=1 // pred_fallthru
      _
    // Predicated region
    $region26: #{_seq2seq_jit.1} parent=1 // pred_check
      _
    $region27: #{_seq2seq_jit.1} parent=1 // pred_check_branch
      %43 = sbr.rel (0) target = $region29
    $region28: #{_seq2seq_jit.1} parent=1 // pred_region
      _
    $region29: #{_seq2seq_jit.1} parent=1 // pred_fallthru
      _
    // Predicated region
    $region30: #{_seq2seq_jit.1} parent=1 // pred_check
      _
    $region31: #{_seq2seq_jit.1} parent=1 // pred_check_branch
      %45 = sbr.rel (0) target = $region33
    $region32: #{_seq2seq_jit.1} parent=1 // pred_region
      _
    $region33: #{_seq2seq_jit.1} parent=1 // pred_fallthru
      _
    // Predicated region
    $region34: #{_seq2seq_jit.1} parent=1 // pred_check
      _
    $region35: #{_seq2seq_jit.1} parent=1 // pred_check_branch
      %47 = sbr.rel (0) target = $region37
    $region36: #{_seq2seq_jit.1} parent=1 // pred_region
      %s49 = ssub.s32 16, 16
      %50 = vsyncadd [#allocation4], %s49
      %s52 = sshll.u32 [#allocation6], 4
      %s53 = int_to_ptr.vmem [resolvable:$true] %s52
      %55 = dma.hbm_to_vmem [thread:$0]  %s8, 16, %s53, [#allocation4]
    $region37: #{_seq2seq_jit.1} parent=1 // pred_fallthru
      _
    // Predicated region
    $region38: #{_seq2seq_jit.1} parent=1 // pred_check
      _
    $region39: #{_seq2seq_jit.1} parent=1 // pred_check_branch
      %57 = sbr.rel (0) target = $region41
    $region40: #{_seq2seq_jit.1} parent=1 // pred_region
      _
    $region41: #{_seq2seq_jit.1} parent=1 // pred_fallthru
      _
    // Predicated region
    $region42: #{_seq2seq_jit.1} parent=1 // pred_check
      _
    $region43: #{_seq2seq_jit.1} parent=1 // pred_check_branch
      %59 = sbr.rel (0) target = $region45
    $region44: #{_seq2seq_jit.1} parent=1 // pred_region
      _
    $region45: #{_seq2seq_jit.1} parent=1 // pred_fallthru
      _
    // Predicated region
    $region46: #{_seq2seq_jit.1} parent=1 // pred_check
      _
    $region47: #{_seq2seq_jit.1} parent=1 // pred_check_branch
      %61 = sbr.rel (0) target = $region49
    $region48: #{_seq2seq_jit.1} parent=1 // pred_region
      _
    $region49: #{_seq2seq_jit.1} parent=1 // pred_fallthru
      _
    // Predicated region
    $region50: #{_seq2seq_jit.1} parent=1 // pred_check
      _
    $region51: #{_seq2seq_jit.1} parent=1 // pred_check_branch
      %63 = sbr.rel (0) target = $region53
    $region52: #{_seq2seq_jit.1} parent=1 // pred_region
      _
    $region53: #{_seq2seq_jit.1} parent=1 // pred_fallthru
      _
    // Predicated region
    $region54: #{_seq2seq_jit.1} parent=1 // pred_check
      _
    $region55: #{_seq2seq_jit.1} parent=1 // pred_check_branch
      %65 = sbr.rel (0) target = $region57
    $region56: #{_seq2seq_jit.1} parent=1 // pred_region
      %66 = dma.done [#allocation5], 16
    $region57: #{_seq2seq_jit.1} parent=1 // pred_fallthru
      _
    // Predicated region
    $region58: #{_seq2seq_jit.1} parent=1 // pred_check
      _
    $region59: #{_seq2seq_jit.1} parent=1 // pred_check_branch
      %68 = sbr.rel (0) target = $region61
    $region60: #{_seq2seq_jit.1} parent=1 // pred_region
      %69 = dma.done [#allocation4], 16
    $region61: #{_seq2seq_jit.1} parent=1 // pred_fallthru
      _
    %70 = sfence
    %v71 = vld [vmem:[%s3] sm:$0xff]
    %v72 = vld [vmem:[%s3 + $0x8] sm:$0xff]
    %v73 = vld [vmem:[%s3 + $0x10] sm:$0xff]
    %v74 = vld [vmem:[%s3 + $0x18] sm:$0xff]
    %v75 = vld [vmem:[%s3 + $0x20] sm:$0xff]
    %v76 = vld [vmem:[%s4] sm:$0x1]
    %v77 = vld [vmem:[%s5] sm:$0xff]
    %v78 = vld [vmem:[%s5 + $0x8] sm:$0xff]
    %v79 = vld [vmem:[%s5 + $0x10] sm:$0xff]
    %v80 = vld [vmem:[%s5 + $0x18] sm:$0xff]
    %v81 = vld [vmem:[%s5 + $0x20] sm:$0xff]
    %v82 = vld [vmem:[%s5 + $0x28] sm:$0xff]
    %v83 = vld [vmem:[%s5 + $0x30] sm:$0xff]
    %v84 = vld [vmem:[%s5 + $0x38] sm:$0xff]
    %v85 = vld [vmem:[%s6] sm:$0x1]
    %v86 = vld [vmem:[%s1] sm:$0xff]
    %vm87 = vcmask 64512
    %v88 = vsel %vm87, %v86, 0.0
    %v90 = vlaneseq
    %v91 = vshrl.u32 %v90, 7
    %v92 = vsub.s32 0, %v91
    %v93 = vrot.slane %v76, %v92
    %vm95 = vcmask 326656
    %v97 = vsel %vm95, %v88, 0
    %99 = vmatprep.subr.mxu0 0.0
    %100 = vmatpush1.msra.mxu0 %v71
    %101 = vmatprep.subr.mxu0 0.0
    %102 = vmatpush1.msra.mxu0 %v72
    %103 = vmatprep.subr.mxu0 0.0
    %104 = vmatpush1.msra.mxu0 %v73
    %105 = vmatprep.subr.mxu0 0.0
    %106 = vmatpush1.msra.mxu0 %v74
    %107 = vmatprep.subr.mxu0 0.0
    %108 = vmatpush1.msra.mxu0 %v75
    %109 = vmatprep.subr.mxu0 0.0
    %110 = vmatpush1.msra.mxu0 0.0
    %111 = vmatprep.subr.mxu0 0.0
    %112 = vmatpush1.msra.mxu0 0.0
    %113 = vmatprep.subr.mxu0 0.0
    %114 = vmatpush1.msra.mxu0 0.0
    %115 = vmatprep.subr.mxu0 0.0
    %116 = vmatpush1.msra.mxu0 0.0
    %117 = vmatprep.subr.mxu0 0.0
    %118 = vmatpush1.msra.mxu0 0.0
    %119 = vmatprep.subr.mxu0 0.0
    %120 = vmatpush1.msra.mxu0 0.0
    %121 = vmatprep.subr.mxu0 0.0
    %122 = vmatpush1.msra.mxu0 0.0
    %123 = vmatprep.subr.mxu0 0.0
    %124 = vmatpush1.msra.mxu0 0.0
    %125 = vmatprep.subr.mxu0 0.0
    %126 = vmatpush1.msra.mxu0 0.0
    %127 = vmatprep.subr.mxu0 0.0
    %128 = vmatpush1.msra.mxu0 0.0
    %129 = vmatprep.subr.mxu0 0.0
    %130 = vmatpush1.msra.mxu0 0.0
    %131 = vmatprep.subr.mxu0 0.0
    %132 = vmatpush1.msra.mxu0 0.0
    %133 = vmatprep.subr.mxu0 0.0
    %134 = vmatpush1.msra.mxu0 0.0
    %135 = vmatprep.subr.mxu0 0.0
    %136 = vmatpush1.msra.mxu0 0.0
    %137 = vmatprep.subr.mxu0 0.0
    %138 = vmatpush1.msra.mxu0 0.0
    %139 = vmatprep.subr.mxu0 0.0
    %140 = vmatpush1.msra.mxu0 0.0
    %141 = vmatprep.subr.mxu0 0.0
    %142 = vmatpush1.msra.mxu0 0.0
    %143 = vmatprep.subr.mxu0 0.0
    %144 = vmatpush1.msra.mxu0 0.0
    %145 = vmatprep.subr.mxu0 0.0
    %146 = vmatpush1.msra.mxu0 0.0
    %147 = vmatprep.subr.mxu0 0.0
    %148 = vmatpush1.msra.mxu0 0.0
    %149 = vmatprep.subr.mxu0 0.0
    %150 = vmatpush1.msra.mxu0 0.0
    %151 = vmatprep.subr.mxu0 0.0
    %152 = vmatpush1.msra.mxu0 0.0
    %153 = vmatprep.subr.mxu0 0.0
    %154 = vmatpush1.msra.mxu0 0.0
    %155 = vmatprep.subr.mxu0 0.0
    %156 = vmatpush1.msra.mxu0 0.0
    %157 = vmatprep.subr.mxu0 0.0
    %158 = vmatpush1.msra.mxu0 0.0
    %159 = vmatprep.subr.mxu0 0.0
    %160 = vmatpush1.msra.mxu0 0.0
    %161 = vmatprep.subr.mxu0 0.0
    %162 = vmatpush1.msra.mxu0 0.0
    %163 = vmatprep.mubr.f32.mxu0 0.0
    %164 = vmatmul.mubr.f32.gmra.mrb[0].mxu0 %v97
    %v165 = vpop.f32.mrb[0].mxu0
    %v166 = vadd.f32 %v93, %v165
    %v167 = vpop.f32.mrb[0].mxu0
    %168 = vdwg.mxu0
    %v169 = vxor.u32 %v166, 2147483648
    %v170 = vmul.f32 %v169, 1.442695
    %v171 = vpow.pop %v170
    %v172 = vadd.f32 %v171, 1.0
    %v173 = vrcp.pop %v172
    %v174 = vmul.f32 1.0, %v173
    %v175 = vtanh.pop %v166
    %v176 = vmul.f32 %v174, 0.0
    %178 = vrot.lane.b32.xlu0 %v175, 64
    %v179 = vpop.permute.xlu0 %178
    %v181 = vmul.f32 %v174, %v179
    %183 = vrot.lane.b32.xlu0 %v181, 32
    %v184 = vpop.permute.xlu0 %183
    %v186 = vadd.f32 %v176, %v184
    %v187 = vtanh.pop %v186
    %189 = vrot.lane.b32.xlu0 %v187, 64
    %v190 = vpop.permute.xlu0 %189
    %v192 = vmul.f32 %v174, %v190
    %194 = vrot.lane.b32.xlu0 %v192, 32
    %v195 = vpop.permute.xlu0 %194
    %vm197 = vcmask 261120
    %v198 = vsel %vm197, %v195, 0.0
    %v200 = vlaneseq
    %v201 = vshrl.u32 %v200, 7
    %v202 = vsub.s32 0, %v201
    %v203 = vrot.slane %v85, %v202
    %vm205 = vcmask 523264
    %v207 = vsel %vm205, %v198, 0
    %209 = vmatprep.subr.mxu0 0.0
    %210 = vmatpush1.msra.mxu0 %v77
    %211 = vmatprep.subr.mxu0 0.0
    %212 = vmatpush1.msra.mxu0 %v78
    %213 = vmatprep.subr.mxu0 0.0
    %214 = vmatpush1.msra.mxu0 %v79
    %215 = vmatprep.subr.mxu0 0.0
    %216 = vmatpush1.msra.mxu0 %v80
    %217 = vmatprep.subr.mxu0 0.0
    %218 = vmatpush1.msra.mxu0 %v81
    %219 = vmatprep.subr.mxu0 0.0
    %220 = vmatpush1.msra.mxu0 %v82
    %221 = vmatprep.subr.mxu0 0.0
    %222 = vmatpush1.msra.mxu0 %v83
    %223 = vmatprep.subr.mxu0 0.0
    %224 = vmatpush1.msra.mxu0 %v84
    %225 = vmatprep.subr.mxu0 0.0
    %226 = vmatpush1.msra.mxu0 0.0
    %227 = vmatprep.subr.mxu0 0.0
    %228 = vmatpush1.msra.mxu0 0.0
    %229 = vmatprep.subr.mxu0 0.0
    %230 = vmatpush1.msra.mxu0 0.0
    %231 = vmatprep.subr.mxu0 0.0
    %232 = vmatpush1.msra.mxu0 0.0
    %233 = vmatprep.subr.mxu0 0.0
    %234 = vmatpush1.msra.mxu0 0.0
    %235 = vmatprep.subr.mxu0 0.0
    %236 = vmatpush1.msra.mxu0 0.0
    %237 = vmatprep.subr.mxu0 0.0
    %238 = vmatpush1.msra.mxu0 0.0
    %239 = vmatprep.subr.mxu0 0.0
    %240 = vmatpush1.msra.mxu0 0.0
    %241 = vmatprep.subr.mxu0 0.0
    %242 = vmatpush1.msra.mxu0 0.0
    %243 = vmatprep.subr.mxu0 0.0
    %244 = vmatpush1.msra.mxu0 0.0
    %245 = vmatprep.subr.mxu0 0.0
    %246 = vmatpush1.msra.mxu0 0.0
    %247 = vmatprep.subr.mxu0 0.0
    %248 = vmatpush1.msra.mxu0 0.0
    %249 = vmatprep.subr.mxu0 0.0
    %250 = vmatpush1.msra.mxu0 0.0
    %251 = vmatprep.subr.mxu0 0.0
    %252 = vmatpush1.msra.mxu0 0.0
    %253 = vmatprep.subr.mxu0 0.0
    %254 = vmatpush1.msra.mxu0 0.0
    %255 = vmatprep.subr.mxu0 0.0
    %256 = vmatpush1.msra.mxu0 0.0
    %257 = vmatprep.subr.mxu0 0.0
    %258 = vmatpush1.msra.mxu0 0.0
    %259 = vmatprep.subr.mxu0 0.0
    %260 = vmatpush1.msra.mxu0 0.0
    %261 = vmatprep.subr.mxu0 0.0
    %262 = vmatpush1.msra.mxu0 0.0
    %263 = vmatprep.subr.mxu0 0.0
    %264 = vmatpush1.msra.mxu0 0.0
    %265 = vmatprep.subr.mxu0 0.0
    %266 = vmatpush1.msra.mxu0 0.0
    %267 = vmatprep.subr.mxu0 0.0
    %268 = vmatpush1.msra.mxu0 0.0
    %269 = vmatprep.subr.mxu0 0.0
    %270 = vmatpush1.msra.mxu0 0.0
    %271 = vmatprep.subr.mxu0 0.0
    %272 = vmatpush1.msra.mxu0 0.0
    %273 = vmatprep.mubr.f32.mxu0 0.0
    %274 = vmatmul.mubr.f32.gmra.mrb[0].mxu0 %v207
    %v275 = vpop.f32.mrb[0].mxu0
    %v276 = vadd.f32 %v203, %v275
    %v277 = vpop.f32.mrb[0].mxu0
    %278 = vdwg.mxu0
    %v279 = vxor.u32 %v276, 2147483648
    %v280 = vmul.f32 %v279, 1.442695
    %v281 = vpow.pop %v280
    %v282 = vadd.f32 %v281, 1.0
    %v283 = vrcp.pop %v282
    %v284 = vmul.f32 1.0, %v283
    %v285 = vtanh.pop %v276
    %v286 = vmul.f32 %v284, 0.0
    %288 = vrot.lane.b32.xlu0 %v285, 64
    %v289 = vpop.permute.xlu0 %288
    %v291 = vmul.f32 %v284, %v289
    %293 = vrot.lane.b32.xlu0 %v291, 32
    %v294 = vpop.permute.xlu0 %293
    %v296 = vadd.f32 %v286, %v294
    %v297 = vtanh.pop %v296
    %299 = vrot.lane.b32.xlu0 %v297, 64
    %v300 = vpop.permute.xlu0 %299
    %v302 = vmul.f32 %v284, %v300
    %v304 = vcombine.high %v302, %v302
    %v306 = vunpack.c.l.s4 1966171168
    %v307 = vunpack.c.0.s8 %v306
    %v308 = vlaneseq
    %v309 = vshrl.u32 %v308, 7
    %v310 = vsub.s32 %v307, %v309
    %v311 = vrot.slane %v302, %v310
    %v313 = vunpack.c.l.s4 1966171168
    %v314 = vunpack.c.0.s8 %v313
    %v315 = vlaneseq
    %v316 = vshrl.u32 %v315, 7
    %v317 = vsub.s32 %v314, %v316
    %v318 = vrot.slane %v304, %v317
    %v319 = vcombine.high %v311, %v311
    %v320 = vcombine.high %v318, %v318
    %v322 = vunpack.c.l.s4 1966171168
    %v323 = vunpack.c.0.s8 %v322
    %v324 = vlaneseq
    %v325 = vshrl.u32 %v324, 7
    %v326 = vsub.s32 %v323, %v325
    %v327 = vrot.slane %v311, %v326
    %v329 = vunpack.c.l.s4 1966171168
    %v330 = vunpack.c.0.s8 %v329
    %v331 = vlaneseq
    %v332 = vshrl.u32 %v331, 7
    %v333 = vsub.s32 %v330, %v332
    %v334 = vrot.slane %v318, %v333
    %v336 = vunpack.c.l.s4 1966171168
    %v337 = vunpack.c.0.s8 %v336
    %v338 = vlaneseq
    %v339 = vshrl.u32 %v338, 7
    %v340 = vsub.s32 %v337, %v339
    %v341 = vrot.slane %v319, %v340
    %v343 = vunpack.c.l.s4 1966171168
    %v344 = vunpack.c.0.s8 %v343
    %v345 = vlaneseq
    %v346 = vshrl.u32 %v345, 7
    %v347 = vsub.s32 %v344, %v346
    %v348 = vrot.slane %v320, %v347
    %v349 = vcombine.high %v327, %v327
    %v350 = vcombine.high %v334, %v334
    %v351 = vcombine.high %v341, %v341
    %v352 = vcombine.high %v348, %v348
    %v353 = vlaneseq
    %v354 = vshrl.u32 %v353, 7
    %v355 = vsub.s32 0, %v354
    %v356 = vrot.slane %v327, %v355
    %v357 = vlaneseq
    %v358 = vshrl.u32 %v357, 7
    %v359 = vsub.s32 0, %v358
    %v360 = vrot.slane %v341, %v359
    %v361 = vlaneseq
    %v362 = vshrl.u32 %v361, 7
    %v363 = vsub.s32 0, %v362
    %v364 = vrot.slane %v349, %v363
    %v365 = vlaneseq
    %v366 = vshrl.u32 %v365, 7
    %v367 = vsub.s32 0, %v366
    %v368 = vrot.slane %v351, %v367
    %v369 = vlaneseq
    %v370 = vshrl.u32 %v369, 7
    %v371 = vsub.s32 0, %v370
    %v372 = vrot.slane %v334, %v371
    %v373 = vlaneseq
    %v374 = vshrl.u32 %v373, 7
    %v375 = vsub.s32 0, %v374
    %v376 = vrot.slane %v348, %v375
    %v377 = vlaneseq
    %v378 = vshrl.u32 %v377, 7
    %v379 = vsub.s32 0, %v378
    %v380 = vrot.slane %v350, %v379
    %v381 = vlaneseq
    %v382 = vshrl.u32 %v381, 7
    %v383 = vsub.s32 0, %v382
    %v384 = vrot.slane %v352, %v383
    %385 = vrot.lane.b32.xlu0 %v356, 32
    %v386 = vpop.permute.xlu0 %385
    %387 = vrot.lane.b32.xlu0 %v360, 32
    %v388 = vpop.permute.xlu0 %387
    %389 = vrot.lane.b32.xlu0 %v364, 32
    %v390 = vpop.permute.xlu0 %389
    %391 = vrot.lane.b32.xlu0 %v368, 32
    %v392 = vpop.permute.xlu0 %391
    %393 = vrot.lane.b32.xlu0 %v372, 32
    %v394 = vpop.permute.xlu0 %393
    %395 = vrot.lane.b32.xlu0 %v376, 32
    %v396 = vpop.permute.xlu0 %395
    %397 = vrot.lane.b32.xlu0 %v380, 32
    %v398 = vpop.permute.xlu0 %397
    %399 = vrot.lane.b32.xlu0 %v384, 32
    %v400 = vpop.permute.xlu0 %399
    %vm409 = vcmask 253952
    %410 = vst.msk [vmem:[#allocation2] sm:$0x1] %vm409, %v386
    %411 = vst.msk [vmem:[#allocation2 + $0x8] sm:$0x1] %vm409, %v388
    %412 = vst.msk [vmem:[#allocation2 + $0x10] sm:$0x1] %vm409, %v390
    %413 = vst.msk [vmem:[#allocation2 + $0x18] sm:$0x1] %vm409, %v392
    %414 = vst.msk [vmem:[#allocation2 + $0x20] sm:$0x1] %vm409, %v394
    %415 = vst.msk [vmem:[#allocation2 + $0x28] sm:$0x1] %vm409, %v396
    %416 = vst.msk [vmem:[#allocation2 + $0x30] sm:$0x1] %vm409, %v398
    %417 = vst.msk [vmem:[#allocation2 + $0x38] sm:$0x1] %vm409, %v400
    %s418 = scalar_lea.vmem %s1, 8
    %v419 = vld [vmem:[%s418] sm:$0xff]
    %420 = vrot.lane.b32.xlu0 %v192, 40
    %v421 = vpop.permute.xlu0 %420
    %v423 = vsel %vm87, %v419, %v421
    %v425 = vsel %vm95, %v423, 0
    %427 = vmatprep.subr.mxu0 0.0
    %428 = vmatpush1.msra.mxu0 %v71
    %429 = vmatprep.subr.mxu0 0.0
    %430 = vmatpush1.msra.mxu0 %v72
    %431 = vmatprep.subr.mxu0 0.0
    %432 = vmatpush1.msra.mxu0 %v73
    %433 = vmatprep.subr.mxu0 0.0
    %434 = vmatpush1.msra.mxu0 %v74
    %435 = vmatprep.subr.mxu0 0.0
    %436 = vmatpush1.msra.mxu0 %v75
    %437 = vmatprep.subr.mxu0 0.0
    %438 = vmatpush1.msra.mxu0 0.0
    %439 = vmatprep.subr.mxu0 0.0
    %440 = vmatpush1.msra.mxu0 0.0
    %441 = vmatprep.subr.mxu0 0.0
    %442 = vmatpush1.msra.mxu0 0.0
    %443 = vmatprep.subr.mxu0 0.0
    %444 = vmatpush1.msra.mxu0 0.0
    %445 = vmatprep.subr.mxu0 0.0
    %446 = vmatpush1.msra.mxu0 0.0
    %447 = vmatprep.subr.mxu0 0.0
    %448 = vmatpush1.msra.mxu0 0.0
    %449 = vmatprep.subr.mxu0 0.0
    %450 = vmatpush1.msra.mxu0 0.0
    %451 = vmatprep.subr.mxu0 0.0
    %452 = vmatpush1.msra.mxu0 0.0
    %453 = vmatprep.subr.mxu0 0.0
    %454 = vmatpush1.msra.mxu0 0.0
    %455 = vmatprep.subr.mxu0 0.0
    %456 = vmatpush1.msra.mxu0 0.0
    %457 = vmatprep.subr.mxu0 0.0
    %458 = vmatpush1.msra.mxu0 0.0
    %459 = vmatprep.subr.mxu0 0.0
    %460 = vmatpush1.msra.mxu0 0.0
    %461 = vmatprep.subr.mxu0 0.0
    %462 = vmatpush1.msra.mxu0 0.0
    %463 = vmatprep.subr.mxu0 0.0
    %464 = vmatpush1.msra.mxu0 0.0
    %465 = vmatprep.subr.mxu0 0.0
    %466 = vmatpush1.msra.mxu0 0.0
    %467 = vmatprep.subr.mxu0 0.0
    %468 = vmatpush1.msra.mxu0 0.0
    %469 = vmatprep.subr.mxu0 0.0
    %470 = vmatpush1.msra.mxu0 0.0
    %471 = vmatprep.subr.mxu0 0.0
    %472 = vmatpush1.msra.mxu0 0.0
    %473 = vmatprep.subr.mxu0 0.0
    %474 = vmatpush1.msra.mxu0 0.0
    %475 = vmatprep.subr.mxu0 0.0
    %476 = vmatpush1.msra.mxu0 0.0
    %477 = vmatprep.subr.mxu0 0.0
    %478 = vmatpush1.msra.mxu0 0.0
    %479 = vmatprep.subr.mxu0 0.0
    %480 = vmatpush1.msra.mxu0 0.0
    %481 = vmatprep.subr.mxu0 0.0
    %482 = vmatpush1.msra.mxu0 0.0
    %483 = vmatprep.subr.mxu0 0.0
    %484 = vmatpush1.msra.mxu0 0.0
    %485 = vmatprep.subr.mxu0 0.0
    %486 = vmatpush1.msra.mxu0 0.0
    %487 = vmatprep.subr.mxu0 0.0
    %488 = vmatpush1.msra.mxu0 0.0
    %489 = vmatprep.subr.mxu0 0.0
    %490 = vmatpush1.msra.mxu0 0.0
    %491 = vmatprep.mubr.f32.mxu0 0.0
    %492 = vmatmul.mubr.f32.gmra.mrb[0].mxu0 %v425
    %v493 = vpop.f32.mrb[0].mxu0
    %v494 = vadd.f32 %v93, %v493
    %v495 = vpop.f32.mrb[0].mxu0
    %496 = vdwg.mxu0
    %v497 = vxor.u32 %v494, 2147483648
    %v498 = vmul.f32 %v497, 1.442695
    %v499 = vpow.pop %v498
    %v500 = vadd.f32 %v499, 1.0
    %v501 = vrcp.pop %v500
    %v502 = vmul.f32 1.0, %v501
    %v503 = vtanh.pop %v494
    %v504 = vmul.f32 %v502, %v186
    %506 = vrot.lane.b32.xlu0 %v503, 64
    %v507 = vpop.permute.xlu0 %506
    %v509 = vmul.f32 %v502, %v507
    %511 = vrot.lane.b32.xlu0 %v509, 32
    %v512 = vpop.permute.xlu0 %511
    %v514 = vadd.f32 %v504, %v512
    %v515 = vtanh.pop %v514
    %517 = vrot.lane.b32.xlu0 %v515, 64
    %v518 = vpop.permute.xlu0 %517
    %v520 = vmul.f32 %v502, %v518
    %522 = vrot.lane.b32.xlu0 %v520, 32
    %v523 = vpop.permute.xlu0 %522
    %525 = vrot.lane.b32.xlu0 %v302, 64
    %v526 = vpop.permute.xlu0 %525
    %v528 = vsel %vm197, %v523, %v526
    %v530 = vsel %vm205, %v528, 0
    %532 = vmatprep.subr.mxu0 0.0
    %533 = vmatpush1.msra.mxu0 %v77
    %534 = vmatprep.subr.mxu0 0.0
    %535 = vmatpush1.msra.mxu0 %v78
    %536 = vmatprep.subr.mxu0 0.0
    %537 = vmatpush1.msra.mxu0 %v79
    %538 = vmatprep.subr.mxu0 0.0
    %539 = vmatpush1.msra.mxu0 %v80
    %540 = vmatprep.subr.mxu0 0.0
    %541 = vmatpush1.msra.mxu0 %v81
    %542 = vmatprep.subr.mxu0 0.0
    %543 = vmatpush1.msra.mxu0 %v82
    %544 = vmatprep.subr.mxu0 0.0
    %545 = vmatpush1.msra.mxu0 %v83
    %546 = vmatprep.subr.mxu0 0.0
    %547 = vmatpush1.msra.mxu0 %v84
    %548 = vmatprep.subr.mxu0 0.0
    %549 = vmatpush1.msra.mxu0 0.0
    %550 = vmatprep.subr.mxu0 0.0
    %551 = vmatpush1.msra.mxu0 0.0
    %552 = vmatprep.subr.mxu0 0.0
    %553 = vmatpush1.msra.mxu0 0.0
    %554 = vmatprep.subr.mxu0 0.0
    %555 = vmatpush1.msra.mxu0 0.0
    %556 = vmatprep.subr.mxu0 0.0
    %557 = vmatpush1.msra.mxu0 0.0
    %558 = vmatprep.subr.mxu0 0.0
    %559 = vmatpush1.msra.mxu0 0.0
    %560 = vmatprep.subr.mxu0 0.0
    %561 = vmatpush1.msra.mxu0 0.0
    %562 = vmatprep.subr.mxu0 0.0
    %563 = vmatpush1.msra.mxu0 0.0
    %564 = vmatprep.subr.mxu0 0.0
    %565 = vmatpush1.msra.mxu0 0.0
    %566 = vmatprep.subr.mxu0 0.0
    %567 = vmatpush1.msra.mxu0 0.0
    %568 = vmatprep.subr.mxu0 0.0
    %569 = vmatpush1.msra.mxu0 0.0
    %570 = vmatprep.subr.mxu0 0.0
    %571 = vmatpush1.msra.mxu0 0.0
    %572 = vmatprep.subr.mxu0 0.0
    %573 = vmatpush1.msra.mxu0 0.0
    %574 = vmatprep.subr.mxu0 0.0
    %575 = vmatpush1.msra.mxu0 0.0
    %576 = vmatprep.subr.mxu0 0.0
    %577 = vmatpush1.msra.mxu0 0.0
    %578 = vmatprep.subr.mxu0 0.0
    %579 = vmatpush1.msra.mxu0 0.0
    %580 = vmatprep.subr.mxu0 0.0
    %581 = vmatpush1.msra.mxu0 0.0
    %582 = vmatprep.subr.mxu0 0.0
    %583 = vmatpush1.msra.mxu0 0.0
    %584 = vmatprep.subr.mxu0 0.0
    %585 = vmatpush1.msra.mxu0 0.0
    %586 = vmatprep.subr.mxu0 0.0
    %587 = vmatpush1.msra.mxu0 0.0
    %588 = vmatprep.subr.mxu0 0.0
    %589 = vmatpush1.msra.mxu0 0.0
    %590 = vmatprep.subr.mxu0 0.0
    %591 = vmatpush1.msra.mxu0 0.0
    %592 = vmatprep.subr.mxu0 0.0
    %593 = vmatpush1.msra.mxu0 0.0
    %594 = vmatprep.subr.mxu0 0.0
    %595 = vmatpush1.msra.mxu0 0.0
    %596 = vmatprep.mubr.f32.mxu0 0.0
    %597 = vmatmul.mubr.f32.gmra.mrb[0].mxu0 %v530
    %v598 = vpop.f32.mrb[0].mxu0
    %v599 = vadd.f32 %v203, %v598
    %v600 = vpop.f32.mrb[0].mxu0
    %601 = vdwg.mxu0
    %v602 = vxor.u32 %v599, 2147483648
    %v603 = vmul.f32 %v602, 1.442695
    %v604 = vpow.pop %v603
    %v605 = vadd.f32 %v604, 1.0
    %v606 = vrcp.pop %v605
    %v607 = vmul.f32 1.0, %v606
    %v608 = vtanh.pop %v599
    %v609 = vmul.f32 %v607, %v296
    %611 = vrot.lane.b32.xlu0 %v608, 64
    %v612 = vpop.permute.xlu0 %611
    %v614 = vmul.f32 %v607, %v612
    %616 = vrot.lane.b32.xlu0 %v614, 32
    %v617 = vpop.permute.xlu0 %616
    %v619 = vadd.f32 %v609, %v617
    %v620 = vtanh.pop %v619
    %622 = vrot.lane.b32.xlu0 %v620, 64
    %v623 = vpop.permute.xlu0 %622
    %v625 = vmul.f32 %v607, %v623
    %v627 = vcombine.high %v625, %v625
    %v629 = vunpack.c.l.s4 1966171168
    %v630 = vunpack.c.0.s8 %v629
    %v631 = vlaneseq
    %v632 = vshrl.u32 %v631, 7
    %v633 = vsub.s32 %v630, %v632
    %v634 = vrot.slane %v625, %v633
    %v636 = vunpack.c.l.s4 1966171168
    %v637 = vunpack.c.0.s8 %v636
    %v638 = vlaneseq
    %v639 = vshrl.u32 %v638, 7
    %v640 = vsub.s32 %v637, %v639
    %v641 = vrot.slane %v627, %v640
    %v642 = vcombine.high %v634, %v634
    %v643 = vcombine.high %v641, %v641
    %v645 = vunpack.c.l.s4 1966171168
    %v646 = vunpack.c.0.s8 %v645
    %v647 = vlaneseq
    %v648 = vshrl.u32 %v647, 7
    %v649 = vsub.s32 %v646, %v648
    %v650 = vrot.slane %v634, %v649
    %v652 = vunpack.c.l.s4 1966171168
    %v653 = vunpack.c.0.s8 %v652
    %v654 = vlaneseq
    %v655 = vshrl.u32 %v654, 7
    %v656 = vsub.s32 %v653, %v655
    %v657 = vrot.slane %v641, %v656
    %v659 = vunpack.c.l.s4 1966171168
    %v660 = vunpack.c.0.s8 %v659
    %v661 = vlaneseq
    %v662 = vshrl.u32 %v661, 7
    %v663 = vsub.s32 %v660, %v662
    %v664 = vrot.slane %v642, %v663
    %v666 = vunpack.c.l.s4 1966171168
    %v667 = vunpack.c.0.s8 %v666
    %v668 = vlaneseq
    %v669 = vshrl.u32 %v668, 7
    %v670 = vsub.s32 %v667, %v669
    %v671 = vrot.slane %v643, %v670
    %v672 = vcombine.high %v650, %v650
    %v673 = vcombine.high %v657, %v657
    %v674 = vcombine.high %v664, %v664
    %v675 = vcombine.high %v671, %v671
    %v676 = vlaneseq
    %v677 = vshrl.u32 %v676, 7
    %v678 = vsub.s32 0, %v677
    %v679 = vrot.slane %v650, %v678
    %v680 = vlaneseq
    %v681 = vshrl.u32 %v680, 7
    %v682 = vsub.s32 0, %v681
    %v683 = vrot.slane %v664, %v682
    %v684 = vlaneseq
    %v685 = vshrl.u32 %v684, 7
    %v686 = vsub.s32 0, %v685
    %v687 = vrot.slane %v672, %v686
    %v688 = vlaneseq
    %v689 = vshrl.u32 %v688, 7
    %v690 = vsub.s32 0, %v689
    %v691 = vrot.slane %v674, %v690
    %v692 = vlaneseq
    %v693 = vshrl.u32 %v692, 7
    %v694 = vsub.s32 0, %v693
    %v695 = vrot.slane %v657, %v694
    %v696 = vlaneseq
    %v697 = vshrl.u32 %v696, 7
    %v698 = vsub.s32 0, %v697
    %v699 = vrot.slane %v671, %v698
    %v700 = vlaneseq
    %v701 = vshrl.u32 %v700, 7
    %v702 = vsub.s32 0, %v701
    %v703 = vrot.slane %v673, %v702
    %v704 = vlaneseq
    %v705 = vshrl.u32 %v704, 7
    %v706 = vsub.s32 0, %v705
    %v707 = vrot.slane %v675, %v706
    %708 = vrot.lane.b32.xlu0 %v679, 32
    %v709 = vpop.permute.xlu0 %708
    %710 = vrot.lane.b32.xlu0 %v683, 32
    %v711 = vpop.permute.xlu0 %710
    %712 = vrot.lane.b32.xlu0 %v687, 32
    %v713 = vpop.permute.xlu0 %712
    %714 = vrot.lane.b32.xlu0 %v691, 32
    %v715 = vpop.permute.xlu0 %714
    %716 = vrot.lane.b32.xlu0 %v695, 32
    %v717 = vpop.permute.xlu0 %716
    %718 = vrot.lane.b32.xlu0 %v699, 32
    %v719 = vpop.permute.xlu0 %718
    %720 = vrot.lane.b32.xlu0 %v703, 32
    %v721 = vpop.permute.xlu0 %720
    %722 = vrot.lane.b32.xlu0 %v707, 32
    %v723 = vpop.permute.xlu0 %722
    %732 = vst.msk [vmem:[#allocation2 + $0x1] sm:$0x1] %vm409, %v709
    %733 = vst.msk [vmem:[#allocation2 + $0x9] sm:$0x1] %vm409, %v711
    %734 = vst.msk [vmem:[#allocation2 + $0x11] sm:$0x1] %vm409, %v713
    %735 = vst.msk [vmem:[#allocation2 + $0x19] sm:$0x1] %vm409, %v715
    %736 = vst.msk [vmem:[#allocation2 + $0x21] sm:$0x1] %vm409, %v717
    %737 = vst.msk [vmem:[#allocation2 + $0x29] sm:$0x1] %vm409, %v719
    %738 = vst.msk [vmem:[#allocation2 + $0x31] sm:$0x1] %vm409, %v721
    %739 = vst.msk [vmem:[#allocation2 + $0x39] sm:$0x1] %vm409, %v723
    %s740 = scalar_lea.vmem %s1, 16
    %v741 = vld [vmem:[%s740] sm:$0xff]
    %742 = vrot.lane.b32.xlu0 %v520, 40
    %v743 = vpop.permute.xlu0 %742
    %v745 = vsel %vm87, %v741, %v743
    %v747 = vsel %vm95, %v745, 0
    %749 = vmatprep.subr.mxu0 0.0
    %750 = vmatpush1.msra.mxu0 %v71
    %751 = vmatprep.subr.mxu0 0.0
    %752 = vmatpush1.msra.mxu0 %v72
    %753 = vmatprep.subr.mxu0 0.0
    %754 = vmatpush1.msra.mxu0 %v73
    %755 = vmatprep.subr.mxu0 0.0
    %756 = vmatpush1.msra.mxu0 %v74
    %757 = vmatprep.subr.mxu0 0.0
    %758 = vmatpush1.msra.mxu0 %v75
    %759 = vmatprep.subr.mxu0 0.0
    %760 = vmatpush1.msra.mxu0 0.0
    %761 = vmatprep.subr.mxu0 0.0
    %762 = vmatpush1.msra.mxu0 0.0
    %763 = vmatprep.subr.mxu0 0.0
    %764 = vmatpush1.msra.mxu0 0.0
    %765 = vmatprep.subr.mxu0 0.0
    %766 = vmatpush1.msra.mxu0 0.0
    %767 = vmatprep.subr.mxu0 0.0
    %768 = vmatpush1.msra.mxu0 0.0
    %769 = vmatprep.subr.mxu0 0.0
    %770 = vmatpush1.msra.mxu0 0.0
    %771 = vmatprep.subr.mxu0 0.0
    %772 = vmatpush1.msra.mxu0 0.0
    %773 = vmatprep.subr.mxu0 0.0
    %774 = vmatpush1.msra.mxu0 0.0
    %775 = vmatprep.subr.mxu0 0.0
    %776 = vmatpush1.msra.mxu0 0.0
    %777 = vmatprep.subr.mxu0 0.0
    %778 = vmatpush1.msra.mxu0 0.0
    %779 = vmatprep.subr.mxu0 0.0
    %780 = vmatpush1.msra.mxu0 0.0
    %781 = vmatprep.subr.mxu0 0.0
    %782 = vmatpush1.msra.mxu0 0.0
    %783 = vmatprep.subr.mxu0 0.0
    %784 = vmatpush1.msra.mxu0 0.0
    %785 = vmatprep.subr.mxu0 0.0
    %786 = vmatpush1.msra.mxu0 0.0
    %787 = vmatprep.subr.mxu0 0.0
    %788 = vmatpush1.msra.mxu0 0.0
    %789 = vmatprep.subr.mxu0 0.0
    %790 = vmatpush1.msra.mxu0 0.0
    %791 = vmatprep.subr.mxu0 0.0
    %792 = vmatpush1.msra.mxu0 0.0
    %793 = vmatprep.subr.mxu0 0.0
    %794 = vmatpush1.msra.mxu0 0.0
    %795 = vmatprep.subr.mxu0 0.0
    %796 = vmatpush1.msra.mxu0 0.0
    %797 = vmatprep.subr.mxu0 0.0
    %798 = vmatpush1.msra.mxu0 0.0
    %799 = vmatprep.subr.mxu0 0.0
    %800 = vmatpush1.msra.mxu0 0.0
    %801 = vmatprep.subr.mxu0 0.0
    %802 = vmatpush1.msra.mxu0 0.0
    %803 = vmatprep.subr.mxu0 0.0
    %804 = vmatpush1.msra.mxu0 0.0
    %805 = vmatprep.subr.mxu0 0.0
    %806 = vmatpush1.msra.mxu0 0.0
    %807 = vmatprep.subr.mxu0 0.0
    %808 = vmatpush1.msra.mxu0 0.0
    %809 = vmatprep.subr.mxu0 0.0
    %810 = vmatpush1.msra.mxu0 0.0
    %811 = vmatprep.subr.mxu0 0.0
    %812 = vmatpush1.msra.mxu0 0.0
    %813 = vmatprep.mubr.f32.mxu0 0.0
    %814 = vmatmul.mubr.f32.gmra.mrb[0].mxu0 %v747
    %v815 = vpop.f32.mrb[0].mxu0
    %v816 = vadd.f32 %v93, %v815
    %v817 = vpop.f32.mrb[0].mxu0
    %818 = vdwg.mxu0
    %v819 = vxor.u32 %v816, 2147483648
    %v820 = vmul.f32 %v819, 1.442695
    %v821 = vpow.pop %v820
    %v822 = vadd.f32 %v821, 1.0
    %v823 = vrcp.pop %v822
    %v824 = vmul.f32 1.0, %v823
    %v825 = vtanh.pop %v816
    %v826 = vmul.f32 %v824, %v514
    %828 = vrot.lane.b32.xlu0 %v825, 64
    %v829 = vpop.permute.xlu0 %828
    %v831 = vmul.f32 %v824, %v829
    %833 = vrot.lane.b32.xlu0 %v831, 32
    %v834 = vpop.permute.xlu0 %833
    %v836 = vadd.f32 %v826, %v834
    %v837 = vtanh.pop %v836
    %839 = vrot.lane.b32.xlu0 %v837, 64
    %v840 = vpop.permute.xlu0 %839
    %v842 = vmul.f32 %v824, %v840
    %844 = vrot.lane.b32.xlu0 %v842, 32
    %v845 = vpop.permute.xlu0 %844
    %847 = vrot.lane.b32.xlu0 %v625, 64
    %v848 = vpop.permute.xlu0 %847
    %v850 = vsel %vm197, %v845, %v848
    %v852 = vsel %vm205, %v850, 0
    %854 = vmatprep.subr.mxu0 0.0
    %855 = vmatpush1.msra.mxu0 %v77
    %856 = vmatprep.subr.mxu0 0.0
    %857 = vmatpush1.msra.mxu0 %v78
    %858 = vmatprep.subr.mxu0 0.0
    %859 = vmatpush1.msra.mxu0 %v79
    %860 = vmatprep.subr.mxu0 0.0
    %861 = vmatpush1.msra.mxu0 %v80
    %862 = vmatprep.subr.mxu0 0.0
    %863 = vmatpush1.msra.mxu0 %v81
    %864 = vmatprep.subr.mxu0 0.0
    %865 = vmatpush1.msra.mxu0 %v82
    %866 = vmatprep.subr.mxu0 0.0
    %867 = vmatpush1.msra.mxu0 %v83
    %868 = vmatprep.subr.mxu0 0.0
    %869 = vmatpush1.msra.mxu0 %v84
    %870 = vmatprep.subr.mxu0 0.0
    %871 = vmatpush1.msra.mxu0 0.0
    %872 = vmatprep.subr.mxu0 0.0
    %873 = vmatpush1.msra.mxu0 0.0
    %874 = vmatprep.subr.mxu0 0.0
    %875 = vmatpush1.msra.mxu0 0.0
    %876 = vmatprep.subr.mxu0 0.0
    %877 = vmatpush1.msra.mxu0 0.0
    %878 = vmatprep.subr.mxu0 0.0
    %879 = vmatpush1.msra.mxu0 0.0
    %880 = vmatprep.subr.mxu0 0.0
    %881 = vmatpush1.msra.mxu0 0.0
    %882 = vmatprep.subr.mxu0 0.0
    %883 = vmatpush1.msra.mxu0 0.0
    %884 = vmatprep.subr.mxu0 0.0
    %885 = vmatpush1.msra.mxu0 0.0
    %886 = vmatprep.subr.mxu0 0.0
    %887 = vmatpush1.msra.mxu0 0.0
    %888 = vmatprep.subr.mxu0 0.0
    %889 = vmatpush1.msra.mxu0 0.0
    %890 = vmatprep.subr.mxu0 0.0
    %891 = vmatpush1.msra.mxu0 0.0
    %892 = vmatprep.subr.mxu0 0.0
    %893 = vmatpush1.msra.mxu0 0.0
    %894 = vmatprep.subr.mxu0 0.0
    %895 = vmatpush1.msra.mxu0 0.0
    %896 = vmatprep.subr.mxu0 0.0
    %897 = vmatpush1.msra.mxu0 0.0
    %898 = vmatprep.subr.mxu0 0.0
    %899 = vmatpush1.msra.mxu0 0.0
    %900 = vmatprep.subr.mxu0 0.0
    %901 = vmatpush1.msra.mxu0 0.0
    %902 = vmatprep.subr.mxu0 0.0
    %903 = vmatpush1.msra.mxu0 0.0
    %904 = vmatprep.subr.mxu0 0.0
    %905 = vmatpush1.msra.mxu0 0.0
    %906 = vmatprep.subr.mxu0 0.0
    %907 = vmatpush1.msra.mxu0 0.0
    %908 = vmatprep.subr.mxu0 0.0
    %909 = vmatpush1.msra.mxu0 0.0
    %910 = vmatprep.subr.mxu0 0.0
    %911 = vmatpush1.msra.mxu0 0.0
    %912 = vmatprep.subr.mxu0 0.0
    %913 = vmatpush1.msra.mxu0 0.0
    %914 = vmatprep.subr.mxu0 0.0
    %915 = vmatpush1.msra.mxu0 0.0
    %916 = vmatprep.subr.mxu0 0.0
    %917 = vmatpush1.msra.mxu0 0.0
    %918 = vmatprep.mubr.f32.mxu0 0.0
    %919 = vmatmul.mubr.f32.gmra.mrb[0].mxu0 %v852
    %v920 = vpop.f32.mrb[0].mxu0
    %v921 = vadd.f32 %v203, %v920
    %v922 = vpop.f32.mrb[0].mxu0
    %923 = vdwg.mxu0
    %v924 = vxor.u32 %v921, 2147483648
    %v925 = vmul.f32 %v924, 1.442695
    %v926 = vpow.pop %v925
    %v927 = vadd.f32 %v926, 1.0
    %v928 = vrcp.pop %v927
    %v929 = vmul.f32 1.0, %v928
    %v930 = vtanh.pop %v921
    %v931 = vmul.f32 %v929, %v619
    %933 = vrot.lane.b32.xlu0 %v930, 64
    %v934 = vpop.permute.xlu0 %933
    %v936 = vmul.f32 %v929, %v934
    %938 = vrot.lane.b32.xlu0 %v936, 32
    %v939 = vpop.permute.xlu0 %938
    %v941 = vadd.f32 %v931, %v939
    %v942 = vtanh.pop %v941
    %944 = vrot.lane.b32.xlu0 %v942, 64
    %v945 = vpop.permute.xlu0 %944
    %v947 = vmul.f32 %v929, %v945
    %v949 = vcombine.high %v947, %v947
    %v951 = vunpack.c.l.s4 1966171168
    %v952 = vunpack.c.0.s8 %v951
    %v953 = vlaneseq
    %v954 = vshrl.u32 %v953, 7
    %v955 = vsub.s32 %v952, %v954
    %v956 = vrot.slane %v947, %v955
    %v958 = vunpack.c.l.s4 1966171168
    %v959 = vunpack.c.0.s8 %v958
    %v960 = vlaneseq
    %v961 = vshrl.u32 %v960, 7
    %v962 = vsub.s32 %v959, %v961
    %v963 = vrot.slane %v949, %v962
    %v964 = vcombine.high %v956, %v956
    %v965 = vcombine.high %v963, %v963
    %v967 = vunpack.c.l.s4 1966171168
    %v968 = vunpack.c.0.s8 %v967
    %v969 = vlaneseq
    %v970 = vshrl.u32 %v969, 7
    %v971 = vsub.s32 %v968, %v970
    %v972 = vrot.slane %v956, %v971
    %v974 = vunpack.c.l.s4 1966171168
    %v975 = vunpack.c.0.s8 %v974
    %v976 = vlaneseq
    %v977 = vshrl.u32 %v976, 7
    %v978 = vsub.s32 %v975, %v977
    %v979 = vrot.slane %v963, %v978
    %v981 = vunpack.c.l.s4 1966171168
    %v982 = vunpack.c.0.s8 %v981
    %v983 = vlaneseq
    %v984 = vshrl.u32 %v983, 7
    %v985 = vsub.s32 %v982, %v984
    %v986 = vrot.slane %v964, %v985
    %v988 = vunpack.c.l.s4 1966171168
    %v989 = vunpack.c.0.s8 %v988
    %v990 = vlaneseq
    %v991 = vshrl.u32 %v990, 7
    %v992 = vsub.s32 %v989, %v991
    %v993 = vrot.slane %v965, %v992
    %v994 = vcombine.high %v972, %v972
    %v995 = vcombine.high %v979, %v979
    %v996 = vcombine.high %v986, %v986
    %v997 = vcombine.high %v993, %v993
    %v998 = vlaneseq
    %v999 = vshrl.u32 %v998, 7
    %v1000 = vsub.s32 0, %v999
    %v1001 = vrot.slane %v972, %v1000
    %v1002 = vlaneseq
    %v1003 = vshrl.u32 %v1002, 7
    %v1004 = vsub.s32 0, %v1003
    %v1005 = vrot.slane %v986, %v1004
    %v1006 = vlaneseq
    %v1007 = vshrl.u32 %v1006, 7
    %v1008 = vsub.s32 0, %v1007
    %v1009 = vrot.slane %v994, %v1008
    %v1010 = vlaneseq
    %v1011 = vshrl.u32 %v1010, 7
    %v1012 = vsub.s32 0, %v1011
    %v1013 = vrot.slane %v996, %v1012
    %v1014 = vlaneseq
    %v1015 = vshrl.u32 %v1014, 7
    %v1016 = vsub.s32 0, %v1015
    %v1017 = vrot.slane %v979, %v1016
    %v1018 = vlaneseq
    %v1019 = vshrl.u32 %v1018, 7
    %v1020 = vsub.s32 0, %v1019
    %v1021 = vrot.slane %v993, %v1020
    %v1022 = vlaneseq
    %v1023 = vshrl.u32 %v1022, 7
    %v1024 = vsub.s32 0, %v1023
    %v1025 = vrot.slane %v995, %v1024
    %v1026 = vlaneseq
    %v1027 = vshrl.u32 %v1026, 7
    %v1028 = vsub.s32 0, %v1027
    %v1029 = vrot.slane %v997, %v1028
    %1030 = vrot.lane.b32.xlu0 %v1001, 32
    %v1031 = vpop.permute.xlu0 %1030
    %1032 = vrot.lane.b32.xlu0 %v1005, 32
    %v1033 = vpop.permute.xlu0 %1032
    %1034 = vrot.lane.b32.xlu0 %v1009, 32
    %v1035 = vpop.permute.xlu0 %1034
    %1036 = vrot.lane.b32.xlu0 %v1013, 32
    %v1037 = vpop.permute.xlu0 %1036
    %1038 = vrot.lane.b32.xlu0 %v1017, 32
    %v1039 = vpop.permute.xlu0 %1038
    %1040 = vrot.lane.b32.xlu0 %v1021, 32
    %v1041 = vpop.permute.xlu0 %1040
    %1042 = vrot.lane.b32.xlu0 %v1025, 32
    %v1043 = vpop.permute.xlu0 %1042
    %1044 = vrot.lane.b32.xlu0 %v1029, 32
    %v1045 = vpop.permute.xlu0 %1044
    %1054 = vst.msk [vmem:[#allocation2 + $0x2] sm:$0x1] %vm409, %v1031
    %1055 = vst.msk [vmem:[#allocation2 + $0xa] sm:$0x1] %vm409, %v1033
    %1056 = vst.msk [vmem:[#allocation2 + $0x12] sm:$0x1] %vm409, %v1035
    %1057 = vst.msk [vmem:[#allocation2 + $0x1a] sm:$0x1] %vm409, %v1037
    %1058 = vst.msk [vmem:[#allocation2 + $0x22] sm:$0x1] %vm409, %v1039
    %1059 = vst.msk [vmem:[#allocation2 + $0x2a] sm:$0x1] %vm409, %v1041
    %1060 = vst.msk [vmem:[#allocation2 + $0x32] sm:$0x1] %vm409, %v1043
    %1061 = vst.msk [vmem:[#allocation2 + $0x3a] sm:$0x1] %vm409, %v1045
    %s1062 = scalar_lea.vmem %s1, 24
    %v1063 = vld [vmem:[%s1062] sm:$0xff]
    %1064 = vrot.lane.b32.xlu0 %v842, 40
    %v1065 = vpop.permute.xlu0 %1064
    %v1067 = vsel %vm87, %v1063, %v1065
    %v1069 = vsel %vm95, %v1067, 0
    %1071 = vmatprep.subr.mxu0 0.0
    %1072 = vmatpush1.msra.mxu0 %v71
    %1073 = vmatprep.subr.mxu0 0.0
    %1074 = vmatpush1.msra.mxu0 %v72
    %1075 = vmatprep.subr.mxu0 0.0
    %1076 = vmatpush1.msra.mxu0 %v73
    %1077 = vmatprep.subr.mxu0 0.0
    %1078 = vmatpush1.msra.mxu0 %v74
    %1079 = vmatprep.subr.mxu0 0.0
    %1080 = vmatpush1.msra.mxu0 %v75
    %1081 = vmatprep.subr.mxu0 0.0
    %1082 = vmatpush1.msra.mxu0 0.0
    %1083 = vmatprep.subr.mxu0 0.0
    %1084 = vmatpush1.msra.mxu0 0.0
    %1085 = vmatprep.subr.mxu0 0.0
    %1086 = vmatpush1.msra.mxu0 0.0
    %1087 = vmatprep.subr.mxu0 0.0
    %1088 = vmatpush1.msra.mxu0 0.0
    %1089 = vmatprep.subr.mxu0 0.0
    %1090 = vmatpush1.msra.mxu0 0.0
    %1091 = vmatprep.subr.mxu0 0.0
    %1092 = vmatpush1.msra.mxu0 0.0
    %1093 = vmatprep.subr.mxu0 0.0
    %1094 = vmatpush1.msra.mxu0 0.0
    %1095 = vmatprep.subr.mxu0 0.0
    %1096 = vmatpush1.msra.mxu0 0.0
    %1097 = vmatprep.subr.mxu0 0.0
    %1098 = vmatpush1.msra.mxu0 0.0
    %1099 = vmatprep.subr.mxu0 0.0
    %1100 = vmatpush1.msra.mxu0 0.0
    %1101 = vmatprep.subr.mxu0 0.0
    %1102 = vmatpush1.msra.mxu0 0.0
    %1103 = vmatprep.subr.mxu0 0.0
    %1104 = vmatpush1.msra.mxu0 0.0
    %1105 = vmatprep.subr.mxu0 0.0
    %1106 = vmatpush1.msra.mxu0 0.0
    %1107 = vmatprep.subr.mxu0 0.0
    %1108 = vmatpush1.msra.mxu0 0.0
    %1109 = vmatprep.subr.mxu0 0.0
    %1110 = vmatpush1.msra.mxu0 0.0
    %1111 = vmatprep.subr.mxu0 0.0
    %1112 = vmatpush1.msra.mxu0 0.0
    %1113 = vmatprep.subr.mxu0 0.0
    %1114 = vmatpush1.msra.mxu0 0.0
    %1115 = vmatprep.subr.mxu0 0.0
    %1116 = vmatpush1.msra.mxu0 0.0
    %1117 = vmatprep.subr.mxu0 0.0
    %1118 = vmatpush1.msra.mxu0 0.0
    %1119 = vmatprep.subr.mxu0 0.0
    %1120 = vmatpush1.msra.mxu0 0.0
    %1121 = vmatprep.subr.mxu0 0.0
    %1122 = vmatpush1.msra.mxu0 0.0
    %1123 = vmatprep.subr.mxu0 0.0
    %1124 = vmatpush1.msra.mxu0 0.0
    %1125 = vmatprep.subr.mxu0 0.0
    %1126 = vmatpush1.msra.mxu0 0.0
    %1127 = vmatprep.subr.mxu0 0.0
    %1128 = vmatpush1.msra.mxu0 0.0
    %1129 = vmatprep.subr.mxu0 0.0
    %1130 = vmatpush1.msra.mxu0 0.0
    %1131 = vmatprep.subr.mxu0 0.0
    %1132 = vmatpush1.msra.mxu0 0.0
    %1133 = vmatprep.subr.mxu0 0.0
    %1134 = vmatpush1.msra.mxu0 0.0
    %1135 = vmatprep.mubr.f32.mxu0 0.0
    %1136 = vmatmul.mubr.f32.gmra.mrb[0].mxu0 %v1069
    %v1137 = vpop.f32.mrb[0].mxu0
    %v1138 = vadd.f32 %v93, %v1137
    %v1139 = vpop.f32.mrb[0].mxu0
    %1140 = vdwg.mxu0
    %v1141 = vxor.u32 %v1138, 2147483648
    %v1142 = vmul.f32 %v1141, 1.442695
    %v1143 = vpow.pop %v1142
    %v1144 = vadd.f32 %v1143, 1.0
    %v1145 = vrcp.pop %v1144
    %v1146 = vmul.f32 1.0, %v1145
    %v1147 = vtanh.pop %v1138
    %v1148 = vmul.f32 %v1146, %v836
    %1150 = vrot.lane.b32.xlu0 %v1147, 64
    %v1151 = vpop.permute.xlu0 %1150
    %v1153 = vmul.f32 %v1146, %v1151
    %1155 = vrot.lane.b32.xlu0 %v1153, 32
    %v1156 = vpop.permute.xlu0 %1155
    %v1158 = vadd.f32 %v1148, %v1156
    %v1159 = vtanh.pop %v1158
    %1161 = vrot.lane.b32.xlu0 %v1159, 64
    %v1162 = vpop.permute.xlu0 %1161
    %v1164 = vmul.f32 %v1146, %v1162
    %1166 = vrot.lane.b32.xlu0 %v1164, 32
    %v1167 = vpop.permute.xlu0 %1166
    %1169 = vrot.lane.b32.xlu0 %v947, 64
    %v1170 = vpop.permute.xlu0 %1169
    %v1172 = vsel %vm197, %v1167, %v1170
    %v1174 = vsel %vm205, %v1172, 0
    %1176 = vmatprep.subr.mxu0 0.0
    %1177 = vmatpush1.msra.mxu0 %v77
    %1178 = vmatprep.subr.mxu0 0.0
    %1179 = vmatpush1.msra.mxu0 %v78
    %1180 = vmatprep.subr.mxu0 0.0
    %1181 = vmatpush1.msra.mxu0 %v79
    %1182 = vmatprep.subr.mxu0 0.0
    %1183 = vmatpush1.msra.mxu0 %v80
    %1184 = vmatprep.subr.mxu0 0.0
    %1185 = vmatpush1.msra.mxu0 %v81
    %1186 = vmatprep.subr.mxu0 0.0
    %1187 = vmatpush1.msra.mxu0 %v82
    %1188 = vmatprep.subr.mxu0 0.0
    %1189 = vmatpush1.msra.mxu0 %v83
    %1190 = vmatprep.subr.mxu0 0.0
    %1191 = vmatpush1.msra.mxu0 %v84
    %1192 = vmatprep.subr.mxu0 0.0
    %1193 = vmatpush1.msra.mxu0 0.0
    %1194 = vmatprep.subr.mxu0 0.0
    %1195 = vmatpush1.msra.mxu0 0.0
    %1196 = vmatprep.subr.mxu0 0.0
    %1197 = vmatpush1.msra.mxu0 0.0
    %1198 = vmatprep.subr.mxu0 0.0
    %1199 = vmatpush1.msra.mxu0 0.0
    %1200 = vmatprep.subr.mxu0 0.0
    %1201 = vmatpush1.msra.mxu0 0.0
    %1202 = vmatprep.subr.mxu0 0.0
    %1203 = vmatpush1.msra.mxu0 0.0
    %1204 = vmatprep.subr.mxu0 0.0
    %1205 = vmatpush1.msra.mxu0 0.0
    %1206 = vmatprep.subr.mxu0 0.0
    %1207 = vmatpush1.msra.mxu0 0.0
    %1208 = vmatprep.subr.mxu0 0.0
    %1209 = vmatpush1.msra.mxu0 0.0
    %1210 = vmatprep.subr.mxu0 0.0
    %1211 = vmatpush1.msra.mxu0 0.0
    %1212 = vmatprep.subr.mxu0 0.0
    %1213 = vmatpush1.msra.mxu0 0.0
    %1214 = vmatprep.subr.mxu0 0.0
    %1215 = vmatpush1.msra.mxu0 0.0
    %1216 = vmatprep.subr.mxu0 0.0
    %1217 = vmatpush1.msra.mxu0 0.0
    %1218 = vmatprep.subr.mxu0 0.0
    %1219 = vmatpush1.msra.mxu0 0.0
    %1220 = vmatprep.subr.mxu0 0.0
    %1221 = vmatpush1.msra.mxu0 0.0
    %1222 = vmatprep.subr.mxu0 0.0
    %1223 = vmatpush1.msra.mxu0 0.0
    %1224 = vmatprep.subr.mxu0 0.0
    %1225 = vmatpush1.msra.mxu0 0.0
    %1226 = vmatprep.subr.mxu0 0.0
    %1227 = vmatpush1.msra.mxu0 0.0
    %1228 = vmatprep.subr.mxu0 0.0
    %1229 = vmatpush1.msra.mxu0 0.0
    %1230 = vmatprep.subr.mxu0 0.0
    %1231 = vmatpush1.msra.mxu0 0.0
    %1232 = vmatprep.subr.mxu0 0.0
    %1233 = vmatpush1.msra.mxu0 0.0
    %1234 = vmatprep.subr.mxu0 0.0
    %1235 = vmatpush1.msra.mxu0 0.0
    %1236 = vmatprep.subr.mxu0 0.0
    %1237 = vmatpush1.msra.mxu0 0.0
    %1238 = vmatprep.subr.mxu0 0.0
    %1239 = vmatpush1.msra.mxu0 0.0
    %1240 = vmatprep.mubr.f32.mxu0 0.0
    %1241 = vmatmul.mubr.f32.gmra.mrb[0].mxu0 %v1174
    %v1242 = vpop.f32.mrb[0].mxu0
    %v1243 = vadd.f32 %v203, %v1242
    %v1244 = vpop.f32.mrb[0].mxu0
    %1245 = vdwg.mxu0
    %v1246 = vxor.u32 %v1243, 2147483648
    %v1247 = vmul.f32 %v1246, 1.442695
    %v1248 = vpow.pop %v1247
    %v1249 = vadd.f32 %v1248, 1.0
    %v1250 = vrcp.pop %v1249
    %v1251 = vmul.f32 1.0, %v1250
    %v1252 = vtanh.pop %v1243
    %v1253 = vmul.f32 %v1251, %v941
    %1255 = vrot.lane.b32.xlu0 %v1252, 64
    %v1256 = vpop.permute.xlu0 %1255
    %v1258 = vmul.f32 %v1251, %v1256
    %1260 = vrot.lane.b32.xlu0 %v1258, 32
    %v1261 = vpop.permute.xlu0 %1260
    %v1263 = vadd.f32 %v1253, %v1261
    %v1264 = vtanh.pop %v1263
    %1266 = vrot.lane.b32.xlu0 %v1264, 64
    %v1267 = vpop.permute.xlu0 %1266
    %v1269 = vmul.f32 %v1251, %v1267
    %v1271 = vcombine.high %v1269, %v1269
    %v1273 = vunpack.c.l.s4 1966171168
    %v1274 = vunpack.c.0.s8 %v1273
    %v1275 = vlaneseq
    %v1276 = vshrl.u32 %v1275, 7
    %v1277 = vsub.s32 %v1274, %v1276
    %v1278 = vrot.slane %v1269, %v1277
    %v1280 = vunpack.c.l.s4 1966171168
    %v1281 = vunpack.c.0.s8 %v1280
    %v1282 = vlaneseq
    %v1283 = vshrl.u32 %v1282, 7
    %v1284 = vsub.s32 %v1281, %v1283
    %v1285 = vrot.slane %v1271, %v1284
    %v1286 = vcombine.high %v1278, %v1278
    %v1287 = vcombine.high %v1285, %v1285
    %v1289 = vunpack.c.l.s4 1966171168
    %v1290 = vunpack.c.0.s8 %v1289
    %v1291 = vlaneseq
    %v1292 = vshrl.u32 %v1291, 7
    %v1293 = vsub.s32 %v1290, %v1292
    %v1294 = vrot.slane %v1278, %v1293
    %v1296 = vunpack.c.l.s4 1966171168
    %v1297 = vunpack.c.0.s8 %v1296
    %v1298 = vlaneseq
    %v1299 = vshrl.u32 %v1298, 7
    %v1300 = vsub.s32 %v1297, %v1299
    %v1301 = vrot.slane %v1285, %v1300
    %v1303 = vunpack.c.l.s4 1966171168
    %v1304 = vunpack.c.0.s8 %v1303
    %v1305 = vlaneseq
    %v1306 = vshrl.u32 %v1305, 7
    %v1307 = vsub.s32 %v1304, %v1306
    %v1308 = vrot.slane %v1286, %v1307
    %v1310 = vunpack.c.l.s4 1966171168
    %v1311 = vunpack.c.0.s8 %v1310
    %v1312 = vlaneseq
    %v1313 = vshrl.u32 %v1312, 7
    %v1314 = vsub.s32 %v1311, %v1313
    %v1315 = vrot.slane %v1287, %v1314
    %v1316 = vcombine.high %v1294, %v1294
    %v1317 = vcombine.high %v1301, %v1301
    %v1318 = vcombine.high %v1308, %v1308
    %v1319 = vcombine.high %v1315, %v1315
    %v1320 = vlaneseq
    %v1321 = vshrl.u32 %v1320, 7
    %v1322 = vsub.s32 0, %v1321
    %v1323 = vrot.slane %v1294, %v1322
    %v1324 = vlaneseq
    %v1325 = vshrl.u32 %v1324, 7
    %v1326 = vsub.s32 0, %v1325
    %v1327 = vrot.slane %v1308, %v1326
    %v1328 = vlaneseq
    %v1329 = vshrl.u32 %v1328, 7
    %v1330 = vsub.s32 0, %v1329
    %v1331 = vrot.slane %v1316, %v1330
    %v1332 = vlaneseq
    %v1333 = vshrl.u32 %v1332, 7
    %v1334 = vsub.s32 0, %v1333
    %v1335 = vrot.slane %v1318, %v1334
    %v1336 = vlaneseq
    %v1337 = vshrl.u32 %v1336, 7
    %v1338 = vsub.s32 0, %v1337
    %v1339 = vrot.slane %v1301, %v1338
    %v1340 = vlaneseq
    %v1341 = vshrl.u32 %v1340, 7
    %v1342 = vsub.s32 0, %v1341
    %v1343 = vrot.slane %v1315, %v1342
    %v1344 = vlaneseq
    %v1345 = vshrl.u32 %v1344, 7
    %v1346 = vsub.s32 0, %v1345
    %v1347 = vrot.slane %v1317, %v1346
    %v1348 = vlaneseq
    %v1349 = vshrl.u32 %v1348, 7
    %v1350 = vsub.s32 0, %v1349
    %v1351 = vrot.slane %v1319, %v1350
    %1352 = vrot.lane.b32.xlu0 %v1323, 32
    %v1353 = vpop.permute.xlu0 %1352
    %1354 = vrot.lane.b32.xlu0 %v1327, 32
    %v1355 = vpop.permute.xlu0 %1354
    %1356 = vrot.lane.b32.xlu0 %v1331, 32
    %v1357 = vpop.permute.xlu0 %1356
    %1358 = vrot.lane.b32.xlu0 %v1335, 32
    %v1359 = vpop.permute.xlu0 %1358
    %1360 = vrot.lane.b32.xlu0 %v1339, 32
    %v1361 = vpop.permute.xlu0 %1360
    %1362 = vrot.lane.b32.xlu0 %v1343, 32
    %v1363 = vpop.permute.xlu0 %1362
    %1364 = vrot.lane.b32.xlu0 %v1347, 32
    %v1365 = vpop.permute.xlu0 %1364
    %1366 = vrot.lane.b32.xlu0 %v1351, 32
    %v1367 = vpop.permute.xlu0 %1366
    %1376 = vst.msk [vmem:[#allocation2 + $0x3] sm:$0x1] %vm409, %v1353
    %1377 = vst.msk [vmem:[#allocation2 + $0xb] sm:$0x1] %vm409, %v1355
    %1378 = vst.msk [vmem:[#allocation2 + $0x13] sm:$0x1] %vm409, %v1357
    %1379 = vst.msk [vmem:[#allocation2 + $0x1b] sm:$0x1] %vm409, %v1359
    %1380 = vst.msk [vmem:[#allocation2 + $0x23] sm:$0x1] %vm409, %v1361
    %1381 = vst.msk [vmem:[#allocation2 + $0x2b] sm:$0x1] %vm409, %v1363
    %1382 = vst.msk [vmem:[#allocation2 + $0x33] sm:$0x1] %vm409, %v1365
    %1383 = vst.msk [vmem:[#allocation2 + $0x3b] sm:$0x1] %vm409, %v1367
    %s1384 = scalar_lea.vmem %s1, 32
    %v1385 = vld [vmem:[%s1384] sm:$0xff]
    %1386 = vrot.lane.b32.xlu0 %v1164, 40
    %v1387 = vpop.permute.xlu0 %1386
    %v1389 = vsel %vm87, %v1385, %v1387
    %v1391 = vsel %vm95, %v1389, 0
    %1393 = vmatprep.subr.mxu0 0.0
    %1394 = vmatpush1.msra.mxu0 %v71
    %1395 = vmatprep.subr.mxu0 0.0
    %1396 = vmatpush1.msra.mxu0 %v72
    %1397 = vmatprep.subr.mxu0 0.0
    %1398 = vmatpush1.msra.mxu0 %v73
    %1399 = vmatprep.subr.mxu0 0.0
    %1400 = vmatpush1.msra.mxu0 %v74
    %1401 = vmatprep.subr.mxu0 0.0
    %1402 = vmatpush1.msra.mxu0 %v75
    %1403 = vmatprep.subr.mxu0 0.0
    %1404 = vmatpush1.msra.mxu0 0.0
    %1405 = vmatprep.subr.mxu0 0.0
    %1406 = vmatpush1.msra.mxu0 0.0
    %1407 = vmatprep.subr.mxu0 0.0
    %1408 = vmatpush1.msra.mxu0 0.0
    %1409 = vmatprep.subr.mxu0 0.0
    %1410 = vmatpush1.msra.mxu0 0.0
    %1411 = vmatprep.subr.mxu0 0.0
    %1412 = vmatpush1.msra.mxu0 0.0
    %1413 = vmatprep.subr.mxu0 0.0
    %1414 = vmatpush1.msra.mxu0 0.0
    %1415 = vmatprep.subr.mxu0 0.0
    %1416 = vmatpush1.msra.mxu0 0.0
    %1417 = vmatprep.subr.mxu0 0.0
    %1418 = vmatpush1.msra.mxu0 0.0
    %1419 = vmatprep.subr.mxu0 0.0
    %1420 = vmatpush1.msra.mxu0 0.0
    %1421 = vmatprep.subr.mxu0 0.0
    %1422 = vmatpush1.msra.mxu0 0.0
    %1423 = vmatprep.subr.mxu0 0.0
    %1424 = vmatpush1.msra.mxu0 0.0
    %1425 = vmatprep.subr.mxu0 0.0
    %1426 = vmatpush1.msra.mxu0 0.0
    %1427 = vmatprep.subr.mxu0 0.0
    %1428 = vmatpush1.msra.mxu0 0.0
    %1429 = vmatprep.subr.mxu0 0.0
    %1430 = vmatpush1.msra.mxu0 0.0
    %1431 = vmatprep.subr.mxu0 0.0
    %1432 = vmatpush1.msra.mxu0 0.0
    %1433 = vmatprep.subr.mxu0 0.0
    %1434 = vmatpush1.msra.mxu0 0.0
    %1435 = vmatprep.subr.mxu0 0.0
    %1436 = vmatpush1.msra.mxu0 0.0
    %1437 = vmatprep.subr.mxu0 0.0
    %1438 = vmatpush1.msra.mxu0 0.0
    %1439 = vmatprep.subr.mxu0 0.0
    %1440 = vmatpush1.msra.mxu0 0.0
    %1441 = vmatprep.subr.mxu0 0.0
    %1442 = vmatpush1.msra.mxu0 0.0
    %1443 = vmatprep.subr.mxu0 0.0
    %1444 = vmatpush1.msra.mxu0 0.0
    %1445 = vmatprep.subr.mxu0 0.0
    %1446 = vmatpush1.msra.mxu0 0.0
    %1447 = vmatprep.subr.mxu0 0.0
    %1448 = vmatpush1.msra.mxu0 0.0
    %1449 = vmatprep.subr.mxu0 0.0
    %1450 = vmatpush1.msra.mxu0 0.0
    %1451 = vmatprep.subr.mxu0 0.0
    %1452 = vmatpush1.msra.mxu0 0.0
    %1453 = vmatprep.subr.mxu0 0.0
    %1454 = vmatpush1.msra.mxu0 0.0
    %1455 = vmatprep.subr.mxu0 0.0
    %1456 = vmatpush1.msra.mxu0 0.0
    %1457 = vmatprep.mubr.f32.mxu0 0.0
    %1458 = vmatmul.mubr.f32.gmra.mrb[0].mxu0 %v1391
    %v1459 = vpop.f32.mrb[0].mxu0
    %v1460 = vadd.f32 %v93, %v1459
    %v1461 = vpop.f32.mrb[0].mxu0
    %1462 = vdwg.mxu0
    %v1463 = vxor.u32 %v1460, 2147483648
    %v1464 = vmul.f32 %v1463, 1.442695
    %v1465 = vpow.pop %v1464
    %v1466 = vadd.f32 %v1465, 1.0
    %v1467 = vrcp.pop %v1466
    %v1468 = vmul.f32 1.0, %v1467
    %v1469 = vtanh.pop %v1460
    %v1470 = vmul.f32 %v1468, %v1158
    %1472 = vrot.lane.b32.xlu0 %v1469, 64
    %v1473 = vpop.permute.xlu0 %1472
    %v1475 = vmul.f32 %v1468, %v1473
    %1477 = vrot.lane.b32.xlu0 %v1475, 32
    %v1478 = vpop.permute.xlu0 %1477
    %v1480 = vadd.f32 %v1470, %v1478
    %v1481 = vtanh.pop %v1480
    %1483 = vrot.lane.b32.xlu0 %v1481, 64
    %v1484 = vpop.permute.xlu0 %1483
    %v1486 = vmul.f32 %v1468, %v1484
    %1488 = vrot.lane.b32.xlu0 %v1486, 32
    %v1489 = vpop.permute.xlu0 %1488
    %1491 = vrot.lane.b32.xlu0 %v1269, 64
    %v1492 = vpop.permute.xlu0 %1491
    %v1494 = vsel %vm197, %v1489, %v1492
    %v1496 = vsel %vm205, %v1494, 0
    %1498 = vmatprep.subr.mxu0 0.0
    %1499 = vmatpush1.msra.mxu0 %v77
    %1500 = vmatprep.subr.mxu0 0.0
    %1501 = vmatpush1.msra.mxu0 %v78
    %1502 = vmatprep.subr.mxu0 0.0
    %1503 = vmatpush1.msra.mxu0 %v79
    %1504 = vmatprep.subr.mxu0 0.0
    %1505 = vmatpush1.msra.mxu0 %v80
    %1506 = vmatprep.subr.mxu0 0.0
    %1507 = vmatpush1.msra.mxu0 %v81
    %1508 = vmatprep.subr.mxu0 0.0
    %1509 = vmatpush1.msra.mxu0 %v82
    %1510 = vmatprep.subr.mxu0 0.0
    %1511 = vmatpush1.msra.mxu0 %v83
    %1512 = vmatprep.subr.mxu0 0.0
    %1513 = vmatpush1.msra.mxu0 %v84
    %1514 = vmatprep.subr.mxu0 0.0
    %1515 = vmatpush1.msra.mxu0 0.0
    %1516 = vmatprep.subr.mxu0 0.0
    %1517 = vmatpush1.msra.mxu0 0.0
    %1518 = vmatprep.subr.mxu0 0.0
    %1519 = vmatpush1.msra.mxu0 0.0
    %1520 = vmatprep.subr.mxu0 0.0
    %1521 = vmatpush1.msra.mxu0 0.0
    %1522 = vmatprep.subr.mxu0 0.0
    %1523 = vmatpush1.msra.mxu0 0.0
    %1524 = vmatprep.subr.mxu0 0.0
    %1525 = vmatpush1.msra.mxu0 0.0
    %1526 = vmatprep.subr.mxu0 0.0
    %1527 = vmatpush1.msra.mxu0 0.0
    %1528 = vmatprep.subr.mxu0 0.0
    %1529 = vmatpush1.msra.mxu0 0.0
    %1530 = vmatprep.subr.mxu0 0.0
    %1531 = vmatpush1.msra.mxu0 0.0
    %1532 = vmatprep.subr.mxu0 0.0
    %1533 = vmatpush1.msra.mxu0 0.0
    %1534 = vmatprep.subr.mxu0 0.0
    %1535 = vmatpush1.msra.mxu0 0.0
    %1536 = vmatprep.subr.mxu0 0.0
    %1537 = vmatpush1.msra.mxu0 0.0
    %1538 = vmatprep.subr.mxu0 0.0
    %1539 = vmatpush1.msra.mxu0 0.0
    %1540 = vmatprep.subr.mxu0 0.0
    %1541 = vmatpush1.msra.mxu0 0.0
    %1542 = vmatprep.subr.mxu0 0.0
    %1543 = vmatpush1.msra.mxu0 0.0
    %1544 = vmatprep.subr.mxu0 0.0
    %1545 = vmatpush1.msra.mxu0 0.0
    %1546 = vmatprep.subr.mxu0 0.0
    %1547 = vmatpush1.msra.mxu0 0.0
    %1548 = vmatprep.subr.mxu0 0.0
    %1549 = vmatpush1.msra.mxu0 0.0
    %1550 = vmatprep.subr.mxu0 0.0
    %1551 = vmatpush1.msra.mxu0 0.0
    %1552 = vmatprep.subr.mxu0 0.0
    %1553 = vmatpush1.msra.mxu0 0.0
    %1554 = vmatprep.subr.mxu0 0.0
    %1555 = vmatpush1.msra.mxu0 0.0
    %1556 = vmatprep.subr.mxu0 0.0
    %1557 = vmatpush1.msra.mxu0 0.0
    %1558 = vmatprep.subr.mxu0 0.0
    %1559 = vmatpush1.msra.mxu0 0.0
    %1560 = vmatprep.subr.mxu0 0.0
    %1561 = vmatpush1.msra.mxu0 0.0
    %1562 = vmatprep.mubr.f32.mxu0 0.0
    %1563 = vmatmul.mubr.f32.gmra.mrb[0].mxu0 %v1496
    %v1564 = vpop.f32.mrb[0].mxu0
    %v1565 = vadd.f32 %v203, %v1564
    %v1566 = vpop.f32.mrb[0].mxu0
    %1567 = vdwg.mxu0
    %v1568 = vxor.u32 %v1565, 2147483648
    %v1569 = vmul.f32 %v1568, 1.442695
    %v1570 = vpow.pop %v1569
    %v1571 = vadd.f32 %v1570, 1.0
    %v1572 = vrcp.pop %v1571
    %v1573 = vmul.f32 1.0, %v1572
    %v1574 = vtanh.pop %v1565
    %v1575 = vmul.f32 %v1573, %v1263
    %1577 = vrot.lane.b32.xlu0 %v1574, 64
    %v1578 = vpop.permute.xlu0 %1577
    %v1580 = vmul.f32 %v1573, %v1578
    %1582 = vrot.lane.b32.xlu0 %v1580, 32
    %v1583 = vpop.permute.xlu0 %1582
    %v1585 = vadd.f32 %v1575, %v1583
    %v1586 = vtanh.pop %v1585
    %1588 = vrot.lane.b32.xlu0 %v1586, 64
    %v1589 = vpop.permute.xlu0 %1588
    %v1591 = vmul.f32 %v1573, %v1589
    %v1593 = vcombine.high %v1591, %v1591
    %v1595 = vunpack.c.l.s4 1966171168
    %v1596 = vunpack.c.0.s8 %v1595
    %v1597 = vlaneseq
    %v1598 = vshrl.u32 %v1597, 7
    %v1599 = vsub.s32 %v1596, %v1598
    %v1600 = vrot.slane %v1591, %v1599
    %v1602 = vunpack.c.l.s4 1966171168
    %v1603 = vunpack.c.0.s8 %v1602
    %v1604 = vlaneseq
    %v1605 = vshrl.u32 %v1604, 7
    %v1606 = vsub.s32 %v1603, %v1605
    %v1607 = vrot.slane %v1593, %v1606
    %v1608 = vcombine.high %v1600, %v1600
    %v1609 = vcombine.high %v1607, %v1607
    %v1611 = vunpack.c.l.s4 1966171168
    %v1612 = vunpack.c.0.s8 %v1611
    %v1613 = vlaneseq
    %v1614 = vshrl.u32 %v1613, 7
    %v1615 = vsub.s32 %v1612, %v1614
    %v1616 = vrot.slane %v1600, %v1615
    %v1618 = vunpack.c.l.s4 1966171168
    %v1619 = vunpack.c.0.s8 %v1618
    %v1620 = vlaneseq
    %v1621 = vshrl.u32 %v1620, 7
    %v1622 = vsub.s32 %v1619, %v1621
    %v1623 = vrot.slane %v1607, %v1622
    %v1625 = vunpack.c.l.s4 1966171168
    %v1626 = vunpack.c.0.s8 %v1625
    %v1627 = vlaneseq
    %v1628 = vshrl.u32 %v1627, 7
    %v1629 = vsub.s32 %v1626, %v1628
    %v1630 = vrot.slane %v1608, %v1629
    %v1632 = vunpack.c.l.s4 1966171168
    %v1633 = vunpack.c.0.s8 %v1632
    %v1634 = vlaneseq
    %v1635 = vshrl.u32 %v1634, 7
    %v1636 = vsub.s32 %v1633, %v1635
    %v1637 = vrot.slane %v1609, %v1636
    %v1638 = vcombine.high %v1616, %v1616
    %v1639 = vcombine.high %v1623, %v1623
    %v1640 = vcombine.high %v1630, %v1630
    %v1641 = vcombine.high %v1637, %v1637
    %v1642 = vlaneseq
    %v1643 = vshrl.u32 %v1642, 7
    %v1644 = vsub.s32 0, %v1643
    %v1645 = vrot.slane %v1616, %v1644
    %v1646 = vlaneseq
    %v1647 = vshrl.u32 %v1646, 7
    %v1648 = vsub.s32 0, %v1647
    %v1649 = vrot.slane %v1630, %v1648
    %v1650 = vlaneseq
    %v1651 = vshrl.u32 %v1650, 7
    %v1652 = vsub.s32 0, %v1651
    %v1653 = vrot.slane %v1638, %v1652
    %v1654 = vlaneseq
    %v1655 = vshrl.u32 %v1654, 7
    %v1656 = vsub.s32 0, %v1655
    %v1657 = vrot.slane %v1640, %v1656
    %v1658 = vlaneseq
    %v1659 = vshrl.u32 %v1658, 7
    %v1660 = vsub.s32 0, %v1659
    %v1661 = vrot.slane %v1623, %v1660
    %v1662 = vlaneseq
    %v1663 = vshrl.u32 %v1662, 7
    %v1664 = vsub.s32 0, %v1663
    %v1665 = vrot.slane %v1637, %v1664
    %v1666 = vlaneseq
    %v1667 = vshrl.u32 %v1666, 7
    %v1668 = vsub.s32 0, %v1667
    %v1669 = vrot.slane %v1639, %v1668
    %v1670 = vlaneseq
    %v1671 = vshrl.u32 %v1670, 7
    %v1672 = vsub.s32 0, %v1671
    %v1673 = vrot.slane %v1641, %v1672
    %1674 = vrot.lane.b32.xlu0 %v1645, 32
    %v1675 = vpop.permute.xlu0 %1674
    %1676 = vrot.lane.b32.xlu0 %v1649, 32
    %v1677 = vpop.permute.xlu0 %1676
    %1678 = vrot.lane.b32.xlu0 %v1653, 32
    %v1679 = vpop.permute.xlu0 %1678
    %1680 = vrot.lane.b32.xlu0 %v1657, 32
    %v1681 = vpop.permute.xlu0 %1680
    %1682 = vrot.lane.b32.xlu0 %v1661, 32
    %v1683 = vpop.permute.xlu0 %1682
    %1684 = vrot.lane.b32.xlu0 %v1665, 32
    %v1685 = vpop.permute.xlu0 %1684
    %1686 = vrot.lane.b32.xlu0 %v1669, 32
    %v1687 = vpop.permute.xlu0 %1686
    %1688 = vrot.lane.b32.xlu0 %v1673, 32
    %v1689 = vpop.permute.xlu0 %1688
    %1698 = vst.msk [vmem:[#allocation2 + $0x4] sm:$0x1] %vm409, %v1675
    %1699 = vst.msk [vmem:[#allocation2 + $0xc] sm:$0x1] %vm409, %v1677
    %1700 = vst.msk [vmem:[#allocation2 + $0x14] sm:$0x1] %vm409, %v1679
    %1701 = vst.msk [vmem:[#allocation2 + $0x1c] sm:$0x1] %vm409, %v1681
    %1702 = vst.msk [vmem:[#allocation2 + $0x24] sm:$0x1] %vm409, %v1683
    %1703 = vst.msk [vmem:[#allocation2 + $0x2c] sm:$0x1] %vm409, %v1685
    %1704 = vst.msk [vmem:[#allocation2 + $0x34] sm:$0x1] %vm409, %v1687
    %1705 = vst.msk [vmem:[#allocation2 + $0x3c] sm:$0x1] %vm409, %v1689
    %s1706 = scalar_lea.vmem %s1, 40
    %v1707 = vld [vmem:[%s1706] sm:$0xff]
    %1708 = vrot.lane.b32.xlu0 %v1486, 40
    %v1709 = vpop.permute.xlu0 %1708
    %v1711 = vsel %vm87, %v1707, %v1709
    %v1713 = vsel %vm95, %v1711, 0
    %1715 = vmatprep.subr.mxu0 0.0
    %1716 = vmatpush1.msra.mxu0 %v71
    %1717 = vmatprep.subr.mxu0 0.0
    %1718 = vmatpush1.msra.mxu0 %v72
    %1719 = vmatprep.subr.mxu0 0.0
    %1720 = vmatpush1.msra.mxu0 %v73
    %1721 = vmatprep.subr.mxu0 0.0
    %1722 = vmatpush1.msra.mxu0 %v74
    %1723 = vmatprep.subr.mxu0 0.0
    %1724 = vmatpush1.msra.mxu0 %v75
    %1725 = vmatprep.subr.mxu0 0.0
    %1726 = vmatpush1.msra.mxu0 0.0
    %1727 = vmatprep.subr.mxu0 0.0
    %1728 = vmatpush1.msra.mxu0 0.0
    %1729 = vmatprep.subr.mxu0 0.0
    %1730 = vmatpush1.msra.mxu0 0.0
    %1731 = vmatprep.subr.mxu0 0.0
    %1732 = vmatpush1.msra.mxu0 0.0
    %1733 = vmatprep.subr.mxu0 0.0
    %1734 = vmatpush1.msra.mxu0 0.0
    %1735 = vmatprep.subr.mxu0 0.0
    %1736 = vmatpush1.msra.mxu0 0.0
    %1737 = vmatprep.subr.mxu0 0.0
    %1738 = vmatpush1.msra.mxu0 0.0
    %1739 = vmatprep.subr.mxu0 0.0
    %1740 = vmatpush1.msra.mxu0 0.0
    %1741 = vmatprep.subr.mxu0 0.0
    %1742 = vmatpush1.msra.mxu0 0.0
    %1743 = vmatprep.subr.mxu0 0.0
    %1744 = vmatpush1.msra.mxu0 0.0
    %1745 = vmatprep.subr.mxu0 0.0
    %1746 = vmatpush1.msra.mxu0 0.0
    %1747 = vmatprep.subr.mxu0 0.0
    %1748 = vmatpush1.msra.mxu0 0.0
    %1749 = vmatprep.subr.mxu0 0.0
    %1750 = vmatpush1.msra.mxu0 0.0
    %1751 = vmatprep.subr.mxu0 0.0
    %1752 = vmatpush1.msra.mxu0 0.0
    %1753 = vmatprep.subr.mxu0 0.0
    %1754 = vmatpush1.msra.mxu0 0.0
    %1755 = vmatprep.subr.mxu0 0.0
    %1756 = vmatpush1.msra.mxu0 0.0
    %1757 = vmatprep.subr.mxu0 0.0
    %1758 = vmatpush1.msra.mxu0 0.0
    %1759 = vmatprep.subr.mxu0 0.0
    %1760 = vmatpush1.msra.mxu0 0.0
    %1761 = vmatprep.subr.mxu0 0.0
    %1762 = vmatpush1.msra.mxu0 0.0
    %1763 = vmatprep.subr.mxu0 0.0
    %1764 = vmatpush1.msra.mxu0 0.0
    %1765 = vmatprep.subr.mxu0 0.0
    %1766 = vmatpush1.msra.mxu0 0.0
    %1767 = vmatprep.subr.mxu0 0.0
    %1768 = vmatpush1.msra.mxu0 0.0
    %1769 = vmatprep.subr.mxu0 0.0
    %1770 = vmatpush1.msra.mxu0 0.0
    %1771 = vmatprep.subr.mxu0 0.0
    %1772 = vmatpush1.msra.mxu0 0.0
    %1773 = vmatprep.subr.mxu0 0.0
    %1774 = vmatpush1.msra.mxu0 0.0
    %1775 = vmatprep.subr.mxu0 0.0
    %1776 = vmatpush1.msra.mxu0 0.0
    %1777 = vmatprep.subr.mxu0 0.0
    %1778 = vmatpush1.msra.mxu0 0.0
    %1779 = vmatprep.mubr.f32.mxu0 0.0
    %1780 = vmatmul.mubr.f32.gmra.mrb[0].mxu0 %v1713
    %v1781 = vpop.f32.mrb[0].mxu0
    %v1782 = vadd.f32 %v93, %v1781
    %v1783 = vpop.f32.mrb[0].mxu0
    %1784 = vdwg.mxu0
    %v1785 = vxor.u32 %v1782, 2147483648
    %v1786 = vmul.f32 %v1785, 1.442695
    %v1787 = vpow.pop %v1786
    %v1788 = vadd.f32 %v1787, 1.0
    %v1789 = vrcp.pop %v1788
    %v1790 = vmul.f32 1.0, %v1789
    %v1791 = vtanh.pop %v1782
    %v1792 = vmul.f32 %v1790, %v1480
    %1794 = vrot.lane.b32.xlu0 %v1791, 64
    %v1795 = vpop.permute.xlu0 %1794
    %v1797 = vmul.f32 %v1790, %v1795
    %1799 = vrot.lane.b32.xlu0 %v1797, 32
    %v1800 = vpop.permute.xlu0 %1799
    %v1802 = vadd.f32 %v1792, %v1800
    %v1803 = vtanh.pop %v1802
    %1805 = vrot.lane.b32.xlu0 %v1803, 64
    %v1806 = vpop.permute.xlu0 %1805
    %v1808 = vmul.f32 %v1790, %v1806
    %1810 = vrot.lane.b32.xlu0 %v1808, 32
    %v1811 = vpop.permute.xlu0 %1810
    %1813 = vrot.lane.b32.xlu0 %v1591, 64
    %v1814 = vpop.permute.xlu0 %1813
    %v1816 = vsel %vm197, %v1811, %v1814
    %v1818 = vsel %vm205, %v1816, 0
    %1820 = vmatprep.subr.mxu0 0.0
    %1821 = vmatpush1.msra.mxu0 %v77
    %1822 = vmatprep.subr.mxu0 0.0
    %1823 = vmatpush1.msra.mxu0 %v78
    %1824 = vmatprep.subr.mxu0 0.0
    %1825 = vmatpush1.msra.mxu0 %v79
    %1826 = vmatprep.subr.mxu0 0.0
    %1827 = vmatpush1.msra.mxu0 %v80
    %1828 = vmatprep.subr.mxu0 0.0
    %1829 = vmatpush1.msra.mxu0 %v81
    %1830 = vmatprep.subr.mxu0 0.0
    %1831 = vmatpush1.msra.mxu0 %v82
    %1832 = vmatprep.subr.mxu0 0.0
    %1833 = vmatpush1.msra.mxu0 %v83
    %1834 = vmatprep.subr.mxu0 0.0
    %1835 = vmatpush1.msra.mxu0 %v84
    %1836 = vmatprep.subr.mxu0 0.0
    %1837 = vmatpush1.msra.mxu0 0.0
    %1838 = vmatprep.subr.mxu0 0.0
    %1839 = vmatpush1.msra.mxu0 0.0
    %1840 = vmatprep.subr.mxu0 0.0
    %1841 = vmatpush1.msra.mxu0 0.0
    %1842 = vmatprep.subr.mxu0 0.0
    %1843 = vmatpush1.msra.mxu0 0.0
    %1844 = vmatprep.subr.mxu0 0.0
    %1845 = vmatpush1.msra.mxu0 0.0
    %1846 = vmatprep.subr.mxu0 0.0
    %1847 = vmatpush1.msra.mxu0 0.0
    %1848 = vmatprep.subr.mxu0 0.0
    %1849 = vmatpush1.msra.mxu0 0.0
    %1850 = vmatprep.subr.mxu0 0.0
    %1851 = vmatpush1.msra.mxu0 0.0
    %1852 = vmatprep.subr.mxu0 0.0
    %1853 = vmatpush1.msra.mxu0 0.0
    %1854 = vmatprep.subr.mxu0 0.0
    %1855 = vmatpush1.msra.mxu0 0.0
    %1856 = vmatprep.subr.mxu0 0.0
    %1857 = vmatpush1.msra.mxu0 0.0
    %1858 = vmatprep.subr.mxu0 0.0
    %1859 = vmatpush1.msra.mxu0 0.0
    %1860 = vmatprep.subr.mxu0 0.0
    %1861 = vmatpush1.msra.mxu0 0.0
    %1862 = vmatprep.subr.mxu0 0.0
    %1863 = vmatpush1.msra.mxu0 0.0
    %1864 = vmatprep.subr.mxu0 0.0
    %1865 = vmatpush1.msra.mxu0 0.0
    %1866 = vmatprep.subr.mxu0 0.0
    %1867 = vmatpush1.msra.mxu0 0.0
    %1868 = vmatprep.subr.mxu0 0.0
    %1869 = vmatpush1.msra.mxu0 0.0
    %1870 = vmatprep.subr.mxu0 0.0
    %1871 = vmatpush1.msra.mxu0 0.0
    %1872 = vmatprep.subr.mxu0 0.0
    %1873 = vmatpush1.msra.mxu0 0.0
    %1874 = vmatprep.subr.mxu0 0.0
    %1875 = vmatpush1.msra.mxu0 0.0
    %1876 = vmatprep.subr.mxu0 0.0
    %1877 = vmatpush1.msra.mxu0 0.0
    %1878 = vmatprep.subr.mxu0 0.0
    %1879 = vmatpush1.msra.mxu0 0.0
    %1880 = vmatprep.subr.mxu0 0.0
    %1881 = vmatpush1.msra.mxu0 0.0
    %1882 = vmatprep.subr.mxu0 0.0
    %1883 = vmatpush1.msra.mxu0 0.0
    %1884 = vmatprep.mubr.f32.mxu0 0.0
    %1885 = vmatmul.mubr.f32.gmra.mrb[0].mxu0 %v1818
    %v1886 = vpop.f32.mrb[0].mxu0
    %v1887 = vadd.f32 %v203, %v1886
    %v1888 = vpop.f32.mrb[0].mxu0
    %1889 = vdwg.mxu0
    %v1890 = vxor.u32 %v1887, 2147483648
    %v1891 = vmul.f32 %v1890, 1.442695
    %v1892 = vpow.pop %v1891
    %v1893 = vadd.f32 %v1892, 1.0
    %v1894 = vrcp.pop %v1893
    %v1895 = vmul.f32 1.0, %v1894
    %v1896 = vtanh.pop %v1887
    %v1897 = vmul.f32 %v1895, %v1585
    %1899 = vrot.lane.b32.xlu0 %v1896, 64
    %v1900 = vpop.permute.xlu0 %1899
    %v1902 = vmul.f32 %v1895, %v1900
    %1904 = vrot.lane.b32.xlu0 %v1902, 32
    %v1905 = vpop.permute.xlu0 %1904
    %v1907 = vadd.f32 %v1897, %v1905
    %v1908 = vtanh.pop %v1907
    %1910 = vrot.lane.b32.xlu0 %v1908, 64
    %v1911 = vpop.permute.xlu0 %1910
    %v1913 = vmul.f32 %v1895, %v1911
    %v1915 = vcombine.high %v1913, %v1913
    %v1917 = vunpack.c.l.s4 1966171168
    %v1918 = vunpack.c.0.s8 %v1917
    %v1919 = vlaneseq
    %v1920 = vshrl.u32 %v1919, 7
    %v1921 = vsub.s32 %v1918, %v1920
    %v1922 = vrot.slane %v1913, %v1921
    %v1924 = vunpack.c.l.s4 1966171168
    %v1925 = vunpack.c.0.s8 %v1924
    %v1926 = vlaneseq
    %v1927 = vshrl.u32 %v1926, 7
    %v1928 = vsub.s32 %v1925, %v1927
    %v1929 = vrot.slane %v1915, %v1928
    %v1930 = vcombine.high %v1922, %v1922
    %v1931 = vcombine.high %v1929, %v1929
    %v1933 = vunpack.c.l.s4 1966171168
    %v1934 = vunpack.c.0.s8 %v1933
    %v1935 = vlaneseq
    %v1936 = vshrl.u32 %v1935, 7
    %v1937 = vsub.s32 %v1934, %v1936
    %v1938 = vrot.slane %v1922, %v1937
    %v1940 = vunpack.c.l.s4 1966171168
    %v1941 = vunpack.c.0.s8 %v1940
    %v1942 = vlaneseq
    %v1943 = vshrl.u32 %v1942, 7
    %v1944 = vsub.s32 %v1941, %v1943
    %v1945 = vrot.slane %v1929, %v1944
    %v1947 = vunpack.c.l.s4 1966171168
    %v1948 = vunpack.c.0.s8 %v1947
    %v1949 = vlaneseq
    %v1950 = vshrl.u32 %v1949, 7
    %v1951 = vsub.s32 %v1948, %v1950
    %v1952 = vrot.slane %v1930, %v1951
    %v1954 = vunpack.c.l.s4 1966171168
    %v1955 = vunpack.c.0.s8 %v1954
    %v1956 = vlaneseq
    %v1957 = vshrl.u32 %v1956, 7
    %v1958 = vsub.s32 %v1955, %v1957
    %v1959 = vrot.slane %v1931, %v1958
    %v1960 = vcombine.high %v1938, %v1938
    %v1961 = vcombine.high %v1945, %v1945
    %v1962 = vcombine.high %v1952, %v1952
    %v1963 = vcombine.high %v1959, %v1959
    %v1964 = vlaneseq
    %v1965 = vshrl.u32 %v1964, 7
    %v1966 = vsub.s32 0, %v1965
    %v1967 = vrot.slane %v1938, %v1966
    %v1968 = vlaneseq
    %v1969 = vshrl.u32 %v1968, 7
    %v1970 = vsub.s32 0, %v1969
    %v1971 = vrot.slane %v1952, %v1970
    %v1972 = vlaneseq
    %v1973 = vshrl.u32 %v1972, 7
    %v1974 = vsub.s32 0, %v1973
    %v1975 = vrot.slane %v1960, %v1974
    %v1976 = vlaneseq
    %v1977 = vshrl.u32 %v1976, 7
    %v1978 = vsub.s32 0, %v1977
    %v1979 = vrot.slane %v1962, %v1978
    %v1980 = vlaneseq
    %v1981 = vshrl.u32 %v1980, 7
    %v1982 = vsub.s32 0, %v1981
    %v1983 = vrot.slane %v1945, %v1982
    %v1984 = vlaneseq
    %v1985 = vshrl.u32 %v1984, 7
    %v1986 = vsub.s32 0, %v1985
    %v1987 = vrot.slane %v1959, %v1986
    %v1988 = vlaneseq
    %v1989 = vshrl.u32 %v1988, 7
    %v1990 = vsub.s32 0, %v1989
    %v1991 = vrot.slane %v1961, %v1990
    %v1992 = vlaneseq
    %v1993 = vshrl.u32 %v1992, 7
    %v1994 = vsub.s32 0, %v1993
    %v1995 = vrot.slane %v1963, %v1994
    %1996 = vrot.lane.b32.xlu0 %v1967, 32
    %v1997 = vpop.permute.xlu0 %1996
    %1998 = vrot.lane.b32.xlu0 %v1971, 32
    %v1999 = vpop.permute.xlu0 %1998
    %2000 = vrot.lane.b32.xlu0 %v1975, 32
    %v2001 = vpop.permute.xlu0 %2000
    %2002 = vrot.lane.b32.xlu0 %v1979, 32
    %v2003 = vpop.permute.xlu0 %2002
    %2004 = vrot.lane.b32.xlu0 %v1983, 32
    %v2005 = vpop.permute.xlu0 %2004
    %2006 = vrot.lane.b32.xlu0 %v1987, 32
    %v2007 = vpop.permute.xlu0 %2006
    %2008 = vrot.lane.b32.xlu0 %v1991, 32
    %v2009 = vpop.permute.xlu0 %2008
    %2010 = vrot.lane.b32.xlu0 %v1995, 32
    %v2011 = vpop.permute.xlu0 %2010
    %2020 = vst.msk [vmem:[#allocation2 + $0x5] sm:$0x1] %vm409, %v1997
    %2021 = vst.msk [vmem:[#allocation2 + $0xd] sm:$0x1] %vm409, %v1999
    %2022 = vst.msk [vmem:[#allocation2 + $0x15] sm:$0x1] %vm409, %v2001
    %2023 = vst.msk [vmem:[#allocation2 + $0x1d] sm:$0x1] %vm409, %v2003
    %2024 = vst.msk [vmem:[#allocation2 + $0x25] sm:$0x1] %vm409, %v2005
    %2025 = vst.msk [vmem:[#allocation2 + $0x2d] sm:$0x1] %vm409, %v2007
    %2026 = vst.msk [vmem:[#allocation2 + $0x35] sm:$0x1] %vm409, %v2009
    %2027 = vst.msk [vmem:[#allocation2 + $0x3d] sm:$0x1] %vm409, %v2011
    %s2028 = scalar_lea.vmem %s1, 48
    %v2029 = vld [vmem:[%s2028] sm:$0xff]
    %2030 = vrot.lane.b32.xlu0 %v1808, 40
    %v2031 = vpop.permute.xlu0 %2030
    %v2033 = vsel %vm87, %v2029, %v2031
    %v2035 = vsel %vm95, %v2033, 0
    %2037 = vmatprep.subr.mxu0 0.0
    %2038 = vmatpush1.msra.mxu0 %v71
    %2039 = vmatprep.subr.mxu0 0.0
    %2040 = vmatpush1.msra.mxu0 %v72
    %2041 = vmatprep.subr.mxu0 0.0
    %2042 = vmatpush1.msra.mxu0 %v73
    %2043 = vmatprep.subr.mxu0 0.0
    %2044 = vmatpush1.msra.mxu0 %v74
    %2045 = vmatprep.subr.mxu0 0.0
    %2046 = vmatpush1.msra.mxu0 %v75
    %2047 = vmatprep.subr.mxu0 0.0
    %2048 = vmatpush1.msra.mxu0 0.0
    %2049 = vmatprep.subr.mxu0 0.0
    %2050 = vmatpush1.msra.mxu0 0.0
    %2051 = vmatprep.subr.mxu0 0.0
    %2052 = vmatpush1.msra.mxu0 0.0
    %2053 = vmatprep.subr.mxu0 0.0
    %2054 = vmatpush1.msra.mxu0 0.0
    %2055 = vmatprep.subr.mxu0 0.0
    %2056 = vmatpush1.msra.mxu0 0.0
    %2057 = vmatprep.subr.mxu0 0.0
    %2058 = vmatpush1.msra.mxu0 0.0
    %2059 = vmatprep.subr.mxu0 0.0
    %2060 = vmatpush1.msra.mxu0 0.0
    %2061 = vmatprep.subr.mxu0 0.0
    %2062 = vmatpush1.msra.mxu0 0.0
    %2063 = vmatprep.subr.mxu0 0.0
    %2064 = vmatpush1.msra.mxu0 0.0
    %2065 = vmatprep.subr.mxu0 0.0
    %2066 = vmatpush1.msra.mxu0 0.0
    %2067 = vmatprep.subr.mxu0 0.0
    %2068 = vmatpush1.msra.mxu0 0.0
    %2069 = vmatprep.subr.mxu0 0.0
    %2070 = vmatpush1.msra.mxu0 0.0
    %2071 = vmatprep.subr.mxu0 0.0
    %2072 = vmatpush1.msra.mxu0 0.0
    %2073 = vmatprep.subr.mxu0 0.0
    %2074 = vmatpush1.msra.mxu0 0.0
    %2075 = vmatprep.subr.mxu0 0.0
    %2076 = vmatpush1.msra.mxu0 0.0
    %2077 = vmatprep.subr.mxu0 0.0
    %2078 = vmatpush1.msra.mxu0 0.0
    %2079 = vmatprep.subr.mxu0 0.0
    %2080 = vmatpush1.msra.mxu0 0.0
    %2081 = vmatprep.subr.mxu0 0.0
    %2082 = vmatpush1.msra.mxu0 0.0
    %2083 = vmatprep.subr.mxu0 0.0
    %2084 = vmatpush1.msra.mxu0 0.0
    %2085 = vmatprep.subr.mxu0 0.0
    %2086 = vmatpush1.msra.mxu0 0.0
    %2087 = vmatprep.subr.mxu0 0.0
    %2088 = vmatpush1.msra.mxu0 0.0
    %2089 = vmatprep.subr.mxu0 0.0
    %2090 = vmatpush1.msra.mxu0 0.0
    %2091 = vmatprep.subr.mxu0 0.0
    %2092 = vmatpush1.msra.mxu0 0.0
    %2093 = vmatprep.subr.mxu0 0.0
    %2094 = vmatpush1.msra.mxu0 0.0
    %2095 = vmatprep.subr.mxu0 0.0
    %2096 = vmatpush1.msra.mxu0 0.0
    %2097 = vmatprep.subr.mxu0 0.0
    %2098 = vmatpush1.msra.mxu0 0.0
    %2099 = vmatprep.subr.mxu0 0.0
    %2100 = vmatpush1.msra.mxu0 0.0
    %2101 = vmatprep.mubr.f32.mxu0 0.0
    %2102 = vmatmul.mubr.f32.gmra.mrb[0].mxu0 %v2035
    %v2103 = vpop.f32.mrb[0].mxu0
    %v2104 = vadd.f32 %v93, %v2103
    %v2105 = vpop.f32.mrb[0].mxu0
    %2106 = vdwg.mxu0
    %v2107 = vxor.u32 %v2104, 2147483648
    %v2108 = vmul.f32 %v2107, 1.442695
    %v2109 = vpow.pop %v2108
    %v2110 = vadd.f32 %v2109, 1.0
    %v2111 = vrcp.pop %v2110
    %v2112 = vmul.f32 1.0, %v2111
    %v2113 = vtanh.pop %v2104
    %v2114 = vmul.f32 %v2112, %v1802
    %2116 = vrot.lane.b32.xlu0 %v2113, 64
    %v2117 = vpop.permute.xlu0 %2116
    %v2119 = vmul.f32 %v2112, %v2117
    %2121 = vrot.lane.b32.xlu0 %v2119, 32
    %v2122 = vpop.permute.xlu0 %2121
    %v2124 = vadd.f32 %v2114, %v2122
    %v2125 = vtanh.pop %v2124
    %2127 = vrot.lane.b32.xlu0 %v2125, 64
    %v2128 = vpop.permute.xlu0 %2127
    %v2130 = vmul.f32 %v2112, %v2128
    %2132 = vrot.lane.b32.xlu0 %v2130, 32
    %v2133 = vpop.permute.xlu0 %2132
    %2135 = vrot.lane.b32.xlu0 %v1913, 64
    %v2136 = vpop.permute.xlu0 %2135
    %v2138 = vsel %vm197, %v2133, %v2136
    %v2140 = vsel %vm205, %v2138, 0
    %2142 = vmatprep.subr.mxu0 0.0
    %2143 = vmatpush1.msra.mxu0 %v77
    %2144 = vmatprep.subr.mxu0 0.0
    %2145 = vmatpush1.msra.mxu0 %v78
    %2146 = vmatprep.subr.mxu0 0.0
    %2147 = vmatpush1.msra.mxu0 %v79
    %2148 = vmatprep.subr.mxu0 0.0
    %2149 = vmatpush1.msra.mxu0 %v80
    %2150 = vmatprep.subr.mxu0 0.0
    %2151 = vmatpush1.msra.mxu0 %v81
    %2152 = vmatprep.subr.mxu0 0.0
    %2153 = vmatpush1.msra.mxu0 %v82
    %2154 = vmatprep.subr.mxu0 0.0
    %2155 = vmatpush1.msra.mxu0 %v83
    %2156 = vmatprep.subr.mxu0 0.0
    %2157 = vmatpush1.msra.mxu0 %v84
    %2158 = vmatprep.subr.mxu0 0.0
    %2159 = vmatpush1.msra.mxu0 0.0
    %2160 = vmatprep.subr.mxu0 0.0
    %2161 = vmatpush1.msra.mxu0 0.0
    %2162 = vmatprep.subr.mxu0 0.0
    %2163 = vmatpush1.msra.mxu0 0.0
    %2164 = vmatprep.subr.mxu0 0.0
    %2165 = vmatpush1.msra.mxu0 0.0
    %2166 = vmatprep.subr.mxu0 0.0
    %2167 = vmatpush1.msra.mxu0 0.0
    %2168 = vmatprep.subr.mxu0 0.0
    %2169 = vmatpush1.msra.mxu0 0.0
    %2170 = vmatprep.subr.mxu0 0.0
    %2171 = vmatpush1.msra.mxu0 0.0
    %2172 = vmatprep.subr.mxu0 0.0
    %2173 = vmatpush1.msra.mxu0 0.0
    %2174 = vmatprep.subr.mxu0 0.0
    %2175 = vmatpush1.msra.mxu0 0.0
    %2176 = vmatprep.subr.mxu0 0.0
    %2177 = vmatpush1.msra.mxu0 0.0
    %2178 = vmatprep.subr.mxu0 0.0
    %2179 = vmatpush1.msra.mxu0 0.0
    %2180 = vmatprep.subr.mxu0 0.0
    %2181 = vmatpush1.msra.mxu0 0.0
    %2182 = vmatprep.subr.mxu0 0.0
    %2183 = vmatpush1.msra.mxu0 0.0
    %2184 = vmatprep.subr.mxu0 0.0
    %2185 = vmatpush1.msra.mxu0 0.0
    %2186 = vmatprep.subr.mxu0 0.0
    %2187 = vmatpush1.msra.mxu0 0.0
    %2188 = vmatprep.subr.mxu0 0.0
    %2189 = vmatpush1.msra.mxu0 0.0
    %2190 = vmatprep.subr.mxu0 0.0
    %2191 = vmatpush1.msra.mxu0 0.0
    %2192 = vmatprep.subr.mxu0 0.0
    %2193 = vmatpush1.msra.mxu0 0.0
    %2194 = vmatprep.subr.mxu0 0.0
    %2195 = vmatpush1.msra.mxu0 0.0
    %2196 = vmatprep.subr.mxu0 0.0
    %2197 = vmatpush1.msra.mxu0 0.0
    %2198 = vmatprep.subr.mxu0 0.0
    %2199 = vmatpush1.msra.mxu0 0.0
    %2200 = vmatprep.subr.mxu0 0.0
    %2201 = vmatpush1.msra.mxu0 0.0
    %2202 = vmatprep.subr.mxu0 0.0
    %2203 = vmatpush1.msra.mxu0 0.0
    %2204 = vmatprep.subr.mxu0 0.0
    %2205 = vmatpush1.msra.mxu0 0.0
    %2206 = vmatprep.mubr.f32.mxu0 0.0
    %2207 = vmatmul.mubr.f32.gmra.mrb[0].mxu0 %v2140
    %v2208 = vpop.f32.mrb[0].mxu0
    %v2209 = vadd.f32 %v203, %v2208
    %v2210 = vpop.f32.mrb[0].mxu0
    %2211 = vdwg.mxu0
    %v2212 = vxor.u32 %v2209, 2147483648
    %v2213 = vmul.f32 %v2212, 1.442695
    %v2214 = vpow.pop %v2213
    %v2215 = vadd.f32 %v2214, 1.0
    %v2216 = vrcp.pop %v2215
    %v2217 = vmul.f32 1.0, %v2216
    %v2218 = vtanh.pop %v2209
    %v2219 = vmul.f32 %v2217, %v1907
    %2221 = vrot.lane.b32.xlu0 %v2218, 64
    %v2222 = vpop.permute.xlu0 %2221
    %v2224 = vmul.f32 %v2217, %v2222
    %2226 = vrot.lane.b32.xlu0 %v2224, 32
    %v2227 = vpop.permute.xlu0 %2226
    %v2229 = vadd.f32 %v2219, %v2227
    %v2230 = vtanh.pop %v2229
    %2232 = vrot.lane.b32.xlu0 %v2230, 64
    %v2233 = vpop.permute.xlu0 %2232
    %v2235 = vmul.f32 %v2217, %v2233
    %v2237 = vcombine.high %v2235, %v2235
    %v2239 = vunpack.c.l.s4 1966171168
    %v2240 = vunpack.c.0.s8 %v2239
    %v2241 = vlaneseq
    %v2242 = vshrl.u32 %v2241, 7
    %v2243 = vsub.s32 %v2240, %v2242
    %v2244 = vrot.slane %v2235, %v2243
    %v2246 = vunpack.c.l.s4 1966171168
    %v2247 = vunpack.c.0.s8 %v2246
    %v2248 = vlaneseq
    %v2249 = vshrl.u32 %v2248, 7
    %v2250 = vsub.s32 %v2247, %v2249
    %v2251 = vrot.slane %v2237, %v2250
    %v2252 = vcombine.high %v2244, %v2244
    %v2253 = vcombine.high %v2251, %v2251
    %v2255 = vunpack.c.l.s4 1966171168
    %v2256 = vunpack.c.0.s8 %v2255
    %v2257 = vlaneseq
    %v2258 = vshrl.u32 %v2257, 7
    %v2259 = vsub.s32 %v2256, %v2258
    %v2260 = vrot.slane %v2244, %v2259
    %v2262 = vunpack.c.l.s4 1966171168
    %v2263 = vunpack.c.0.s8 %v2262
    %v2264 = vlaneseq
    %v2265 = vshrl.u32 %v2264, 7
    %v2266 = vsub.s32 %v2263, %v2265
    %v2267 = vrot.slane %v2251, %v2266
    %v2269 = vunpack.c.l.s4 1966171168
    %v2270 = vunpack.c.0.s8 %v2269
    %v2271 = vlaneseq
    %v2272 = vshrl.u32 %v2271, 7
    %v2273 = vsub.s32 %v2270, %v2272
    %v2274 = vrot.slane %v2252, %v2273
    %v2276 = vunpack.c.l.s4 1966171168
    %v2277 = vunpack.c.0.s8 %v2276
    %v2278 = vlaneseq
    %v2279 = vshrl.u32 %v2278, 7
    %v2280 = vsub.s32 %v2277, %v2279
    %v2281 = vrot.slane %v2253, %v2280
    %v2282 = vcombine.high %v2260, %v2260
    %v2283 = vcombine.high %v2267, %v2267
    %v2284 = vcombine.high %v2274, %v2274
    %v2285 = vcombine.high %v2281, %v2281
    %v2286 = vlaneseq
    %v2287 = vshrl.u32 %v2286, 7
    %v2288 = vsub.s32 0, %v2287
    %v2289 = vrot.slane %v2260, %v2288
    %v2290 = vlaneseq
    %v2291 = vshrl.u32 %v2290, 7
    %v2292 = vsub.s32 0, %v2291
    %v2293 = vrot.slane %v2274, %v2292
    %v2294 = vlaneseq
    %v2295 = vshrl.u32 %v2294, 7
    %v2296 = vsub.s32 0, %v2295
    %v2297 = vrot.slane %v2282, %v2296
    %v2298 = vlaneseq
    %v2299 = vshrl.u32 %v2298, 7
    %v2300 = vsub.s32 0, %v2299
    %v2301 = vrot.slane %v2284, %v2300
    %v2302 = vlaneseq
    %v2303 = vshrl.u32 %v2302, 7
    %v2304 = vsub.s32 0, %v2303
    %v2305 = vrot.slane %v2267, %v2304
    %v2306 = vlaneseq
    %v2307 = vshrl.u32 %v2306, 7
    %v2308 = vsub.s32 0, %v2307
    %v2309 = vrot.slane %v2281, %v2308
    %v2310 = vlaneseq
    %v2311 = vshrl.u32 %v2310, 7
    %v2312 = vsub.s32 0, %v2311
    %v2313 = vrot.slane %v2283, %v2312
    %v2314 = vlaneseq
    %v2315 = vshrl.u32 %v2314, 7
    %v2316 = vsub.s32 0, %v2315
    %v2317 = vrot.slane %v2285, %v2316
    %2318 = vrot.lane.b32.xlu0 %v2289, 32
    %v2319 = vpop.permute.xlu0 %2318
    %2320 = vrot.lane.b32.xlu0 %v2293, 32
    %v2321 = vpop.permute.xlu0 %2320
    %2322 = vrot.lane.b32.xlu0 %v2297, 32
    %v2323 = vpop.permute.xlu0 %2322
    %2324 = vrot.lane.b32.xlu0 %v2301, 32
    %v2325 = vpop.permute.xlu0 %2324
    %2326 = vrot.lane.b32.xlu0 %v2305, 32
    %v2327 = vpop.permute.xlu0 %2326
    %2328 = vrot.lane.b32.xlu0 %v2309, 32
    %v2329 = vpop.permute.xlu0 %2328
    %2330 = vrot.lane.b32.xlu0 %v2313, 32
    %v2331 = vpop.permute.xlu0 %2330
    %2332 = vrot.lane.b32.xlu0 %v2317, 32
    %v2333 = vpop.permute.xlu0 %2332
    %2342 = vst.msk [vmem:[#allocation2 + $0x6] sm:$0x1] %vm409, %v2319
    %2343 = vst.msk [vmem:[#allocation2 + $0xe] sm:$0x1] %vm409, %v2321
    %2344 = vst.msk [vmem:[#allocation2 + $0x16] sm:$0x1] %vm409, %v2323
    %2345 = vst.msk [vmem:[#allocation2 + $0x1e] sm:$0x1] %vm409, %v2325
    %2346 = vst.msk [vmem:[#allocation2 + $0x26] sm:$0x1] %vm409, %v2327
    %2347 = vst.msk [vmem:[#allocation2 + $0x2e] sm:$0x1] %vm409, %v2329
    %2348 = vst.msk [vmem:[#allocation2 + $0x36] sm:$0x1] %vm409, %v2331
    %2349 = vst.msk [vmem:[#allocation2 + $0x3e] sm:$0x1] %vm409, %v2333
    %s2350 = scalar_lea.vmem %s1, 56
    %v2351 = vld [vmem:[%s2350] sm:$0xff]
    %2352 = vrot.lane.b32.xlu0 %v2130, 40
    %v2353 = vpop.permute.xlu0 %2352
    %v2355 = vsel %vm87, %v2351, %v2353
    %v2357 = vsel %vm95, %v2355, 0
    %2359 = vmatprep.subr.mxu0 0.0
    %2360 = vmatpush1.msra.mxu0 %v71
    %2361 = vmatprep.subr.mxu0 0.0
    %2362 = vmatpush1.msra.mxu0 %v72
    %2363 = vmatprep.subr.mxu0 0.0
    %2364 = vmatpush1.msra.mxu0 %v73
    %2365 = vmatprep.subr.mxu0 0.0
    %2366 = vmatpush1.msra.mxu0 %v74
    %2367 = vmatprep.subr.mxu0 0.0
    %2368 = vmatpush1.msra.mxu0 %v75
    %2369 = vmatprep.subr.mxu0 0.0
    %2370 = vmatpush1.msra.mxu0 0.0
    %2371 = vmatprep.subr.mxu0 0.0
    %2372 = vmatpush1.msra.mxu0 0.0
    %2373 = vmatprep.subr.mxu0 0.0
    %2374 = vmatpush1.msra.mxu0 0.0
    %2375 = vmatprep.subr.mxu0 0.0
    %2376 = vmatpush1.msra.mxu0 0.0
    %2377 = vmatprep.subr.mxu0 0.0
    %2378 = vmatpush1.msra.mxu0 0.0
    %2379 = vmatprep.subr.mxu0 0.0
    %2380 = vmatpush1.msra.mxu0 0.0
    %2381 = vmatprep.subr.mxu0 0.0
    %2382 = vmatpush1.msra.mxu0 0.0
    %2383 = vmatprep.subr.mxu0 0.0
    %2384 = vmatpush1.msra.mxu0 0.0
    %2385 = vmatprep.subr.mxu0 0.0
    %2386 = vmatpush1.msra.mxu0 0.0
    %2387 = vmatprep.subr.mxu0 0.0
    %2388 = vmatpush1.msra.mxu0 0.0
    %2389 = vmatprep.subr.mxu0 0.0
    %2390 = vmatpush1.msra.mxu0 0.0
    %2391 = vmatprep.subr.mxu0 0.0
    %2392 = vmatpush1.msra.mxu0 0.0
    %2393 = vmatprep.subr.mxu0 0.0
    %2394 = vmatpush1.msra.mxu0 0.0
    %2395 = vmatprep.subr.mxu0 0.0
    %2396 = vmatpush1.msra.mxu0 0.0
    %2397 = vmatprep.subr.mxu0 0.0
    %2398 = vmatpush1.msra.mxu0 0.0
    %2399 = vmatprep.subr.mxu0 0.0
    %2400 = vmatpush1.msra.mxu0 0.0
    %2401 = vmatprep.subr.mxu0 0.0
    %2402 = vmatpush1.msra.mxu0 0.0
    %2403 = vmatprep.subr.mxu0 0.0
    %2404 = vmatpush1.msra.mxu0 0.0
    %2405 = vmatprep.subr.mxu0 0.0
    %2406 = vmatpush1.msra.mxu0 0.0
    %2407 = vmatprep.subr.mxu0 0.0
    %2408 = vmatpush1.msra.mxu0 0.0
    %2409 = vmatprep.subr.mxu0 0.0
    %2410 = vmatpush1.msra.mxu0 0.0
    %2411 = vmatprep.subr.mxu0 0.0
    %2412 = vmatpush1.msra.mxu0 0.0
    %2413 = vmatprep.subr.mxu0 0.0
    %2414 = vmatpush1.msra.mxu0 0.0
    %2415 = vmatprep.subr.mxu0 0.0
    %2416 = vmatpush1.msra.mxu0 0.0
    %2417 = vmatprep.subr.mxu0 0.0
    %2418 = vmatpush1.msra.mxu0 0.0
    %2419 = vmatprep.subr.mxu0 0.0
    %2420 = vmatpush1.msra.mxu0 0.0
    %2421 = vmatprep.subr.mxu0 0.0
    %2422 = vmatpush1.msra.mxu0 0.0
    %2423 = vmatprep.mubr.f32.mxu0 0.0
    %2424 = vmatmul.mubr.f32.gmra.mrb[0].mxu0 %v2357
    %v2425 = vpop.f32.mrb[0].mxu0
    %v2426 = vadd.f32 %v93, %v2425
    %v2427 = vpop.f32.mrb[0].mxu0
    %2428 = vdwg.mxu0
    %v2429 = vxor.u32 %v2426, 2147483648
    %v2430 = vmul.f32 %v2429, 1.442695
    %v2431 = vpow.pop %v2430
    %v2432 = vadd.f32 %v2431, 1.0
    %v2433 = vrcp.pop %v2432
    %v2434 = vmul.f32 1.0, %v2433
    %v2435 = vtanh.pop %v2426
    %v2436 = vmul.f32 %v2434, %v2124
    %2438 = vrot.lane.b32.xlu0 %v2435, 64
    %v2439 = vpop.permute.xlu0 %2438
    %v2441 = vmul.f32 %v2434, %v2439
    %2443 = vrot.lane.b32.xlu0 %v2441, 32
    %v2444 = vpop.permute.xlu0 %2443
    %v2446 = vadd.f32 %v2436, %v2444
    %v2447 = vtanh.pop %v2446
    %2449 = vrot.lane.b32.xlu0 %v2447, 64
    %v2450 = vpop.permute.xlu0 %2449
    %v2452 = vmul.f32 %v2434, %v2450
    %2454 = vrot.lane.b32.xlu0 %v2452, 32
    %v2455 = vpop.permute.xlu0 %2454
    %2457 = vrot.lane.b32.xlu0 %v2235, 64
    %v2458 = vpop.permute.xlu0 %2457
    %v2460 = vsel %vm197, %v2455, %v2458
    %v2462 = vsel %vm205, %v2460, 0
    %2464 = vmatprep.subr.mxu0 0.0
    %2465 = vmatpush1.msra.mxu0 %v77
    %2466 = vmatprep.subr.mxu0 0.0
    %2467 = vmatpush1.msra.mxu0 %v78
    %2468 = vmatprep.subr.mxu0 0.0
    %2469 = vmatpush1.msra.mxu0 %v79
    %2470 = vmatprep.subr.mxu0 0.0
    %2471 = vmatpush1.msra.mxu0 %v80
    %2472 = vmatprep.subr.mxu0 0.0
    %2473 = vmatpush1.msra.mxu0 %v81
    %2474 = vmatprep.subr.mxu0 0.0
    %2475 = vmatpush1.msra.mxu0 %v82
    %2476 = vmatprep.subr.mxu0 0.0
    %2477 = vmatpush1.msra.mxu0 %v83
    %2478 = vmatprep.subr.mxu0 0.0
    %2479 = vmatpush1.msra.mxu0 %v84
    %2480 = vmatprep.subr.mxu0 0.0
    %2481 = vmatpush1.msra.mxu0 0.0
    %2482 = vmatprep.subr.mxu0 0.0
    %2483 = vmatpush1.msra.mxu0 0.0
    %2484 = vmatprep.subr.mxu0 0.0
    %2485 = vmatpush1.msra.mxu0 0.0
    %2486 = vmatprep.subr.mxu0 0.0
    %2487 = vmatpush1.msra.mxu0 0.0
    %2488 = vmatprep.subr.mxu0 0.0
    %2489 = vmatpush1.msra.mxu0 0.0
    %2490 = vmatprep.subr.mxu0 0.0
    %2491 = vmatpush1.msra.mxu0 0.0
    %2492 = vmatprep.subr.mxu0 0.0
    %2493 = vmatpush1.msra.mxu0 0.0
    %2494 = vmatprep.subr.mxu0 0.0
    %2495 = vmatpush1.msra.mxu0 0.0
    %2496 = vmatprep.subr.mxu0 0.0
    %2497 = vmatpush1.msra.mxu0 0.0
    %2498 = vmatprep.subr.mxu0 0.0
    %2499 = vmatpush1.msra.mxu0 0.0
    %2500 = vmatprep.subr.mxu0 0.0
    %2501 = vmatpush1.msra.mxu0 0.0
    %2502 = vmatprep.subr.mxu0 0.0
    %2503 = vmatpush1.msra.mxu0 0.0
    %2504 = vmatprep.subr.mxu0 0.0
    %2505 = vmatpush1.msra.mxu0 0.0
    %2506 = vmatprep.subr.mxu0 0.0
    %2507 = vmatpush1.msra.mxu0 0.0
    %2508 = vmatprep.subr.mxu0 0.0
    %2509 = vmatpush1.msra.mxu0 0.0
    %2510 = vmatprep.subr.mxu0 0.0
    %2511 = vmatpush1.msra.mxu0 0.0
    %2512 = vmatprep.subr.mxu0 0.0
    %2513 = vmatpush1.msra.mxu0 0.0
    %2514 = vmatprep.subr.mxu0 0.0
    %2515 = vmatpush1.msra.mxu0 0.0
    %2516 = vmatprep.subr.mxu0 0.0
    %2517 = vmatpush1.msra.mxu0 0.0
    %2518 = vmatprep.subr.mxu0 0.0
    %2519 = vmatpush1.msra.mxu0 0.0
    %2520 = vmatprep.subr.mxu0 0.0
    %2521 = vmatpush1.msra.mxu0 0.0
    %2522 = vmatprep.subr.mxu0 0.0
    %2523 = vmatpush1.msra.mxu0 0.0
    %2524 = vmatprep.subr.mxu0 0.0
    %2525 = vmatpush1.msra.mxu0 0.0
    %2526 = vmatprep.subr.mxu0 0.0
    %2527 = vmatpush1.msra.mxu0 0.0
    %2528 = vmatprep.mubr.f32.mxu0 0.0
    %2529 = vmatmul.mubr.f32.gmra.mrb[0].mxu0 %v2462
    %v2530 = vpop.f32.mrb[0].mxu0
    %v2531 = vadd.f32 %v203, %v2530
    %v2532 = vpop.f32.mrb[0].mxu0
    %2533 = vdwg.mxu0
    %v2534 = vxor.u32 %v2531, 2147483648
    %v2535 = vmul.f32 %v2534, 1.442695
    %v2536 = vpow.pop %v2535
    %v2537 = vadd.f32 %v2536, 1.0
    %v2538 = vrcp.pop %v2537
    %v2539 = vmul.f32 1.0, %v2538
    %v2540 = vtanh.pop %v2531
    %v2541 = vmul.f32 %v2539, %v2229
    %2543 = vrot.lane.b32.xlu0 %v2540, 64
    %v2544 = vpop.permute.xlu0 %2543
    %v2546 = vmul.f32 %v2539, %v2544
    %2548 = vrot.lane.b32.xlu0 %v2546, 32
    %v2549 = vpop.permute.xlu0 %2548
    %v2551 = vadd.f32 %v2541, %v2549
    %v2552 = vtanh.pop %v2551
    %2554 = vrot.lane.b32.xlu0 %v2552, 64
    %v2555 = vpop.permute.xlu0 %2554
    %v2557 = vmul.f32 %v2539, %v2555
    %v2559 = vcombine.high %v2557, %v2557
    %v2561 = vunpack.c.l.s4 1966171168
    %v2562 = vunpack.c.0.s8 %v2561
    %v2563 = vlaneseq
    %v2564 = vshrl.u32 %v2563, 7
    %v2565 = vsub.s32 %v2562, %v2564
    %v2566 = vrot.slane %v2557, %v2565
    %v2568 = vunpack.c.l.s4 1966171168
    %v2569 = vunpack.c.0.s8 %v2568
    %v2570 = vlaneseq
    %v2571 = vshrl.u32 %v2570, 7
    %v2572 = vsub.s32 %v2569, %v2571
    %v2573 = vrot.slane %v2559, %v2572
    %v2574 = vcombine.high %v2566, %v2566
    %v2575 = vcombine.high %v2573, %v2573
    %v2577 = vunpack.c.l.s4 1966171168
    %v2578 = vunpack.c.0.s8 %v2577
    %v2579 = vlaneseq
    %v2580 = vshrl.u32 %v2579, 7
    %v2581 = vsub.s32 %v2578, %v2580
    %v2582 = vrot.slane %v2566, %v2581
    %v2584 = vunpack.c.l.s4 1966171168
    %v2585 = vunpack.c.0.s8 %v2584
    %v2586 = vlaneseq
    %v2587 = vshrl.u32 %v2586, 7
    %v2588 = vsub.s32 %v2585, %v2587
    %v2589 = vrot.slane %v2573, %v2588
    %v2591 = vunpack.c.l.s4 1966171168
    %v2592 = vunpack.c.0.s8 %v2591
    %v2593 = vlaneseq
    %v2594 = vshrl.u32 %v2593, 7
    %v2595 = vsub.s32 %v2592, %v2594
    %v2596 = vrot.slane %v2574, %v2595
    %v2598 = vunpack.c.l.s4 1966171168
    %v2599 = vunpack.c.0.s8 %v2598
    %v2600 = vlaneseq
    %v2601 = vshrl.u32 %v2600, 7
    %v2602 = vsub.s32 %v2599, %v2601
    %v2603 = vrot.slane %v2575, %v2602
    %v2604 = vcombine.high %v2582, %v2582
    %v2605 = vcombine.high %v2589, %v2589
    %v2606 = vcombine.high %v2596, %v2596
    %v2607 = vcombine.high %v2603, %v2603
    %v2608 = vlaneseq
    %v2609 = vshrl.u32 %v2608, 7
    %v2610 = vsub.s32 0, %v2609
    %v2611 = vrot.slane %v2582, %v2610
    %v2612 = vlaneseq
    %v2613 = vshrl.u32 %v2612, 7
    %v2614 = vsub.s32 0, %v2613
    %v2615 = vrot.slane %v2596, %v2614
    %v2616 = vlaneseq
    %v2617 = vshrl.u32 %v2616, 7
    %v2618 = vsub.s32 0, %v2617
    %v2619 = vrot.slane %v2604, %v2618
    %v2620 = vlaneseq
    %v2621 = vshrl.u32 %v2620, 7
    %v2622 = vsub.s32 0, %v2621
    %v2623 = vrot.slane %v2606, %v2622
    %v2624 = vlaneseq
    %v2625 = vshrl.u32 %v2624, 7
    %v2626 = vsub.s32 0, %v2625
    %v2627 = vrot.slane %v2589, %v2626
    %v2628 = vlaneseq
    %v2629 = vshrl.u32 %v2628, 7
    %v2630 = vsub.s32 0, %v2629
    %v2631 = vrot.slane %v2603, %v2630
    %v2632 = vlaneseq
    %v2633 = vshrl.u32 %v2632, 7
    %v2634 = vsub.s32 0, %v2633
    %v2635 = vrot.slane %v2605, %v2634
    %v2636 = vlaneseq
    %v2637 = vshrl.u32 %v2636, 7
    %v2638 = vsub.s32 0, %v2637
    %v2639 = vrot.slane %v2607, %v2638
    %2640 = vrot.lane.b32.xlu0 %v2611, 32
    %v2641 = vpop.permute.xlu0 %2640
    %2642 = vrot.lane.b32.xlu0 %v2615, 32
    %v2643 = vpop.permute.xlu0 %2642
    %2644 = vrot.lane.b32.xlu0 %v2619, 32
    %v2645 = vpop.permute.xlu0 %2644
    %2646 = vrot.lane.b32.xlu0 %v2623, 32
    %v2647 = vpop.permute.xlu0 %2646
    %2648 = vrot.lane.b32.xlu0 %v2627, 32
    %v2649 = vpop.permute.xlu0 %2648
    %2650 = vrot.lane.b32.xlu0 %v2631, 32
    %v2651 = vpop.permute.xlu0 %2650
    %2652 = vrot.lane.b32.xlu0 %v2635, 32
    %v2653 = vpop.permute.xlu0 %2652
    %2654 = vrot.lane.b32.xlu0 %v2639, 32
    %v2655 = vpop.permute.xlu0 %2654
    %2664 = vst.msk [vmem:[#allocation2 + $0x7] sm:$0x1] %vm409, %v2641
    %2665 = vst.msk [vmem:[#allocation2 + $0xf] sm:$0x1] %vm409, %v2643
    %2666 = vst.msk [vmem:[#allocation2 + $0x17] sm:$0x1] %vm409, %v2645
    %2667 = vst.msk [vmem:[#allocation2 + $0x1f] sm:$0x1] %vm409, %v2647
    %2668 = vst.msk [vmem:[#allocation2 + $0x27] sm:$0x1] %vm409, %v2649
    %2669 = vst.msk [vmem:[#allocation2 + $0x2f] sm:$0x1] %vm409, %v2651
    %2670 = vst.msk [vmem:[#allocation2 + $0x37] sm:$0x1] %vm409, %v2653
    %2671 = vst.msk [vmem:[#allocation2 + $0x3f] sm:$0x1] %vm409, %v2655
    %2672 = vst.msk [vmem:[%s13] sm:$0xff] %vm87, 0.0
    %2673 = vst.msk [vmem:[%s14] sm:$0xff] %vm87, 0.0
    %v2674 = vld [vmem:[#allocation2] sm:$0xff]
    %v2675 = vld [vmem:[#allocation2 + $0x8] sm:$0xff]
    %v2676 = vld [vmem:[#allocation2 + $0x10] sm:$0xff]
    %v2677 = vld [vmem:[#allocation2 + $0x18] sm:$0xff]
    %v2678 = vld [vmem:[#allocation2 + $0x20] sm:$0xff]
    %v2679 = vld [vmem:[#allocation2 + $0x28] sm:$0xff]
    %v2680 = vld [vmem:[#allocation2 + $0x30] sm:$0xff]
    %v2681 = vld [vmem:[#allocation2 + $0x38] sm:$0xff]
    %v2682 = vld [vmem:[%s7] sm:$0xff]
    %v2683 = vld [vmem:[%s7 + $0x8] sm:$0xff]
    %v2684 = vld [vmem:[%s7 + $0x10] sm:$0xff]
    %v2685 = vld [vmem:[%s7 + $0x18] sm:$0xff]
    %v2686 = vld [vmem:[%s7 + $0x20] sm:$0xff]
    %v2687 = vld [vmem:[%s7 + $0x28] sm:$0xff]
    %v2688 = vld [vmem:[%s7 + $0x30] sm:$0xff]
    %v2689 = vld [vmem:[%s7 + $0x38] sm:$0xff]
    %v2690 = vld [vmem:[%s7 + $0x40] sm:$0xff]
    %v2691 = vld [vmem:[#allocation6] sm:$0x1]
    %v2692 = vld [vmem:[%s9] sm:$0xff]
    %v2693 = vld [vmem:[%s9 + $0x8] sm:$0xff]
    %v2694 = vld [vmem:[%s9 + $0x10] sm:$0xff]
    %v2695 = vld [vmem:[%s9 + $0x18] sm:$0xff]
    %v2696 = vld [vmem:[%s9 + $0x20] sm:$0xff]
    %v2697 = vld [vmem:[%s9 + $0x28] sm:$0xff]
    %v2698 = vld [vmem:[%s9 + $0x30] sm:$0xff]
    %v2699 = vld [vmem:[%s9 + $0x38] sm:$0xff]
    %v2700 = vld [vmem:[%s10] sm:$0x1]
    %v2701 = vld [vmem:[%s11] sm:$0xff]
    %v2702 = vld [vmem:[%s11 + $0x8] sm:$0xff]
    %v2703 = vld [vmem:[%s11 + $0x10] sm:$0xff]
    %v2704 = vld [vmem:[%s11 + $0x18] sm:$0xff]
    %v2705 = vld [vmem:[%s11 + $0x20] sm:$0xff]
    %v2706 = vld [vmem:[%s11 + $0x28] sm:$0xff]
    %v2707 = vld [vmem:[%s11 + $0x30] sm:$0xff]
    %v2708 = vld [vmem:[%s11 + $0x38] sm:$0xff]
    %v2709 = vld [vmem:[%s12] sm:$0x1]
    %v2710 = vld [vmem:[%s2] sm:$0xff]
    %v2711 = vmul.f32 %v2674, %v2641
    %v2712 = vmul.f32 %v2675, %v2643
    %v2713 = vmul.f32 %v2676, %v2645
    %v2714 = vmul.f32 %v2677, %v2647
    %v2715 = vmul.f32 %v2678, %v2649
    %v2716 = vmul.f32 %v2679, %v2651
    %v2717 = vmul.f32 %v2680, %v2653
    %v2718 = vmul.f32 %v2681, %v2655
    %v2719 = vsel %vm197, %v2711, 0.0
    %2720 = vadd.xlane.f32.xlu0 %v2719
    %v2721 = vpop.xlane.xlu0 %2720
    %v2722 = vsel %vm197, %v2712, 0.0
    %2723 = vadd.xlane.f32.xlu0 %v2722
    %v2724 = vpop.xlane.xlu0 %2723
    %v2725 = vsel %vm197, %v2713, 0.0
    %2726 = vadd.xlane.f32.xlu0 %v2725
    %v2727 = vpop.xlane.xlu0 %2726
    %v2728 = vsel %vm197, %v2714, 0.0
    %2729 = vadd.xlane.f32.xlu0 %v2728
    %v2730 = vpop.xlane.xlu0 %2729
    %v2731 = vsel %vm197, %v2715, 0.0
    %2732 = vadd.xlane.f32.xlu0 %v2731
    %v2733 = vpop.xlane.xlu0 %2732
    %v2734 = vsel %vm197, %v2716, 0.0
    %2735 = vadd.xlane.f32.xlu0 %v2734
    %v2736 = vpop.xlane.xlu0 %2735
    %v2737 = vsel %vm197, %v2717, 0.0
    %2738 = vadd.xlane.f32.xlu0 %v2737
    %v2739 = vpop.xlane.xlu0 %2738
    %v2740 = vsel %vm197, %v2718, 0.0
    %2741 = vadd.xlane.f32.xlu0 %v2740
    %v2742 = vpop.xlane.xlu0 %2741
    %v2751 = vlaneseq
    %v2752 = vand.u32 %v2751, 127
    %v2753 = vlaneseq
    %v2754 = vshrl.u32 %v2753, 7
    %v2755 = vsub.s32 %v2752, %v2754
    %v2756 = vrot.slane %v2721, %v2755
    %v2757 = vlaneseq
    %v2758 = vshrl.u32 %v2757, 7
    %v2759 = vsub.s32 %v2752, %v2758
    %v2760 = vrot.slane %v2724, %v2759
    %v2761 = vlaneseq
    %v2762 = vshrl.u32 %v2761, 7
    %v2763 = vsub.s32 %v2752, %v2762
    %v2764 = vrot.slane %v2727, %v2763
    %v2765 = vlaneseq
    %v2766 = vshrl.u32 %v2765, 7
    %v2767 = vsub.s32 %v2752, %v2766
    %v2768 = vrot.slane %v2730, %v2767
    %v2769 = vlaneseq
    %v2770 = vshrl.u32 %v2769, 7
    %v2771 = vsub.s32 %v2752, %v2770
    %v2772 = vrot.slane %v2733, %v2771
    %v2773 = vlaneseq
    %v2774 = vshrl.u32 %v2773, 7
    %v2775 = vsub.s32 %v2752, %v2774
    %v2776 = vrot.slane %v2736, %v2775
    %v2777 = vlaneseq
    %v2778 = vshrl.u32 %v2777, 7
    %v2779 = vsub.s32 %v2752, %v2778
    %v2780 = vrot.slane %v2739, %v2779
    %v2781 = vlaneseq
    %v2782 = vshrl.u32 %v2781, 7
    %v2783 = vsub.s32 %v2752, %v2782
    %v2784 = vrot.slane %v2742, %v2783
    %vm2785 = vcmask 1041409
    %v2786 = vsel %vm2785, %v2760, %v2756
    %vm2787 = vcmask 1042434
    %v2788 = vsel %vm2787, %v2764, %v2786
    %vm2789 = vcmask 1043459
    %v2790 = vsel %vm2789, %v2768, %v2788
    %vm2791 = vcmask 1044484
    %v2792 = vsel %vm2791, %v2772, %v2790
    %vm2793 = vcmask 1045509
    %v2794 = vsel %vm2793, %v2776, %v2792
    %vm2795 = vcmask 1046534
    %v2796 = vsel %vm2795, %v2780, %v2794
    %vm2797 = vcmask 1047559
    %v2798 = vsel %vm2797, %v2784, %v2796
    %v2800 = vsel %vm87, %v2798, -inf
    %2801 = vmax.xlane.f32.xlu0 %v2800
    %v2802 = vpop.xlane.xlu0 %2801
    %v2804 = vlaneseq
    %v2805 = vshrl.u32 %v2804, 7
    %v2806 = vsub.s32 0, %v2805
    %v2807 = vrot.slane %v2802, %v2806
    %v2808 = vlaneseq
    %v2809 = vshrl.u32 %v2808, 7
    %v2810 = vsub.s32 1, %v2809
    %v2811 = vrot.slane %v2802, %v2810
    %v2812 = vlaneseq
    %v2813 = vshrl.u32 %v2812, 7
    %v2814 = vsub.s32 2, %v2813
    %v2815 = vrot.slane %v2802, %v2814
    %v2816 = vlaneseq
    %v2817 = vshrl.u32 %v2816, 7
    %v2818 = vsub.s32 3, %v2817
    %v2819 = vrot.slane %v2802, %v2818
    %v2820 = vlaneseq
    %v2821 = vshrl.u32 %v2820, 7
    %v2822 = vsub.s32 4, %v2821
    %v2823 = vrot.slane %v2802, %v2822
    %v2824 = vlaneseq
    %v2825 = vshrl.u32 %v2824, 7
    %v2826 = vsub.s32 5, %v2825
    %v2827 = vrot.slane %v2802, %v2826
    %v2828 = vlaneseq
    %v2829 = vshrl.u32 %v2828, 7
    %v2830 = vsub.s32 6, %v2829
    %v2831 = vrot.slane %v2802, %v2830
    %v2832 = vlaneseq
    %v2833 = vshrl.u32 %v2832, 7
    %v2834 = vsub.s32 7, %v2833
    %v2835 = vrot.slane %v2802, %v2834
    %v2844 = vsub.f32 %v2721, %v2807
    %v2845 = vsub.f32 %v2724, %v2811
    %v2846 = vsub.f32 %v2727, %v2815
    %v2847 = vsub.f32 %v2730, %v2819
    %v2848 = vsub.f32 %v2733, %v2823
    %v2849 = vsub.f32 %v2736, %v2827
    %v2850 = vsub.f32 %v2739, %v2831
    %v2851 = vsub.f32 %v2742, %v2835
    %v2852 = vmul.f32 %v2844, 1.442695
    %v2853 = vpow.pop %v2852
    %v2854 = vmul.f32 %v2845, 1.442695
    %v2855 = vpow.pop %v2854
    %v2856 = vmul.f32 %v2846, 1.442695
    %v2857 = vpow.pop %v2856
    %v2858 = vmul.f32 %v2847, 1.442695
    %v2859 = vpow.pop %v2858
    %v2860 = vmul.f32 %v2848, 1.442695
    %v2861 = vpow.pop %v2860
    %v2862 = vmul.f32 %v2849, 1.442695
    %v2863 = vpow.pop %v2862
    %v2864 = vmul.f32 %v2850, 1.442695
    %v2865 = vpow.pop %v2864
    %v2866 = vmul.f32 %v2851, 1.442695
    %v2867 = vpow.pop %v2866
    %2876 = vset.pattern.permute.xlu0 0
    %2877 = vperm.xlu0 %2876, %v2853
    %v2878 = vpop.permute.xlu0 %2877
    %2879 = vset.pattern.permute.xlu0 0
    %2880 = vperm.xlu0 %2879, %v2855
    %v2881 = vpop.permute.xlu0 %2880
    %2882 = vset.pattern.permute.xlu0 0
    %2883 = vperm.xlu0 %2882, %v2857
    %v2884 = vpop.permute.xlu0 %2883
    %2885 = vset.pattern.permute.xlu0 0
    %2886 = vperm.xlu0 %2885, %v2859
    %v2887 = vpop.permute.xlu0 %2886
    %2888 = vset.pattern.permute.xlu0 0
    %2889 = vperm.xlu0 %2888, %v2861
    %v2890 = vpop.permute.xlu0 %2889
    %2891 = vset.pattern.permute.xlu0 0
    %2892 = vperm.xlu0 %2891, %v2863
    %v2893 = vpop.permute.xlu0 %2892
    %2894 = vset.pattern.permute.xlu0 0
    %2895 = vperm.xlu0 %2894, %v2865
    %v2896 = vpop.permute.xlu0 %2895
    %2897 = vset.pattern.permute.xlu0 0
    %2898 = vperm.xlu0 %2897, %v2867
    %v2899 = vpop.permute.xlu0 %2898
    %v2900 = vlaneseq
    %v2901 = vshrl.u32 %v2900, 7
    %v2902 = vsub.s32 %v2752, %v2901
    %v2903 = vrot.slane %v2878, %v2902
    %v2904 = vlaneseq
    %v2905 = vshrl.u32 %v2904, 7
    %v2906 = vsub.s32 %v2752, %v2905
    %v2907 = vrot.slane %v2881, %v2906
    %v2908 = vlaneseq
    %v2909 = vshrl.u32 %v2908, 7
    %v2910 = vsub.s32 %v2752, %v2909
    %v2911 = vrot.slane %v2884, %v2910
    %v2912 = vlaneseq
    %v2913 = vshrl.u32 %v2912, 7
    %v2914 = vsub.s32 %v2752, %v2913
    %v2915 = vrot.slane %v2887, %v2914
    %v2916 = vlaneseq
    %v2917 = vshrl.u32 %v2916, 7
    %v2918 = vsub.s32 %v2752, %v2917
    %v2919 = vrot.slane %v2890, %v2918
    %v2920 = vlaneseq
    %v2921 = vshrl.u32 %v2920, 7
    %v2922 = vsub.s32 %v2752, %v2921
    %v2923 = vrot.slane %v2893, %v2922
    %v2924 = vlaneseq
    %v2925 = vshrl.u32 %v2924, 7
    %v2926 = vsub.s32 %v2752, %v2925
    %v2927 = vrot.slane %v2896, %v2926
    %v2928 = vlaneseq
    %v2929 = vshrl.u32 %v2928, 7
    %v2930 = vsub.s32 %v2752, %v2929
    %v2931 = vrot.slane %v2899, %v2930
    %v2932 = vsel %vm2785, %v2907, %v2903
    %v2933 = vsel %vm2787, %v2911, %v2932
    %v2934 = vsel %vm2789, %v2915, %v2933
    %v2935 = vsel %vm2791, %v2919, %v2934
    %v2936 = vsel %vm2793, %v2923, %v2935
    %v2937 = vsel %vm2795, %v2927, %v2936
    %v2938 = vsel %vm2797, %v2931, %v2937
    %v2940 = vsel %vm87, %v2938, 0.0
    %2941 = vadd.xlane.f32.xlu0 %v2940
    %v2942 = vpop.xlane.xlu0 %2941
    %v2944 = vlaneseq
    %v2945 = vshrl.u32 %v2944, 7
    %v2946 = vsub.s32 0, %v2945
    %v2947 = vrot.slane %v2942, %v2946
    %v2948 = vlaneseq
    %v2949 = vshrl.u32 %v2948, 7
    %v2950 = vsub.s32 1, %v2949
    %v2951 = vrot.slane %v2942, %v2950
    %v2952 = vlaneseq
    %v2953 = vshrl.u32 %v2952, 7
    %v2954 = vsub.s32 2, %v2953
    %v2955 = vrot.slane %v2942, %v2954
    %v2956 = vlaneseq
    %v2957 = vshrl.u32 %v2956, 7
    %v2958 = vsub.s32 3, %v2957
    %v2959 = vrot.slane %v2942, %v2958
    %v2960 = vlaneseq
    %v2961 = vshrl.u32 %v2960, 7
    %v2962 = vsub.s32 4, %v2961
    %v2963 = vrot.slane %v2942, %v2962
    %v2964 = vlaneseq
    %v2965 = vshrl.u32 %v2964, 7
    %v2966 = vsub.s32 5, %v2965
    %v2967 = vrot.slane %v2942, %v2966
    %v2968 = vlaneseq
    %v2969 = vshrl.u32 %v2968, 7
    %v2970 = vsub.s32 6, %v2969
    %v2971 = vrot.slane %v2942, %v2970
    %v2972 = vlaneseq
    %v2973 = vshrl.u32 %v2972, 7
    %v2974 = vsub.s32 7, %v2973
    %v2975 = vrot.slane %v2942, %v2974
    %v2984 = vrcp.pop %v2947
    %v2985 = vmul.f32 %v2853, %v2984
    %v2986 = vrcp.pop %v2951
    %v2987 = vmul.f32 %v2855, %v2986
    %v2988 = vrcp.pop %v2955
    %v2989 = vmul.f32 %v2857, %v2988
    %v2990 = vrcp.pop %v2959
    %v2991 = vmul.f32 %v2859, %v2990
    %v2992 = vrcp.pop %v2963
    %v2993 = vmul.f32 %v2861, %v2992
    %v2994 = vrcp.pop %v2967
    %v2995 = vmul.f32 %v2863, %v2994
    %v2996 = vrcp.pop %v2971
    %v2997 = vmul.f32 %v2865, %v2996
    %v2998 = vrcp.pop %v2975
    %v2999 = vmul.f32 %v2867, %v2998
    %3001 = vset.pattern.permute.xlu0 0
    %3002 = vperm.xlu0 %3001, %v2985
    %v3003 = vpop.permute.xlu0 %3002
    %3006 = vset.pattern.permute.xlu0 0
    %3007 = vperm.xlu0 %3006, %v2987
    %v3008 = vpop.permute.xlu0 %3007
    %3011 = vset.pattern.permute.xlu0 0
    %3012 = vperm.xlu0 %3011, %v2989
    %v3013 = vpop.permute.xlu0 %3012
    %3016 = vset.pattern.permute.xlu0 0
    %3017 = vperm.xlu0 %3016, %v2991
    %v3018 = vpop.permute.xlu0 %3017
    %3021 = vset.pattern.permute.xlu0 0
    %3022 = vperm.xlu0 %3021, %v2993
    %v3023 = vpop.permute.xlu0 %3022
    %3026 = vset.pattern.permute.xlu0 0
    %3027 = vperm.xlu0 %3026, %v2995
    %v3028 = vpop.permute.xlu0 %3027
    %3031 = vset.pattern.permute.xlu0 0
    %3032 = vperm.xlu0 %3031, %v2997
    %v3033 = vpop.permute.xlu0 %3032
    %3036 = vset.pattern.permute.xlu0 0
    %3037 = vperm.xlu0 %3036, %v2999
    %v3038 = vpop.permute.xlu0 %3037
    %v3040 = vmul.f32 %v3003, %v2674
    %v3041 = vmul.f32 %v3008, %v2675
    %v3042 = vmul.f32 %v3013, %v2676
    %v3043 = vmul.f32 %v3018, %v2677
    %v3044 = vmul.f32 %v3023, %v2678
    %v3045 = vmul.f32 %v3028, %v2679
    %v3046 = vmul.f32 %v3033, %v2680
    %v3047 = vmul.f32 %v3038, %v2681
    %v3048 = vsel %vm197, %v3040, 0.0
    %v3049 = vrot.slane %v3048, 4
    %v3050 = vadd.f32 %v3048, %v3049
    %v3051 = vrot.slane %v3050, 2
    %v3052 = vadd.f32 %v3050, %v3051
    %v3053 = vrot.slane %v3052, 1
    %v3054 = vadd.f32 %v3052, %v3053
    %v3055 = vsel %vm197, %v3041, 0.0
    %v3056 = vrot.slane %v3055, 4
    %v3057 = vadd.f32 %v3055, %v3056
    %v3058 = vrot.slane %v3057, 2
    %v3059 = vadd.f32 %v3057, %v3058
    %v3060 = vrot.slane %v3059, 1
    %v3061 = vadd.f32 %v3059, %v3060
    %v3062 = vsel %vm197, %v3042, 0.0
    %v3063 = vrot.slane %v3062, 4
    %v3064 = vadd.f32 %v3062, %v3063
    %v3065 = vrot.slane %v3064, 2
    %v3066 = vadd.f32 %v3064, %v3065
    %v3067 = vrot.slane %v3066, 1
    %v3068 = vadd.f32 %v3066, %v3067
    %v3069 = vsel %vm197, %v3043, 0.0
    %v3070 = vrot.slane %v3069, 4
    %v3071 = vadd.f32 %v3069, %v3070
    %v3072 = vrot.slane %v3071, 2
    %v3073 = vadd.f32 %v3071, %v3072
    %v3074 = vrot.slane %v3073, 1
    %v3075 = vadd.f32 %v3073, %v3074
    %v3076 = vsel %vm197, %v3044, 0.0
    %v3077 = vrot.slane %v3076, 4
    %v3078 = vadd.f32 %v3076, %v3077
    %v3079 = vrot.slane %v3078, 2
    %v3080 = vadd.f32 %v3078, %v3079
    %v3081 = vrot.slane %v3080, 1
    %v3082 = vadd.f32 %v3080, %v3081
    %v3083 = vsel %vm197, %v3045, 0.0
    %v3084 = vrot.slane %v3083, 4
    %v3085 = vadd.f32 %v3083, %v3084
    %v3086 = vrot.slane %v3085, 2
    %v3087 = vadd.f32 %v3085, %v3086
    %v3088 = vrot.slane %v3087, 1
    %v3089 = vadd.f32 %v3087, %v3088
    %v3090 = vsel %vm197, %v3046, 0.0
    %v3091 = vrot.slane %v3090, 4
    %v3092 = vadd.f32 %v3090, %v3091
    %v3093 = vrot.slane %v3092, 2
    %v3094 = vadd.f32 %v3092, %v3093
    %v3095 = vrot.slane %v3094, 1
    %v3096 = vadd.f32 %v3094, %v3095
    %v3097 = vsel %vm197, %v3047, 0.0
    %v3098 = vrot.slane %v3097, 4
    %v3099 = vadd.f32 %v3097, %v3098
    %v3100 = vrot.slane %v3099, 2
    %v3101 = vadd.f32 %v3099, %v3100
    %v3102 = vrot.slane %v3101, 1
    %v3103 = vadd.f32 %v3101, %v3102
    %v3104 = vlaneseq
    %v3105 = vshrl.u32 %v3104, 7
    %v3106 = vsub.s32 %v2752, %v3105
    %v3107 = vrot.slane %v3003, %v3106
    %v3108 = vlaneseq
    %v3109 = vshrl.u32 %v3108, 7
    %v3110 = vsub.s32 %v2752, %v3109
    %v3111 = vrot.slane %v3008, %v3110
    %v3112 = vlaneseq
    %v3113 = vshrl.u32 %v3112, 7
    %v3114 = vsub.s32 %v2752, %v3113
    %v3115 = vrot.slane %v3013, %v3114
    %v3116 = vlaneseq
    %v3117 = vshrl.u32 %v3116, 7
    %v3118 = vsub.s32 %v2752, %v3117
    %v3119 = vrot.slane %v3018, %v3118
    %v3120 = vlaneseq
    %v3121 = vshrl.u32 %v3120, 7
    %v3122 = vsub.s32 %v2752, %v3121
    %v3123 = vrot.slane %v3023, %v3122
    %v3124 = vlaneseq
    %v3125 = vshrl.u32 %v3124, 7
    %v3126 = vsub.s32 %v2752, %v3125
    %v3127 = vrot.slane %v3028, %v3126
    %v3128 = vlaneseq
    %v3129 = vshrl.u32 %v3128, 7
    %v3130 = vsub.s32 %v2752, %v3129
    %v3131 = vrot.slane %v3033, %v3130
    %v3132 = vlaneseq
    %v3133 = vshrl.u32 %v3132, 7
    %v3134 = vsub.s32 %v2752, %v3133
    %v3135 = vrot.slane %v3038, %v3134
    %v3136 = vsel %vm2785, %v3111, %v3107
    %v3137 = vsel %vm2787, %v3115, %v3136
    %v3138 = vsel %vm2789, %v3119, %v3137
    %v3139 = vsel %vm2791, %v3123, %v3138
    %v3140 = vsel %vm2793, %v3127, %v3139
    %v3141 = vsel %vm2795, %v3131, %v3140
    %v3142 = vsel %vm2797, %v3135, %v3141
    %s3144 = scalar_lea.vmem %s14, 8
    %3145 = vst.msk [vmem:[%s3144] sm:$0xff] %vm87, %v3142
    %v3154 = vsel %vm2785, %v3061, %v3054
    %v3155 = vsel %vm2787, %v3068, %v3154
    %v3156 = vsel %vm2789, %v3075, %v3155
    %v3157 = vsel %vm2791, %v3082, %v3156
    %v3158 = vsel %vm2793, %v3089, %v3157
    %v3159 = vsel %vm2795, %v3096, %v3158
    %v3160 = vsel %vm2797, %v3103, %v3159
    %3161 = vrot.lane.b32.xlu0 %v3160, 8
    %v3162 = vpop.permute.xlu0 %3161
    %3164 = vrot.lane.b32.xlu0 %v2452, 72
    %v3165 = vpop.permute.xlu0 %3164
    %v3167 = vsel %vm87, %v2710, %v3162
    %v3168 = vsel %vm95, %v3167, %v3165
    %v3170 = vlaneseq
    %v3171 = vshrl.u32 %v3170, 7
    %v3172 = vsub.s32 0, %v3171
    %v3173 = vrot.slane %v2691, %v3172
    %vm3175 = vcmask 588800
    %v3177 = vsel %vm3175, %v3168, 0
    %3179 = vmatprep.subr.mxu0 0.0
    %3180 = vmatpush1.msra.mxu0 %v2682
    %3181 = vmatprep.subr.mxu0 0.0
    %3182 = vmatpush1.msra.mxu0 %v2683
    %3183 = vmatprep.subr.mxu0 0.0
    %3184 = vmatpush1.msra.mxu0 %v2684
    %3185 = vmatprep.subr.mxu0 0.0
    %3186 = vmatpush1.msra.mxu0 %v2685
    %3187 = vmatprep.subr.mxu0 0.0
    %3188 = vmatpush1.msra.mxu0 %v2686
    %3189 = vmatprep.subr.mxu0 0.0
    %3190 = vmatpush1.msra.mxu0 %v2687
    %3191 = vmatprep.subr.mxu0 0.0
    %3192 = vmatpush1.msra.mxu0 %v2688
    %3193 = vmatprep.subr.mxu0 0.0
    %3194 = vmatpush1.msra.mxu0 %v2689
    %3195 = vmatprep.subr.mxu0 0.0
    %3196 = vmatpush1.msra.mxu0 %v2690
    %3197 = vmatprep.subr.mxu0 0.0
    %3198 = vmatpush1.msra.mxu0 0.0
    %3199 = vmatprep.subr.mxu0 0.0
    %3200 = vmatpush1.msra.mxu0 0.0
    %3201 = vmatprep.subr.mxu0 0.0
    %3202 = vmatpush1.msra.mxu0 0.0
    %3203 = vmatprep.subr.mxu0 0.0
    %3204 = vmatpush1.msra.mxu0 0.0
    %3205 = vmatprep.subr.mxu0 0.0
    %3206 = vmatpush1.msra.mxu0 0.0
    %3207 = vmatprep.subr.mxu0 0.0
    %3208 = vmatpush1.msra.mxu0 0.0
    %3209 = vmatprep.subr.mxu0 0.0
    %3210 = vmatpush1.msra.mxu0 0.0
    %3211 = vmatprep.subr.mxu0 0.0
    %3212 = vmatpush1.msra.mxu0 0.0
    %3213 = vmatprep.subr.mxu0 0.0
    %3214 = vmatpush1.msra.mxu0 0.0
    %3215 = vmatprep.subr.mxu0 0.0
    %3216 = vmatpush1.msra.mxu0 0.0
    %3217 = vmatprep.subr.mxu0 0.0
    %3218 = vmatpush1.msra.mxu0 0.0
    %3219 = vmatprep.subr.mxu0 0.0
    %3220 = vmatpush1.msra.mxu0 0.0
    %3221 = vmatprep.subr.mxu0 0.0
    %3222 = vmatpush1.msra.mxu0 0.0
    %3223 = vmatprep.subr.mxu0 0.0
    %3224 = vmatpush1.msra.mxu0 0.0
    %3225 = vmatprep.subr.mxu0 0.0
    %3226 = vmatpush1.msra.mxu0 0.0
    %3227 = vmatprep.subr.mxu0 0.0
    %3228 = vmatpush1.msra.mxu0 0.0
    %3229 = vmatprep.subr.mxu0 0.0
    %3230 = vmatpush1.msra.mxu0 0.0
    %3231 = vmatprep.subr.mxu0 0.0
    %3232 = vmatpush1.msra.mxu0 0.0
    %3233 = vmatprep.subr.mxu0 0.0
    %3234 = vmatpush1.msra.mxu0 0.0
    %3235 = vmatprep.subr.mxu0 0.0
    %3236 = vmatpush1.msra.mxu0 0.0
    %3237 = vmatprep.subr.mxu0 0.0
    %3238 = vmatpush1.msra.mxu0 0.0
    %3239 = vmatprep.subr.mxu0 0.0
    %3240 = vmatpush1.msra.mxu0 0.0
    %3241 = vmatprep.subr.mxu0 0.0
    %3242 = vmatpush1.msra.mxu0 0.0
    %3243 = vmatprep.mubr.f32.mxu0 0.0
    %3244 = vmatmul.mubr.f32.gmra.mrb[0].mxu0 %v3177
    %v3245 = vpop.f32.mrb[0].mxu0
    %v3246 = vadd.f32 %v3173, %v3245
    %v3247 = vpop.f32.mrb[0].mxu0
    %3248 = vdwg.mxu0
    %v3249 = vxor.u32 %v3246, 2147483648
    %v3250 = vmul.f32 %v3249, 1.442695
    %v3251 = vpow.pop %v3250
    %v3252 = vadd.f32 %v3251, 1.0
    %v3253 = vrcp.pop %v3252
    %v3254 = vmul.f32 1.0, %v3253
    %v3255 = vtanh.pop %v3246
    %v3256 = vmul.f32 %v3254, %v2446
    %3258 = vrot.lane.b32.xlu0 %v3255, 64
    %v3259 = vpop.permute.xlu0 %3258
    %v3261 = vmul.f32 %v3254, %v3259
    %3263 = vrot.lane.b32.xlu0 %v3261, 32
    %v3264 = vpop.permute.xlu0 %3263
    %v3266 = vadd.f32 %v3256, %v3264
    %v3267 = vtanh.pop %v3266
    %3269 = vrot.lane.b32.xlu0 %v3267, 64
    %v3270 = vpop.permute.xlu0 %3269
    %v3272 = vmul.f32 %v3254, %v3270
    %3274 = vrot.lane.b32.xlu0 %v3272, 32
    %v3275 = vpop.permute.xlu0 %3274
    %3277 = vrot.lane.b32.xlu0 %v2557, 64
    %v3278 = vpop.permute.xlu0 %3277
    %v3280 = vsel %vm197, %v3275, %v3278
    %v3282 = vlaneseq
    %v3283 = vshrl.u32 %v3282, 7
    %v3284 = vsub.s32 0, %v3283
    %v3285 = vrot.slane %v2700, %v3284
    %v3288 = vsel %vm205, %v3280, 0
    %3290 = vmatprep.subr.mxu0 0.0
    %3291 = vmatpush1.msra.mxu0 %v2692
    %3292 = vmatprep.subr.mxu0 0.0
    %3293 = vmatpush1.msra.mxu0 %v2693
    %3294 = vmatprep.subr.mxu0 0.0
    %3295 = vmatpush1.msra.mxu0 %v2694
    %3296 = vmatprep.subr.mxu0 0.0
    %3297 = vmatpush1.msra.mxu0 %v2695
    %3298 = vmatprep.subr.mxu0 0.0
    %3299 = vmatpush1.msra.mxu0 %v2696
    %3300 = vmatprep.subr.mxu0 0.0
    %3301 = vmatpush1.msra.mxu0 %v2697
    %3302 = vmatprep.subr.mxu0 0.0
    %3303 = vmatpush1.msra.mxu0 %v2698
    %3304 = vmatprep.subr.mxu0 0.0
    %3305 = vmatpush1.msra.mxu0 %v2699
    %3306 = vmatprep.subr.mxu0 0.0
    %3307 = vmatpush1.msra.mxu0 0.0
    %3308 = vmatprep.subr.mxu0 0.0
    %3309 = vmatpush1.msra.mxu0 0.0
    %3310 = vmatprep.subr.mxu0 0.0
    %3311 = vmatpush1.msra.mxu0 0.0
    %3312 = vmatprep.subr.mxu0 0.0
    %3313 = vmatpush1.msra.mxu0 0.0
    %3314 = vmatprep.subr.mxu0 0.0
    %3315 = vmatpush1.msra.mxu0 0.0
    %3316 = vmatprep.subr.mxu0 0.0
    %3317 = vmatpush1.msra.mxu0 0.0
    %3318 = vmatprep.subr.mxu0 0.0
    %3319 = vmatpush1.msra.mxu0 0.0
    %3320 = vmatprep.subr.mxu0 0.0
    %3321 = vmatpush1.msra.mxu0 0.0
    %3322 = vmatprep.subr.mxu0 0.0
    %3323 = vmatpush1.msra.mxu0 0.0
    %3324 = vmatprep.subr.mxu0 0.0
    %3325 = vmatpush1.msra.mxu0 0.0
    %3326 = vmatprep.subr.mxu0 0.0
    %3327 = vmatpush1.msra.mxu0 0.0
    %3328 = vmatprep.subr.mxu0 0.0
    %3329 = vmatpush1.msra.mxu0 0.0
    %3330 = vmatprep.subr.mxu0 0.0
    %3331 = vmatpush1.msra.mxu0 0.0
    %3332 = vmatprep.subr.mxu0 0.0
    %3333 = vmatpush1.msra.mxu0 0.0
    %3334 = vmatprep.subr.mxu0 0.0
    %3335 = vmatpush1.msra.mxu0 0.0
    %3336 = vmatprep.subr.mxu0 0.0
    %3337 = vmatpush1.msra.mxu0 0.0
    %3338 = vmatprep.subr.mxu0 0.0
    %3339 = vmatpush1.msra.mxu0 0.0
    %3340 = vmatprep.subr.mxu0 0.0
    %3341 = vmatpush1.msra.mxu0 0.0
    %3342 = vmatprep.subr.mxu0 0.0
    %3343 = vmatpush1.msra.mxu0 0.0
    %3344 = vmatprep.subr.mxu0 0.0
    %3345 = vmatpush1.msra.mxu0 0.0
    %3346 = vmatprep.subr.mxu0 0.0
    %3347 = vmatpush1.msra.mxu0 0.0
    %3348 = vmatprep.subr.mxu0 0.0
    %3349 = vmatpush1.msra.mxu0 0.0
    %3350 = vmatprep.subr.mxu0 0.0
    %3351 = vmatpush1.msra.mxu0 0.0
    %3352 = vmatprep.subr.mxu0 0.0
    %3353 = vmatpush1.msra.mxu0 0.0
    %3354 = vmatprep.mubr.f32.mxu0 0.0
    %3355 = vmatmul.mubr.f32.gmra.mrb[0].mxu0 %v3288
    %v3356 = vpop.f32.mrb[0].mxu0
    %v3357 = vadd.f32 %v3285, %v3356
    %v3358 = vpop.f32.mrb[0].mxu0
    %3359 = vdwg.mxu0
    %v3360 = vxor.u32 %v3357, 2147483648
    %v3361 = vmul.f32 %v3360, 1.442695
    %v3362 = vpow.pop %v3361
    %v3363 = vadd.f32 %v3362, 1.0
    %v3364 = vrcp.pop %v3363
    %v3365 = vmul.f32 1.0, %v3364
    %v3366 = vtanh.pop %v3357
    %v3367 = vmul.f32 %v3365, %v2551
    %3369 = vrot.lane.b32.xlu0 %v3366, 64
    %v3370 = vpop.permute.xlu0 %3369
    %v3372 = vmul.f32 %v3365, %v3370
    %3374 = vrot.lane.b32.xlu0 %v3372, 32
    %v3375 = vpop.permute.xlu0 %3374
    %v3377 = vadd.f32 %v3367, %v3375
    %v3378 = vtanh.pop %v3377
    %3380 = vrot.lane.b32.xlu0 %v3378, 64
    %v3381 = vpop.permute.xlu0 %3380
    %v3383 = vmul.f32 %v3365, %v3381
    %3385 = vrot.lane.b32.xlu0 %v3383, 32
    %v3386 = vpop.permute.xlu0 %3385
    %3388 = vrot.lane.b32.xlu0 %v3160, 32
    %v3389 = vpop.permute.xlu0 %3388
    %v3391 = vsel %vm197, %v3386, %v3389
    %v3393 = vlaneseq
    %v3394 = vshrl.u32 %v3393, 7
    %v3395 = vsub.s32 0, %v3394
    %v3396 = vrot.slane %v2709, %v3395
    %v3399 = vsel %vm205, %v3391, 0
    %3401 = vmatprep.subr.mxu0 0.0
    %3402 = vmatpush1.msra.mxu0 %v2701
    %3403 = vmatprep.subr.mxu0 0.0
    %3404 = vmatpush1.msra.mxu0 %v2702
    %3405 = vmatprep.subr.mxu0 0.0
    %3406 = vmatpush1.msra.mxu0 %v2703
    %3407 = vmatprep.subr.mxu0 0.0
    %3408 = vmatpush1.msra.mxu0 %v2704
    %3409 = vmatprep.subr.mxu0 0.0
    %3410 = vmatpush1.msra.mxu0 %v2705
    %3411 = vmatprep.subr.mxu0 0.0
    %3412 = vmatpush1.msra.mxu0 %v2706
    %3413 = vmatprep.subr.mxu0 0.0
    %3414 = vmatpush1.msra.mxu0 %v2707
    %3415 = vmatprep.subr.mxu0 0.0
    %3416 = vmatpush1.msra.mxu0 %v2708
    %3417 = vmatprep.subr.mxu0 0.0
    %3418 = vmatpush1.msra.mxu0 0.0
    %3419 = vmatprep.subr.mxu0 0.0
    %3420 = vmatpush1.msra.mxu0 0.0
    %3421 = vmatprep.subr.mxu0 0.0
    %3422 = vmatpush1.msra.mxu0 0.0
    %3423 = vmatprep.subr.mxu0 0.0
    %3424 = vmatpush1.msra.mxu0 0.0
    %3425 = vmatprep.subr.mxu0 0.0
    %3426 = vmatpush1.msra.mxu0 0.0
    %3427 = vmatprep.subr.mxu0 0.0
    %3428 = vmatpush1.msra.mxu0 0.0
    %3429 = vmatprep.subr.mxu0 0.0
    %3430 = vmatpush1.msra.mxu0 0.0
    %3431 = vmatprep.subr.mxu0 0.0
    %3432 = vmatpush1.msra.mxu0 0.0
    %3433 = vmatprep.subr.mxu0 0.0
    %3434 = vmatpush1.msra.mxu0 0.0
    %3435 = vmatprep.subr.mxu0 0.0
    %3436 = vmatpush1.msra.mxu0 0.0
    %3437 = vmatprep.subr.mxu0 0.0
    %3438 = vmatpush1.msra.mxu0 0.0
    %3439 = vmatprep.subr.mxu0 0.0
    %3440 = vmatpush1.msra.mxu0 0.0
    %3441 = vmatprep.subr.mxu0 0.0
    %3442 = vmatpush1.msra.mxu0 0.0
    %3443 = vmatprep.subr.mxu0 0.0
    %3444 = vmatpush1.msra.mxu0 0.0
    %3445 = vmatprep.subr.mxu0 0.0
    %3446 = vmatpush1.msra.mxu0 0.0
    %3447 = vmatprep.subr.mxu0 0.0
    %3448 = vmatpush1.msra.mxu0 0.0
    %3449 = vmatprep.subr.mxu0 0.0
    %3450 = vmatpush1.msra.mxu0 0.0
    %3451 = vmatprep.subr.mxu0 0.0
    %3452 = vmatpush1.msra.mxu0 0.0
    %3453 = vmatprep.subr.mxu0 0.0
    %3454 = vmatpush1.msra.mxu0 0.0
    %3455 = vmatprep.subr.mxu0 0.0
    %3456 = vmatpush1.msra.mxu0 0.0
    %3457 = vmatprep.subr.mxu0 0.0
    %3458 = vmatpush1.msra.mxu0 0.0
    %3459 = vmatprep.subr.mxu0 0.0
    %3460 = vmatpush1.msra.mxu0 0.0
    %3461 = vmatprep.subr.mxu0 0.0
    %3462 = vmatpush1.msra.mxu0 0.0
    %3463 = vmatprep.subr.mxu0 0.0
    %3464 = vmatpush1.msra.mxu0 0.0
    %3465 = vmatprep.mubr.f32.mxu0 0.0
    %3466 = vmatmul.mubr.f32.gmra.mrb[0].mxu0 %v3399
    %v3467 = vpop.f32.mrb[0].mxu0
    %v3468 = vadd.f32 %v3396, %v3467
    %v3469 = vpop.f32.mrb[0].mxu0
    %3470 = vdwg.mxu0
    %s3471 = scalar_lea.vmem %s13, 8
    %3472 = vst.msk [vmem:[%s3471] sm:$0xff] %vm87, %v3468
    %s3473 = sld [smem:[#allocation3 + $0x1]]
    %s3474 = scalar_lea.vmem %s2, 8
    %v3475 = vld [vmem:[%s3474] sm:$0xff]
    %v3476 = vstv %s3473
    %v3477 = vmul.f32 %v3476, %v3475
    %s3478 = ssub.f32 1.0, %s3473
    %v3479 = vstv %s3478
    %v3480 = vmul.f32 %v3479, %v3468
    %v3481 = vadd.f32 %v3477, %v3480
    %v3482 = vcombine.high %v3383, %v3383
    %v3484 = vunpack.c.l.s4 1966171168
    %v3485 = vunpack.c.0.s8 %v3484
    %v3486 = vlaneseq
    %v3487 = vshrl.u32 %v3486, 7
    %v3488 = vsub.s32 %v3485, %v3487
    %v3489 = vrot.slane %v3383, %v3488
    %v3491 = vunpack.c.l.s4 1966171168
    %v3492 = vunpack.c.0.s8 %v3491
    %v3493 = vlaneseq
    %v3494 = vshrl.u32 %v3493, 7
    %v3495 = vsub.s32 %v3492, %v3494
    %v3496 = vrot.slane %v3482, %v3495
    %v3497 = vcombine.high %v3489, %v3489
    %v3498 = vcombine.high %v3496, %v3496
    %v3500 = vunpack.c.l.s4 1966171168
    %v3501 = vunpack.c.0.s8 %v3500
    %v3502 = vlaneseq
    %v3503 = vshrl.u32 %v3502, 7
    %v3504 = vsub.s32 %v3501, %v3503
    %v3505 = vrot.slane %v3489, %v3504
    %v3507 = vunpack.c.l.s4 1966171168
    %v3508 = vunpack.c.0.s8 %v3507
    %v3509 = vlaneseq
    %v3510 = vshrl.u32 %v3509, 7
    %v3511 = vsub.s32 %v3508, %v3510
    %v3512 = vrot.slane %v3496, %v3511
    %v3514 = vunpack.c.l.s4 1966171168
    %v3515 = vunpack.c.0.s8 %v3514
    %v3516 = vlaneseq
    %v3517 = vshrl.u32 %v3516, 7
    %v3518 = vsub.s32 %v3515, %v3517
    %v3519 = vrot.slane %v3497, %v3518
    %v3521 = vunpack.c.l.s4 1966171168
    %v3522 = vunpack.c.0.s8 %v3521
    %v3523 = vlaneseq
    %v3524 = vshrl.u32 %v3523, 7
    %v3525 = vsub.s32 %v3522, %v3524
    %v3526 = vrot.slane %v3498, %v3525
    %v3527 = vcombine.high %v3505, %v3505
    %v3528 = vcombine.high %v3512, %v3512
    %v3529 = vcombine.high %v3519, %v3519
    %v3530 = vcombine.high %v3526, %v3526
    %v3531 = vlaneseq
    %v3532 = vshrl.u32 %v3531, 7
    %v3533 = vsub.s32 0, %v3532
    %v3534 = vrot.slane %v3505, %v3533
    %v3535 = vlaneseq
    %v3536 = vshrl.u32 %v3535, 7
    %v3537 = vsub.s32 0, %v3536
    %v3538 = vrot.slane %v3519, %v3537
    %v3539 = vlaneseq
    %v3540 = vshrl.u32 %v3539, 7
    %v3541 = vsub.s32 0, %v3540
    %v3542 = vrot.slane %v3527, %v3541
    %v3543 = vlaneseq
    %v3544 = vshrl.u32 %v3543, 7
    %v3545 = vsub.s32 0, %v3544
    %v3546 = vrot.slane %v3529, %v3545
    %v3547 = vlaneseq
    %v3548 = vshrl.u32 %v3547, 7
    %v3549 = vsub.s32 0, %v3548
    %v3550 = vrot.slane %v3512, %v3549
    %v3551 = vlaneseq
    %v3552 = vshrl.u32 %v3551, 7
    %v3553 = vsub.s32 0, %v3552
    %v3554 = vrot.slane %v3526, %v3553
    %v3555 = vlaneseq
    %v3556 = vshrl.u32 %v3555, 7
    %v3557 = vsub.s32 0, %v3556
    %v3558 = vrot.slane %v3528, %v3557
    %v3559 = vlaneseq
    %v3560 = vshrl.u32 %v3559, 7
    %v3561 = vsub.s32 0, %v3560
    %v3562 = vrot.slane %v3530, %v3561
    %3563 = vrot.lane.b32.xlu0 %v3534, 32
    %v3564 = vpop.permute.xlu0 %3563
    %3565 = vrot.lane.b32.xlu0 %v3538, 32
    %v3566 = vpop.permute.xlu0 %3565
    %3567 = vrot.lane.b32.xlu0 %v3542, 32
    %v3568 = vpop.permute.xlu0 %3567
    %3569 = vrot.lane.b32.xlu0 %v3546, 32
    %v3570 = vpop.permute.xlu0 %3569
    %3571 = vrot.lane.b32.xlu0 %v3550, 32
    %v3572 = vpop.permute.xlu0 %3571
    %3573 = vrot.lane.b32.xlu0 %v3554, 32
    %v3574 = vpop.permute.xlu0 %3573
    %3575 = vrot.lane.b32.xlu0 %v3558, 32
    %v3576 = vpop.permute.xlu0 %3575
    %3577 = vrot.lane.b32.xlu0 %v3562, 32
    %v3578 = vpop.permute.xlu0 %3577
    %v3587 = vmul.f32 %v2674, %v3564
    %v3588 = vmul.f32 %v2675, %v3566
    %v3589 = vmul.f32 %v2676, %v3568
    %v3590 = vmul.f32 %v2677, %v3570
    %v3591 = vmul.f32 %v2678, %v3572
    %v3592 = vmul.f32 %v2679, %v3574
    %v3593 = vmul.f32 %v2680, %v3576
    %v3594 = vmul.f32 %v2681, %v3578
    %v3595 = vsel %vm197, %v3587, 0.0
    %3596 = vadd.xlane.f32.xlu0 %v3595
    %v3597 = vpop.xlane.xlu0 %3596
    %v3598 = vsel %vm197, %v3588, 0.0
    %3599 = vadd.xlane.f32.xlu0 %v3598
    %v3600 = vpop.xlane.xlu0 %3599
    %v3601 = vsel %vm197, %v3589, 0.0
    %3602 = vadd.xlane.f32.xlu0 %v3601
    %v3603 = vpop.xlane.xlu0 %3602
    %v3604 = vsel %vm197, %v3590, 0.0
    %3605 = vadd.xlane.f32.xlu0 %v3604
    %v3606 = vpop.xlane.xlu0 %3605
    %v3607 = vsel %vm197, %v3591, 0.0
    %3608 = vadd.xlane.f32.xlu0 %v3607
    %v3609 = vpop.xlane.xlu0 %3608
    %v3610 = vsel %vm197, %v3592, 0.0
    %3611 = vadd.xlane.f32.xlu0 %v3610
    %v3612 = vpop.xlane.xlu0 %3611
    %v3613 = vsel %vm197, %v3593, 0.0
    %3614 = vadd.xlane.f32.xlu0 %v3613
    %v3615 = vpop.xlane.xlu0 %3614
    %v3616 = vsel %vm197, %v3594, 0.0
    %3617 = vadd.xlane.f32.xlu0 %v3616
    %v3618 = vpop.xlane.xlu0 %3617
    %v3627 = vlaneseq
    %v3628 = vshrl.u32 %v3627, 7
    %v3629 = vsub.s32 %v2752, %v3628
    %v3630 = vrot.slane %v3597, %v3629
    %v3631 = vlaneseq
    %v3632 = vshrl.u32 %v3631, 7
    %v3633 = vsub.s32 %v2752, %v3632
    %v3634 = vrot.slane %v3600, %v3633
    %v3635 = vlaneseq
    %v3636 = vshrl.u32 %v3635, 7
    %v3637 = vsub.s32 %v2752, %v3636
    %v3638 = vrot.slane %v3603, %v3637
    %v3639 = vlaneseq
    %v3640 = vshrl.u32 %v3639, 7
    %v3641 = vsub.s32 %v2752, %v3640
    %v3642 = vrot.slane %v3606, %v3641
    %v3643 = vlaneseq
    %v3644 = vshrl.u32 %v3643, 7
    %v3645 = vsub.s32 %v2752, %v3644
    %v3646 = vrot.slane %v3609, %v3645
    %v3647 = vlaneseq
    %v3648 = vshrl.u32 %v3647, 7
    %v3649 = vsub.s32 %v2752, %v3648
    %v3650 = vrot.slane %v3612, %v3649
    %v3651 = vlaneseq
    %v3652 = vshrl.u32 %v3651, 7
    %v3653 = vsub.s32 %v2752, %v3652
    %v3654 = vrot.slane %v3615, %v3653
    %v3655 = vlaneseq
    %v3656 = vshrl.u32 %v3655, 7
    %v3657 = vsub.s32 %v2752, %v3656
    %v3658 = vrot.slane %v3618, %v3657
    %v3659 = vsel %vm2785, %v3634, %v3630
    %v3660 = vsel %vm2787, %v3638, %v3659
    %v3661 = vsel %vm2789, %v3642, %v3660
    %v3662 = vsel %vm2791, %v3646, %v3661
    %v3663 = vsel %vm2793, %v3650, %v3662
    %v3664 = vsel %vm2795, %v3654, %v3663
    %v3665 = vsel %vm2797, %v3658, %v3664
    %v3667 = vsel %vm87, %v3665, -inf
    %3668 = vmax.xlane.f32.xlu0 %v3667
    %v3669 = vpop.xlane.xlu0 %3668
    %v3671 = vlaneseq
    %v3672 = vshrl.u32 %v3671, 7
    %v3673 = vsub.s32 0, %v3672
    %v3674 = vrot.slane %v3669, %v3673
    %v3675 = vlaneseq
    %v3676 = vshrl.u32 %v3675, 7
    %v3677 = vsub.s32 1, %v3676
    %v3678 = vrot.slane %v3669, %v3677
    %v3679 = vlaneseq
    %v3680 = vshrl.u32 %v3679, 7
    %v3681 = vsub.s32 2, %v3680
    %v3682 = vrot.slane %v3669, %v3681
    %v3683 = vlaneseq
    %v3684 = vshrl.u32 %v3683, 7
    %v3685 = vsub.s32 3, %v3684
    %v3686 = vrot.slane %v3669, %v3685
    %v3687 = vlaneseq
    %v3688 = vshrl.u32 %v3687, 7
    %v3689 = vsub.s32 4, %v3688
    %v3690 = vrot.slane %v3669, %v3689
    %v3691 = vlaneseq
    %v3692 = vshrl.u32 %v3691, 7
    %v3693 = vsub.s32 5, %v3692
    %v3694 = vrot.slane %v3669, %v3693
    %v3695 = vlaneseq
    %v3696 = vshrl.u32 %v3695, 7
    %v3697 = vsub.s32 6, %v3696
    %v3698 = vrot.slane %v3669, %v3697
    %v3699 = vlaneseq
    %v3700 = vshrl.u32 %v3699, 7
    %v3701 = vsub.s32 7, %v3700
    %v3702 = vrot.slane %v3669, %v3701
    %v3711 = vsub.f32 %v3597, %v3674
    %v3712 = vsub.f32 %v3600, %v3678
    %v3713 = vsub.f32 %v3603, %v3682
    %v3714 = vsub.f32 %v3606, %v3686
    %v3715 = vsub.f32 %v3609, %v3690
    %v3716 = vsub.f32 %v3612, %v3694
    %v3717 = vsub.f32 %v3615, %v3698
    %v3718 = vsub.f32 %v3618, %v3702
    %v3719 = vmul.f32 %v3711, 1.442695
    %v3720 = vpow.pop %v3719
    %v3721 = vmul.f32 %v3712, 1.442695
    %v3722 = vpow.pop %v3721
    %v3723 = vmul.f32 %v3713, 1.442695
    %v3724 = vpow.pop %v3723
    %v3725 = vmul.f32 %v3714, 1.442695
    %v3726 = vpow.pop %v3725
    %v3727 = vmul.f32 %v3715, 1.442695
    %v3728 = vpow.pop %v3727
    %v3729 = vmul.f32 %v3716, 1.442695
    %v3730 = vpow.pop %v3729
    %v3731 = vmul.f32 %v3717, 1.442695
    %v3732 = vpow.pop %v3731
    %v3733 = vmul.f32 %v3718, 1.442695
    %v3734 = vpow.pop %v3733
    %3743 = vset.pattern.permute.xlu0 0
    %3744 = vperm.xlu0 %3743, %v3720
    %v3745 = vpop.permute.xlu0 %3744
    %3746 = vset.pattern.permute.xlu0 0
    %3747 = vperm.xlu0 %3746, %v3722
    %v3748 = vpop.permute.xlu0 %3747
    %3749 = vset.pattern.permute.xlu0 0
    %3750 = vperm.xlu0 %3749, %v3724
    %v3751 = vpop.permute.xlu0 %3750
    %3752 = vset.pattern.permute.xlu0 0
    %3753 = vperm.xlu0 %3752, %v3726
    %v3754 = vpop.permute.xlu0 %3753
    %3755 = vset.pattern.permute.xlu0 0
    %3756 = vperm.xlu0 %3755, %v3728
    %v3757 = vpop.permute.xlu0 %3756
    %3758 = vset.pattern.permute.xlu0 0
    %3759 = vperm.xlu0 %3758, %v3730
    %v3760 = vpop.permute.xlu0 %3759
    %3761 = vset.pattern.permute.xlu0 0
    %3762 = vperm.xlu0 %3761, %v3732
    %v3763 = vpop.permute.xlu0 %3762
    %3764 = vset.pattern.permute.xlu0 0
    %3765 = vperm.xlu0 %3764, %v3734
    %v3766 = vpop.permute.xlu0 %3765
    %v3767 = vlaneseq
    %v3768 = vshrl.u32 %v3767, 7
    %v3769 = vsub.s32 %v2752, %v3768
    %v3770 = vrot.slane %v3745, %v3769
    %v3771 = vlaneseq
    %v3772 = vshrl.u32 %v3771, 7
    %v3773 = vsub.s32 %v2752, %v3772
    %v3774 = vrot.slane %v3748, %v3773
    %v3775 = vlaneseq
    %v3776 = vshrl.u32 %v3775, 7
    %v3777 = vsub.s32 %v2752, %v3776
    %v3778 = vrot.slane %v3751, %v3777
    %v3779 = vlaneseq
    %v3780 = vshrl.u32 %v3779, 7
    %v3781 = vsub.s32 %v2752, %v3780
    %v3782 = vrot.slane %v3754, %v3781
    %v3783 = vlaneseq
    %v3784 = vshrl.u32 %v3783, 7
    %v3785 = vsub.s32 %v2752, %v3784
    %v3786 = vrot.slane %v3757, %v3785
    %v3787 = vlaneseq
    %v3788 = vshrl.u32 %v3787, 7
    %v3789 = vsub.s32 %v2752, %v3788
    %v3790 = vrot.slane %v3760, %v3789
    %v3791 = vlaneseq
    %v3792 = vshrl.u32 %v3791, 7
    %v3793 = vsub.s32 %v2752, %v3792
    %v3794 = vrot.slane %v3763, %v3793
    %v3795 = vlaneseq
    %v3796 = vshrl.u32 %v3795, 7
    %v3797 = vsub.s32 %v2752, %v3796
    %v3798 = vrot.slane %v3766, %v3797
    %v3799 = vsel %vm2785, %v3774, %v3770
    %v3800 = vsel %vm2787, %v3778, %v3799
    %v3801 = vsel %vm2789, %v3782, %v3800
    %v3802 = vsel %vm2791, %v3786, %v3801
    %v3803 = vsel %vm2793, %v3790, %v3802
    %v3804 = vsel %vm2795, %v3794, %v3803
    %v3805 = vsel %vm2797, %v3798, %v3804
    %v3807 = vsel %vm87, %v3805, 0.0
    %3808 = vadd.xlane.f32.xlu0 %v3807
    %v3809 = vpop.xlane.xlu0 %3808
    %v3811 = vlaneseq
    %v3812 = vshrl.u32 %v3811, 7
    %v3813 = vsub.s32 0, %v3812
    %v3814 = vrot.slane %v3809, %v3813
    %v3815 = vlaneseq
    %v3816 = vshrl.u32 %v3815, 7
    %v3817 = vsub.s32 1, %v3816
    %v3818 = vrot.slane %v3809, %v3817
    %v3819 = vlaneseq
    %v3820 = vshrl.u32 %v3819, 7
    %v3821 = vsub.s32 2, %v3820
    %v3822 = vrot.slane %v3809, %v3821
    %v3823 = vlaneseq
    %v3824 = vshrl.u32 %v3823, 7
    %v3825 = vsub.s32 3, %v3824
    %v3826 = vrot.slane %v3809, %v3825
    %v3827 = vlaneseq
    %v3828 = vshrl.u32 %v3827, 7
    %v3829 = vsub.s32 4, %v3828
    %v3830 = vrot.slane %v3809, %v3829
    %v3831 = vlaneseq
    %v3832 = vshrl.u32 %v3831, 7
    %v3833 = vsub.s32 5, %v3832
    %v3834 = vrot.slane %v3809, %v3833
    %v3835 = vlaneseq
    %v3836 = vshrl.u32 %v3835, 7
    %v3837 = vsub.s32 6, %v3836
    %v3838 = vrot.slane %v3809, %v3837
    %v3839 = vlaneseq
    %v3840 = vshrl.u32 %v3839, 7
    %v3841 = vsub.s32 7, %v3840
    %v3842 = vrot.slane %v3809, %v3841
    %v3851 = vrcp.pop %v3814
    %v3852 = vmul.f32 %v3720, %v3851
    %v3853 = vrcp.pop %v3818
    %v3854 = vmul.f32 %v3722, %v3853
    %v3855 = vrcp.pop %v3822
    %v3856 = vmul.f32 %v3724, %v3855
    %v3857 = vrcp.pop %v3826
    %v3858 = vmul.f32 %v3726, %v3857
    %v3859 = vrcp.pop %v3830
    %v3860 = vmul.f32 %v3728, %v3859
    %v3861 = vrcp.pop %v3834
    %v3862 = vmul.f32 %v3730, %v3861
    %v3863 = vrcp.pop %v3838
    %v3864 = vmul.f32 %v3732, %v3863
    %v3865 = vrcp.pop %v3842
    %v3866 = vmul.f32 %v3734, %v3865
    %3868 = vset.pattern.permute.xlu0 0
    %3869 = vperm.xlu0 %3868, %v3852
    %v3870 = vpop.permute.xlu0 %3869
    %3873 = vset.pattern.permute.xlu0 0
    %3874 = vperm.xlu0 %3873, %v3854
    %v3875 = vpop.permute.xlu0 %3874
    %3878 = vset.pattern.permute.xlu0 0
    %3879 = vperm.xlu0 %3878, %v3856
    %v3880 = vpop.permute.xlu0 %3879
    %3883 = vset.pattern.permute.xlu0 0
    %3884 = vperm.xlu0 %3883, %v3858
    %v3885 = vpop.permute.xlu0 %3884
    %3888 = vset.pattern.permute.xlu0 0
    %3889 = vperm.xlu0 %3888, %v3860
    %v3890 = vpop.permute.xlu0 %3889
    %3893 = vset.pattern.permute.xlu0 0
    %3894 = vperm.xlu0 %3893, %v3862
    %v3895 = vpop.permute.xlu0 %3894
    %3898 = vset.pattern.permute.xlu0 0
    %3899 = vperm.xlu0 %3898, %v3864
    %v3900 = vpop.permute.xlu0 %3899
    %3903 = vset.pattern.permute.xlu0 0
    %3904 = vperm.xlu0 %3903, %v3866
    %v3905 = vpop.permute.xlu0 %3904
    %v3907 = vmul.f32 %v3870, %v2674
    %v3908 = vmul.f32 %v3875, %v2675
    %v3909 = vmul.f32 %v3880, %v2676
    %v3910 = vmul.f32 %v3885, %v2677
    %v3911 = vmul.f32 %v3890, %v2678
    %v3912 = vmul.f32 %v3895, %v2679
    %v3913 = vmul.f32 %v3900, %v2680
    %v3914 = vmul.f32 %v3905, %v2681
    %v3915 = vsel %vm197, %v3907, 0.0
    %v3916 = vrot.slane %v3915, 4
    %v3917 = vadd.f32 %v3915, %v3916
    %v3918 = vrot.slane %v3917, 2
    %v3919 = vadd.f32 %v3917, %v3918
    %v3920 = vrot.slane %v3919, 1
    %v3921 = vadd.f32 %v3919, %v3920
    %v3922 = vsel %vm197, %v3908, 0.0
    %v3923 = vrot.slane %v3922, 4
    %v3924 = vadd.f32 %v3922, %v3923
    %v3925 = vrot.slane %v3924, 2
    %v3926 = vadd.f32 %v3924, %v3925
    %v3927 = vrot.slane %v3926, 1
    %v3928 = vadd.f32 %v3926, %v3927
    %v3929 = vsel %vm197, %v3909, 0.0
    %v3930 = vrot.slane %v3929, 4
    %v3931 = vadd.f32 %v3929, %v3930
    %v3932 = vrot.slane %v3931, 2
    %v3933 = vadd.f32 %v3931, %v3932
    %v3934 = vrot.slane %v3933, 1
    %v3935 = vadd.f32 %v3933, %v3934
    %v3936 = vsel %vm197, %v3910, 0.0
    %v3937 = vrot.slane %v3936, 4
    %v3938 = vadd.f32 %v3936, %v3937
    %v3939 = vrot.slane %v3938, 2
    %v3940 = vadd.f32 %v3938, %v3939
    %v3941 = vrot.slane %v3940, 1
    %v3942 = vadd.f32 %v3940, %v3941
    %v3943 = vsel %vm197, %v3911, 0.0
    %v3944 = vrot.slane %v3943, 4
    %v3945 = vadd.f32 %v3943, %v3944
    %v3946 = vrot.slane %v3945, 2
    %v3947 = vadd.f32 %v3945, %v3946
    %v3948 = vrot.slane %v3947, 1
    %v3949 = vadd.f32 %v3947, %v3948
    %v3950 = vsel %vm197, %v3912, 0.0
    %v3951 = vrot.slane %v3950, 4
    %v3952 = vadd.f32 %v3950, %v3951
    %v3953 = vrot.slane %v3952, 2
    %v3954 = vadd.f32 %v3952, %v3953
    %v3955 = vrot.slane %v3954, 1
    %v3956 = vadd.f32 %v3954, %v3955
    %v3957 = vsel %vm197, %v3913, 0.0
    %v3958 = vrot.slane %v3957, 4
    %v3959 = vadd.f32 %v3957, %v3958
    %v3960 = vrot.slane %v3959, 2
    %v3961 = vadd.f32 %v3959, %v3960
    %v3962 = vrot.slane %v3961, 1
    %v3963 = vadd.f32 %v3961, %v3962
    %v3964 = vsel %vm197, %v3914, 0.0
    %v3965 = vrot.slane %v3964, 4
    %v3966 = vadd.f32 %v3964, %v3965
    %v3967 = vrot.slane %v3966, 2
    %v3968 = vadd.f32 %v3966, %v3967
    %v3969 = vrot.slane %v3968, 1
    %v3970 = vadd.f32 %v3968, %v3969
    %v3971 = vlaneseq
    %v3972 = vshrl.u32 %v3971, 7
    %v3973 = vsub.s32 %v2752, %v3972
    %v3974 = vrot.slane %v3870, %v3973
    %v3975 = vlaneseq
    %v3976 = vshrl.u32 %v3975, 7
    %v3977 = vsub.s32 %v2752, %v3976
    %v3978 = vrot.slane %v3875, %v3977
    %v3979 = vlaneseq
    %v3980 = vshrl.u32 %v3979, 7
    %v3981 = vsub.s32 %v2752, %v3980
    %v3982 = vrot.slane %v3880, %v3981
    %v3983 = vlaneseq
    %v3984 = vshrl.u32 %v3983, 7
    %v3985 = vsub.s32 %v2752, %v3984
    %v3986 = vrot.slane %v3885, %v3985
    %v3987 = vlaneseq
    %v3988 = vshrl.u32 %v3987, 7
    %v3989 = vsub.s32 %v2752, %v3988
    %v3990 = vrot.slane %v3890, %v3989
    %v3991 = vlaneseq
    %v3992 = vshrl.u32 %v3991, 7
    %v3993 = vsub.s32 %v2752, %v3992
    %v3994 = vrot.slane %v3895, %v3993
    %v3995 = vlaneseq
    %v3996 = vshrl.u32 %v3995, 7
    %v3997 = vsub.s32 %v2752, %v3996
    %v3998 = vrot.slane %v3900, %v3997
    %v3999 = vlaneseq
    %v4000 = vshrl.u32 %v3999, 7
    %v4001 = vsub.s32 %v2752, %v4000
    %v4002 = vrot.slane %v3905, %v4001
    %v4003 = vsel %vm2785, %v3978, %v3974
    %v4004 = vsel %vm2787, %v3982, %v4003
    %v4005 = vsel %vm2789, %v3986, %v4004
    %v4006 = vsel %vm2791, %v3990, %v4005
    %v4007 = vsel %vm2793, %v3994, %v4006
    %v4008 = vsel %vm2795, %v3998, %v4007
    %v4009 = vsel %vm2797, %v4002, %v4008
    %s4011 = scalar_lea.vmem %s14, 16
    %4012 = vst.msk [vmem:[%s4011] sm:$0xff] %vm87, %v4009
    %v4021 = vsel %vm2785, %v3928, %v3921
    %v4022 = vsel %vm2787, %v3935, %v4021
    %v4023 = vsel %vm2789, %v3942, %v4022
    %v4024 = vsel %vm2791, %v3949, %v4023
    %v4025 = vsel %vm2793, %v3956, %v4024
    %v4026 = vsel %vm2795, %v3963, %v4025
    %v4027 = vsel %vm2797, %v3970, %v4026
    %4028 = vrot.lane.b32.xlu0 %v4027, 8
    %v4029 = vpop.permute.xlu0 %4028
    %4031 = vrot.lane.b32.xlu0 %v3272, 72
    %v4032 = vpop.permute.xlu0 %4031
    %v4034 = vsel %vm87, %v3481, %v4029
    %v4035 = vsel %vm95, %v4034, %v4032
    %v4037 = vsel %vm3175, %v4035, 0
    %4039 = vmatprep.subr.mxu0 0.0
    %4040 = vmatpush1.msra.mxu0 %v2682
    %4041 = vmatprep.subr.mxu0 0.0
    %4042 = vmatpush1.msra.mxu0 %v2683
    %4043 = vmatprep.subr.mxu0 0.0
    %4044 = vmatpush1.msra.mxu0 %v2684
    %4045 = vmatprep.subr.mxu0 0.0
    %4046 = vmatpush1.msra.mxu0 %v2685
    %4047 = vmatprep.subr.mxu0 0.0
    %4048 = vmatpush1.msra.mxu0 %v2686
    %4049 = vmatprep.subr.mxu0 0.0
    %4050 = vmatpush1.msra.mxu0 %v2687
    %4051 = vmatprep.subr.mxu0 0.0
    %4052 = vmatpush1.msra.mxu0 %v2688
    %4053 = vmatprep.subr.mxu0 0.0
    %4054 = vmatpush1.msra.mxu0 %v2689
    %4055 = vmatprep.subr.mxu0 0.0
    %4056 = vmatpush1.msra.mxu0 %v2690
    %4057 = vmatprep.subr.mxu0 0.0
    %4058 = vmatpush1.msra.mxu0 0.0
    %4059 = vmatprep.subr.mxu0 0.0
    %4060 = vmatpush1.msra.mxu0 0.0
    %4061 = vmatprep.subr.mxu0 0.0
    %4062 = vmatpush1.msra.mxu0 0.0
    %4063 = vmatprep.subr.mxu0 0.0
    %4064 = vmatpush1.msra.mxu0 0.0
    %4065 = vmatprep.subr.mxu0 0.0
    %4066 = vmatpush1.msra.mxu0 0.0
    %4067 = vmatprep.subr.mxu0 0.0
    %4068 = vmatpush1.msra.mxu0 0.0
    %4069 = vmatprep.subr.mxu0 0.0
    %4070 = vmatpush1.msra.mxu0 0.0
    %4071 = vmatprep.subr.mxu0 0.0
    %4072 = vmatpush1.msra.mxu0 0.0
    %4073 = vmatprep.subr.mxu0 0.0
    %4074 = vmatpush1.msra.mxu0 0.0
    %4075 = vmatprep.subr.mxu0 0.0
    %4076 = vmatpush1.msra.mxu0 0.0
    %4077 = vmatprep.subr.mxu0 0.0
    %4078 = vmatpush1.msra.mxu0 0.0
    %4079 = vmatprep.subr.mxu0 0.0
    %4080 = vmatpush1.msra.mxu0 0.0
    %4081 = vmatprep.subr.mxu0 0.0
    %4082 = vmatpush1.msra.mxu0 0.0
    %4083 = vmatprep.subr.mxu0 0.0
    %4084 = vmatpush1.msra.mxu0 0.0
    %4085 = vmatprep.subr.mxu0 0.0
    %4086 = vmatpush1.msra.mxu0 0.0
    %4087 = vmatprep.subr.mxu0 0.0
    %4088 = vmatpush1.msra.mxu0 0.0
    %4089 = vmatprep.subr.mxu0 0.0
    %4090 = vmatpush1.msra.mxu0 0.0
    %4091 = vmatprep.subr.mxu0 0.0
    %4092 = vmatpush1.msra.mxu0 0.0
    %4093 = vmatprep.subr.mxu0 0.0
    %4094 = vmatpush1.msra.mxu0 0.0
    %4095 = vmatprep.subr.mxu0 0.0
    %4096 = vmatpush1.msra.mxu0 0.0
    %4097 = vmatprep.subr.mxu0 0.0
    %4098 = vmatpush1.msra.mxu0 0.0
    %4099 = vmatprep.subr.mxu0 0.0
    %4100 = vmatpush1.msra.mxu0 0.0
    %4101 = vmatprep.subr.mxu0 0.0
    %4102 = vmatpush1.msra.mxu0 0.0
    %4103 = vmatprep.mubr.f32.mxu0 0.0
    %4104 = vmatmul.mubr.f32.gmra.mrb[0].mxu0 %v4037
    %v4105 = vpop.f32.mrb[0].mxu0
    %v4106 = vadd.f32 %v3173, %v4105
    %v4107 = vpop.f32.mrb[0].mxu0
    %4108 = vdwg.mxu0
    %v4109 = vxor.u32 %v4106, 2147483648
    %v4110 = vmul.f32 %v4109, 1.442695
    %v4111 = vpow.pop %v4110
    %v4112 = vadd.f32 %v4111, 1.0
    %v4113 = vrcp.pop %v4112
    %v4114 = vmul.f32 1.0, %v4113
    %v4115 = vtanh.pop %v4106
    %v4116 = vmul.f32 %v4114, %v3266
    %4118 = vrot.lane.b32.xlu0 %v4115, 64
    %v4119 = vpop.permute.xlu0 %4118
    %v4121 = vmul.f32 %v4114, %v4119
    %4123 = vrot.lane.b32.xlu0 %v4121, 32
    %v4124 = vpop.permute.xlu0 %4123
    %v4126 = vadd.f32 %v4116, %v4124
    %v4127 = vtanh.pop %v4126
    %4129 = vrot.lane.b32.xlu0 %v4127, 64
    %v4130 = vpop.permute.xlu0 %4129
    %v4132 = vmul.f32 %v4114, %v4130
    %4134 = vrot.lane.b32.xlu0 %v4132, 32
    %v4135 = vpop.permute.xlu0 %4134
    %4137 = vrot.lane.b32.xlu0 %v3383, 64
    %v4138 = vpop.permute.xlu0 %4137
    %v4140 = vsel %vm197, %v4135, %v4138
    %v4142 = vsel %vm205, %v4140, 0
    %4144 = vmatprep.subr.mxu0 0.0
    %4145 = vmatpush1.msra.mxu0 %v2692
    %4146 = vmatprep.subr.mxu0 0.0
    %4147 = vmatpush1.msra.mxu0 %v2693
    %4148 = vmatprep.subr.mxu0 0.0
    %4149 = vmatpush1.msra.mxu0 %v2694
    %4150 = vmatprep.subr.mxu0 0.0
    %4151 = vmatpush1.msra.mxu0 %v2695
    %4152 = vmatprep.subr.mxu0 0.0
    %4153 = vmatpush1.msra.mxu0 %v2696
    %4154 = vmatprep.subr.mxu0 0.0
    %4155 = vmatpush1.msra.mxu0 %v2697
    %4156 = vmatprep.subr.mxu0 0.0
    %4157 = vmatpush1.msra.mxu0 %v2698
    %4158 = vmatprep.subr.mxu0 0.0
    %4159 = vmatpush1.msra.mxu0 %v2699
    %4160 = vmatprep.subr.mxu0 0.0
    %4161 = vmatpush1.msra.mxu0 0.0
    %4162 = vmatprep.subr.mxu0 0.0
    %4163 = vmatpush1.msra.mxu0 0.0
    %4164 = vmatprep.subr.mxu0 0.0
    %4165 = vmatpush1.msra.mxu0 0.0
    %4166 = vmatprep.subr.mxu0 0.0
    %4167 = vmatpush1.msra.mxu0 0.0
    %4168 = vmatprep.subr.mxu0 0.0
    %4169 = vmatpush1.msra.mxu0 0.0
    %4170 = vmatprep.subr.mxu0 0.0
    %4171 = vmatpush1.msra.mxu0 0.0
    %4172 = vmatprep.subr.mxu0 0.0
    %4173 = vmatpush1.msra.mxu0 0.0
    %4174 = vmatprep.subr.mxu0 0.0
    %4175 = vmatpush1.msra.mxu0 0.0
    %4176 = vmatprep.subr.mxu0 0.0
    %4177 = vmatpush1.msra.mxu0 0.0
    %4178 = vmatprep.subr.mxu0 0.0
    %4179 = vmatpush1.msra.mxu0 0.0
    %4180 = vmatprep.subr.mxu0 0.0
    %4181 = vmatpush1.msra.mxu0 0.0
    %4182 = vmatprep.subr.mxu0 0.0
    %4183 = vmatpush1.msra.mxu0 0.0
    %4184 = vmatprep.subr.mxu0 0.0
    %4185 = vmatpush1.msra.mxu0 0.0
    %4186 = vmatprep.subr.mxu0 0.0
    %4187 = vmatpush1.msra.mxu0 0.0
    %4188 = vmatprep.subr.mxu0 0.0
    %4189 = vmatpush1.msra.mxu0 0.0
    %4190 = vmatprep.subr.mxu0 0.0
    %4191 = vmatpush1.msra.mxu0 0.0
    %4192 = vmatprep.subr.mxu0 0.0
    %4193 = vmatpush1.msra.mxu0 0.0
    %4194 = vmatprep.subr.mxu0 0.0
    %4195 = vmatpush1.msra.mxu0 0.0
    %4196 = vmatprep.subr.mxu0 0.0
    %4197 = vmatpush1.msra.mxu0 0.0
    %4198 = vmatprep.subr.mxu0 0.0
    %4199 = vmatpush1.msra.mxu0 0.0
    %4200 = vmatprep.subr.mxu0 0.0
    %4201 = vmatpush1.msra.mxu0 0.0
    %4202 = vmatprep.subr.mxu0 0.0
    %4203 = vmatpush1.msra.mxu0 0.0
    %4204 = vmatprep.subr.mxu0 0.0
    %4205 = vmatpush1.msra.mxu0 0.0
    %4206 = vmatprep.subr.mxu0 0.0
    %4207 = vmatpush1.msra.mxu0 0.0
    %4208 = vmatprep.mubr.f32.mxu0 0.0
    %4209 = vmatmul.mubr.f32.gmra.mrb[0].mxu0 %v4142
    %v4210 = vpop.f32.mrb[0].mxu0
    %v4211 = vadd.f32 %v3285, %v4210
    %v4212 = vpop.f32.mrb[0].mxu0
    %4213 = vdwg.mxu0
    %v4214 = vxor.u32 %v4211, 2147483648
    %v4215 = vmul.f32 %v4214, 1.442695
    %v4216 = vpow.pop %v4215
    %v4217 = vadd.f32 %v4216, 1.0
    %v4218 = vrcp.pop %v4217
    %v4219 = vmul.f32 1.0, %v4218
    %v4220 = vtanh.pop %v4211
    %v4221 = vmul.f32 %v4219, %v3377
    %4223 = vrot.lane.b32.xlu0 %v4220, 64
    %v4224 = vpop.permute.xlu0 %4223
    %v4226 = vmul.f32 %v4219, %v4224
    %4228 = vrot.lane.b32.xlu0 %v4226, 32
    %v4229 = vpop.permute.xlu0 %4228
    %v4231 = vadd.f32 %v4221, %v4229
    %v4232 = vtanh.pop %v4231
    %4234 = vrot.lane.b32.xlu0 %v4232, 64
    %v4235 = vpop.permute.xlu0 %4234
    %v4237 = vmul.f32 %v4219, %v4235
    %4239 = vrot.lane.b32.xlu0 %v4237, 32
    %v4240 = vpop.permute.xlu0 %4239
    %4242 = vrot.lane.b32.xlu0 %v4027, 32
    %v4243 = vpop.permute.xlu0 %4242
    %v4245 = vsel %vm197, %v4240, %v4243
    %v4247 = vsel %vm205, %v4245, 0
    %4249 = vmatprep.subr.mxu0 0.0
    %4250 = vmatpush1.msra.mxu0 %v2701
    %4251 = vmatprep.subr.mxu0 0.0
    %4252 = vmatpush1.msra.mxu0 %v2702
    %4253 = vmatprep.subr.mxu0 0.0
    %4254 = vmatpush1.msra.mxu0 %v2703
    %4255 = vmatprep.subr.mxu0 0.0
    %4256 = vmatpush1.msra.mxu0 %v2704
    %4257 = vmatprep.subr.mxu0 0.0
    %4258 = vmatpush1.msra.mxu0 %v2705
    %4259 = vmatprep.subr.mxu0 0.0
    %4260 = vmatpush1.msra.mxu0 %v2706
    %4261 = vmatprep.subr.mxu0 0.0
    %4262 = vmatpush1.msra.mxu0 %v2707
    %4263 = vmatprep.subr.mxu0 0.0
    %4264 = vmatpush1.msra.mxu0 %v2708
    %4265 = vmatprep.subr.mxu0 0.0
    %4266 = vmatpush1.msra.mxu0 0.0
    %4267 = vmatprep.subr.mxu0 0.0
    %4268 = vmatpush1.msra.mxu0 0.0
    %4269 = vmatprep.subr.mxu0 0.0
    %4270 = vmatpush1.msra.mxu0 0.0
    %4271 = vmatprep.subr.mxu0 0.0
    %4272 = vmatpush1.msra.mxu0 0.0
    %4273 = vmatprep.subr.mxu0 0.0
    %4274 = vmatpush1.msra.mxu0 0.0
    %4275 = vmatprep.subr.mxu0 0.0
    %4276 = vmatpush1.msra.mxu0 0.0
    %4277 = vmatprep.subr.mxu0 0.0
    %4278 = vmatpush1.msra.mxu0 0.0
    %4279 = vmatprep.subr.mxu0 0.0
    %4280 = vmatpush1.msra.mxu0 0.0
    %4281 = vmatprep.subr.mxu0 0.0
    %4282 = vmatpush1.msra.mxu0 0.0
    %4283 = vmatprep.subr.mxu0 0.0
    %4284 = vmatpush1.msra.mxu0 0.0
    %4285 = vmatprep.subr.mxu0 0.0
    %4286 = vmatpush1.msra.mxu0 0.0
    %4287 = vmatprep.subr.mxu0 0.0
    %4288 = vmatpush1.msra.mxu0 0.0
    %4289 = vmatprep.subr.mxu0 0.0
    %4290 = vmatpush1.msra.mxu0 0.0
    %4291 = vmatprep.subr.mxu0 0.0
    %4292 = vmatpush1.msra.mxu0 0.0
    %4293 = vmatprep.subr.mxu0 0.0
    %4294 = vmatpush1.msra.mxu0 0.0
    %4295 = vmatprep.subr.mxu0 0.0
    %4296 = vmatpush1.msra.mxu0 0.0
    %4297 = vmatprep.subr.mxu0 0.0
    %4298 = vmatpush1.msra.mxu0 0.0
    %4299 = vmatprep.subr.mxu0 0.0
    %4300 = vmatpush1.msra.mxu0 0.0
    %4301 = vmatprep.subr.mxu0 0.0
    %4302 = vmatpush1.msra.mxu0 0.0
    %4303 = vmatprep.subr.mxu0 0.0
    %4304 = vmatpush1.msra.mxu0 0.0
    %4305 = vmatprep.subr.mxu0 0.0
    %4306 = vmatpush1.msra.mxu0 0.0
    %4307 = vmatprep.subr.mxu0 0.0
    %4308 = vmatpush1.msra.mxu0 0.0
    %4309 = vmatprep.subr.mxu0 0.0
    %4310 = vmatpush1.msra.mxu0 0.0
    %4311 = vmatprep.subr.mxu0 0.0
    %4312 = vmatpush1.msra.mxu0 0.0
    %4313 = vmatprep.mubr.f32.mxu0 0.0
    %4314 = vmatmul.mubr.f32.gmra.mrb[0].mxu0 %v4247
    %v4315 = vpop.f32.mrb[0].mxu0
    %v4316 = vadd.f32 %v3396, %v4315
    %v4317 = vpop.f32.mrb[0].mxu0
    %4318 = vdwg.mxu0
    %s4319 = scalar_lea.vmem %s13, 16
    %4320 = vst.msk [vmem:[%s4319] sm:$0xff] %vm87, %v4316
    %s4321 = sld [smem:[#allocation3 + $0x2]]
    %s4322 = scalar_lea.vmem %s2, 16
    %v4323 = vld [vmem:[%s4322] sm:$0xff]
    %v4324 = vstv %s4321
    %v4325 = vmul.f32 %v4324, %v4323
    %s4326 = ssub.f32 1.0, %s4321
    %v4327 = vstv %s4326
    %v4328 = vmul.f32 %v4327, %v4316
    %v4329 = vadd.f32 %v4325, %v4328
    %v4330 = vcombine.high %v4237, %v4237
    %v4332 = vunpack.c.l.s4 1966171168
    %v4333 = vunpack.c.0.s8 %v4332
    %v4334 = vlaneseq
    %v4335 = vshrl.u32 %v4334, 7
    %v4336 = vsub.s32 %v4333, %v4335
    %v4337 = vrot.slane %v4237, %v4336
    %v4339 = vunpack.c.l.s4 1966171168
    %v4340 = vunpack.c.0.s8 %v4339
    %v4341 = vlaneseq
    %v4342 = vshrl.u32 %v4341, 7
    %v4343 = vsub.s32 %v4340, %v4342
    %v4344 = vrot.slane %v4330, %v4343
    %v4345 = vcombine.high %v4337, %v4337
    %v4346 = vcombine.high %v4344, %v4344
    %v4348 = vunpack.c.l.s4 1966171168
    %v4349 = vunpack.c.0.s8 %v4348
    %v4350 = vlaneseq
    %v4351 = vshrl.u32 %v4350, 7
    %v4352 = vsub.s32 %v4349, %v4351
    %v4353 = vrot.slane %v4337, %v4352
    %v4355 = vunpack.c.l.s4 1966171168
    %v4356 = vunpack.c.0.s8 %v4355
    %v4357 = vlaneseq
    %v4358 = vshrl.u32 %v4357, 7
    %v4359 = vsub.s32 %v4356, %v4358
    %v4360 = vrot.slane %v4344, %v4359
    %v4362 = vunpack.c.l.s4 1966171168
    %v4363 = vunpack.c.0.s8 %v4362
    %v4364 = vlaneseq
    %v4365 = vshrl.u32 %v4364, 7
    %v4366 = vsub.s32 %v4363, %v4365
    %v4367 = vrot.slane %v4345, %v4366
    %v4369 = vunpack.c.l.s4 1966171168
    %v4370 = vunpack.c.0.s8 %v4369
    %v4371 = vlaneseq
    %v4372 = vshrl.u32 %v4371, 7
    %v4373 = vsub.s32 %v4370, %v4372
    %v4374 = vrot.slane %v4346, %v4373
    %v4375 = vcombine.high %v4353, %v4353
    %v4376 = vcombine.high %v4360, %v4360
    %v4377 = vcombine.high %v4367, %v4367
    %v4378 = vcombine.high %v4374, %v4374
    %v4379 = vlaneseq
    %v4380 = vshrl.u32 %v4379, 7
    %v4381 = vsub.s32 0, %v4380
    %v4382 = vrot.slane %v4353, %v4381
    %v4383 = vlaneseq
    %v4384 = vshrl.u32 %v4383, 7
    %v4385 = vsub.s32 0, %v4384
    %v4386 = vrot.slane %v4367, %v4385
    %v4387 = vlaneseq
    %v4388 = vshrl.u32 %v4387, 7
    %v4389 = vsub.s32 0, %v4388
    %v4390 = vrot.slane %v4375, %v4389
    %v4391 = vlaneseq
    %v4392 = vshrl.u32 %v4391, 7
    %v4393 = vsub.s32 0, %v4392
    %v4394 = vrot.slane %v4377, %v4393
    %v4395 = vlaneseq
    %v4396 = vshrl.u32 %v4395, 7
    %v4397 = vsub.s32 0, %v4396
    %v4398 = vrot.slane %v4360, %v4397
    %v4399 = vlaneseq
    %v4400 = vshrl.u32 %v4399, 7
    %v4401 = vsub.s32 0, %v4400
    %v4402 = vrot.slane %v4374, %v4401
    %v4403 = vlaneseq
    %v4404 = vshrl.u32 %v4403, 7
    %v4405 = vsub.s32 0, %v4404
    %v4406 = vrot.slane %v4376, %v4405
    %v4407 = vlaneseq
    %v4408 = vshrl.u32 %v4407, 7
    %v4409 = vsub.s32 0, %v4408
    %v4410 = vrot.slane %v4378, %v4409
    %4411 = vrot.lane.b32.xlu0 %v4382, 32
    %v4412 = vpop.permute.xlu0 %4411
    %4413 = vrot.lane.b32.xlu0 %v4386, 32
    %v4414 = vpop.permute.xlu0 %4413
    %4415 = vrot.lane.b32.xlu0 %v4390, 32
    %v4416 = vpop.permute.xlu0 %4415
    %4417 = vrot.lane.b32.xlu0 %v4394, 32
    %v4418 = vpop.permute.xlu0 %4417
    %4419 = vrot.lane.b32.xlu0 %v4398, 32
    %v4420 = vpop.permute.xlu0 %4419
    %4421 = vrot.lane.b32.xlu0 %v4402, 32
    %v4422 = vpop.permute.xlu0 %4421
    %4423 = vrot.lane.b32.xlu0 %v4406, 32
    %v4424 = vpop.permute.xlu0 %4423
    %4425 = vrot.lane.b32.xlu0 %v4410, 32
    %v4426 = vpop.permute.xlu0 %4425
    %v4435 = vmul.f32 %v2674, %v4412
    %v4436 = vmul.f32 %v2675, %v4414
    %v4437 = vmul.f32 %v2676, %v4416
    %v4438 = vmul.f32 %v2677, %v4418
    %v4439 = vmul.f32 %v2678, %v4420
    %v4440 = vmul.f32 %v2679, %v4422
    %v4441 = vmul.f32 %v2680, %v4424
    %v4442 = vmul.f32 %v2681, %v4426
    %v4443 = vsel %vm197, %v4435, 0.0
    %4444 = vadd.xlane.f32.xlu0 %v4443
    %v4445 = vpop.xlane.xlu0 %4444
    %v4446 = vsel %vm197, %v4436, 0.0
    %4447 = vadd.xlane.f32.xlu0 %v4446
    %v4448 = vpop.xlane.xlu0 %4447
    %v4449 = vsel %vm197, %v4437, 0.0
    %4450 = vadd.xlane.f32.xlu0 %v4449
    %v4451 = vpop.xlane.xlu0 %4450
    %v4452 = vsel %vm197, %v4438, 0.0
    %4453 = vadd.xlane.f32.xlu0 %v4452
    %v4454 = vpop.xlane.xlu0 %4453
    %v4455 = vsel %vm197, %v4439, 0.0
    %4456 = vadd.xlane.f32.xlu0 %v4455
    %v4457 = vpop.xlane.xlu0 %4456
    %v4458 = vsel %vm197, %v4440, 0.0
    %4459 = vadd.xlane.f32.xlu0 %v4458
    %v4460 = vpop.xlane.xlu0 %4459
    %v4461 = vsel %vm197, %v4441, 0.0
    %4462 = vadd.xlane.f32.xlu0 %v4461
    %v4463 = vpop.xlane.xlu0 %4462
    %v4464 = vsel %vm197, %v4442, 0.0
    %4465 = vadd.xlane.f32.xlu0 %v4464
    %v4466 = vpop.xlane.xlu0 %4465
    %v4475 = vlaneseq
    %v4476 = vshrl.u32 %v4475, 7
    %v4477 = vsub.s32 %v2752, %v4476
    %v4478 = vrot.slane %v4445, %v4477
    %v4479 = vlaneseq
    %v4480 = vshrl.u32 %v4479, 7
    %v4481 = vsub.s32 %v2752, %v4480
    %v4482 = vrot.slane %v4448, %v4481
    %v4483 = vlaneseq
    %v4484 = vshrl.u32 %v4483, 7
    %v4485 = vsub.s32 %v2752, %v4484
    %v4486 = vrot.slane %v4451, %v4485
    %v4487 = vlaneseq
    %v4488 = vshrl.u32 %v4487, 7
    %v4489 = vsub.s32 %v2752, %v4488
    %v4490 = vrot.slane %v4454, %v4489
    %v4491 = vlaneseq
    %v4492 = vshrl.u32 %v4491, 7
    %v4493 = vsub.s32 %v2752, %v4492
    %v4494 = vrot.slane %v4457, %v4493
    %v4495 = vlaneseq
    %v4496 = vshrl.u32 %v4495, 7
    %v4497 = vsub.s32 %v2752, %v4496
    %v4498 = vrot.slane %v4460, %v4497
    %v4499 = vlaneseq
    %v4500 = vshrl.u32 %v4499, 7
    %v4501 = vsub.s32 %v2752, %v4500
    %v4502 = vrot.slane %v4463, %v4501
    %v4503 = vlaneseq
    %v4504 = vshrl.u32 %v4503, 7
    %v4505 = vsub.s32 %v2752, %v4504
    %v4506 = vrot.slane %v4466, %v4505
    %v4507 = vsel %vm2785, %v4482, %v4478
    %v4508 = vsel %vm2787, %v4486, %v4507
    %v4509 = vsel %vm2789, %v4490, %v4508
    %v4510 = vsel %vm2791, %v4494, %v4509
    %v4511 = vsel %vm2793, %v4498, %v4510
    %v4512 = vsel %vm2795, %v4502, %v4511
    %v4513 = vsel %vm2797, %v4506, %v4512
    %v4515 = vsel %vm87, %v4513, -inf
    %4516 = vmax.xlane.f32.xlu0 %v4515
    %v4517 = vpop.xlane.xlu0 %4516
    %v4519 = vlaneseq
    %v4520 = vshrl.u32 %v4519, 7
    %v4521 = vsub.s32 0, %v4520
    %v4522 = vrot.slane %v4517, %v4521
    %v4523 = vlaneseq
    %v4524 = vshrl.u32 %v4523, 7
    %v4525 = vsub.s32 1, %v4524
    %v4526 = vrot.slane %v4517, %v4525
    %v4527 = vlaneseq
    %v4528 = vshrl.u32 %v4527, 7
    %v4529 = vsub.s32 2, %v4528
    %v4530 = vrot.slane %v4517, %v4529
    %v4531 = vlaneseq
    %v4532 = vshrl.u32 %v4531, 7
    %v4533 = vsub.s32 3, %v4532
    %v4534 = vrot.slane %v4517, %v4533
    %v4535 = vlaneseq
    %v4536 = vshrl.u32 %v4535, 7
    %v4537 = vsub.s32 4, %v4536
    %v4538 = vrot.slane %v4517, %v4537
    %v4539 = vlaneseq
    %v4540 = vshrl.u32 %v4539, 7
    %v4541 = vsub.s32 5, %v4540
    %v4542 = vrot.slane %v4517, %v4541
    %v4543 = vlaneseq
    %v4544 = vshrl.u32 %v4543, 7
    %v4545 = vsub.s32 6, %v4544
    %v4546 = vrot.slane %v4517, %v4545
    %v4547 = vlaneseq
    %v4548 = vshrl.u32 %v4547, 7
    %v4549 = vsub.s32 7, %v4548
    %v4550 = vrot.slane %v4517, %v4549
    %v4559 = vsub.f32 %v4445, %v4522
    %v4560 = vsub.f32 %v4448, %v4526
    %v4561 = vsub.f32 %v4451, %v4530
    %v4562 = vsub.f32 %v4454, %v4534
    %v4563 = vsub.f32 %v4457, %v4538
    %v4564 = vsub.f32 %v4460, %v4542
    %v4565 = vsub.f32 %v4463, %v4546
    %v4566 = vsub.f32 %v4466, %v4550
    %v4567 = vmul.f32 %v4559, 1.442695
    %v4568 = vpow.pop %v4567
    %v4569 = vmul.f32 %v4560, 1.442695
    %v4570 = vpow.pop %v4569
    %v4571 = vmul.f32 %v4561, 1.442695
    %v4572 = vpow.pop %v4571
    %v4573 = vmul.f32 %v4562, 1.442695
    %v4574 = vpow.pop %v4573
    %v4575 = vmul.f32 %v4563, 1.442695
    %v4576 = vpow.pop %v4575
    %v4577 = vmul.f32 %v4564, 1.442695
    %v4578 = vpow.pop %v4577
    %v4579 = vmul.f32 %v4565, 1.442695
    %v4580 = vpow.pop %v4579
    %v4581 = vmul.f32 %v4566, 1.442695
    %v4582 = vpow.pop %v4581
    %4591 = vset.pattern.permute.xlu0 0
    %4592 = vperm.xlu0 %4591, %v4568
    %v4593 = vpop.permute.xlu0 %4592
    %4594 = vset.pattern.permute.xlu0 0
    %4595 = vperm.xlu0 %4594, %v4570
    %v4596 = vpop.permute.xlu0 %4595
    %4597 = vset.pattern.permute.xlu0 0
    %4598 = vperm.xlu0 %4597, %v4572
    %v4599 = vpop.permute.xlu0 %4598
    %4600 = vset.pattern.permute.xlu0 0
    %4601 = vperm.xlu0 %4600, %v4574
    %v4602 = vpop.permute.xlu0 %4601
    %4603 = vset.pattern.permute.xlu0 0
    %4604 = vperm.xlu0 %4603, %v4576
    %v4605 = vpop.permute.xlu0 %4604
    %4606 = vset.pattern.permute.xlu0 0
    %4607 = vperm.xlu0 %4606, %v4578
    %v4608 = vpop.permute.xlu0 %4607
    %4609 = vset.pattern.permute.xlu0 0
    %4610 = vperm.xlu0 %4609, %v4580
    %v4611 = vpop.permute.xlu0 %4610
    %4612 = vset.pattern.permute.xlu0 0
    %4613 = vperm.xlu0 %4612, %v4582
    %v4614 = vpop.permute.xlu0 %4613
    %v4615 = vlaneseq
    %v4616 = vshrl.u32 %v4615, 7
    %v4617 = vsub.s32 %v2752, %v4616
    %v4618 = vrot.slane %v4593, %v4617
    %v4619 = vlaneseq
    %v4620 = vshrl.u32 %v4619, 7
    %v4621 = vsub.s32 %v2752, %v4620
    %v4622 = vrot.slane %v4596, %v4621
    %v4623 = vlaneseq
    %v4624 = vshrl.u32 %v4623, 7
    %v4625 = vsub.s32 %v2752, %v4624
    %v4626 = vrot.slane %v4599, %v4625
    %v4627 = vlaneseq
    %v4628 = vshrl.u32 %v4627, 7
    %v4629 = vsub.s32 %v2752, %v4628
    %v4630 = vrot.slane %v4602, %v4629
    %v4631 = vlaneseq
    %v4632 = vshrl.u32 %v4631, 7
    %v4633 = vsub.s32 %v2752, %v4632
    %v4634 = vrot.slane %v4605, %v4633
    %v4635 = vlaneseq
    %v4636 = vshrl.u32 %v4635, 7
    %v4637 = vsub.s32 %v2752, %v4636
    %v4638 = vrot.slane %v4608, %v4637
    %v4639 = vlaneseq
    %v4640 = vshrl.u32 %v4639, 7
    %v4641 = vsub.s32 %v2752, %v4640
    %v4642 = vrot.slane %v4611, %v4641
    %v4643 = vlaneseq
    %v4644 = vshrl.u32 %v4643, 7
    %v4645 = vsub.s32 %v2752, %v4644
    %v4646 = vrot.slane %v4614, %v4645
    %v4647 = vsel %vm2785, %v4622, %v4618
    %v4648 = vsel %vm2787, %v4626, %v4647
    %v4649 = vsel %vm2789, %v4630, %v4648
    %v4650 = vsel %vm2791, %v4634, %v4649
    %v4651 = vsel %vm2793, %v4638, %v4650
    %v4652 = vsel %vm2795, %v4642, %v4651
    %v4653 = vsel %vm2797, %v4646, %v4652
    %v4655 = vsel %vm87, %v4653, 0.0
    %4656 = vadd.xlane.f32.xlu0 %v4655
    %v4657 = vpop.xlane.xlu0 %4656
    %v4659 = vlaneseq
    %v4660 = vshrl.u32 %v4659, 7
    %v4661 = vsub.s32 0, %v4660
    %v4662 = vrot.slane %v4657, %v4661
    %v4663 = vlaneseq
    %v4664 = vshrl.u32 %v4663, 7
    %v4665 = vsub.s32 1, %v4664
    %v4666 = vrot.slane %v4657, %v4665
    %v4667 = vlaneseq
    %v4668 = vshrl.u32 %v4667, 7
    %v4669 = vsub.s32 2, %v4668
    %v4670 = vrot.slane %v4657, %v4669
    %v4671 = vlaneseq
    %v4672 = vshrl.u32 %v4671, 7
    %v4673 = vsub.s32 3, %v4672
    %v4674 = vrot.slane %v4657, %v4673
    %v4675 = vlaneseq
    %v4676 = vshrl.u32 %v4675, 7
    %v4677 = vsub.s32 4, %v4676
    %v4678 = vrot.slane %v4657, %v4677
    %v4679 = vlaneseq
    %v4680 = vshrl.u32 %v4679, 7
    %v4681 = vsub.s32 5, %v4680
    %v4682 = vrot.slane %v4657, %v4681
    %v4683 = vlaneseq
    %v4684 = vshrl.u32 %v4683, 7
    %v4685 = vsub.s32 6, %v4684
    %v4686 = vrot.slane %v4657, %v4685
    %v4687 = vlaneseq
    %v4688 = vshrl.u32 %v4687, 7
    %v4689 = vsub.s32 7, %v4688
    %v4690 = vrot.slane %v4657, %v4689
    %v4699 = vrcp.pop %v4662
    %v4700 = vmul.f32 %v4568, %v4699
    %v4701 = vrcp.pop %v4666
    %v4702 = vmul.f32 %v4570, %v4701
    %v4703 = vrcp.pop %v4670
    %v4704 = vmul.f32 %v4572, %v4703
    %v4705 = vrcp.pop %v4674
    %v4706 = vmul.f32 %v4574, %v4705
    %v4707 = vrcp.pop %v4678
    %v4708 = vmul.f32 %v4576, %v4707
    %v4709 = vrcp.pop %v4682
    %v4710 = vmul.f32 %v4578, %v4709
    %v4711 = vrcp.pop %v4686
    %v4712 = vmul.f32 %v4580, %v4711
    %v4713 = vrcp.pop %v4690
    %v4714 = vmul.f32 %v4582, %v4713
    %4716 = vset.pattern.permute.xlu0 0
    %4717 = vperm.xlu0 %4716, %v4700
    %v4718 = vpop.permute.xlu0 %4717
    %4721 = vset.pattern.permute.xlu0 0
    %4722 = vperm.xlu0 %4721, %v4702
    %v4723 = vpop.permute.xlu0 %4722
    %4726 = vset.pattern.permute.xlu0 0
    %4727 = vperm.xlu0 %4726, %v4704
    %v4728 = vpop.permute.xlu0 %4727
    %4731 = vset.pattern.permute.xlu0 0
    %4732 = vperm.xlu0 %4731, %v4706
    %v4733 = vpop.permute.xlu0 %4732
    %4736 = vset.pattern.permute.xlu0 0
    %4737 = vperm.xlu0 %4736, %v4708
    %v4738 = vpop.permute.xlu0 %4737
    %4741 = vset.pattern.permute.xlu0 0
    %4742 = vperm.xlu0 %4741, %v4710
    %v4743 = vpop.permute.xlu0 %4742
    %4746 = vset.pattern.permute.xlu0 0
    %4747 = vperm.xlu0 %4746, %v4712
    %v4748 = vpop.permute.xlu0 %4747
    %4751 = vset.pattern.permute.xlu0 0
    %4752 = vperm.xlu0 %4751, %v4714
    %v4753 = vpop.permute.xlu0 %4752
    %v4755 = vmul.f32 %v4718, %v2674
    %v4756 = vmul.f32 %v4723, %v2675
    %v4757 = vmul.f32 %v4728, %v2676
    %v4758 = vmul.f32 %v4733, %v2677
    %v4759 = vmul.f32 %v4738, %v2678
    %v4760 = vmul.f32 %v4743, %v2679
    %v4761 = vmul.f32 %v4748, %v2680
    %v4762 = vmul.f32 %v4753, %v2681
    %v4763 = vsel %vm197, %v4755, 0.0
    %v4764 = vrot.slane %v4763, 4
    %v4765 = vadd.f32 %v4763, %v4764
    %v4766 = vrot.slane %v4765, 2
    %v4767 = vadd.f32 %v4765, %v4766
    %v4768 = vrot.slane %v4767, 1
    %v4769 = vadd.f32 %v4767, %v4768
    %v4770 = vsel %vm197, %v4756, 0.0
    %v4771 = vrot.slane %v4770, 4
    %v4772 = vadd.f32 %v4770, %v4771
    %v4773 = vrot.slane %v4772, 2
    %v4774 = vadd.f32 %v4772, %v4773
    %v4775 = vrot.slane %v4774, 1
    %v4776 = vadd.f32 %v4774, %v4775
    %v4777 = vsel %vm197, %v4757, 0.0
    %v4778 = vrot.slane %v4777, 4
    %v4779 = vadd.f32 %v4777, %v4778
    %v4780 = vrot.slane %v4779, 2
    %v4781 = vadd.f32 %v4779, %v4780
    %v4782 = vrot.slane %v4781, 1
    %v4783 = vadd.f32 %v4781, %v4782
    %v4784 = vsel %vm197, %v4758, 0.0
    %v4785 = vrot.slane %v4784, 4
    %v4786 = vadd.f32 %v4784, %v4785
    %v4787 = vrot.slane %v4786, 2
    %v4788 = vadd.f32 %v4786, %v4787
    %v4789 = vrot.slane %v4788, 1
    %v4790 = vadd.f32 %v4788, %v4789
    %v4791 = vsel %vm197, %v4759, 0.0
    %v4792 = vrot.slane %v4791, 4
    %v4793 = vadd.f32 %v4791, %v4792
    %v4794 = vrot.slane %v4793, 2
    %v4795 = vadd.f32 %v4793, %v4794
    %v4796 = vrot.slane %v4795, 1
    %v4797 = vadd.f32 %v4795, %v4796
    %v4798 = vsel %vm197, %v4760, 0.0
    %v4799 = vrot.slane %v4798, 4
    %v4800 = vadd.f32 %v4798, %v4799
    %v4801 = vrot.slane %v4800, 2
    %v4802 = vadd.f32 %v4800, %v4801
    %v4803 = vrot.slane %v4802, 1
    %v4804 = vadd.f32 %v4802, %v4803
    %v4805 = vsel %vm197, %v4761, 0.0
    %v4806 = vrot.slane %v4805, 4
    %v4807 = vadd.f32 %v4805, %v4806
    %v4808 = vrot.slane %v4807, 2
    %v4809 = vadd.f32 %v4807, %v4808
    %v4810 = vrot.slane %v4809, 1
    %v4811 = vadd.f32 %v4809, %v4810
    %v4812 = vsel %vm197, %v4762, 0.0
    %v4813 = vrot.slane %v4812, 4
    %v4814 = vadd.f32 %v4812, %v4813
    %v4815 = vrot.slane %v4814, 2
    %v4816 = vadd.f32 %v4814, %v4815
    %v4817 = vrot.slane %v4816, 1
    %v4818 = vadd.f32 %v4816, %v4817
    %v4819 = vlaneseq
    %v4820 = vshrl.u32 %v4819, 7
    %v4821 = vsub.s32 %v2752, %v4820
    %v4822 = vrot.slane %v4718, %v4821
    %v4823 = vlaneseq
    %v4824 = vshrl.u32 %v4823, 7
    %v4825 = vsub.s32 %v2752, %v4824
    %v4826 = vrot.slane %v4723, %v4825
    %v4827 = vlaneseq
    %v4828 = vshrl.u32 %v4827, 7
    %v4829 = vsub.s32 %v2752, %v4828
    %v4830 = vrot.slane %v4728, %v4829
    %v4831 = vlaneseq
    %v4832 = vshrl.u32 %v4831, 7
    %v4833 = vsub.s32 %v2752, %v4832
    %v4834 = vrot.slane %v4733, %v4833
    %v4835 = vlaneseq
    %v4836 = vshrl.u32 %v4835, 7
    %v4837 = vsub.s32 %v2752, %v4836
    %v4838 = vrot.slane %v4738, %v4837
    %v4839 = vlaneseq
    %v4840 = vshrl.u32 %v4839, 7
    %v4841 = vsub.s32 %v2752, %v4840
    %v4842 = vrot.slane %v4743, %v4841
    %v4843 = vlaneseq
    %v4844 = vshrl.u32 %v4843, 7
    %v4845 = vsub.s32 %v2752, %v4844
    %v4846 = vrot.slane %v4748, %v4845
    %v4847 = vlaneseq
    %v4848 = vshrl.u32 %v4847, 7
    %v4849 = vsub.s32 %v2752, %v4848
    %v4850 = vrot.slane %v4753, %v4849
    %v4851 = vsel %vm2785, %v4826, %v4822
    %v4852 = vsel %vm2787, %v4830, %v4851
    %v4853 = vsel %vm2789, %v4834, %v4852
    %v4854 = vsel %vm2791, %v4838, %v4853
    %v4855 = vsel %vm2793, %v4842, %v4854
    %v4856 = vsel %vm2795, %v4846, %v4855
    %v4857 = vsel %vm2797, %v4850, %v4856
    %s4859 = scalar_lea.vmem %s14, 24
    %4860 = vst.msk [vmem:[%s4859] sm:$0xff] %vm87, %v4857
    %v4869 = vsel %vm2785, %v4776, %v4769
    %v4870 = vsel %vm2787, %v4783, %v4869
    %v4871 = vsel %vm2789, %v4790, %v4870
    %v4872 = vsel %vm2791, %v4797, %v4871
    %v4873 = vsel %vm2793, %v4804, %v4872
    %v4874 = vsel %vm2795, %v4811, %v4873
    %v4875 = vsel %vm2797, %v4818, %v4874
    %4876 = vrot.lane.b32.xlu0 %v4875, 8
    %v4877 = vpop.permute.xlu0 %4876
    %4879 = vrot.lane.b32.xlu0 %v4132, 72
    %v4880 = vpop.permute.xlu0 %4879
    %v4882 = vsel %vm87, %v4329, %v4877
    %v4883 = vsel %vm95, %v4882, %v4880
    %v4885 = vsel %vm3175, %v4883, 0
    %4887 = vmatprep.subr.mxu0 0.0
    %4888 = vmatpush1.msra.mxu0 %v2682
    %4889 = vmatprep.subr.mxu0 0.0
    %4890 = vmatpush1.msra.mxu0 %v2683
    %4891 = vmatprep.subr.mxu0 0.0
    %4892 = vmatpush1.msra.mxu0 %v2684
    %4893 = vmatprep.subr.mxu0 0.0
    %4894 = vmatpush1.msra.mxu0 %v2685
    %4895 = vmatprep.subr.mxu0 0.0
    %4896 = vmatpush1.msra.mxu0 %v2686
    %4897 = vmatprep.subr.mxu0 0.0
    %4898 = vmatpush1.msra.mxu0 %v2687
    %4899 = vmatprep.subr.mxu0 0.0
    %4900 = vmatpush1.msra.mxu0 %v2688
    %4901 = vmatprep.subr.mxu0 0.0
    %4902 = vmatpush1.msra.mxu0 %v2689
    %4903 = vmatprep.subr.mxu0 0.0
    %4904 = vmatpush1.msra.mxu0 %v2690
    %4905 = vmatprep.subr.mxu0 0.0
    %4906 = vmatpush1.msra.mxu0 0.0
    %4907 = vmatprep.subr.mxu0 0.0
    %4908 = vmatpush1.msra.mxu0 0.0
    %4909 = vmatprep.subr.mxu0 0.0
    %4910 = vmatpush1.msra.mxu0 0.0
    %4911 = vmatprep.subr.mxu0 0.0
    %4912 = vmatpush1.msra.mxu0 0.0
    %4913 = vmatprep.subr.mxu0 0.0
    %4914 = vmatpush1.msra.mxu0 0.0
    %4915 = vmatprep.subr.mxu0 0.0
    %4916 = vmatpush1.msra.mxu0 0.0
    %4917 = vmatprep.subr.mxu0 0.0
    %4918 = vmatpush1.msra.mxu0 0.0
    %4919 = vmatprep.subr.mxu0 0.0
    %4920 = vmatpush1.msra.mxu0 0.0
    %4921 = vmatprep.subr.mxu0 0.0
    %4922 = vmatpush1.msra.mxu0 0.0
    %4923 = vmatprep.subr.mxu0 0.0
    %4924 = vmatpush1.msra.mxu0 0.0
    %4925 = vmatprep.subr.mxu0 0.0
    %4926 = vmatpush1.msra.mxu0 0.0
    %4927 = vmatprep.subr.mxu0 0.0
    %4928 = vmatpush1.msra.mxu0 0.0
    %4929 = vmatprep.subr.mxu0 0.0
    %4930 = vmatpush1.msra.mxu0 0.0
    %4931 = vmatprep.subr.mxu0 0.0
    %4932 = vmatpush1.msra.mxu0 0.0
    %4933 = vmatprep.subr.mxu0 0.0
    %4934 = vmatpush1.msra.mxu0 0.0
    %4935 = vmatprep.subr.mxu0 0.0
    %4936 = vmatpush1.msra.mxu0 0.0
    %4937 = vmatprep.subr.mxu0 0.0
    %4938 = vmatpush1.msra.mxu0 0.0
    %4939 = vmatprep.subr.mxu0 0.0
    %4940 = vmatpush1.msra.mxu0 0.0
    %4941 = vmatprep.subr.mxu0 0.0
    %4942 = vmatpush1.msra.mxu0 0.0
    %4943 = vmatprep.subr.mxu0 0.0
    %4944 = vmatpush1.msra.mxu0 0.0
    %4945 = vmatprep.subr.mxu0 0.0
    %4946 = vmatpush1.msra.mxu0 0.0
    %4947 = vmatprep.subr.mxu0 0.0
    %4948 = vmatpush1.msra.mxu0 0.0
    %4949 = vmatprep.subr.mxu0 0.0
    %4950 = vmatpush1.msra.mxu0 0.0
    %4951 = vmatprep.mubr.f32.mxu0 0.0
    %4952 = vmatmul.mubr.f32.gmra.mrb[0].mxu0 %v4885
    %v4953 = vpop.f32.mrb[0].mxu0
    %v4954 = vadd.f32 %v3173, %v4953
    %v4955 = vpop.f32.mrb[0].mxu0
    %4956 = vdwg.mxu0
    %v4957 = vxor.u32 %v4954, 2147483648
    %v4958 = vmul.f32 %v4957, 1.442695
    %v4959 = vpow.pop %v4958
    %v4960 = vadd.f32 %v4959, 1.0
    %v4961 = vrcp.pop %v4960
    %v4962 = vmul.f32 1.0, %v4961
    %v4963 = vtanh.pop %v4954
    %v4964 = vmul.f32 %v4962, %v4126
    %4966 = vrot.lane.b32.xlu0 %v4963, 64
    %v4967 = vpop.permute.xlu0 %4966
    %v4969 = vmul.f32 %v4962, %v4967
    %4971 = vrot.lane.b32.xlu0 %v4969, 32
    %v4972 = vpop.permute.xlu0 %4971
    %v4974 = vadd.f32 %v4964, %v4972
    %v4975 = vtanh.pop %v4974
    %4977 = vrot.lane.b32.xlu0 %v4975, 64
    %v4978 = vpop.permute.xlu0 %4977
    %v4980 = vmul.f32 %v4962, %v4978
    %4982 = vrot.lane.b32.xlu0 %v4980, 32
    %v4983 = vpop.permute.xlu0 %4982
    %4985 = vrot.lane.b32.xlu0 %v4237, 64
    %v4986 = vpop.permute.xlu0 %4985
    %v4988 = vsel %vm197, %v4983, %v4986
    %v4990 = vsel %vm205, %v4988, 0
    %4992 = vmatprep.subr.mxu0 0.0
    %4993 = vmatpush1.msra.mxu0 %v2692
    %4994 = vmatprep.subr.mxu0 0.0
    %4995 = vmatpush1.msra.mxu0 %v2693
    %4996 = vmatprep.subr.mxu0 0.0
    %4997 = vmatpush1.msra.mxu0 %v2694
    %4998 = vmatprep.subr.mxu0 0.0
    %4999 = vmatpush1.msra.mxu0 %v2695
    %5000 = vmatprep.subr.mxu0 0.0
    %5001 = vmatpush1.msra.mxu0 %v2696
    %5002 = vmatprep.subr.mxu0 0.0
    %5003 = vmatpush1.msra.mxu0 %v2697
    %5004 = vmatprep.subr.mxu0 0.0
    %5005 = vmatpush1.msra.mxu0 %v2698
    %5006 = vmatprep.subr.mxu0 0.0
    %5007 = vmatpush1.msra.mxu0 %v2699
    %5008 = vmatprep.subr.mxu0 0.0
    %5009 = vmatpush1.msra.mxu0 0.0
    %5010 = vmatprep.subr.mxu0 0.0
    %5011 = vmatpush1.msra.mxu0 0.0
    %5012 = vmatprep.subr.mxu0 0.0
    %5013 = vmatpush1.msra.mxu0 0.0
    %5014 = vmatprep.subr.mxu0 0.0
    %5015 = vmatpush1.msra.mxu0 0.0
    %5016 = vmatprep.subr.mxu0 0.0
    %5017 = vmatpush1.msra.mxu0 0.0
    %5018 = vmatprep.subr.mxu0 0.0
    %5019 = vmatpush1.msra.mxu0 0.0
    %5020 = vmatprep.subr.mxu0 0.0
    %5021 = vmatpush1.msra.mxu0 0.0
    %5022 = vmatprep.subr.mxu0 0.0
    %5023 = vmatpush1.msra.mxu0 0.0
    %5024 = vmatprep.subr.mxu0 0.0
    %5025 = vmatpush1.msra.mxu0 0.0
    %5026 = vmatprep.subr.mxu0 0.0
    %5027 = vmatpush1.msra.mxu0 0.0
    %5028 = vmatprep.subr.mxu0 0.0
    %5029 = vmatpush1.msra.mxu0 0.0
    %5030 = vmatprep.subr.mxu0 0.0
    %5031 = vmatpush1.msra.mxu0 0.0
    %5032 = vmatprep.subr.mxu0 0.0
    %5033 = vmatpush1.msra.mxu0 0.0
    %5034 = vmatprep.subr.mxu0 0.0
    %5035 = vmatpush1.msra.mxu0 0.0
    %5036 = vmatprep.subr.mxu0 0.0
    %5037 = vmatpush1.msra.mxu0 0.0
    %5038 = vmatprep.subr.mxu0 0.0
    %5039 = vmatpush1.msra.mxu0 0.0
    %5040 = vmatprep.subr.mxu0 0.0
    %5041 = vmatpush1.msra.mxu0 0.0
    %5042 = vmatprep.subr.mxu0 0.0
    %5043 = vmatpush1.msra.mxu0 0.0
    %5044 = vmatprep.subr.mxu0 0.0
    %5045 = vmatpush1.msra.mxu0 0.0
    %5046 = vmatprep.subr.mxu0 0.0
    %5047 = vmatpush1.msra.mxu0 0.0
    %5048 = vmatprep.subr.mxu0 0.0
    %5049 = vmatpush1.msra.mxu0 0.0
    %5050 = vmatprep.subr.mxu0 0.0
    %5051 = vmatpush1.msra.mxu0 0.0
    %5052 = vmatprep.subr.mxu0 0.0
    %5053 = vmatpush1.msra.mxu0 0.0
    %5054 = vmatprep.subr.mxu0 0.0
    %5055 = vmatpush1.msra.mxu0 0.0
    %5056 = vmatprep.mubr.f32.mxu0 0.0
    %5057 = vmatmul.mubr.f32.gmra.mrb[0].mxu0 %v4990
    %v5058 = vpop.f32.mrb[0].mxu0
    %v5059 = vadd.f32 %v3285, %v5058
    %v5060 = vpop.f32.mrb[0].mxu0
    %5061 = vdwg.mxu0
    %v5062 = vxor.u32 %v5059, 2147483648
    %v5063 = vmul.f32 %v5062, 1.442695
    %v5064 = vpow.pop %v5063
    %v5065 = vadd.f32 %v5064, 1.0
    %v5066 = vrcp.pop %v5065
    %v5067 = vmul.f32 1.0, %v5066
    %v5068 = vtanh.pop %v5059
    %v5069 = vmul.f32 %v5067, %v4231
    %5071 = vrot.lane.b32.xlu0 %v5068, 64
    %v5072 = vpop.permute.xlu0 %5071
    %v5074 = vmul.f32 %v5067, %v5072
    %5076 = vrot.lane.b32.xlu0 %v5074, 32
    %v5077 = vpop.permute.xlu0 %5076
    %v5079 = vadd.f32 %v5069, %v5077
    %v5080 = vtanh.pop %v5079
    %5082 = vrot.lane.b32.xlu0 %v5080, 64
    %v5083 = vpop.permute.xlu0 %5082
    %v5085 = vmul.f32 %v5067, %v5083
    %5087 = vrot.lane.b32.xlu0 %v5085, 32
    %v5088 = vpop.permute.xlu0 %5087
    %5090 = vrot.lane.b32.xlu0 %v4875, 32
    %v5091 = vpop.permute.xlu0 %5090
    %v5093 = vsel %vm197, %v5088, %v5091
    %v5095 = vsel %vm205, %v5093, 0
    %5097 = vmatprep.subr.mxu0 0.0
    %5098 = vmatpush1.msra.mxu0 %v2701
    %5099 = vmatprep.subr.mxu0 0.0
    %5100 = vmatpush1.msra.mxu0 %v2702
    %5101 = vmatprep.subr.mxu0 0.0
    %5102 = vmatpush1.msra.mxu0 %v2703
    %5103 = vmatprep.subr.mxu0 0.0
    %5104 = vmatpush1.msra.mxu0 %v2704
    %5105 = vmatprep.subr.mxu0 0.0
    %5106 = vmatpush1.msra.mxu0 %v2705
    %5107 = vmatprep.subr.mxu0 0.0
    %5108 = vmatpush1.msra.mxu0 %v2706
    %5109 = vmatprep.subr.mxu0 0.0
    %5110 = vmatpush1.msra.mxu0 %v2707
    %5111 = vmatprep.subr.mxu0 0.0
    %5112 = vmatpush1.msra.mxu0 %v2708
    %5113 = vmatprep.subr.mxu0 0.0
    %5114 = vmatpush1.msra.mxu0 0.0
    %5115 = vmatprep.subr.mxu0 0.0
    %5116 = vmatpush1.msra.mxu0 0.0
    %5117 = vmatprep.subr.mxu0 0.0
    %5118 = vmatpush1.msra.mxu0 0.0
    %5119 = vmatprep.subr.mxu0 0.0
    %5120 = vmatpush1.msra.mxu0 0.0
    %5121 = vmatprep.subr.mxu0 0.0
    %5122 = vmatpush1.msra.mxu0 0.0
    %5123 = vmatprep.subr.mxu0 0.0
    %5124 = vmatpush1.msra.mxu0 0.0
    %5125 = vmatprep.subr.mxu0 0.0
    %5126 = vmatpush1.msra.mxu0 0.0
    %5127 = vmatprep.subr.mxu0 0.0
    %5128 = vmatpush1.msra.mxu0 0.0
    %5129 = vmatprep.subr.mxu0 0.0
    %5130 = vmatpush1.msra.mxu0 0.0
    %5131 = vmatprep.subr.mxu0 0.0
    %5132 = vmatpush1.msra.mxu0 0.0
    %5133 = vmatprep.subr.mxu0 0.0
    %5134 = vmatpush1.msra.mxu0 0.0
    %5135 = vmatprep.subr.mxu0 0.0
    %5136 = vmatpush1.msra.mxu0 0.0
    %5137 = vmatprep.subr.mxu0 0.0
    %5138 = vmatpush1.msra.mxu0 0.0
    %5139 = vmatprep.subr.mxu0 0.0
    %5140 = vmatpush1.msra.mxu0 0.0
    %5141 = vmatprep.subr.mxu0 0.0
    %5142 = vmatpush1.msra.mxu0 0.0
    %5143 = vmatprep.subr.mxu0 0.0
    %5144 = vmatpush1.msra.mxu0 0.0
    %5145 = vmatprep.subr.mxu0 0.0
    %5146 = vmatpush1.msra.mxu0 0.0
    %5147 = vmatprep.subr.mxu0 0.0
    %5148 = vmatpush1.msra.mxu0 0.0
    %5149 = vmatprep.subr.mxu0 0.0
    %5150 = vmatpush1.msra.mxu0 0.0
    %5151 = vmatprep.subr.mxu0 0.0
    %5152 = vmatpush1.msra.mxu0 0.0
    %5153 = vmatprep.subr.mxu0 0.0
    %5154 = vmatpush1.msra.mxu0 0.0
    %5155 = vmatprep.subr.mxu0 0.0
    %5156 = vmatpush1.msra.mxu0 0.0
    %5157 = vmatprep.subr.mxu0 0.0
    %5158 = vmatpush1.msra.mxu0 0.0
    %5159 = vmatprep.subr.mxu0 0.0
    %5160 = vmatpush1.msra.mxu0 0.0
    %5161 = vmatprep.mubr.f32.mxu0 0.0
    %5162 = vmatmul.mubr.f32.gmra.mrb[0].mxu0 %v5095
    %v5163 = vpop.f32.mrb[0].mxu0
    %v5164 = vadd.f32 %v3396, %v5163
    %v5165 = vpop.f32.mrb[0].mxu0
    %5166 = vdwg.mxu0
    %s5167 = scalar_lea.vmem %s13, 24
    %5168 = vst.msk [vmem:[%s5167] sm:$0xff] %vm87, %v5164
    %s5169 = sld [smem:[#allocation3 + $0x3]]
    %s5170 = scalar_lea.vmem %s2, 24
    %v5171 = vld [vmem:[%s5170] sm:$0xff]
    %v5172 = vstv %s5169
    %v5173 = vmul.f32 %v5172, %v5171
    %s5174 = ssub.f32 1.0, %s5169
    %v5175 = vstv %s5174
    %v5176 = vmul.f32 %v5175, %v5164
    %v5177 = vadd.f32 %v5173, %v5176
    %v5178 = vcombine.high %v5085, %v5085
    %v5180 = vunpack.c.l.s4 1966171168
    %v5181 = vunpack.c.0.s8 %v5180
    %v5182 = vlaneseq
    %v5183 = vshrl.u32 %v5182, 7
    %v5184 = vsub.s32 %v5181, %v5183
    %v5185 = vrot.slane %v5085, %v5184
    %v5187 = vunpack.c.l.s4 1966171168
    %v5188 = vunpack.c.0.s8 %v5187
    %v5189 = vlaneseq
    %v5190 = vshrl.u32 %v5189, 7
    %v5191 = vsub.s32 %v5188, %v5190
    %v5192 = vrot.slane %v5178, %v5191
    %v5193 = vcombine.high %v5185, %v5185
    %v5194 = vcombine.high %v5192, %v5192
    %v5196 = vunpack.c.l.s4 1966171168
    %v5197 = vunpack.c.0.s8 %v5196
    %v5198 = vlaneseq
    %v5199 = vshrl.u32 %v5198, 7
    %v5200 = vsub.s32 %v5197, %v5199
    %v5201 = vrot.slane %v5185, %v5200
    %v5203 = vunpack.c.l.s4 1966171168
    %v5204 = vunpack.c.0.s8 %v5203
    %v5205 = vlaneseq
    %v5206 = vshrl.u32 %v5205, 7
    %v5207 = vsub.s32 %v5204, %v5206
    %v5208 = vrot.slane %v5192, %v5207
    %v5210 = vunpack.c.l.s4 1966171168
    %v5211 = vunpack.c.0.s8 %v5210
    %v5212 = vlaneseq
    %v5213 = vshrl.u32 %v5212, 7
    %v5214 = vsub.s32 %v5211, %v5213
    %v5215 = vrot.slane %v5193, %v5214
    %v5217 = vunpack.c.l.s4 1966171168
    %v5218 = vunpack.c.0.s8 %v5217
    %v5219 = vlaneseq
    %v5220 = vshrl.u32 %v5219, 7
    %v5221 = vsub.s32 %v5218, %v5220
    %v5222 = vrot.slane %v5194, %v5221
    %v5223 = vcombine.high %v5201, %v5201
    %v5224 = vcombine.high %v5208, %v5208
    %v5225 = vcombine.high %v5215, %v5215
    %v5226 = vcombine.high %v5222, %v5222
    %v5227 = vlaneseq
    %v5228 = vshrl.u32 %v5227, 7
    %v5229 = vsub.s32 0, %v5228
    %v5230 = vrot.slane %v5201, %v5229
    %v5231 = vlaneseq
    %v5232 = vshrl.u32 %v5231, 7
    %v5233 = vsub.s32 0, %v5232
    %v5234 = vrot.slane %v5215, %v5233
    %v5235 = vlaneseq
    %v5236 = vshrl.u32 %v5235, 7
    %v5237 = vsub.s32 0, %v5236
    %v5238 = vrot.slane %v5223, %v5237
    %v5239 = vlaneseq
    %v5240 = vshrl.u32 %v5239, 7
    %v5241 = vsub.s32 0, %v5240
    %v5242 = vrot.slane %v5225, %v5241
    %v5243 = vlaneseq
    %v5244 = vshrl.u32 %v5243, 7
    %v5245 = vsub.s32 0, %v5244
    %v5246 = vrot.slane %v5208, %v5245
    %v5247 = vlaneseq
    %v5248 = vshrl.u32 %v5247, 7
    %v5249 = vsub.s32 0, %v5248
    %v5250 = vrot.slane %v5222, %v5249
    %v5251 = vlaneseq
    %v5252 = vshrl.u32 %v5251, 7
    %v5253 = vsub.s32 0, %v5252
    %v5254 = vrot.slane %v5224, %v5253
    %v5255 = vlaneseq
    %v5256 = vshrl.u32 %v5255, 7
    %v5257 = vsub.s32 0, %v5256
    %v5258 = vrot.slane %v5226, %v5257
    %5259 = vrot.lane.b32.xlu0 %v5230, 32
    %v5260 = vpop.permute.xlu0 %5259
    %5261 = vrot.lane.b32.xlu0 %v5234, 32
    %v5262 = vpop.permute.xlu0 %5261
    %5263 = vrot.lane.b32.xlu0 %v5238, 32
    %v5264 = vpop.permute.xlu0 %5263
    %5265 = vrot.lane.b32.xlu0 %v5242, 32
    %v5266 = vpop.permute.xlu0 %5265
    %5267 = vrot.lane.b32.xlu0 %v5246, 32
    %v5268 = vpop.permute.xlu0 %5267
    %5269 = vrot.lane.b32.xlu0 %v5250, 32
    %v5270 = vpop.permute.xlu0 %5269
    %5271 = vrot.lane.b32.xlu0 %v5254, 32
    %v5272 = vpop.permute.xlu0 %5271
    %5273 = vrot.lane.b32.xlu0 %v5258, 32
    %v5274 = vpop.permute.xlu0 %5273
    %v5283 = vmul.f32 %v2674, %v5260
    %v5284 = vmul.f32 %v2675, %v5262
    %v5285 = vmul.f32 %v2676, %v5264
    %v5286 = vmul.f32 %v2677, %v5266
    %v5287 = vmul.f32 %v2678, %v5268
    %v5288 = vmul.f32 %v2679, %v5270
    %v5289 = vmul.f32 %v2680, %v5272
    %v5290 = vmul.f32 %v2681, %v5274
    %v5291 = vsel %vm197, %v5283, 0.0
    %5292 = vadd.xlane.f32.xlu0 %v5291
    %v5293 = vpop.xlane.xlu0 %5292
    %v5294 = vsel %vm197, %v5284, 0.0
    %5295 = vadd.xlane.f32.xlu0 %v5294
    %v5296 = vpop.xlane.xlu0 %5295
    %v5297 = vsel %vm197, %v5285, 0.0
    %5298 = vadd.xlane.f32.xlu0 %v5297
    %v5299 = vpop.xlane.xlu0 %5298
    %v5300 = vsel %vm197, %v5286, 0.0
    %5301 = vadd.xlane.f32.xlu0 %v5300
    %v5302 = vpop.xlane.xlu0 %5301
    %v5303 = vsel %vm197, %v5287, 0.0
    %5304 = vadd.xlane.f32.xlu0 %v5303
    %v5305 = vpop.xlane.xlu0 %5304
    %v5306 = vsel %vm197, %v5288, 0.0
    %5307 = vadd.xlane.f32.xlu0 %v5306
    %v5308 = vpop.xlane.xlu0 %5307
    %v5309 = vsel %vm197, %v5289, 0.0
    %5310 = vadd.xlane.f32.xlu0 %v5309
    %v5311 = vpop.xlane.xlu0 %5310
    %v5312 = vsel %vm197, %v5290, 0.0
    %5313 = vadd.xlane.f32.xlu0 %v5312
    %v5314 = vpop.xlane.xlu0 %5313
    %v5323 = vlaneseq
    %v5324 = vshrl.u32 %v5323, 7
    %v5325 = vsub.s32 %v2752, %v5324
    %v5326 = vrot.slane %v5293, %v5325
    %v5327 = vlaneseq
    %v5328 = vshrl.u32 %v5327, 7
    %v5329 = vsub.s32 %v2752, %v5328
    %v5330 = vrot.slane %v5296, %v5329
    %v5331 = vlaneseq
    %v5332 = vshrl.u32 %v5331, 7
    %v5333 = vsub.s32 %v2752, %v5332
    %v5334 = vrot.slane %v5299, %v5333
    %v5335 = vlaneseq
    %v5336 = vshrl.u32 %v5335, 7
    %v5337 = vsub.s32 %v2752, %v5336
    %v5338 = vrot.slane %v5302, %v5337
    %v5339 = vlaneseq
    %v5340 = vshrl.u32 %v5339, 7
    %v5341 = vsub.s32 %v2752, %v5340
    %v5342 = vrot.slane %v5305, %v5341
    %v5343 = vlaneseq
    %v5344 = vshrl.u32 %v5343, 7
    %v5345 = vsub.s32 %v2752, %v5344
    %v5346 = vrot.slane %v5308, %v5345
    %v5347 = vlaneseq
    %v5348 = vshrl.u32 %v5347, 7
    %v5349 = vsub.s32 %v2752, %v5348
    %v5350 = vrot.slane %v5311, %v5349
    %v5351 = vlaneseq
    %v5352 = vshrl.u32 %v5351, 7
    %v5353 = vsub.s32 %v2752, %v5352
    %v5354 = vrot.slane %v5314, %v5353
    %v5355 = vsel %vm2785, %v5330, %v5326
    %v5356 = vsel %vm2787, %v5334, %v5355
    %v5357 = vsel %vm2789, %v5338, %v5356
    %v5358 = vsel %vm2791, %v5342, %v5357
    %v5359 = vsel %vm2793, %v5346, %v5358
    %v5360 = vsel %vm2795, %v5350, %v5359
    %v5361 = vsel %vm2797, %v5354, %v5360
    %v5363 = vsel %vm87, %v5361, -inf
    %5364 = vmax.xlane.f32.xlu0 %v5363
    %v5365 = vpop.xlane.xlu0 %5364
    %v5367 = vlaneseq
    %v5368 = vshrl.u32 %v5367, 7
    %v5369 = vsub.s32 0, %v5368
    %v5370 = vrot.slane %v5365, %v5369
    %v5371 = vlaneseq
    %v5372 = vshrl.u32 %v5371, 7
    %v5373 = vsub.s32 1, %v5372
    %v5374 = vrot.slane %v5365, %v5373
    %v5375 = vlaneseq
    %v5376 = vshrl.u32 %v5375, 7
    %v5377 = vsub.s32 2, %v5376
    %v5378 = vrot.slane %v5365, %v5377
    %v5379 = vlaneseq
    %v5380 = vshrl.u32 %v5379, 7
    %v5381 = vsub.s32 3, %v5380
    %v5382 = vrot.slane %v5365, %v5381
    %v5383 = vlaneseq
    %v5384 = vshrl.u32 %v5383, 7
    %v5385 = vsub.s32 4, %v5384
    %v5386 = vrot.slane %v5365, %v5385
    %v5387 = vlaneseq
    %v5388 = vshrl.u32 %v5387, 7
    %v5389 = vsub.s32 5, %v5388
    %v5390 = vrot.slane %v5365, %v5389
    %v5391 = vlaneseq
    %v5392 = vshrl.u32 %v5391, 7
    %v5393 = vsub.s32 6, %v5392
    %v5394 = vrot.slane %v5365, %v5393
    %v5395 = vlaneseq
    %v5396 = vshrl.u32 %v5395, 7
    %v5397 = vsub.s32 7, %v5396
    %v5398 = vrot.slane %v5365, %v5397
    %v5407 = vsub.f32 %v5293, %v5370
    %v5408 = vsub.f32 %v5296, %v5374
    %v5409 = vsub.f32 %v5299, %v5378
    %v5410 = vsub.f32 %v5302, %v5382
    %v5411 = vsub.f32 %v5305, %v5386
    %v5412 = vsub.f32 %v5308, %v5390
    %v5413 = vsub.f32 %v5311, %v5394
    %v5414 = vsub.f32 %v5314, %v5398
    %v5415 = vmul.f32 %v5407, 1.442695
    %v5416 = vpow.pop %v5415
    %v5417 = vmul.f32 %v5408, 1.442695
    %v5418 = vpow.pop %v5417
    %v5419 = vmul.f32 %v5409, 1.442695
    %v5420 = vpow.pop %v5419
    %v5421 = vmul.f32 %v5410, 1.442695
    %v5422 = vpow.pop %v5421
    %v5423 = vmul.f32 %v5411, 1.442695
    %v5424 = vpow.pop %v5423
    %v5425 = vmul.f32 %v5412, 1.442695
    %v5426 = vpow.pop %v5425
    %v5427 = vmul.f32 %v5413, 1.442695
    %v5428 = vpow.pop %v5427
    %v5429 = vmul.f32 %v5414, 1.442695
    %v5430 = vpow.pop %v5429
    %5439 = vset.pattern.permute.xlu0 0
    %5440 = vperm.xlu0 %5439, %v5416
    %v5441 = vpop.permute.xlu0 %5440
    %5442 = vset.pattern.permute.xlu0 0
    %5443 = vperm.xlu0 %5442, %v5418
    %v5444 = vpop.permute.xlu0 %5443
    %5445 = vset.pattern.permute.xlu0 0
    %5446 = vperm.xlu0 %5445, %v5420
    %v5447 = vpop.permute.xlu0 %5446
    %5448 = vset.pattern.permute.xlu0 0
    %5449 = vperm.xlu0 %5448, %v5422
    %v5450 = vpop.permute.xlu0 %5449
    %5451 = vset.pattern.permute.xlu0 0
    %5452 = vperm.xlu0 %5451, %v5424
    %v5453 = vpop.permute.xlu0 %5452
    %5454 = vset.pattern.permute.xlu0 0
    %5455 = vperm.xlu0 %5454, %v5426
    %v5456 = vpop.permute.xlu0 %5455
    %5457 = vset.pattern.permute.xlu0 0
    %5458 = vperm.xlu0 %5457, %v5428
    %v5459 = vpop.permute.xlu0 %5458
    %5460 = vset.pattern.permute.xlu0 0
    %5461 = vperm.xlu0 %5460, %v5430
    %v5462 = vpop.permute.xlu0 %5461
    %v5463 = vlaneseq
    %v5464 = vshrl.u32 %v5463, 7
    %v5465 = vsub.s32 %v2752, %v5464
    %v5466 = vrot.slane %v5441, %v5465
    %v5467 = vlaneseq
    %v5468 = vshrl.u32 %v5467, 7
    %v5469 = vsub.s32 %v2752, %v5468
    %v5470 = vrot.slane %v5444, %v5469
    %v5471 = vlaneseq
    %v5472 = vshrl.u32 %v5471, 7
    %v5473 = vsub.s32 %v2752, %v5472
    %v5474 = vrot.slane %v5447, %v5473
    %v5475 = vlaneseq
    %v5476 = vshrl.u32 %v5475, 7
    %v5477 = vsub.s32 %v2752, %v5476
    %v5478 = vrot.slane %v5450, %v5477
    %v5479 = vlaneseq
    %v5480 = vshrl.u32 %v5479, 7
    %v5481 = vsub.s32 %v2752, %v5480
    %v5482 = vrot.slane %v5453, %v5481
    %v5483 = vlaneseq
    %v5484 = vshrl.u32 %v5483, 7
    %v5485 = vsub.s32 %v2752, %v5484
    %v5486 = vrot.slane %v5456, %v5485
    %v5487 = vlaneseq
    %v5488 = vshrl.u32 %v5487, 7
    %v5489 = vsub.s32 %v2752, %v5488
    %v5490 = vrot.slane %v5459, %v5489
    %v5491 = vlaneseq
    %v5492 = vshrl.u32 %v5491, 7
    %v5493 = vsub.s32 %v2752, %v5492
    %v5494 = vrot.slane %v5462, %v5493
    %v5495 = vsel %vm2785, %v5470, %v5466
    %v5496 = vsel %vm2787, %v5474, %v5495
    %v5497 = vsel %vm2789, %v5478, %v5496
    %v5498 = vsel %vm2791, %v5482, %v5497
    %v5499 = vsel %vm2793, %v5486, %v5498
    %v5500 = vsel %vm2795, %v5490, %v5499
    %v5501 = vsel %vm2797, %v5494, %v5500
    %v5503 = vsel %vm87, %v5501, 0.0
    %5504 = vadd.xlane.f32.xlu0 %v5503
    %v5505 = vpop.xlane.xlu0 %5504
    %v5507 = vlaneseq
    %v5508 = vshrl.u32 %v5507, 7
    %v5509 = vsub.s32 0, %v5508
    %v5510 = vrot.slane %v5505, %v5509
    %v5511 = vlaneseq
    %v5512 = vshrl.u32 %v5511, 7
    %v5513 = vsub.s32 1, %v5512
    %v5514 = vrot.slane %v5505, %v5513
    %v5515 = vlaneseq
    %v5516 = vshrl.u32 %v5515, 7
    %v5517 = vsub.s32 2, %v5516
    %v5518 = vrot.slane %v5505, %v5517
    %v5519 = vlaneseq
    %v5520 = vshrl.u32 %v5519, 7
    %v5521 = vsub.s32 3, %v5520
    %v5522 = vrot.slane %v5505, %v5521
    %v5523 = vlaneseq
    %v5524 = vshrl.u32 %v5523, 7
    %v5525 = vsub.s32 4, %v5524
    %v5526 = vrot.slane %v5505, %v5525
    %v5527 = vlaneseq
    %v5528 = vshrl.u32 %v5527, 7
    %v5529 = vsub.s32 5, %v5528
    %v5530 = vrot.slane %v5505, %v5529
    %v5531 = vlaneseq
    %v5532 = vshrl.u32 %v5531, 7
    %v5533 = vsub.s32 6, %v5532
    %v5534 = vrot.slane %v5505, %v5533
    %v5535 = vlaneseq
    %v5536 = vshrl.u32 %v5535, 7
    %v5537 = vsub.s32 7, %v5536
    %v5538 = vrot.slane %v5505, %v5537
    %v5547 = vrcp.pop %v5510
    %v5548 = vmul.f32 %v5416, %v5547
    %v5549 = vrcp.pop %v5514
    %v5550 = vmul.f32 %v5418, %v5549
    %v5551 = vrcp.pop %v5518
    %v5552 = vmul.f32 %v5420, %v5551
    %v5553 = vrcp.pop %v5522
    %v5554 = vmul.f32 %v5422, %v5553
    %v5555 = vrcp.pop %v5526
    %v5556 = vmul.f32 %v5424, %v5555
    %v5557 = vrcp.pop %v5530
    %v5558 = vmul.f32 %v5426, %v5557
    %v5559 = vrcp.pop %v5534
    %v5560 = vmul.f32 %v5428, %v5559
    %v5561 = vrcp.pop %v5538
    %v5562 = vmul.f32 %v5430, %v5561
    %5564 = vset.pattern.permute.xlu0 0
    %5565 = vperm.xlu0 %5564, %v5548
    %v5566 = vpop.permute.xlu0 %5565
    %5569 = vset.pattern.permute.xlu0 0
    %5570 = vperm.xlu0 %5569, %v5550
    %v5571 = vpop.permute.xlu0 %5570
    %5574 = vset.pattern.permute.xlu0 0
    %5575 = vperm.xlu0 %5574, %v5552
    %v5576 = vpop.permute.xlu0 %5575
    %5579 = vset.pattern.permute.xlu0 0
    %5580 = vperm.xlu0 %5579, %v5554
    %v5581 = vpop.permute.xlu0 %5580
    %5584 = vset.pattern.permute.xlu0 0
    %5585 = vperm.xlu0 %5584, %v5556
    %v5586 = vpop.permute.xlu0 %5585
    %5589 = vset.pattern.permute.xlu0 0
    %5590 = vperm.xlu0 %5589, %v5558
    %v5591 = vpop.permute.xlu0 %5590
    %5594 = vset.pattern.permute.xlu0 0
    %5595 = vperm.xlu0 %5594, %v5560
    %v5596 = vpop.permute.xlu0 %5595
    %5599 = vset.pattern.permute.xlu0 0
    %5600 = vperm.xlu0 %5599, %v5562
    %v5601 = vpop.permute.xlu0 %5600
    %v5603 = vmul.f32 %v5566, %v2674
    %v5604 = vmul.f32 %v5571, %v2675
    %v5605 = vmul.f32 %v5576, %v2676
    %v5606 = vmul.f32 %v5581, %v2677
    %v5607 = vmul.f32 %v5586, %v2678
    %v5608 = vmul.f32 %v5591, %v2679
    %v5609 = vmul.f32 %v5596, %v2680
    %v5610 = vmul.f32 %v5601, %v2681
    %v5611 = vsel %vm197, %v5603, 0.0
    %v5612 = vrot.slane %v5611, 4
    %v5613 = vadd.f32 %v5611, %v5612
    %v5614 = vrot.slane %v5613, 2
    %v5615 = vadd.f32 %v5613, %v5614
    %v5616 = vrot.slane %v5615, 1
    %v5617 = vadd.f32 %v5615, %v5616
    %v5618 = vsel %vm197, %v5604, 0.0
    %v5619 = vrot.slane %v5618, 4
    %v5620 = vadd.f32 %v5618, %v5619
    %v5621 = vrot.slane %v5620, 2
    %v5622 = vadd.f32 %v5620, %v5621
    %v5623 = vrot.slane %v5622, 1
    %v5624 = vadd.f32 %v5622, %v5623
    %v5625 = vsel %vm197, %v5605, 0.0
    %v5626 = vrot.slane %v5625, 4
    %v5627 = vadd.f32 %v5625, %v5626
    %v5628 = vrot.slane %v5627, 2
    %v5629 = vadd.f32 %v5627, %v5628
    %v5630 = vrot.slane %v5629, 1
    %v5631 = vadd.f32 %v5629, %v5630
    %v5632 = vsel %vm197, %v5606, 0.0
    %v5633 = vrot.slane %v5632, 4
    %v5634 = vadd.f32 %v5632, %v5633
    %v5635 = vrot.slane %v5634, 2
    %v5636 = vadd.f32 %v5634, %v5635
    %v5637 = vrot.slane %v5636, 1
    %v5638 = vadd.f32 %v5636, %v5637
    %v5639 = vsel %vm197, %v5607, 0.0
    %v5640 = vrot.slane %v5639, 4
    %v5641 = vadd.f32 %v5639, %v5640
    %v5642 = vrot.slane %v5641, 2
    %v5643 = vadd.f32 %v5641, %v5642
    %v5644 = vrot.slane %v5643, 1
    %v5645 = vadd.f32 %v5643, %v5644
    %v5646 = vsel %vm197, %v5608, 0.0
    %v5647 = vrot.slane %v5646, 4
    %v5648 = vadd.f32 %v5646, %v5647
    %v5649 = vrot.slane %v5648, 2
    %v5650 = vadd.f32 %v5648, %v5649
    %v5651 = vrot.slane %v5650, 1
    %v5652 = vadd.f32 %v5650, %v5651
    %v5653 = vsel %vm197, %v5609, 0.0
    %v5654 = vrot.slane %v5653, 4
    %v5655 = vadd.f32 %v5653, %v5654
    %v5656 = vrot.slane %v5655, 2
    %v5657 = vadd.f32 %v5655, %v5656
    %v5658 = vrot.slane %v5657, 1
    %v5659 = vadd.f32 %v5657, %v5658
    %v5660 = vsel %vm197, %v5610, 0.0
    %v5661 = vrot.slane %v5660, 4
    %v5662 = vadd.f32 %v5660, %v5661
    %v5663 = vrot.slane %v5662, 2
    %v5664 = vadd.f32 %v5662, %v5663
    %v5665 = vrot.slane %v5664, 1
    %v5666 = vadd.f32 %v5664, %v5665
    %v5667 = vlaneseq
    %v5668 = vshrl.u32 %v5667, 7
    %v5669 = vsub.s32 %v2752, %v5668
    %v5670 = vrot.slane %v5566, %v5669
    %v5671 = vlaneseq
    %v5672 = vshrl.u32 %v5671, 7
    %v5673 = vsub.s32 %v2752, %v5672
    %v5674 = vrot.slane %v5571, %v5673
    %v5675 = vlaneseq
    %v5676 = vshrl.u32 %v5675, 7
    %v5677 = vsub.s32 %v2752, %v5676
    %v5678 = vrot.slane %v5576, %v5677
    %v5679 = vlaneseq
    %v5680 = vshrl.u32 %v5679, 7
    %v5681 = vsub.s32 %v2752, %v5680
    %v5682 = vrot.slane %v5581, %v5681
    %v5683 = vlaneseq
    %v5684 = vshrl.u32 %v5683, 7
    %v5685 = vsub.s32 %v2752, %v5684
    %v5686 = vrot.slane %v5586, %v5685
    %v5687 = vlaneseq
    %v5688 = vshrl.u32 %v5687, 7
    %v5689 = vsub.s32 %v2752, %v5688
    %v5690 = vrot.slane %v5591, %v5689
    %v5691 = vlaneseq
    %v5692 = vshrl.u32 %v5691, 7
    %v5693 = vsub.s32 %v2752, %v5692
    %v5694 = vrot.slane %v5596, %v5693
    %v5695 = vlaneseq
    %v5696 = vshrl.u32 %v5695, 7
    %v5697 = vsub.s32 %v2752, %v5696
    %v5698 = vrot.slane %v5601, %v5697
    %v5699 = vsel %vm2785, %v5674, %v5670
    %v5700 = vsel %vm2787, %v5678, %v5699
    %v5701 = vsel %vm2789, %v5682, %v5700
    %v5702 = vsel %vm2791, %v5686, %v5701
    %v5703 = vsel %vm2793, %v5690, %v5702
    %v5704 = vsel %vm2795, %v5694, %v5703
    %v5705 = vsel %vm2797, %v5698, %v5704
    %s5707 = scalar_lea.vmem %s14, 32
    %5708 = vst.msk [vmem:[%s5707] sm:$0xff] %vm87, %v5705
    %v5717 = vsel %vm2785, %v5624, %v5617
    %v5718 = vsel %vm2787, %v5631, %v5717
    %v5719 = vsel %vm2789, %v5638, %v5718
    %v5720 = vsel %vm2791, %v5645, %v5719
    %v5721 = vsel %vm2793, %v5652, %v5720
    %v5722 = vsel %vm2795, %v5659, %v5721
    %v5723 = vsel %vm2797, %v5666, %v5722
    %5724 = vrot.lane.b32.xlu0 %v5723, 8
    %v5725 = vpop.permute.xlu0 %5724
    %5727 = vrot.lane.b32.xlu0 %v4980, 72
    %v5728 = vpop.permute.xlu0 %5727
    %v5730 = vsel %vm87, %v5177, %v5725
    %v5731 = vsel %vm95, %v5730, %v5728
    %v5733 = vsel %vm3175, %v5731, 0
    %5735 = vmatprep.subr.mxu0 0.0
    %5736 = vmatpush1.msra.mxu0 %v2682
    %5737 = vmatprep.subr.mxu0 0.0
    %5738 = vmatpush1.msra.mxu0 %v2683
    %5739 = vmatprep.subr.mxu0 0.0
    %5740 = vmatpush1.msra.mxu0 %v2684
    %5741 = vmatprep.subr.mxu0 0.0
    %5742 = vmatpush1.msra.mxu0 %v2685
    %5743 = vmatprep.subr.mxu0 0.0
    %5744 = vmatpush1.msra.mxu0 %v2686
    %5745 = vmatprep.subr.mxu0 0.0
    %5746 = vmatpush1.msra.mxu0 %v2687
    %5747 = vmatprep.subr.mxu0 0.0
    %5748 = vmatpush1.msra.mxu0 %v2688
    %5749 = vmatprep.subr.mxu0 0.0
    %5750 = vmatpush1.msra.mxu0 %v2689
    %5751 = vmatprep.subr.mxu0 0.0
    %5752 = vmatpush1.msra.mxu0 %v2690
    %5753 = vmatprep.subr.mxu0 0.0
    %5754 = vmatpush1.msra.mxu0 0.0
    %5755 = vmatprep.subr.mxu0 0.0
    %5756 = vmatpush1.msra.mxu0 0.0
    %5757 = vmatprep.subr.mxu0 0.0
    %5758 = vmatpush1.msra.mxu0 0.0
    %5759 = vmatprep.subr.mxu0 0.0
    %5760 = vmatpush1.msra.mxu0 0.0
    %5761 = vmatprep.subr.mxu0 0.0
    %5762 = vmatpush1.msra.mxu0 0.0
    %5763 = vmatprep.subr.mxu0 0.0
    %5764 = vmatpush1.msra.mxu0 0.0
    %5765 = vmatprep.subr.mxu0 0.0
    %5766 = vmatpush1.msra.mxu0 0.0
    %5767 = vmatprep.subr.mxu0 0.0
    %5768 = vmatpush1.msra.mxu0 0.0
    %5769 = vmatprep.subr.mxu0 0.0
    %5770 = vmatpush1.msra.mxu0 0.0
    %5771 = vmatprep.subr.mxu0 0.0
    %5772 = vmatpush1.msra.mxu0 0.0
    %5773 = vmatprep.subr.mxu0 0.0
    %5774 = vmatpush1.msra.mxu0 0.0
    %5775 = vmatprep.subr.mxu0 0.0
    %5776 = vmatpush1.msra.mxu0 0.0
    %5777 = vmatprep.subr.mxu0 0.0
    %5778 = vmatpush1.msra.mxu0 0.0
    %5779 = vmatprep.subr.mxu0 0.0
    %5780 = vmatpush1.msra.mxu0 0.0
    %5781 = vmatprep.subr.mxu0 0.0
    %5782 = vmatpush1.msra.mxu0 0.0
    %5783 = vmatprep.subr.mxu0 0.0
    %5784 = vmatpush1.msra.mxu0 0.0
    %5785 = vmatprep.subr.mxu0 0.0
    %5786 = vmatpush1.msra.mxu0 0.0
    %5787 = vmatprep.subr.mxu0 0.0
    %5788 = vmatpush1.msra.mxu0 0.0
    %5789 = vmatprep.subr.mxu0 0.0
    %5790 = vmatpush1.msra.mxu0 0.0
    %5791 = vmatprep.subr.mxu0 0.0
    %5792 = vmatpush1.msra.mxu0 0.0
    %5793 = vmatprep.subr.mxu0 0.0
    %5794 = vmatpush1.msra.mxu0 0.0
    %5795 = vmatprep.subr.mxu0 0.0
    %5796 = vmatpush1.msra.mxu0 0.0
    %5797 = vmatprep.subr.mxu0 0.0
    %5798 = vmatpush1.msra.mxu0 0.0
    %5799 = vmatprep.mubr.f32.mxu0 0.0
    %5800 = vmatmul.mubr.f32.gmra.mrb[0].mxu0 %v5733
    %v5801 = vpop.f32.mrb[0].mxu0
    %v5802 = vadd.f32 %v3173, %v5801
    %v5803 = vpop.f32.mrb[0].mxu0
    %5804 = vdwg.mxu0
    %v5805 = vxor.u32 %v5802, 2147483648
    %v5806 = vmul.f32 %v5805, 1.442695
    %v5807 = vpow.pop %v5806
    %v5808 = vadd.f32 %v5807, 1.0
    %v5809 = vrcp.pop %v5808
    %v5810 = vmul.f32 1.0, %v5809
    %v5811 = vtanh.pop %v5802
    %v5812 = vmul.f32 %v5810, %v4974
    %5814 = vrot.lane.b32.xlu0 %v5811, 64
    %v5815 = vpop.permute.xlu0 %5814
    %v5817 = vmul.f32 %v5810, %v5815
    %5819 = vrot.lane.b32.xlu0 %v5817, 32
    %v5820 = vpop.permute.xlu0 %5819
    %v5822 = vadd.f32 %v5812, %v5820
    %v5823 = vtanh.pop %v5822
    %5825 = vrot.lane.b32.xlu0 %v5823, 64
    %v5826 = vpop.permute.xlu0 %5825
    %v5828 = vmul.f32 %v5810, %v5826
    %5830 = vrot.lane.b32.xlu0 %v5828, 32
    %v5831 = vpop.permute.xlu0 %5830
    %5833 = vrot.lane.b32.xlu0 %v5085, 64
    %v5834 = vpop.permute.xlu0 %5833
    %v5836 = vsel %vm197, %v5831, %v5834
    %v5838 = vsel %vm205, %v5836, 0
    %5840 = vmatprep.subr.mxu0 0.0
    %5841 = vmatpush1.msra.mxu0 %v2692
    %5842 = vmatprep.subr.mxu0 0.0
    %5843 = vmatpush1.msra.mxu0 %v2693
    %5844 = vmatprep.subr.mxu0 0.0
    %5845 = vmatpush1.msra.mxu0 %v2694
    %5846 = vmatprep.subr.mxu0 0.0
    %5847 = vmatpush1.msra.mxu0 %v2695
    %5848 = vmatprep.subr.mxu0 0.0
    %5849 = vmatpush1.msra.mxu0 %v2696
    %5850 = vmatprep.subr.mxu0 0.0
    %5851 = vmatpush1.msra.mxu0 %v2697
    %5852 = vmatprep.subr.mxu0 0.0
    %5853 = vmatpush1.msra.mxu0 %v2698
    %5854 = vmatprep.subr.mxu0 0.0
    %5855 = vmatpush1.msra.mxu0 %v2699
    %5856 = vmatprep.subr.mxu0 0.0
    %5857 = vmatpush1.msra.mxu0 0.0
    %5858 = vmatprep.subr.mxu0 0.0
    %5859 = vmatpush1.msra.mxu0 0.0
    %5860 = vmatprep.subr.mxu0 0.0
    %5861 = vmatpush1.msra.mxu0 0.0
    %5862 = vmatprep.subr.mxu0 0.0
    %5863 = vmatpush1.msra.mxu0 0.0
    %5864 = vmatprep.subr.mxu0 0.0
    %5865 = vmatpush1.msra.mxu0 0.0
    %5866 = vmatprep.subr.mxu0 0.0
    %5867 = vmatpush1.msra.mxu0 0.0
    %5868 = vmatprep.subr.mxu0 0.0
    %5869 = vmatpush1.msra.mxu0 0.0
    %5870 = vmatprep.subr.mxu0 0.0
    %5871 = vmatpush1.msra.mxu0 0.0
    %5872 = vmatprep.subr.mxu0 0.0
    %5873 = vmatpush1.msra.mxu0 0.0
    %5874 = vmatprep.subr.mxu0 0.0
    %5875 = vmatpush1.msra.mxu0 0.0
    %5876 = vmatprep.subr.mxu0 0.0
    %5877 = vmatpush1.msra.mxu0 0.0
    %5878 = vmatprep.subr.mxu0 0.0
    %5879 = vmatpush1.msra.mxu0 0.0
    %5880 = vmatprep.subr.mxu0 0.0
    %5881 = vmatpush1.msra.mxu0 0.0
    %5882 = vmatprep.subr.mxu0 0.0
    %5883 = vmatpush1.msra.mxu0 0.0
    %5884 = vmatprep.subr.mxu0 0.0
    %5885 = vmatpush1.msra.mxu0 0.0
    %5886 = vmatprep.subr.mxu0 0.0
    %5887 = vmatpush1.msra.mxu0 0.0
    %5888 = vmatprep.subr.mxu0 0.0
    %5889 = vmatpush1.msra.mxu0 0.0
    %5890 = vmatprep.subr.mxu0 0.0
    %5891 = vmatpush1.msra.mxu0 0.0
    %5892 = vmatprep.subr.mxu0 0.0
    %5893 = vmatpush1.msra.mxu0 0.0
    %5894 = vmatprep.subr.mxu0 0.0
    %5895 = vmatpush1.msra.mxu0 0.0
    %5896 = vmatprep.subr.mxu0 0.0
    %5897 = vmatpush1.msra.mxu0 0.0
    %5898 = vmatprep.subr.mxu0 0.0
    %5899 = vmatpush1.msra.mxu0 0.0
    %5900 = vmatprep.subr.mxu0 0.0
    %5901 = vmatpush1.msra.mxu0 0.0
    %5902 = vmatprep.subr.mxu0 0.0
    %5903 = vmatpush1.msra.mxu0 0.0
    %5904 = vmatprep.mubr.f32.mxu0 0.0
    %5905 = vmatmul.mubr.f32.gmra.mrb[0].mxu0 %v5838
    %v5906 = vpop.f32.mrb[0].mxu0
    %v5907 = vadd.f32 %v3285, %v5906
    %v5908 = vpop.f32.mrb[0].mxu0
    %5909 = vdwg.mxu0
    %v5910 = vxor.u32 %v5907, 2147483648
    %v5911 = vmul.f32 %v5910, 1.442695
    %v5912 = vpow.pop %v5911
    %v5913 = vadd.f32 %v5912, 1.0
    %v5914 = vrcp.pop %v5913
    %v5915 = vmul.f32 1.0, %v5914
    %v5916 = vtanh.pop %v5907
    %v5917 = vmul.f32 %v5915, %v5079
    %5919 = vrot.lane.b32.xlu0 %v5916, 64
    %v5920 = vpop.permute.xlu0 %5919
    %v5922 = vmul.f32 %v5915, %v5920
    %5924 = vrot.lane.b32.xlu0 %v5922, 32
    %v5925 = vpop.permute.xlu0 %5924
    %v5927 = vadd.f32 %v5917, %v5925
    %v5928 = vtanh.pop %v5927
    %5930 = vrot.lane.b32.xlu0 %v5928, 64
    %v5931 = vpop.permute.xlu0 %5930
    %v5933 = vmul.f32 %v5915, %v5931
    %5935 = vrot.lane.b32.xlu0 %v5933, 32
    %v5936 = vpop.permute.xlu0 %5935
    %5938 = vrot.lane.b32.xlu0 %v5723, 32
    %v5939 = vpop.permute.xlu0 %5938
    %v5941 = vsel %vm197, %v5936, %v5939
    %v5943 = vsel %vm205, %v5941, 0
    %5945 = vmatprep.subr.mxu0 0.0
    %5946 = vmatpush1.msra.mxu0 %v2701
    %5947 = vmatprep.subr.mxu0 0.0
    %5948 = vmatpush1.msra.mxu0 %v2702
    %5949 = vmatprep.subr.mxu0 0.0
    %5950 = vmatpush1.msra.mxu0 %v2703
    %5951 = vmatprep.subr.mxu0 0.0
    %5952 = vmatpush1.msra.mxu0 %v2704
    %5953 = vmatprep.subr.mxu0 0.0
    %5954 = vmatpush1.msra.mxu0 %v2705
    %5955 = vmatprep.subr.mxu0 0.0
    %5956 = vmatpush1.msra.mxu0 %v2706
    %5957 = vmatprep.subr.mxu0 0.0
    %5958 = vmatpush1.msra.mxu0 %v2707
    %5959 = vmatprep.subr.mxu0 0.0
    %5960 = vmatpush1.msra.mxu0 %v2708
    %5961 = vmatprep.subr.mxu0 0.0
    %5962 = vmatpush1.msra.mxu0 0.0
    %5963 = vmatprep.subr.mxu0 0.0
    %5964 = vmatpush1.msra.mxu0 0.0
    %5965 = vmatprep.subr.mxu0 0.0
    %5966 = vmatpush1.msra.mxu0 0.0
    %5967 = vmatprep.subr.mxu0 0.0
    %5968 = vmatpush1.msra.mxu0 0.0
    %5969 = vmatprep.subr.mxu0 0.0
    %5970 = vmatpush1.msra.mxu0 0.0
    %5971 = vmatprep.subr.mxu0 0.0
    %5972 = vmatpush1.msra.mxu0 0.0
    %5973 = vmatprep.subr.mxu0 0.0
    %5974 = vmatpush1.msra.mxu0 0.0
    %5975 = vmatprep.subr.mxu0 0.0
    %5976 = vmatpush1.msra.mxu0 0.0
    %5977 = vmatprep.subr.mxu0 0.0
    %5978 = vmatpush1.msra.mxu0 0.0
    %5979 = vmatprep.subr.mxu0 0.0
    %5980 = vmatpush1.msra.mxu0 0.0
    %5981 = vmatprep.subr.mxu0 0.0
    %5982 = vmatpush1.msra.mxu0 0.0
    %5983 = vmatprep.subr.mxu0 0.0
    %5984 = vmatpush1.msra.mxu0 0.0
    %5985 = vmatprep.subr.mxu0 0.0
    %5986 = vmatpush1.msra.mxu0 0.0
    %5987 = vmatprep.subr.mxu0 0.0
    %5988 = vmatpush1.msra.mxu0 0.0
    %5989 = vmatprep.subr.mxu0 0.0
    %5990 = vmatpush1.msra.mxu0 0.0
    %5991 = vmatprep.subr.mxu0 0.0
    %5992 = vmatpush1.msra.mxu0 0.0
    %5993 = vmatprep.subr.mxu0 0.0
    %5994 = vmatpush1.msra.mxu0 0.0
    %5995 = vmatprep.subr.mxu0 0.0
    %5996 = vmatpush1.msra.mxu0 0.0
    %5997 = vmatprep.subr.mxu0 0.0
    %5998 = vmatpush1.msra.mxu0 0.0
    %5999 = vmatprep.subr.mxu0 0.0
    %6000 = vmatpush1.msra.mxu0 0.0
    %6001 = vmatprep.subr.mxu0 0.0
    %6002 = vmatpush1.msra.mxu0 0.0
    %6003 = vmatprep.subr.mxu0 0.0
    %6004 = vmatpush1.msra.mxu0 0.0
    %6005 = vmatprep.subr.mxu0 0.0
    %6006 = vmatpush1.msra.mxu0 0.0
    %6007 = vmatprep.subr.mxu0 0.0
    %6008 = vmatpush1.msra.mxu0 0.0
    %6009 = vmatprep.mubr.f32.mxu0 0.0
    %6010 = vmatmul.mubr.f32.gmra.mrb[0].mxu0 %v5943
    %v6011 = vpop.f32.mrb[0].mxu0
    %v6012 = vadd.f32 %v3396, %v6011
    %v6013 = vpop.f32.mrb[0].mxu0
    %6014 = vdwg.mxu0
    %s6015 = scalar_lea.vmem %s13, 32
    %6016 = vst.msk [vmem:[%s6015] sm:$0xff] %vm87, %v6012
    %s6017 = sld [smem:[#allocation3 + $0x4]]
    %s6018 = scalar_lea.vmem %s2, 32
    %v6019 = vld [vmem:[%s6018] sm:$0xff]
    %v6020 = vstv %s6017
    %v6021 = vmul.f32 %v6020, %v6019
    %s6022 = ssub.f32 1.0, %s6017
    %v6023 = vstv %s6022
    %v6024 = vmul.f32 %v6023, %v6012
    %v6025 = vadd.f32 %v6021, %v6024
    %v6026 = vcombine.high %v5933, %v5933
    %v6028 = vunpack.c.l.s4 1966171168
    %v6029 = vunpack.c.0.s8 %v6028
    %v6030 = vlaneseq
    %v6031 = vshrl.u32 %v6030, 7
    %v6032 = vsub.s32 %v6029, %v6031
    %v6033 = vrot.slane %v5933, %v6032
    %v6035 = vunpack.c.l.s4 1966171168
    %v6036 = vunpack.c.0.s8 %v6035
    %v6037 = vlaneseq
    %v6038 = vshrl.u32 %v6037, 7
    %v6039 = vsub.s32 %v6036, %v6038
    %v6040 = vrot.slane %v6026, %v6039
    %v6041 = vcombine.high %v6033, %v6033
    %v6042 = vcombine.high %v6040, %v6040
    %v6044 = vunpack.c.l.s4 1966171168
    %v6045 = vunpack.c.0.s8 %v6044
    %v6046 = vlaneseq
    %v6047 = vshrl.u32 %v6046, 7
    %v6048 = vsub.s32 %v6045, %v6047
    %v6049 = vrot.slane %v6033, %v6048
    %v6051 = vunpack.c.l.s4 1966171168
    %v6052 = vunpack.c.0.s8 %v6051
    %v6053 = vlaneseq
    %v6054 = vshrl.u32 %v6053, 7
    %v6055 = vsub.s32 %v6052, %v6054
    %v6056 = vrot.slane %v6040, %v6055
    %v6058 = vunpack.c.l.s4 1966171168
    %v6059 = vunpack.c.0.s8 %v6058
    %v6060 = vlaneseq
    %v6061 = vshrl.u32 %v6060, 7
    %v6062 = vsub.s32 %v6059, %v6061
    %v6063 = vrot.slane %v6041, %v6062
    %v6065 = vunpack.c.l.s4 1966171168
    %v6066 = vunpack.c.0.s8 %v6065
    %v6067 = vlaneseq
    %v6068 = vshrl.u32 %v6067, 7
    %v6069 = vsub.s32 %v6066, %v6068
    %v6070 = vrot.slane %v6042, %v6069
    %v6071 = vcombine.high %v6049, %v6049
    %v6072 = vcombine.high %v6056, %v6056
    %v6073 = vcombine.high %v6063, %v6063
    %v6074 = vcombine.high %v6070, %v6070
    %v6075 = vlaneseq
    %v6076 = vshrl.u32 %v6075, 7
    %v6077 = vsub.s32 0, %v6076
    %v6078 = vrot.slane %v6049, %v6077
    %v6079 = vlaneseq
    %v6080 = vshrl.u32 %v6079, 7
    %v6081 = vsub.s32 0, %v6080
    %v6082 = vrot.slane %v6063, %v6081
    %v6083 = vlaneseq
    %v6084 = vshrl.u32 %v6083, 7
    %v6085 = vsub.s32 0, %v6084
    %v6086 = vrot.slane %v6071, %v6085
    %v6087 = vlaneseq
    %v6088 = vshrl.u32 %v6087, 7
    %v6089 = vsub.s32 0, %v6088
    %v6090 = vrot.slane %v6073, %v6089
    %v6091 = vlaneseq
    %v6092 = vshrl.u32 %v6091, 7
    %v6093 = vsub.s32 0, %v6092
    %v6094 = vrot.slane %v6056, %v6093
    %v6095 = vlaneseq
    %v6096 = vshrl.u32 %v6095, 7
    %v6097 = vsub.s32 0, %v6096
    %v6098 = vrot.slane %v6070, %v6097
    %v6099 = vlaneseq
    %v6100 = vshrl.u32 %v6099, 7
    %v6101 = vsub.s32 0, %v6100
    %v6102 = vrot.slane %v6072, %v6101
    %v6103 = vlaneseq
    %v6104 = vshrl.u32 %v6103, 7
    %v6105 = vsub.s32 0, %v6104
    %v6106 = vrot.slane %v6074, %v6105
    %6107 = vrot.lane.b32.xlu0 %v6078, 32
    %v6108 = vpop.permute.xlu0 %6107
    %6109 = vrot.lane.b32.xlu0 %v6082, 32
    %v6110 = vpop.permute.xlu0 %6109
    %6111 = vrot.lane.b32.xlu0 %v6086, 32
    %v6112 = vpop.permute.xlu0 %6111
    %6113 = vrot.lane.b32.xlu0 %v6090, 32
    %v6114 = vpop.permute.xlu0 %6113
    %6115 = vrot.lane.b32.xlu0 %v6094, 32
    %v6116 = vpop.permute.xlu0 %6115
    %6117 = vrot.lane.b32.xlu0 %v6098, 32
    %v6118 = vpop.permute.xlu0 %6117
    %6119 = vrot.lane.b32.xlu0 %v6102, 32
    %v6120 = vpop.permute.xlu0 %6119
    %6121 = vrot.lane.b32.xlu0 %v6106, 32
    %v6122 = vpop.permute.xlu0 %6121
    %v6131 = vmul.f32 %v2674, %v6108
    %v6132 = vmul.f32 %v2675, %v6110
    %v6133 = vmul.f32 %v2676, %v6112
    %v6134 = vmul.f32 %v2677, %v6114
    %v6135 = vmul.f32 %v2678, %v6116
    %v6136 = vmul.f32 %v2679, %v6118
    %v6137 = vmul.f32 %v2680, %v6120
    %v6138 = vmul.f32 %v2681, %v6122
    %v6139 = vsel %vm197, %v6131, 0.0
    %6140 = vadd.xlane.f32.xlu0 %v6139
    %v6141 = vpop.xlane.xlu0 %6140
    %v6142 = vsel %vm197, %v6132, 0.0
    %6143 = vadd.xlane.f32.xlu0 %v6142
    %v6144 = vpop.xlane.xlu0 %6143
    %v6145 = vsel %vm197, %v6133, 0.0
    %6146 = vadd.xlane.f32.xlu0 %v6145
    %v6147 = vpop.xlane.xlu0 %6146
    %v6148 = vsel %vm197, %v6134, 0.0
    %6149 = vadd.xlane.f32.xlu0 %v6148
    %v6150 = vpop.xlane.xlu0 %6149
    %v6151 = vsel %vm197, %v6135, 0.0
    %6152 = vadd.xlane.f32.xlu0 %v6151
    %v6153 = vpop.xlane.xlu0 %6152
    %v6154 = vsel %vm197, %v6136, 0.0
    %6155 = vadd.xlane.f32.xlu0 %v6154
    %v6156 = vpop.xlane.xlu0 %6155
    %v6157 = vsel %vm197, %v6137, 0.0
    %6158 = vadd.xlane.f32.xlu0 %v6157
    %v6159 = vpop.xlane.xlu0 %6158
    %v6160 = vsel %vm197, %v6138, 0.0
    %6161 = vadd.xlane.f32.xlu0 %v6160
    %v6162 = vpop.xlane.xlu0 %6161
    %v6171 = vlaneseq
    %v6172 = vshrl.u32 %v6171, 7
    %v6173 = vsub.s32 %v2752, %v6172
    %v6174 = vrot.slane %v6141, %v6173
    %v6175 = vlaneseq
    %v6176 = vshrl.u32 %v6175, 7
    %v6177 = vsub.s32 %v2752, %v6176
    %v6178 = vrot.slane %v6144, %v6177
    %v6179 = vlaneseq
    %v6180 = vshrl.u32 %v6179, 7
    %v6181 = vsub.s32 %v2752, %v6180
    %v6182 = vrot.slane %v6147, %v6181
    %v6183 = vlaneseq
    %v6184 = vshrl.u32 %v6183, 7
    %v6185 = vsub.s32 %v2752, %v6184
    %v6186 = vrot.slane %v6150, %v6185
    %v6187 = vlaneseq
    %v6188 = vshrl.u32 %v6187, 7
    %v6189 = vsub.s32 %v2752, %v6188
    %v6190 = vrot.slane %v6153, %v6189
    %v6191 = vlaneseq
    %v6192 = vshrl.u32 %v6191, 7
    %v6193 = vsub.s32 %v2752, %v6192
    %v6194 = vrot.slane %v6156, %v6193
    %v6195 = vlaneseq
    %v6196 = vshrl.u32 %v6195, 7
    %v6197 = vsub.s32 %v2752, %v6196
    %v6198 = vrot.slane %v6159, %v6197
    %v6199 = vlaneseq
    %v6200 = vshrl.u32 %v6199, 7
    %v6201 = vsub.s32 %v2752, %v6200
    %v6202 = vrot.slane %v6162, %v6201
    %v6203 = vsel %vm2785, %v6178, %v6174
    %v6204 = vsel %vm2787, %v6182, %v6203
    %v6205 = vsel %vm2789, %v6186, %v6204
    %v6206 = vsel %vm2791, %v6190, %v6205
    %v6207 = vsel %vm2793, %v6194, %v6206
    %v6208 = vsel %vm2795, %v6198, %v6207
    %v6209 = vsel %vm2797, %v6202, %v6208
    %v6211 = vsel %vm87, %v6209, -inf
    %6212 = vmax.xlane.f32.xlu0 %v6211
    %v6213 = vpop.xlane.xlu0 %6212
    %v6215 = vlaneseq
    %v6216 = vshrl.u32 %v6215, 7
    %v6217 = vsub.s32 0, %v6216
    %v6218 = vrot.slane %v6213, %v6217
    %v6219 = vlaneseq
    %v6220 = vshrl.u32 %v6219, 7
    %v6221 = vsub.s32 1, %v6220
    %v6222 = vrot.slane %v6213, %v6221
    %v6223 = vlaneseq
    %v6224 = vshrl.u32 %v6223, 7
    %v6225 = vsub.s32 2, %v6224
    %v6226 = vrot.slane %v6213, %v6225
    %v6227 = vlaneseq
    %v6228 = vshrl.u32 %v6227, 7
    %v6229 = vsub.s32 3, %v6228
    %v6230 = vrot.slane %v6213, %v6229
    %v6231 = vlaneseq
    %v6232 = vshrl.u32 %v6231, 7
    %v6233 = vsub.s32 4, %v6232
    %v6234 = vrot.slane %v6213, %v6233
    %v6235 = vlaneseq
    %v6236 = vshrl.u32 %v6235, 7
    %v6237 = vsub.s32 5, %v6236
    %v6238 = vrot.slane %v6213, %v6237
    %v6239 = vlaneseq
    %v6240 = vshrl.u32 %v6239, 7
    %v6241 = vsub.s32 6, %v6240
    %v6242 = vrot.slane %v6213, %v6241
    %v6243 = vlaneseq
    %v6244 = vshrl.u32 %v6243, 7
    %v6245 = vsub.s32 7, %v6244
    %v6246 = vrot.slane %v6213, %v6245
    %v6255 = vsub.f32 %v6141, %v6218
    %v6256 = vsub.f32 %v6144, %v6222
    %v6257 = vsub.f32 %v6147, %v6226
    %v6258 = vsub.f32 %v6150, %v6230
    %v6259 = vsub.f32 %v6153, %v6234
    %v6260 = vsub.f32 %v6156, %v6238
    %v6261 = vsub.f32 %v6159, %v6242
    %v6262 = vsub.f32 %v6162, %v6246
    %v6263 = vmul.f32 %v6255, 1.442695
    %v6264 = vpow.pop %v6263
    %v6265 = vmul.f32 %v6256, 1.442695
    %v6266 = vpow.pop %v6265
    %v6267 = vmul.f32 %v6257, 1.442695
    %v6268 = vpow.pop %v6267
    %v6269 = vmul.f32 %v6258, 1.442695
    %v6270 = vpow.pop %v6269
    %v6271 = vmul.f32 %v6259, 1.442695
    %v6272 = vpow.pop %v6271
    %v6273 = vmul.f32 %v6260, 1.442695
    %v6274 = vpow.pop %v6273
    %v6275 = vmul.f32 %v6261, 1.442695
    %v6276 = vpow.pop %v6275
    %v6277 = vmul.f32 %v6262, 1.442695
    %v6278 = vpow.pop %v6277
    %6287 = vset.pattern.permute.xlu0 0
    %6288 = vperm.xlu0 %6287, %v6264
    %v6289 = vpop.permute.xlu0 %6288
    %6290 = vset.pattern.permute.xlu0 0
    %6291 = vperm.xlu0 %6290, %v6266
    %v6292 = vpop.permute.xlu0 %6291
    %6293 = vset.pattern.permute.xlu0 0
    %6294 = vperm.xlu0 %6293, %v6268
    %v6295 = vpop.permute.xlu0 %6294
    %6296 = vset.pattern.permute.xlu0 0
    %6297 = vperm.xlu0 %6296, %v6270
    %v6298 = vpop.permute.xlu0 %6297
    %6299 = vset.pattern.permute.xlu0 0
    %6300 = vperm.xlu0 %6299, %v6272
    %v6301 = vpop.permute.xlu0 %6300
    %6302 = vset.pattern.permute.xlu0 0
    %6303 = vperm.xlu0 %6302, %v6274
    %v6304 = vpop.permute.xlu0 %6303
    %6305 = vset.pattern.permute.xlu0 0
    %6306 = vperm.xlu0 %6305, %v6276
    %v6307 = vpop.permute.xlu0 %6306
    %6308 = vset.pattern.permute.xlu0 0
    %6309 = vperm.xlu0 %6308, %v6278
    %v6310 = vpop.permute.xlu0 %6309
    %v6311 = vlaneseq
    %v6312 = vshrl.u32 %v6311, 7
    %v6313 = vsub.s32 %v2752, %v6312
    %v6314 = vrot.slane %v6289, %v6313
    %v6315 = vlaneseq
    %v6316 = vshrl.u32 %v6315, 7
    %v6317 = vsub.s32 %v2752, %v6316
    %v6318 = vrot.slane %v6292, %v6317
    %v6319 = vlaneseq
    %v6320 = vshrl.u32 %v6319, 7
    %v6321 = vsub.s32 %v2752, %v6320
    %v6322 = vrot.slane %v6295, %v6321
    %v6323 = vlaneseq
    %v6324 = vshrl.u32 %v6323, 7
    %v6325 = vsub.s32 %v2752, %v6324
    %v6326 = vrot.slane %v6298, %v6325
    %v6327 = vlaneseq
    %v6328 = vshrl.u32 %v6327, 7
    %v6329 = vsub.s32 %v2752, %v6328
    %v6330 = vrot.slane %v6301, %v6329
    %v6331 = vlaneseq
    %v6332 = vshrl.u32 %v6331, 7
    %v6333 = vsub.s32 %v2752, %v6332
    %v6334 = vrot.slane %v6304, %v6333
    %v6335 = vlaneseq
    %v6336 = vshrl.u32 %v6335, 7
    %v6337 = vsub.s32 %v2752, %v6336
    %v6338 = vrot.slane %v6307, %v6337
    %v6339 = vlaneseq
    %v6340 = vshrl.u32 %v6339, 7
    %v6341 = vsub.s32 %v2752, %v6340
    %v6342 = vrot.slane %v6310, %v6341
    %v6343 = vsel %vm2785, %v6318, %v6314
    %v6344 = vsel %vm2787, %v6322, %v6343
    %v6345 = vsel %vm2789, %v6326, %v6344
    %v6346 = vsel %vm2791, %v6330, %v6345
    %v6347 = vsel %vm2793, %v6334, %v6346
    %v6348 = vsel %vm2795, %v6338, %v6347
    %v6349 = vsel %vm2797, %v6342, %v6348
    %v6351 = vsel %vm87, %v6349, 0.0
    %6352 = vadd.xlane.f32.xlu0 %v6351
    %v6353 = vpop.xlane.xlu0 %6352
    %v6355 = vlaneseq
    %v6356 = vshrl.u32 %v6355, 7
    %v6357 = vsub.s32 0, %v6356
    %v6358 = vrot.slane %v6353, %v6357
    %v6359 = vlaneseq
    %v6360 = vshrl.u32 %v6359, 7
    %v6361 = vsub.s32 1, %v6360
    %v6362 = vrot.slane %v6353, %v6361
    %v6363 = vlaneseq
    %v6364 = vshrl.u32 %v6363, 7
    %v6365 = vsub.s32 2, %v6364
    %v6366 = vrot.slane %v6353, %v6365
    %v6367 = vlaneseq
    %v6368 = vshrl.u32 %v6367, 7
    %v6369 = vsub.s32 3, %v6368
    %v6370 = vrot.slane %v6353, %v6369
    %v6371 = vlaneseq
    %v6372 = vshrl.u32 %v6371, 7
    %v6373 = vsub.s32 4, %v6372
    %v6374 = vrot.slane %v6353, %v6373
    %v6375 = vlaneseq
    %v6376 = vshrl.u32 %v6375, 7
    %v6377 = vsub.s32 5, %v6376
    %v6378 = vrot.slane %v6353, %v6377
    %v6379 = vlaneseq
    %v6380 = vshrl.u32 %v6379, 7
    %v6381 = vsub.s32 6, %v6380
    %v6382 = vrot.slane %v6353, %v6381
    %v6383 = vlaneseq
    %v6384 = vshrl.u32 %v6383, 7
    %v6385 = vsub.s32 7, %v6384
    %v6386 = vrot.slane %v6353, %v6385
    %v6395 = vrcp.pop %v6358
    %v6396 = vmul.f32 %v6264, %v6395
    %v6397 = vrcp.pop %v6362
    %v6398 = vmul.f32 %v6266, %v6397
    %v6399 = vrcp.pop %v6366
    %v6400 = vmul.f32 %v6268, %v6399
    %v6401 = vrcp.pop %v6370
    %v6402 = vmul.f32 %v6270, %v6401
    %v6403 = vrcp.pop %v6374
    %v6404 = vmul.f32 %v6272, %v6403
    %v6405 = vrcp.pop %v6378
    %v6406 = vmul.f32 %v6274, %v6405
    %v6407 = vrcp.pop %v6382
    %v6408 = vmul.f32 %v6276, %v6407
    %v6409 = vrcp.pop %v6386
    %v6410 = vmul.f32 %v6278, %v6409
    %6412 = vset.pattern.permute.xlu0 0
    %6413 = vperm.xlu0 %6412, %v6396
    %v6414 = vpop.permute.xlu0 %6413
    %6417 = vset.pattern.permute.xlu0 0
    %6418 = vperm.xlu0 %6417, %v6398
    %v6419 = vpop.permute.xlu0 %6418
    %6422 = vset.pattern.permute.xlu0 0
    %6423 = vperm.xlu0 %6422, %v6400
    %v6424 = vpop.permute.xlu0 %6423
    %6427 = vset.pattern.permute.xlu0 0
    %6428 = vperm.xlu0 %6427, %v6402
    %v6429 = vpop.permute.xlu0 %6428
    %6432 = vset.pattern.permute.xlu0 0
    %6433 = vperm.xlu0 %6432, %v6404
    %v6434 = vpop.permute.xlu0 %6433
    %6437 = vset.pattern.permute.xlu0 0
    %6438 = vperm.xlu0 %6437, %v6406
    %v6439 = vpop.permute.xlu0 %6438
    %6442 = vset.pattern.permute.xlu0 0
    %6443 = vperm.xlu0 %6442, %v6408
    %v6444 = vpop.permute.xlu0 %6443
    %6447 = vset.pattern.permute.xlu0 0
    %6448 = vperm.xlu0 %6447, %v6410
    %v6449 = vpop.permute.xlu0 %6448
    %v6451 = vmul.f32 %v6414, %v2674
    %v6452 = vmul.f32 %v6419, %v2675
    %v6453 = vmul.f32 %v6424, %v2676
    %v6454 = vmul.f32 %v6429, %v2677
    %v6455 = vmul.f32 %v6434, %v2678
    %v6456 = vmul.f32 %v6439, %v2679
    %v6457 = vmul.f32 %v6444, %v2680
    %v6458 = vmul.f32 %v6449, %v2681
    %v6459 = vsel %vm197, %v6451, 0.0
    %v6460 = vrot.slane %v6459, 4
    %v6461 = vadd.f32 %v6459, %v6460
    %v6462 = vrot.slane %v6461, 2
    %v6463 = vadd.f32 %v6461, %v6462
    %v6464 = vrot.slane %v6463, 1
    %v6465 = vadd.f32 %v6463, %v6464
    %v6466 = vsel %vm197, %v6452, 0.0
    %v6467 = vrot.slane %v6466, 4
    %v6468 = vadd.f32 %v6466, %v6467
    %v6469 = vrot.slane %v6468, 2
    %v6470 = vadd.f32 %v6468, %v6469
    %v6471 = vrot.slane %v6470, 1
    %v6472 = vadd.f32 %v6470, %v6471
    %v6473 = vsel %vm197, %v6453, 0.0
    %v6474 = vrot.slane %v6473, 4
    %v6475 = vadd.f32 %v6473, %v6474
    %v6476 = vrot.slane %v6475, 2
    %v6477 = vadd.f32 %v6475, %v6476
    %v6478 = vrot.slane %v6477, 1
    %v6479 = vadd.f32 %v6477, %v6478
    %v6480 = vsel %vm197, %v6454, 0.0
    %v6481 = vrot.slane %v6480, 4
    %v6482 = vadd.f32 %v6480, %v6481
    %v6483 = vrot.slane %v6482, 2
    %v6484 = vadd.f32 %v6482, %v6483
    %v6485 = vrot.slane %v6484, 1
    %v6486 = vadd.f32 %v6484, %v6485
    %v6487 = vsel %vm197, %v6455, 0.0
    %v6488 = vrot.slane %v6487, 4
    %v6489 = vadd.f32 %v6487, %v6488
    %v6490 = vrot.slane %v6489, 2
    %v6491 = vadd.f32 %v6489, %v6490
    %v6492 = vrot.slane %v6491, 1
    %v6493 = vadd.f32 %v6491, %v6492
    %v6494 = vsel %vm197, %v6456, 0.0
    %v6495 = vrot.slane %v6494, 4
    %v6496 = vadd.f32 %v6494, %v6495
    %v6497 = vrot.slane %v6496, 2
    %v6498 = vadd.f32 %v6496, %v6497
    %v6499 = vrot.slane %v6498, 1
    %v6500 = vadd.f32 %v6498, %v6499
    %v6501 = vsel %vm197, %v6457, 0.0
    %v6502 = vrot.slane %v6501, 4
    %v6503 = vadd.f32 %v6501, %v6502
    %v6504 = vrot.slane %v6503, 2
    %v6505 = vadd.f32 %v6503, %v6504
    %v6506 = vrot.slane %v6505, 1
    %v6507 = vadd.f32 %v6505, %v6506
    %v6508 = vsel %vm197, %v6458, 0.0
    %v6509 = vrot.slane %v6508, 4
    %v6510 = vadd.f32 %v6508, %v6509
    %v6511 = vrot.slane %v6510, 2
    %v6512 = vadd.f32 %v6510, %v6511
    %v6513 = vrot.slane %v6512, 1
    %v6514 = vadd.f32 %v6512, %v6513
    %v6515 = vlaneseq
    %v6516 = vshrl.u32 %v6515, 7
    %v6517 = vsub.s32 %v2752, %v6516
    %v6518 = vrot.slane %v6414, %v6517
    %v6519 = vlaneseq
    %v6520 = vshrl.u32 %v6519, 7
    %v6521 = vsub.s32 %v2752, %v6520
    %v6522 = vrot.slane %v6419, %v6521
    %v6523 = vlaneseq
    %v6524 = vshrl.u32 %v6523, 7
    %v6525 = vsub.s32 %v2752, %v6524
    %v6526 = vrot.slane %v6424, %v6525
    %v6527 = vlaneseq
    %v6528 = vshrl.u32 %v6527, 7
    %v6529 = vsub.s32 %v2752, %v6528
    %v6530 = vrot.slane %v6429, %v6529
    %v6531 = vlaneseq
    %v6532 = vshrl.u32 %v6531, 7
    %v6533 = vsub.s32 %v2752, %v6532
    %v6534 = vrot.slane %v6434, %v6533
    %v6535 = vlaneseq
    %v6536 = vshrl.u32 %v6535, 7
    %v6537 = vsub.s32 %v2752, %v6536
    %v6538 = vrot.slane %v6439, %v6537
    %v6539 = vlaneseq
    %v6540 = vshrl.u32 %v6539, 7
    %v6541 = vsub.s32 %v2752, %v6540
    %v6542 = vrot.slane %v6444, %v6541
    %v6543 = vlaneseq
    %v6544 = vshrl.u32 %v6543, 7
    %v6545 = vsub.s32 %v2752, %v6544
    %v6546 = vrot.slane %v6449, %v6545
    %v6547 = vsel %vm2785, %v6522, %v6518
    %v6548 = vsel %vm2787, %v6526, %v6547
    %v6549 = vsel %vm2789, %v6530, %v6548
    %v6550 = vsel %vm2791, %v6534, %v6549
    %v6551 = vsel %vm2793, %v6538, %v6550
    %v6552 = vsel %vm2795, %v6542, %v6551
    %v6553 = vsel %vm2797, %v6546, %v6552
    %s6555 = scalar_lea.vmem %s14, 40
    %6556 = vst.msk [vmem:[%s6555] sm:$0xff] %vm87, %v6553
    %v6565 = vsel %vm2785, %v6472, %v6465
    %v6566 = vsel %vm2787, %v6479, %v6565
    %v6567 = vsel %vm2789, %v6486, %v6566
    %v6568 = vsel %vm2791, %v6493, %v6567
    %v6569 = vsel %vm2793, %v6500, %v6568
    %v6570 = vsel %vm2795, %v6507, %v6569
    %v6571 = vsel %vm2797, %v6514, %v6570
    %6572 = vrot.lane.b32.xlu0 %v6571, 8
    %v6573 = vpop.permute.xlu0 %6572
    %6575 = vrot.lane.b32.xlu0 %v5828, 72
    %v6576 = vpop.permute.xlu0 %6575
    %v6578 = vsel %vm87, %v6025, %v6573
    %v6579 = vsel %vm95, %v6578, %v6576
    %v6581 = vsel %vm3175, %v6579, 0
    %6583 = vmatprep.subr.mxu0 0.0
    %6584 = vmatpush1.msra.mxu0 %v2682
    %6585 = vmatprep.subr.mxu0 0.0
    %6586 = vmatpush1.msra.mxu0 %v2683
    %6587 = vmatprep.subr.mxu0 0.0
    %6588 = vmatpush1.msra.mxu0 %v2684
    %6589 = vmatprep.subr.mxu0 0.0
    %6590 = vmatpush1.msra.mxu0 %v2685
    %6591 = vmatprep.subr.mxu0 0.0
    %6592 = vmatpush1.msra.mxu0 %v2686
    %6593 = vmatprep.subr.mxu0 0.0
    %6594 = vmatpush1.msra.mxu0 %v2687
    %6595 = vmatprep.subr.mxu0 0.0
    %6596 = vmatpush1.msra.mxu0 %v2688
    %6597 = vmatprep.subr.mxu0 0.0
    %6598 = vmatpush1.msra.mxu0 %v2689
    %6599 = vmatprep.subr.mxu0 0.0
    %6600 = vmatpush1.msra.mxu0 %v2690
    %6601 = vmatprep.subr.mxu0 0.0
    %6602 = vmatpush1.msra.mxu0 0.0
    %6603 = vmatprep.subr.mxu0 0.0
    %6604 = vmatpush1.msra.mxu0 0.0
    %6605 = vmatprep.subr.mxu0 0.0
    %6606 = vmatpush1.msra.mxu0 0.0
    %6607 = vmatprep.subr.mxu0 0.0
    %6608 = vmatpush1.msra.mxu0 0.0
    %6609 = vmatprep.subr.mxu0 0.0
    %6610 = vmatpush1.msra.mxu0 0.0
    %6611 = vmatprep.subr.mxu0 0.0
    %6612 = vmatpush1.msra.mxu0 0.0
    %6613 = vmatprep.subr.mxu0 0.0
    %6614 = vmatpush1.msra.mxu0 0.0
    %6615 = vmatprep.subr.mxu0 0.0
    %6616 = vmatpush1.msra.mxu0 0.0
    %6617 = vmatprep.subr.mxu0 0.0
    %6618 = vmatpush1.msra.mxu0 0.0
    %6619 = vmatprep.subr.mxu0 0.0
    %6620 = vmatpush1.msra.mxu0 0.0
    %6621 = vmatprep.subr.mxu0 0.0
    %6622 = vmatpush1.msra.mxu0 0.0
    %6623 = vmatprep.subr.mxu0 0.0
    %6624 = vmatpush1.msra.mxu0 0.0
    %6625 = vmatprep.subr.mxu0 0.0
    %6626 = vmatpush1.msra.mxu0 0.0
    %6627 = vmatprep.subr.mxu0 0.0
    %6628 = vmatpush1.msra.mxu0 0.0
    %6629 = vmatprep.subr.mxu0 0.0
    %6630 = vmatpush1.msra.mxu0 0.0
    %6631 = vmatprep.subr.mxu0 0.0
    %6632 = vmatpush1.msra.mxu0 0.0
    %6633 = vmatprep.subr.mxu0 0.0
    %6634 = vmatpush1.msra.mxu0 0.0
    %6635 = vmatprep.subr.mxu0 0.0
    %6636 = vmatpush1.msra.mxu0 0.0
    %6637 = vmatprep.subr.mxu0 0.0
    %6638 = vmatpush1.msra.mxu0 0.0
    %6639 = vmatprep.subr.mxu0 0.0
    %6640 = vmatpush1.msra.mxu0 0.0
    %6641 = vmatprep.subr.mxu0 0.0
    %6642 = vmatpush1.msra.mxu0 0.0
    %6643 = vmatprep.subr.mxu0 0.0
    %6644 = vmatpush1.msra.mxu0 0.0
    %6645 = vmatprep.subr.mxu0 0.0
    %6646 = vmatpush1.msra.mxu0 0.0
    %6647 = vmatprep.mubr.f32.mxu0 0.0
    %6648 = vmatmul.mubr.f32.gmra.mrb[0].mxu0 %v6581
    %v6649 = vpop.f32.mrb[0].mxu0
    %v6650 = vadd.f32 %v3173, %v6649
    %v6651 = vpop.f32.mrb[0].mxu0
    %6652 = vdwg.mxu0
    %v6653 = vxor.u32 %v6650, 2147483648
    %v6654 = vmul.f32 %v6653, 1.442695
    %v6655 = vpow.pop %v6654
    %v6656 = vadd.f32 %v6655, 1.0
    %v6657 = vrcp.pop %v6656
    %v6658 = vmul.f32 1.0, %v6657
    %v6659 = vtanh.pop %v6650
    %v6660 = vmul.f32 %v6658, %v5822
    %6662 = vrot.lane.b32.xlu0 %v6659, 64
    %v6663 = vpop.permute.xlu0 %6662
    %v6665 = vmul.f32 %v6658, %v6663
    %6667 = vrot.lane.b32.xlu0 %v6665, 32
    %v6668 = vpop.permute.xlu0 %6667
    %v6670 = vadd.f32 %v6660, %v6668
    %v6671 = vtanh.pop %v6670
    %6673 = vrot.lane.b32.xlu0 %v6671, 64
    %v6674 = vpop.permute.xlu0 %6673
    %v6676 = vmul.f32 %v6658, %v6674
    %6678 = vrot.lane.b32.xlu0 %v6676, 32
    %v6679 = vpop.permute.xlu0 %6678
    %6681 = vrot.lane.b32.xlu0 %v5933, 64
    %v6682 = vpop.permute.xlu0 %6681
    %v6684 = vsel %vm197, %v6679, %v6682
    %v6686 = vsel %vm205, %v6684, 0
    %6688 = vmatprep.subr.mxu0 0.0
    %6689 = vmatpush1.msra.mxu0 %v2692
    %6690 = vmatprep.subr.mxu0 0.0
    %6691 = vmatpush1.msra.mxu0 %v2693
    %6692 = vmatprep.subr.mxu0 0.0
    %6693 = vmatpush1.msra.mxu0 %v2694
    %6694 = vmatprep.subr.mxu0 0.0
    %6695 = vmatpush1.msra.mxu0 %v2695
    %6696 = vmatprep.subr.mxu0 0.0
    %6697 = vmatpush1.msra.mxu0 %v2696
    %6698 = vmatprep.subr.mxu0 0.0
    %6699 = vmatpush1.msra.mxu0 %v2697
    %6700 = vmatprep.subr.mxu0 0.0
    %6701 = vmatpush1.msra.mxu0 %v2698
    %6702 = vmatprep.subr.mxu0 0.0
    %6703 = vmatpush1.msra.mxu0 %v2699
    %6704 = vmatprep.subr.mxu0 0.0
    %6705 = vmatpush1.msra.mxu0 0.0
    %6706 = vmatprep.subr.mxu0 0.0
    %6707 = vmatpush1.msra.mxu0 0.0
    %6708 = vmatprep.subr.mxu0 0.0
    %6709 = vmatpush1.msra.mxu0 0.0
    %6710 = vmatprep.subr.mxu0 0.0
    %6711 = vmatpush1.msra.mxu0 0.0
    %6712 = vmatprep.subr.mxu0 0.0
    %6713 = vmatpush1.msra.mxu0 0.0
    %6714 = vmatprep.subr.mxu0 0.0
    %6715 = vmatpush1.msra.mxu0 0.0
    %6716 = vmatprep.subr.mxu0 0.0
    %6717 = vmatpush1.msra.mxu0 0.0
    %6718 = vmatprep.subr.mxu0 0.0
    %6719 = vmatpush1.msra.mxu0 0.0
    %6720 = vmatprep.subr.mxu0 0.0
    %6721 = vmatpush1.msra.mxu0 0.0
    %6722 = vmatprep.subr.mxu0 0.0
    %6723 = vmatpush1.msra.mxu0 0.0
    %6724 = vmatprep.subr.mxu0 0.0
    %6725 = vmatpush1.msra.mxu0 0.0
    %6726 = vmatprep.subr.mxu0 0.0
    %6727 = vmatpush1.msra.mxu0 0.0
    %6728 = vmatprep.subr.mxu0 0.0
    %6729 = vmatpush1.msra.mxu0 0.0
    %6730 = vmatprep.subr.mxu0 0.0
    %6731 = vmatpush1.msra.mxu0 0.0
    %6732 = vmatprep.subr.mxu0 0.0
    %6733 = vmatpush1.msra.mxu0 0.0
    %6734 = vmatprep.subr.mxu0 0.0
    %6735 = vmatpush1.msra.mxu0 0.0
    %6736 = vmatprep.subr.mxu0 0.0
    %6737 = vmatpush1.msra.mxu0 0.0
    %6738 = vmatprep.subr.mxu0 0.0
    %6739 = vmatpush1.msra.mxu0 0.0
    %6740 = vmatprep.subr.mxu0 0.0
    %6741 = vmatpush1.msra.mxu0 0.0
    %6742 = vmatprep.subr.mxu0 0.0
    %6743 = vmatpush1.msra.mxu0 0.0
    %6744 = vmatprep.subr.mxu0 0.0
    %6745 = vmatpush1.msra.mxu0 0.0
    %6746 = vmatprep.subr.mxu0 0.0
    %6747 = vmatpush1.msra.mxu0 0.0
    %6748 = vmatprep.subr.mxu0 0.0
    %6749 = vmatpush1.msra.mxu0 0.0
    %6750 = vmatprep.subr.mxu0 0.0
    %6751 = vmatpush1.msra.mxu0 0.0
    %6752 = vmatprep.mubr.f32.mxu0 0.0
    %6753 = vmatmul.mubr.f32.gmra.mrb[0].mxu0 %v6686
    %v6754 = vpop.f32.mrb[0].mxu0
    %v6755 = vadd.f32 %v3285, %v6754
    %v6756 = vpop.f32.mrb[0].mxu0
    %6757 = vdwg.mxu0
    %v6758 = vxor.u32 %v6755, 2147483648
    %v6759 = vmul.f32 %v6758, 1.442695
    %v6760 = vpow.pop %v6759
    %v6761 = vadd.f32 %v6760, 1.0
    %v6762 = vrcp.pop %v6761
    %v6763 = vmul.f32 1.0, %v6762
    %v6764 = vtanh.pop %v6755
    %v6765 = vmul.f32 %v6763, %v5927
    %6767 = vrot.lane.b32.xlu0 %v6764, 64
    %v6768 = vpop.permute.xlu0 %6767
    %v6770 = vmul.f32 %v6763, %v6768
    %6772 = vrot.lane.b32.xlu0 %v6770, 32
    %v6773 = vpop.permute.xlu0 %6772
    %v6775 = vadd.f32 %v6765, %v6773
    %v6776 = vtanh.pop %v6775
    %6778 = vrot.lane.b32.xlu0 %v6776, 64
    %v6779 = vpop.permute.xlu0 %6778
    %v6781 = vmul.f32 %v6763, %v6779
    %6783 = vrot.lane.b32.xlu0 %v6781, 32
    %v6784 = vpop.permute.xlu0 %6783
    %6786 = vrot.lane.b32.xlu0 %v6571, 32
    %v6787 = vpop.permute.xlu0 %6786
    %v6789 = vsel %vm197, %v6784, %v6787
    %v6791 = vsel %vm205, %v6789, 0
    %6793 = vmatprep.subr.mxu0 0.0
    %6794 = vmatpush1.msra.mxu0 %v2701
    %6795 = vmatprep.subr.mxu0 0.0
    %6796 = vmatpush1.msra.mxu0 %v2702
    %6797 = vmatprep.subr.mxu0 0.0
    %6798 = vmatpush1.msra.mxu0 %v2703
    %6799 = vmatprep.subr.mxu0 0.0
    %6800 = vmatpush1.msra.mxu0 %v2704
    %6801 = vmatprep.subr.mxu0 0.0
    %6802 = vmatpush1.msra.mxu0 %v2705
    %6803 = vmatprep.subr.mxu0 0.0
    %6804 = vmatpush1.msra.mxu0 %v2706
    %6805 = vmatprep.subr.mxu0 0.0
    %6806 = vmatpush1.msra.mxu0 %v2707
    %6807 = vmatprep.subr.mxu0 0.0
    %6808 = vmatpush1.msra.mxu0 %v2708
    %6809 = vmatprep.subr.mxu0 0.0
    %6810 = vmatpush1.msra.mxu0 0.0
    %6811 = vmatprep.subr.mxu0 0.0
    %6812 = vmatpush1.msra.mxu0 0.0
    %6813 = vmatprep.subr.mxu0 0.0
    %6814 = vmatpush1.msra.mxu0 0.0
    %6815 = vmatprep.subr.mxu0 0.0
    %6816 = vmatpush1.msra.mxu0 0.0
    %6817 = vmatprep.subr.mxu0 0.0
    %6818 = vmatpush1.msra.mxu0 0.0
    %6819 = vmatprep.subr.mxu0 0.0
    %6820 = vmatpush1.msra.mxu0 0.0
    %6821 = vmatprep.subr.mxu0 0.0
    %6822 = vmatpush1.msra.mxu0 0.0
    %6823 = vmatprep.subr.mxu0 0.0
    %6824 = vmatpush1.msra.mxu0 0.0
    %6825 = vmatprep.subr.mxu0 0.0
    %6826 = vmatpush1.msra.mxu0 0.0
    %6827 = vmatprep.subr.mxu0 0.0
    %6828 = vmatpush1.msra.mxu0 0.0
    %6829 = vmatprep.subr.mxu0 0.0
    %6830 = vmatpush1.msra.mxu0 0.0
    %6831 = vmatprep.subr.mxu0 0.0
    %6832 = vmatpush1.msra.mxu0 0.0
    %6833 = vmatprep.subr.mxu0 0.0
    %6834 = vmatpush1.msra.mxu0 0.0
    %6835 = vmatprep.subr.mxu0 0.0
    %6836 = vmatpush1.msra.mxu0 0.0
    %6837 = vmatprep.subr.mxu0 0.0
    %6838 = vmatpush1.msra.mxu0 0.0
    %6839 = vmatprep.subr.mxu0 0.0
    %6840 = vmatpush1.msra.mxu0 0.0
    %6841 = vmatprep.subr.mxu0 0.0
    %6842 = vmatpush1.msra.mxu0 0.0
    %6843 = vmatprep.subr.mxu0 0.0
    %6844 = vmatpush1.msra.mxu0 0.0
    %6845 = vmatprep.subr.mxu0 0.0
    %6846 = vmatpush1.msra.mxu0 0.0
    %6847 = vmatprep.subr.mxu0 0.0
    %6848 = vmatpush1.msra.mxu0 0.0
    %6849 = vmatprep.subr.mxu0 0.0
    %6850 = vmatpush1.msra.mxu0 0.0
    %6851 = vmatprep.subr.mxu0 0.0
    %6852 = vmatpush1.msra.mxu0 0.0
    %6853 = vmatprep.subr.mxu0 0.0
    %6854 = vmatpush1.msra.mxu0 0.0
    %6855 = vmatprep.subr.mxu0 0.0
    %6856 = vmatpush1.msra.mxu0 0.0
    %6857 = vmatprep.mubr.f32.mxu0 0.0
    %6858 = vmatmul.mubr.f32.gmra.mrb[0].mxu0 %v6791
    %v6859 = vpop.f32.mrb[0].mxu0
    %v6860 = vadd.f32 %v3396, %v6859
    %v6861 = vpop.f32.mrb[0].mxu0
    %6862 = vdwg.mxu0
    %s6863 = scalar_lea.vmem %s13, 40
    %6864 = vst.msk [vmem:[%s6863] sm:$0xff] %vm87, %v6860
    // Predicated region
    $region62: #{_seq2seq_jit.1} parent=1 // pred_check
      _
    $region63: #{_seq2seq_jit.1} parent=1 // pred_check_branch
      %6866 = sbr.rel (0) target = $region65
    $region64: #{_seq2seq_jit.1} parent=1 // pred_region
      _
    $region65: #{_seq2seq_jit.1} parent=1 // pred_fallthru
      _
    // Predicated region
    $region66: #{_seq2seq_jit.1} parent=1 // pred_check
      _
    $region67: #{_seq2seq_jit.1} parent=1 // pred_check_branch
      %6868 = sbr.rel (0) target = $region69
    $region68: #{_seq2seq_jit.1} parent=1 // pred_region
      _
    $region69: #{_seq2seq_jit.1} parent=1 // pred_fallthru
      _
    // Predicated region
    $region70: #{_seq2seq_jit.1} parent=1 // pred_check
      _
    $region71: #{_seq2seq_jit.1} parent=1 // pred_check_branch
      %6870 = sbr.rel (0) target = $region73
    $region72: #{_seq2seq_jit.1} parent=1 // pred_region
      _
    $region73: #{_seq2seq_jit.1} parent=1 // pred_fallthru
      _
    // Predicated region
    $region74: #{_seq2seq_jit.1} parent=1 // pred_check
      _
    $region75: #{_seq2seq_jit.1} parent=1 // pred_check_branch
      %6872 = sbr.rel (0) target = $region77
    $region76: #{_seq2seq_jit.1} parent=1 // pred_region
      _
    $region77: #{_seq2seq_jit.1} parent=1 // pred_fallthru
      _
    %6873 = vsyncpa [#allocation4], 1
    %6874 = vsyncpa [#allocation5], 1

</llo_original>
